<compile_context>
chip_gen: v6e
topology: v6e:2x2x1
jax: 0.10.0
libtpu: 0.0.40
codegen_flags: <defaults>
</compile_context>

<pallas_src>
import functools
import math

import numpy as np

import jax
import jax.numpy as jnp
from jax.experimental import pallas as pl
from jax.experimental.pallas import tpu as pltpu

CPAD = 128  # lane-padded channel width used everywhere


# ----------------------------- Pallas kernels ------------------------------

def _stem_kernel(p_ref, w_ref, s_ref, b_ref, mask_ref, o_ref, hbuf,
                 *, deltas, conv_h, conv_w, pool_h, pool_w, imgs):
    """7x7/s2 conv (patches @ W) + BN + ReLU + 3x3/s2/p1 maxpool, one batch chunk per step."""
    conv = jnp.dot(p_ref[...], w_ref[...], preferred_element_type=jnp.float32)
    h = jnp.maximum(conv * s_ref[...] + b_ref[...], 0.0)
    rows = h.shape[0]

    # 3x3 neighbourhood max at every conv position via XLU rolls + 0/1 boundary masks.
    # h >= 0 post-ReLU, so masked-out (out-of-bounds) taps contributing 0 act like -inf pad.
    best = h
    for k, d in enumerate(deltas):
        if d == 0:
            continue
        best = jnp.maximum(best, pltpu.roll(h, shift=(-d) % rows, axis=0) * mask_ref[k])
    hbuf[...] = best

    # Stride-2 subsample in y and x via strided sublane reads (no selection matmuls).
    parts = []
    for im in range(imgs):
        base = im * conv_h * conv_w
        for oy in range(pool_h):
            parts.append(hbuf[pl.ds(base + 2 * oy * conv_w, pool_w, stride=2), :])
    o_ref[...] = jnp.concatenate(parts, axis=0).astype(o_ref.dtype)


def _dense_block_kernel(x_ref, s1_ref, b1_ref, w1_ref, s2_ref, b2_ref, w2_ref, mask_ref,
                        o_ref, acc_ref, *, deltas, inner, pack):
    """One fused DenseBlock: grid axis 1 walks the layers, x lives in a VMEM f32 accumulator.

    Per layer: BN1+ReLU -> 1x1 conv -> BN2+ReLU -> 3x3 conv -> concat (add at lane offset).
    The 3x3 conv shifts come from pltpu.roll + boundary masks; `pack` taps (each `inner`
    channels wide) share one 128-lane group, so the whole tap stack is a single matmul
    against the pre-packed w2 of shape (ceil(9/pack)*128, 128).
    """
    layer = pl.program_id(1)

    @pl.when(layer == 0)
    def _():
        acc_ref[...] = x_ref[...].astype(jnp.float32)

    x = acc_ref[...]
    rows = x.shape[0]

    h = jnp.maximum(x * s1_ref[...] + b1_ref[...], 0.0)
    h = jnp.dot(h.astype(jnp.bfloat16), w1_ref[...], preferred_element_type=jnp.float32)
    h = jnp.maximum(h * s2_ref[...] + b2_ref[...], 0.0)          # nonzero only in lanes [0,inner)

    num_taps = len(deltas)
    num_groups = -(-num_taps // pack)
    groups = []
    for g in range(num_groups):
        acc = None
        for t in range(pack):
            k = g * pack + t
            if k >= num_taps:
                break
            d = deltas[k]
            sh = h if d == 0 else pltpu.roll(h, shift=(-d) % rows, axis=0) * mask_ref[k]
            if t:
                # place this tap's `inner` channels at lane offset t*inner (wrapped lanes are 0)
                sh = pltpu.roll(sh, shift=t * inner, axis=1)
            acc = sh if acc is None else acc + sh
        groups.append(acc)
    h_cat = groups[0] if num_groups == 1 else jnp.concatenate(groups, axis=-1)

    new = jnp.dot(h_cat.astype(jnp.bfloat16), w2_ref[...],
                  preferred_element_type=jnp.float32)            # growth lanes at offset cin
    acc_ref[...] = x + new                                       # concat-as-add

    @pl.when(layer == pl.num_programs(1) - 1)
    def _():
        o_ref[...] = acc_ref[...].astype(o_ref.dtype)


def _transition_kernel(x_ref, s_ref, b_ref, w_ref, o_ref, hbuf, *, img_h, img_w, imgs):
    """Fused Transition: BN+ReLU -> 1x1 conv -> 2x2/s2 avg pool (rolls + strided subsample)."""
    x = x_ref[...].astype(jnp.float32)
    h = jnp.maximum(x * s_ref[...] + b_ref[...], 0.0)
    h = jnp.dot(h.astype(jnp.bfloat16), w_ref[...], preferred_element_type=jnp.float32)
    rows = h.shape[0]
    # kept rows are even-(y,x) positions whose (+1,+w,+w+1) shifts never leave the image,
    # so no boundary masks are needed.
    pooled = (h
              + pltpu.roll(h, shift=(-1) % rows, axis=0)
              + pltpu.roll(h, shift=(-img_w) % rows, axis=0)
              + pltpu.roll(h, shift=(-(img_w + 1)) % rows, axis=0)) * 0.25
    hbuf[...] = pooled
    parts = []
    for im in range(imgs):
        base = im * img_h * img_w
        for oy in range(img_h // 2):
            parts.append(hbuf[pl.ds(base + 2 * oy * img_w, img_w // 2, stride=2), :])
    o_ref[...] = jnp.concatenate(parts, axis=0).astype(o_ref.dtype)


def _head_kernel(x_ref, s_ref, b_ref, w_ref, bias_ref, o_ref, *, img_rows, imgs):
    """Fused head: BN+ReLU -> global avg pool (sublane reduce) -> classifier matmul + bias."""
    h = jnp.maximum(x_ref[...].astype(jnp.float32) * s_ref[...] + b_ref[...], 0.0)
    pooled = jnp.concatenate(
        [jnp.mean(h[im * img_rows:(im + 1) * img_rows, :], axis=0, keepdims=True)
         for im in range(imgs)], axis=0)                          # (imgs, 128)
    o_ref[...] = (jnp.dot(pooled.astype(jnp.bfloat16), w_ref[...],
                          preferred_element_type=jnp.float32) + bias_ref[...])


# ----------------------------- pallas_call wrappers -------------------------

def _cparams(dims):
    # explicit, conservative scoped-VMEM request; safe on v5e/v6e (128 MiB) and v7x (64 MiB)
    return pltpu.CompilerParams(dimension_semantics=dims,
                                vmem_limit_bytes=32 * 1024 * 1024)


def pallas_stem(patches, w0, s0, b0, masks, deltas, *, n_chunks, imgs,
                conv_h, conv_w, pool_h, pool_w):
    conv_rows = imgs * conv_h * conv_w
    pool_rows = imgs * pool_h * pool_w
    k_pad = patches.shape[1]
    kern = functools.partial(_stem_kernel, deltas=tuple(deltas), conv_h=conv_h,
                             conv_w=conv_w, pool_h=pool_h, pool_w=pool_w, imgs=imgs)
    flops = 2 * n_chunks * conv_rows * k_pad * CPAD
    bytes_acc = patches.size * 2 + w0.size * 2 + n_chunks * pool_rows * CPAD * 2
    return pl.pallas_call(
        kern,
        out_shape=jax.ShapeDtypeStruct((n_chunks * pool_rows, CPAD), jnp.bfloat16),
        grid=(n_chunks,),
        in_specs=[
            pl.BlockSpec((conv_rows, k_pad), lambda i: (i, 0)),
            pl.BlockSpec((k_pad, CPAD), lambda i: (0, 0)),
            pl.BlockSpec((1, CPAD), lambda i: (0, 0)),
            pl.BlockSpec((1, CPAD), lambda i: (0, 0)),
            pl.BlockSpec((9, conv_rows, 1), lambda i: (0, 0, 0)),
        ],
        out_specs=pl.BlockSpec((pool_rows, CPAD), lambda i: (i, 0)),
        scratch_shapes=[pltpu.VMEM((conv_rows, CPAD), jnp.float32)],
        compiler_params=_cparams(("parallel",)),
        cost_estimate=pl.CostEstimate(flops=int(flops), transcendentals=0,
                                      bytes_accessed=int(bytes_acc)),
    )(patches, w0, s0, b0, masks)


def pallas_dense_block(x, bp, masks, deltas, *, n_chunks, chunk_rows, inner, pack):
    num_layers = bp["w1"].shape[0]
    g_rows = bp["w2"].shape[1]                    # ceil(9/pack) * 128
    kern = functools.partial(_dense_block_kernel, deltas=tuple(deltas),
                             inner=inner, pack=pack)
    flops = 2 * n_chunks * num_layers * chunk_rows * (CPAD * CPAD + g_rows * CPAD)
    bytes_acc = 2 * x.size * 2 + (bp["w1"].size + bp["w2"].size) * 2
    return pl.pallas_call(
        kern,
        out_shape=jax.ShapeDtypeStruct((n_chunks * chunk_rows, CPAD), jnp.bfloat16),
        grid=(n_chunks, num_layers),
        in_specs=[
            pl.BlockSpec((chunk_rows, CPAD), lambda i, l: (i, 0)),        # x (read at layer 0)
            pl.BlockSpec((None, 1, CPAD), lambda i, l: (l, 0, 0)),        # bn1 scale
            pl.BlockSpec((None, 1, CPAD), lambda i, l: (l, 0, 0)),        # bn1 shift
            pl.BlockSpec((None, CPAD, CPAD), lambda i, l: (l, 0, 0)),     # 1x1 conv w1
            pl.BlockSpec((None, 1, CPAD), lambda i, l: (l, 0, 0)),        # bn2 scale
            pl.BlockSpec((None, 1, CPAD), lambda i, l: (l, 0, 0)),        # bn2 shift
            pl.BlockSpec((None, g_rows, CPAD), lambda i, l: (l, 0, 0)),   # packed 3x3 conv w2
            pl.BlockSpec((9, chunk_rows, 1), lambda i, l: (0, 0, 0)),     # boundary masks
        ],
        out_specs=pl.BlockSpec((chunk_rows, CPAD), lambda i, l: (i, 0)),
        scratch_shapes=[pltpu.VMEM((chunk_rows, CPAD), jnp.float32)],     # resident activation
        compiler_params=_cparams(("parallel", "arbitrary")),
        cost_estimate=pl.CostEstimate(flops=int(flops), transcendentals=0,
                                      bytes_accessed=int(bytes_acc)),
    )(x, bp["s1"], bp["b1"], bp["w1"], bp["s2"], bp["b2"], bp["w2"], masks)


def pallas_transition(x, tp, *, n_chunks, imgs, img_h, img_w):
    assert img_h % 2 == 0 and img_w % 2 == 0
    rows_in = imgs * img_h * img_w
    rows_out = imgs * (img_h // 2) * (img_w // 2)
    s, b = tp["bn"]
    kern = functools.partial(_transition_kernel, img_h=img_h, img_w=img_w, imgs=imgs)
    return pl.pallas_call(
        kern,
        out_shape=jax.ShapeDtypeStruct((n_chunks * rows_out, CPAD), jnp.bfloat16),
        grid=(n_chunks,),
        in_specs=[
            pl.BlockSpec((rows_in, CPAD), lambda i: (i, 0)),
            pl.BlockSpec((1, CPAD), lambda i: (0, 0)),
            pl.BlockSpec((1, CPAD), lambda i: (0, 0)),
            pl.BlockSpec((CPAD, CPAD), lambda i: (0, 0)),
        ],
        out_specs=pl.BlockSpec((rows_out, CPAD), lambda i: (i, 0)),
        scratch_shapes=[pltpu.VMEM((rows_in, CPAD), jnp.float32)],
        compiler_params=_cparams(("parallel",)),
        cost_estimate=pl.CostEstimate(
            flops=int(2 * n_chunks * rows_in * CPAD * CPAD), transcendentals=0,
            bytes_accessed=int(x.size * 2 + tp["w"].size * 2
                               + n_chunks * rows_out * CPAD * 2)),
    )(x, s, b, tp["w"])


def pallas_head(x, s, b, w, bias, *, n_img, img_rows):
    total_rows = x.shape[0]
    kern = functools.partial(_head_kernel, img_rows=img_rows, imgs=n_img)
    return pl.pallas_call(
        kern,
        out_shape=jax.ShapeDtypeStruct((n_img, CPAD), jnp.float32),
        grid=(1,),
        in_specs=[
            pl.BlockSpec((total_rows, CPAD), lambda i: (0, 0)),
            pl.BlockSpec((1, CPAD), lambda i: (0, 0)),
            pl.BlockSpec((1, CPAD), lambda i: (0, 0)),
            pl.BlockSpec((CPAD, CPAD), lambda i: (0, 0)),
            pl.BlockSpec((1, CPAD), lambda i: (0, 0)),
        ],
        out_specs=pl.BlockSpec((n_img, CPAD), lambda i: (0, 0)),
        compiler_params=_cparams(("arbitrary",)),
        cost_estimate=pl.CostEstimate(flops=int(2 * n_img * CPAD * CPAD), transcendentals=0,
                                      bytes_accessed=int(x.size * 2 + w.size * 2)),
    )(x, s, b, w, bias)


# ------------------------------- geometry (trace-time constants) ------------

def im2col(x, kh, kw, stride, pad):
    """x: (N, H, W, C) NHWC -> patches (N, oh, ow, kh*kw*C). One-time, stem only."""
    x = jnp.pad(x, ((0, 0), (pad, pad), (pad, pad), (0, 0)))
    n, hh, ww, _ = x.shape
    oh = (hh - kh) // stride + 1
    ow = (ww - kw) // stride + 1
    cols = []
    for i in range(kh):
        for j in range(kw):
            cols.append(x[:, i:i + stride * oh:stride, j:j + stride * ow:stride, :])
    patches = jnp.stack(cols, axis=3)
    return patches.reshape(n, oh, ow, -1), oh, ow


def _shift_masks(h, w):
    """(9, h*w, 1) 0/1 validity masks + flattened-row deltas for 3x3 taps on an h x w image.

    Tap order is (di, dj) in raster order over (-1, 0, 1)^2.  Applying `pltpu.roll` by
    (-delta) % rows and multiplying by mask[k] yields zero-padded spatial shifts.
    """
    masks = np.zeros((9, h * w, 1), np.float32)
    deltas = []
    k = 0
    for di in (-1, 0, 1):
        for dj in (-1, 0, 1):
            deltas.append(di * w + dj)
            for y in range(h):
                if not 0 <= y + di < h:
                    continue
                for x in range(w):
                    if 0 <= x + dj < w:
                        masks[k, y * w + x, 0] = 1.0
            k += 1
    return jnp.asarray(masks, jnp.float32), deltas


def _num_chunks(n_batch, *rows_per_img):
    """Grid over batch only when every per-image row count keeps blocks sublane-aligned."""
    return n_batch if all(r % 8 == 0 for r in rows_per_img) else 1


# ------------------------------- forward -------------------------------------

def densenet_forward(x_nchw, params):
    x = jnp.transpose(x_nchw, (0, 2, 3, 1)).astype(jnp.float32)   # NCHW -> NHWC
    n_img = x.shape[0]
    inner, pack = params["inner"], params["pack"]

    # --- Stem: 7x7/s2 conv + BN + ReLU + 3x3/s2 maxpool, fused ---------------
    patches, oh, ow = im2col(x, 7, 7, 2, 3)
    k_raw = patches.shape[-1]
    k_pad = -(-k_raw // 128) * 128                                 # 1470 -> 1536
    patches = jnp.pad(patches, ((0, 0), (0, 0), (0, 0), (0, k_pad - k_raw)))
    patches = patches.reshape(n_img * oh * ow, k_pad).astype(jnp.bfloat16)
    ph, pw = (oh + 1) // 2, (ow + 1) // 2
    nch = _num_chunks(n_img, oh * ow, ph * pw)
    imgs = n_img // nch
    masks, deltas = _shift_masks(oh, ow)
    masks = jnp.tile(masks, (1, imgs, 1))
    s0, b0 = params["norm0"]
    h = pallas_stem(patches, params["conv0_w"], s0, b0, masks, deltas,
                    n_chunks=nch, imgs=imgs, conv_h=oh, conv_w=ow, pool_h=ph, pool_w=pw)
    fh, fw = ph, pw

    # --- Dense block 1 (single fused call over (batch, layer)) ---------------
    nch = _num_chunks(n_img, fh * fw)
    imgs = n_img // nch
    masks, deltas = _shift_masks(fh, fw)
    masks = jnp.tile(masks, (1, imgs, 1))
    h = pallas_dense_block(h, params["block1"], masks, deltas,
                           n_chunks=nch, chunk_rows=imgs * fh * fw, inner=inner, pack=pack)

    # --- Transition 1: BN+ReLU + 1x1 conv + 2x2 avg pool, fused --------------
    nch = _num_chunks(n_img, fh * fw, (fh // 2) * (fw // 2))
    imgs = n_img // nch
    h = pallas_transition(h, params["trans1"], n_chunks=nch, imgs=imgs, img_h=fh, img_w=fw)
    fh, fw = fh // 2, fw // 2

    # --- Dense block 2 --------------------------------------------------------
    nch = _num_chunks(n_img, fh * fw)
    imgs = n_img // nch
    masks, deltas = _shift_masks(fh, fw)
    masks = jnp.tile(masks, (1, imgs, 1))
    h = pallas_dense_block(h, params["block2"], masks, deltas,
                           n_chunks=nch, chunk_rows=imgs * fh * fw, inner=inner, pack=pack)

    # --- Head: norm5 + ReLU + global avg pool ('avg') + classifier, fused -----
    s5, b5 = params["norm5"]
    logits = pallas_head(h, s5, b5, params["fc_w"], params["fc_b"],
                         n_img=n_img, img_rows=fh * fw)
    return logits[:, :params["n_classes"]]


# ---------------------------- Parameter init --------------------------------

def _pad_lanes(v):
    return jnp.zeros((1, CPAD), jnp.float32).at[0, :v.shape[0]].set(v)


def make_params(key, in_c=30, n_classes=75, init_feat=16, growth=8, bn_size=4,
                block_config=(2, 2)):
    keys = iter(jax.random.split(key, 512))

    def nxt():
        return next(keys)

    def bn(c):
        gamma = 1.0 + 0.1 * jax.random.normal(nxt(), (c,), jnp.float32)
        beta = 0.1 * jax.random.normal(nxt(), (c,), jnp.float32)
        mean = 0.1 * jax.random.normal(nxt(), (c,), jnp.float32)
        var = jnp.abs(1.0 + 0.1 * jax.random.normal(nxt(), (c,), jnp.float32))
        scale = gamma * jax.lax.rsqrt(var + 1e-5)
        shift = beta - mean * scale
        return _pad_lanes(scale), _pad_lanes(shift)

    def rand_w(shape, fan_in):
        return jax.random.normal(nxt(), shape, jnp.float32) / math.sqrt(fan_in)

    def embed(w):
        out = jnp.zeros((CPAD, CPAD), jnp.float32)
        return out.at[:w.shape[0], :w.shape[1]].set(w).astype(jnp.bfloat16)

    inner = bn_size * growth
    assert inner <= CPAD
    pack = CPAD // inner if CPAD % inner == 0 else 1               # taps per 128-lane group
    n_groups = -(-9 // pack)

    params = {"n_classes": n_classes, "inner": inner, "pack": pack}

    # Stem conv: rows flattened in (kh, kw, Cin) order, contraction padded to a 128 multiple.
    k_raw = 49 * in_c
    k_pad = -(-k_raw // 128) * 128
    w0 = rand_w((k_raw, init_feat), k_raw)
    params["conv0_w"] = (jnp.zeros((k_pad, CPAD), jnp.float32)
                         .at[:k_raw, :init_feat].set(w0).astype(jnp.bfloat16))
    params["norm0"] = bn(init_feat)

    def make_layer(cin):
        assert cin + growth <= CPAD, "concat-as-add needs total channels <= 128 lanes"
        w1 = rand_w((cin, inner), cin)
        w2 = rand_w((9, inner, growth), 9 * inner)
        # pack: tap k -> lane group k//pack, contraction rows offset (k%pack)*inner,
        # output columns at lane offset cin (so concat is just an add in the kernel).
        w2p = jnp.zeros((n_groups * CPAD, CPAD), jnp.float32)
        for k in range(9):
            g, t = divmod(k, pack)
            w2p = w2p.at[g * CPAD + t * inner:g * CPAD + (t + 1) * inner,
                         cin:cin + growth].set(w2[k])
        s1, b1 = bn(cin)
        s2, b2 = bn(inner)
        return dict(s1=s1, b1=b1, w1=embed(w1), s2=s2, b2=b2,
                    w2=w2p.astype(jnp.bfloat16))

    def stack_block(layers):
        return {k: jnp.stack([ly[k] for ly in layers], axis=0) for k in layers[0]}

    c = init_feat
    layers = []
    for _ in range(block_config[0]):
        layers.append(make_layer(c))
        c += growth
    params["block1"] = stack_block(layers)

    c_out = c // 2
    params["trans1"] = dict(bn=bn(c), w=embed(rand_w((c, c_out), c)))
    c = c_out

    layers = []
    for _ in range(block_config[1]):
        layers.append(make_layer(c))
        c += growth
    params["block2"] = stack_block(layers)

    params["norm5"] = bn(c)
    params["fc_w"] = embed(rand_w((c, n_classes), c))
    fcb = 0.01 * jax.random.normal(nxt(), (n_classes,), jnp.float32)
    params["fc_b"] = jnp.zeros((1, CPAD), jnp.float32).at[0, :n_classes].set(fcb)
    return params


# --------------------------------- Main --------------------------------------

if __name__ == "__main__":
    key = jax.random.PRNGKey(0)
    k_param, k_x = jax.random.split(key)

    in_c, n_classes = 30, 75
    batch, spatial = 2, 32
    # PyTorch-style NCHW input
    x = jax.random.normal(k_x, (batch, in_c, spatial, spatial), jnp.float32)

    params = make_params(k_param, in_c=in_c, n_classes=n_classes)

    fwd = jax.jit(functools.partial(densenet_forward, params=params))
    logits = jax.block_until_ready(fwd(x))

    assert logits.shape == (batch, n_classes), logits.shape
    assert bool(jnp.all(jnp.isfinite(logits)))
    print("KERNEL_OK")
</pallas_src>

<mosaic_0001>
module attributes {stable_mosaic.version = 11 : i64} {
  func.func @_stem_kernel(%arg0: i32, %arg1: memref<256x1536xbf16, #tpu.memory_space<vmem>>, %arg2: memref<1536x128xbf16, #tpu.memory_space<vmem>>, %arg3: memref<1x128xf32, #tpu.memory_space<vmem>>, %arg4: memref<1x128xf32, #tpu.memory_space<vmem>>, %arg5: memref<9x256x1xf32, #tpu.memory_space<vmem>>, %arg6: memref<64x128xbf16, #tpu.memory_space<vmem>>, %arg7: memref<256x128xf32, #tpu.memory_space<vmem>>) attributes {dimension_semantics = [#tpu.dimension_semantics<parallel>], iteration_bounds = array<i64: 2>, scalar_prefetch = 0 : i64, scratch_operands = 1 : i64, tpu.core_type = #tpu.core_type<tc>, window_params = [{transform_indices = @transform_0, window_bounds = array<i64: 256, 1536>}, {pipeline_mode = #tpu.pipeline_mode<synchronous>, transform_indices = @transform_1, window_bounds = array<i64: 1536, 128>}, {pipeline_mode = #tpu.pipeline_mode<synchronous>, transform_indices = @transform_2, window_bounds = array<i64: 1, 128>}, {pipeline_mode = #tpu.pipeline_mode<synchronous>, transform_indices = @transform_3, window_bounds = array<i64: 1, 128>}, {pipeline_mode = #tpu.pipeline_mode<synchronous>, transform_indices = @transform_4, window_bounds = array<i64: 9, 256, 1>}, {transform_indices = @transform_5, window_bounds = array<i64: 64, 128>}]} {
    %c0 = arith.constant 0 : index
    %c0_0 = arith.constant 0 : index
    %0 = vector.load %arg1[%c0, %c0_0] : memref<256x1536xbf16, #tpu.memory_space<vmem>>, vector<256x1536xbf16>
    %c0_1 = arith.constant 0 : index
    %c0_2 = arith.constant 0 : index
    %1 = vector.load %arg2[%c0_1, %c0_2] : memref<1536x128xbf16, #tpu.memory_space<vmem>>, vector<1536x128xbf16>
    %cst = arith.constant dense<0.000000e+00> : vector<256x128xf32>
    %2 = tpu.matmul %0, %1, %cst {dimension_numbers = #tpu.dot_dimension_numbers<[1], [0], [0], [1], [0, 0, 1, 1], [], []>} : vector<256x1536xbf16>, vector<1536x128xbf16>, vector<256x128xf32> -> vector<256x128xf32>
    %c0_3 = arith.constant 0 : index
    %c0_4 = arith.constant 0 : index
    %3 = vector.load %arg3[%c0_3, %c0_4] : memref<1x128xf32, #tpu.memory_space<vmem>>, vector<1x128xf32>
    %4 = vector.broadcast %3 : vector<1x128xf32> to vector<256x128xf32>
    %5 = arith.mulf %2, %4 : vector<256x128xf32>
    %c0_5 = arith.constant 0 : index
    %c0_6 = arith.constant 0 : index
    %6 = vector.load %arg4[%c0_5, %c0_6] : memref<1x128xf32, #tpu.memory_space<vmem>>, vector<1x128xf32>
    %7 = vector.broadcast %6 : vector<1x128xf32> to vector<256x128xf32>
    %8 = arith.addf %5, %7 : vector<256x128xf32>
    %cst_7 = arith.constant 0.000000e+00 : f32
    %9 = vector.broadcast %cst_7 : f32 to vector<256x128xf32>
    %10 = arith.maximumf %8, %9 : vector<256x128xf32>
    %c17_i32 = arith.constant 17 : i32
    %11 = tpu.dynamic_rotate %10 by %c17_i32 dim 0 : vector<256x128xf32>, i32 -> vector<256x128xf32>
    %c0_8 = arith.constant 0 : index
    %c0_9 = arith.constant 0 : index
    %c0_10 = arith.constant 0 : index
    %12 = vector.load %arg5[%c0_8, %c0_9, %c0_10] : memref<9x256x1xf32, #tpu.memory_space<vmem>>, vector<1x256x1xf32>
    %13 = vector.shape_cast %12 : vector<1x256x1xf32> to vector<256x1xf32>
    %14 = vector.broadcast %13 : vector<256x1xf32> to vector<256x128xf32>
    %15 = arith.mulf %11, %14 : vector<256x128xf32>
    %16 = arith.maximumf %10, %15 : vector<256x128xf32>
    %c16_i32 = arith.constant 16 : i32
    %17 = tpu.dynamic_rotate %10 by %c16_i32 dim 0 : vector<256x128xf32>, i32 -> vector<256x128xf32>
    %c1 = arith.constant 1 : index
    %c0_11 = arith.constant 0 : index
    %c0_12 = arith.constant 0 : index
    %18 = vector.load %arg5[%c1, %c0_11, %c0_12] : memref<9x256x1xf32, #tpu.memory_space<vmem>>, vector<1x256x1xf32>
    %19 = vector.shape_cast %18 : vector<1x256x1xf32> to vector<256x1xf32>
    %20 = vector.broadcast %19 : vector<256x1xf32> to vector<256x128xf32>
    %21 = arith.mulf %17, %20 : vector<256x128xf32>
    %22 = arith.maximumf %16, %21 : vector<256x128xf32>
    %c15_i32 = arith.constant 15 : i32
    %23 = tpu.dynamic_rotate %10 by %c15_i32 dim 0 : vector<256x128xf32>, i32 -> vector<256x128xf32>
    %c2 = arith.constant 2 : index
    %c0_13 = arith.constant 0 : index
    %c0_14 = arith.constant 0 : index
    %24 = vector.load %arg5[%c2, %c0_13, %c0_14] : memref<9x256x1xf32, #tpu.memory_space<vmem>>, vector<1x256x1xf32>
    %25 = vector.shape_cast %24 : vector<1x256x1xf32> to vector<256x1xf32>
    %26 = vector.broadcast %25 : vector<256x1xf32> to vector<256x128xf32>
    %27 = arith.mulf %23, %26 : vector<256x128xf32>
    %28 = arith.maximumf %22, %27 : vector<256x128xf32>
    %c1_i32 = arith.constant 1 : i32
    %29 = tpu.dynamic_rotate %10 by %c1_i32 dim 0 : vector<256x128xf32>, i32 -> vector<256x128xf32>
    %c3 = arith.constant 3 : index
    %c0_15 = arith.constant 0 : index
    %c0_16 = arith.constant 0 : index
    %30 = vector.load %arg5[%c3, %c0_15, %c0_16] : memref<9x256x1xf32, #tpu.memory_space<vmem>>, vector<1x256x1xf32>
    %31 = vector.shape_cast %30 : vector<1x256x1xf32> to vector<256x1xf32>
    %32 = vector.broadcast %31 : vector<256x1xf32> to vector<256x128xf32>
    %33 = arith.mulf %29, %32 : vector<256x128xf32>
    %34 = arith.maximumf %28, %33 : vector<256x128xf32>
    %c255_i32 = arith.constant 255 : i32
    %35 = tpu.dynamic_rotate %10 by %c255_i32 dim 0 : vector<256x128xf32>, i32 -> vector<256x128xf32>
    %c5 = arith.constant 5 : index
    %c0_17 = arith.constant 0 : index
    %c0_18 = arith.constant 0 : index
    %36 = vector.load %arg5[%c5, %c0_17, %c0_18] : memref<9x256x1xf32, #tpu.memory_space<vmem>>, vector<1x256x1xf32>
    %37 = vector.shape_cast %36 : vector<1x256x1xf32> to vector<256x1xf32>
    %38 = vector.broadcast %37 : vector<256x1xf32> to vector<256x128xf32>
    %39 = arith.mulf %35, %38 : vector<256x128xf32>
    %40 = arith.maximumf %34, %39 : vector<256x128xf32>
    %c241_i32 = arith.constant 241 : i32
    %41 = tpu.dynamic_rotate %10 by %c241_i32 dim 0 : vector<256x128xf32>, i32 -> vector<256x128xf32>
    %c6 = arith.constant 6 : index
    %c0_19 = arith.constant 0 : index
    %c0_20 = arith.constant 0 : index
    %42 = vector.load %arg5[%c6, %c0_19, %c0_20] : memref<9x256x1xf32, #tpu.memory_space<vmem>>, vector<1x256x1xf32>
    %43 = vector.shape_cast %42 : vector<1x256x1xf32> to vector<256x1xf32>
    %44 = vector.broadcast %43 : vector<256x1xf32> to vector<256x128xf32>
    %45 = arith.mulf %41, %44 : vector<256x128xf32>
    %46 = arith.maximumf %40, %45 : vector<256x128xf32>
    %c240_i32 = arith.constant 240 : i32
    %47 = tpu.dynamic_rotate %10 by %c240_i32 dim 0 : vector<256x128xf32>, i32 -> vector<256x128xf32>
    %c7 = arith.constant 7 : index
    %c0_21 = arith.constant 0 : index
    %c0_22 = arith.constant 0 : index
    %48 = vector.load %arg5[%c7, %c0_21, %c0_22] : memref<9x256x1xf32, #tpu.memory_space<vmem>>, vector<1x256x1xf32>
    %49 = vector.shape_cast %48 : vector<1x256x1xf32> to vector<256x1xf32>
    %50 = vector.broadcast %49 : vector<256x1xf32> to vector<256x128xf32>
    %51 = arith.mulf %47, %50 : vector<256x128xf32>
    %52 = arith.maximumf %46, %51 : vector<256x128xf32>
    %c239_i32 = arith.constant 239 : i32
    %53 = tpu.dynamic_rotate %10 by %c239_i32 dim 0 : vector<256x128xf32>, i32 -> vector<256x128xf32>
    %c8 = arith.constant 8 : index
    %c0_23 = arith.constant 0 : index
    %c0_24 = arith.constant 0 : index
    %54 = vector.load %arg5[%c8, %c0_23, %c0_24] : memref<9x256x1xf32, #tpu.memory_space<vmem>>, vector<1x256x1xf32>
    %55 = vector.shape_cast %54 : vector<1x256x1xf32> to vector<256x1xf32>
    %56 = vector.broadcast %55 : vector<256x1xf32> to vector<256x128xf32>
    %57 = arith.mulf %53, %56 : vector<256x128xf32>
    %58 = arith.maximumf %52, %57 : vector<256x128xf32>
    %c0_25 = arith.constant 0 : index
    %c0_26 = arith.constant 0 : index
    %59 = vector.load %arg7[%c0_25, %c0_26] : memref<256x128xf32, #tpu.memory_space<vmem>>, vector<256x128xf32>
    tpu.vector_store %arg7[%c0_25, %c0_26], %58 {strides = array<i32>} : memref<256x128xf32, #tpu.memory_space<vmem>>, vector<256x128xf32>,
    %c0_27 = arith.constant 0 : index
    %c0_28 = arith.constant 0 : index
    %60 = tpu.strided_load %arg7[%c0_27, %c0_28] {strides = array<i32: 2, 1>} : memref<256x128xf32, #tpu.memory_space<vmem>>, vector<8x128xf32>
    %c32 = arith.constant 32 : index
    %c0_29 = arith.constant 0 : index
    %61 = tpu.strided_load %arg7[%c32, %c0_29] {strides = array<i32: 2, 1>} : memref<256x128xf32, #tpu.memory_space<vmem>>, vector<8x128xf32>
    %c64 = arith.constant 64 : index
    %c0_30 = arith.constant 0 : index
    %62 = tpu.strided_load %arg7[%c64, %c0_30] {strides = array<i32: 2, 1>} : memref<256x128xf32, #tpu.memory_space<vmem>>, vector<8x128xf32>
    %c96 = arith.constant 96 : index
    %c0_31 = arith.constant 0 : index
    %63 = tpu.strided_load %arg7[%c96, %c0_31] {strides = array<i32: 2, 1>} : memref<256x128xf32, #tpu.memory_space<vmem>>, vector<8x128xf32>
    %c128 = arith.constant 128 : index
    %c0_32 = arith.constant 0 : index
    %64 = tpu.strided_load %arg7[%c128, %c0_32] {strides = array<i32: 2, 1>} : memref<256x128xf32, #tpu.memory_space<vmem>>, vector<8x128xf32>
    %c160 = arith.constant 160 : index
    %c0_33 = arith.constant 0 : index
    %65 = tpu.strided_load %arg7[%c160, %c0_33] {strides = array<i32: 2, 1>} : memref<256x128xf32, #tpu.memory_space<vmem>>, vector<8x128xf32>
    %c192 = arith.constant 192 : index
    %c0_34 = arith.constant 0 : index
    %66 = tpu.strided_load %arg7[%c192, %c0_34] {strides = array<i32: 2, 1>} : memref<256x128xf32, #tpu.memory_space<vmem>>, vector<8x128xf32>
    %c224 = arith.constant 224 : index
    %c0_35 = arith.constant 0 : index
    %67 = tpu.strided_load %arg7[%c224, %c0_35] {strides = array<i32: 2, 1>} : memref<256x128xf32, #tpu.memory_space<vmem>>, vector<8x128xf32>
    %68 = tpu.concatenate %60, %61, %62, %63, %64, %65, %66, %67 in 0 : vector<8x128xf32>, vector<8x128xf32>, vector<8x128xf32>, vector<8x128xf32>, vector<8x128xf32>, vector<8x128xf32>, vector<8x128xf32>, vector<8x128xf32> -> vector<64x128xf32>
    %69 = arith.truncf %68 : vector<64x128xf32> to vector<64x128xbf16>
    %c0_36 = arith.constant 0 : index
    %c0_37 = arith.constant 0 : index
    %70 = vector.load %arg6[%c0_36, %c0_37] : memref<64x128xbf16, #tpu.memory_space<vmem>>, vector<64x128xbf16>
    tpu.vector_store %arg6[%c0_36, %c0_37], %69 {strides = array<i32>} : memref<64x128xbf16, #tpu.memory_space<vmem>>, vector<64x128xbf16>,
    return
  }
  func.func @transform_0(%arg0: i32) -> (i32, i32) {
    %c0_i32 = arith.constant 0 : i32
    %c0_i32_0 = arith.constant 0 : i32
    return %arg0, %c0_i32 : i32, i32
  }
  func.func @transform_1(%arg0: i32) -> (i32, i32) {
    %c0_i32 = arith.constant 0 : i32
    %c0_i32_0 = arith.constant 0 : i32
    %c0_i32_1 = arith.constant 0 : i32
    return %c0_i32, %c0_i32_0 : i32, i32
  }
  func.func @transform_2(%arg0: i32) -> (i32, i32) {
    %c0_i32 = arith.constant 0 : i32
    %c0_i32_0 = arith.constant 0 : i32
    %c0_i32_1 = arith.constant 0 : i32
    return %c0_i32, %c0_i32_0 : i32, i32
  }
  func.func @transform_3(%arg0: i32) -> (i32, i32) {
    %c0_i32 = arith.constant 0 : i32
    %c0_i32_0 = arith.constant 0 : i32
    %c0_i32_1 = arith.constant 0 : i32
    return %c0_i32, %c0_i32_0 : i32, i32
  }
  func.func @transform_4(%arg0: i32) -> (i32, i32, i32) {
    %c0_i32 = arith.constant 0 : i32
    %c0_i32_0 = arith.constant 0 : i32
    %c0_i32_1 = arith.constant 0 : i32
    %c0_i32_2 = arith.constant 0 : i32
    return %c0_i32, %c0_i32_0, %c0_i32_1 : i32, i32, i32
  }
  func.func @transform_5(%arg0: i32) -> (i32, i32) {
    %c0_i32 = arith.constant 0 : i32
    %c0_i32_0 = arith.constant 0 : i32
    return %arg0, %c0_i32 : i32, i32
  }
}

module attributes {stable_mosaic.version = 11 : i64} {
  func.func @_dense_block_kernel(%arg0: i32, %arg1: i32, %arg2: memref<64x128xbf16, #tpu.memory_space<vmem>>, %arg3: memref<1x1x128xf32, #tpu.memory_space<vmem>>, %arg4: memref<1x1x128xf32, #tpu.memory_space<vmem>>, %arg5: memref<1x128x128xbf16, #tpu.memory_space<vmem>>, %arg6: memref<1x1x128xf32, #tpu.memory_space<vmem>>, %arg7: memref<1x1x128xf32, #tpu.memory_space<vmem>>, %arg8: memref<1x384x128xbf16, #tpu.memory_space<vmem>>, %arg9: memref<9x64x1xf32, #tpu.memory_space<vmem>>, %arg10: memref<64x128xbf16, #tpu.memory_space<vmem>>, %arg11: memref<64x128xf32, #tpu.memory_space<vmem>>) attributes {dimension_semantics = [#tpu.dimension_semantics<parallel>, #tpu.dimension_semantics<arbitrary>], iteration_bounds = array<i64: 2, 2>, scalar_prefetch = 0 : i64, scratch_operands = 1 : i64, tpu.core_type = #tpu.core_type<tc>, window_params = [{transform_indices = @transform_0, window_bounds = array<i64: 64, 128>}, {transform_indices = @transform_1, window_bounds = array<i64: 1, 1, 128>}, {transform_indices = @transform_2, window_bounds = array<i64: 1, 1, 128>}, {transform_indices = @transform_3, window_bounds = array<i64: 1, 128, 128>}, {transform_indices = @transform_4, window_bounds = array<i64: 1, 1, 128>}, {transform_indices = @transform_5, window_bounds = array<i64: 1, 1, 128>}, {transform_indices = @transform_6, window_bounds = array<i64: 1, 384, 128>}, {pipeline_mode = #tpu.pipeline_mode<synchronous>, transform_indices = @transform_7, window_bounds = array<i64: 9, 64, 1>}, {transform_indices = @transform_8, window_bounds = array<i64: 64, 128>}]} {
    %c0_i32 = arith.constant 0 : i32
    %0 = arith.cmpi eq, %arg1, %c0_i32 : i32
    %1 = arith.extui %0 : i1 to i32
    %c0_i32_0 = arith.constant 0 : i32
    %2 = arith.cmpi ne, %1, %c0_i32_0 : i32
    scf.if %2 {
      %c0_47 = arith.constant 0 : index
      %c0_48 = arith.constant 0 : index
      %90 = vector.load %arg2[%c0_47, %c0_48] : memref<64x128xbf16, #tpu.memory_space<vmem>>, vector<64x128xbf16>
      %91 = arith.extf %90 : vector<64x128xbf16> to vector<64x128xf32>
      %c0_49 = arith.constant 0 : index
      %c0_50 = arith.constant 0 : index
      %92 = vector.load %arg11[%c0_49, %c0_50] : memref<64x128xf32, #tpu.memory_space<vmem>>, vector<64x128xf32>
      tpu.vector_store %arg11[%c0_49, %c0_50], %91 {strides = array<i32>} : memref<64x128xf32, #tpu.memory_space<vmem>>, vector<64x128xf32>,
    } else {
    }
    %c0 = arith.constant 0 : index
    %c0_1 = arith.constant 0 : index
    %3 = vector.load %arg11[%c0, %c0_1] : memref<64x128xf32, #tpu.memory_space<vmem>>, vector<64x128xf32>
    %c0_2 = arith.constant 0 : index
    %c0_3 = arith.constant 0 : index
    %c0_4 = arith.constant 0 : index
    %4 = vector.load %arg3[%c0_2, %c0_3, %c0_4] : memref<1x1x128xf32, #tpu.memory_space<vmem>>, vector<1x1x128xf32>
    %5 = vector.shape_cast %4 : vector<1x1x128xf32> to vector<1x128xf32>
    %6 = vector.broadcast %5 : vector<1x128xf32> to vector<64x128xf32>
    %7 = arith.mulf %3, %6 : vector<64x128xf32>
    %c0_5 = arith.constant 0 : index
    %c0_6 = arith.constant 0 : index
    %c0_7 = arith.constant 0 : index
    %8 = vector.load %arg4[%c0_5, %c0_6, %c0_7] : memref<1x1x128xf32, #tpu.memory_space<vmem>>, vector<1x1x128xf32>
    %9 = vector.shape_cast %8 : vector<1x1x128xf32> to vector<1x128xf32>
    %10 = vector.broadcast %9 : vector<1x128xf32> to vector<64x128xf32>
    %11 = arith.addf %7, %10 : vector<64x128xf32>
    %cst = arith.constant 0.000000e+00 : f32
    %12 = vector.broadcast %cst : f32 to vector<64x128xf32>
    %13 = arith.maximumf %11, %12 : vector<64x128xf32>
    %14 = arith.truncf %13 : vector<64x128xf32> to vector<64x128xbf16>
    %c0_8 = arith.constant 0 : index
    %c0_9 = arith.constant 0 : index
    %c0_10 = arith.constant 0 : index
    %15 = vector.load %arg5[%c0_8, %c0_9, %c0_10] : memref<1x128x128xbf16, #tpu.memory_space<vmem>>, vector<1x128x128xbf16>
    %16 = vector.shape_cast %15 : vector<1x128x128xbf16> to vector<128x128xbf16>
    %cst_11 = arith.constant dense<0.000000e+00> : vector<64x128xf32>
    %17 = tpu.matmul %14, %16, %cst_11 {dimension_numbers = #tpu.dot_dimension_numbers<[1], [0], [0], [1], [0, 0, 1, 1], [], []>} : vector<64x128xbf16>, vector<128x128xbf16>, vector<64x128xf32> -> vector<64x128xf32>
    %c0_12 = arith.constant 0 : index
    %c0_13 = arith.constant 0 : index
    %c0_14 = arith.constant 0 : index
    %18 = vector.load %arg6[%c0_12, %c0_13, %c0_14] : memref<1x1x128xf32, #tpu.memory_space<vmem>>, vector<1x1x128xf32>
    %19 = vector.shape_cast %18 : vector<1x1x128xf32> to vector<1x128xf32>
    %20 = vector.broadcast %19 : vector<1x128xf32> to vector<64x128xf32>
    %21 = arith.mulf %17, %20 : vector<64x128xf32>
    %c0_15 = arith.constant 0 : index
    %c0_16 = arith.constant 0 : index
    %c0_17 = arith.constant 0 : index
    %22 = vector.load %arg7[%c0_15, %c0_16, %c0_17] : memref<1x1x128xf32, #tpu.memory_space<vmem>>, vector<1x1x128xf32>
    %23 = vector.shape_cast %22 : vector<1x1x128xf32> to vector<1x128xf32>
    %24 = vector.broadcast %23 : vector<1x128xf32> to vector<64x128xf32>
    %25 = arith.addf %21, %24 : vector<64x128xf32>
    %cst_18 = arith.constant 0.000000e+00 : f32
    %26 = vector.broadcast %cst_18 : f32 to vector<64x128xf32>
    %27 = arith.maximumf %25, %26 : vector<64x128xf32>
    %c9_i32 = arith.constant 9 : i32
    %28 = tpu.dynamic_rotate %27 by %c9_i32 dim 0 : vector<64x128xf32>, i32 -> vector<64x128xf32>
    %c0_19 = arith.constant 0 : index
    %c0_20 = arith.constant 0 : index
    %c0_21 = arith.constant 0 : index
    %29 = vector.load %arg9[%c0_19, %c0_20, %c0_21] : memref<9x64x1xf32, #tpu.memory_space<vmem>>, vector<1x64x1xf32>
    %30 = vector.shape_cast %29 : vector<1x64x1xf32> to vector<64x1xf32>
    %31 = vector.broadcast %30 : vector<64x1xf32> to vector<64x128xf32>
    %32 = arith.mulf %28, %31 : vector<64x128xf32>
    %c8_i32 = arith.constant 8 : i32
    %33 = tpu.dynamic_rotate %27 by %c8_i32 dim 0 : vector<64x128xf32>, i32 -> vector<64x128xf32>
    %c1 = arith.constant 1 : index
    %c0_22 = arith.constant 0 : index
    %c0_23 = arith.constant 0 : index
    %34 = vector.load %arg9[%c1, %c0_22, %c0_23] : memref<9x64x1xf32, #tpu.memory_space<vmem>>, vector<1x64x1xf32>
    %35 = vector.shape_cast %34 : vector<1x64x1xf32> to vector<64x1xf32>
    %36 = vector.broadcast %35 : vector<64x1xf32> to vector<64x128xf32>
    %37 = arith.mulf %33, %36 : vector<64x128xf32>
    %c32_i32 = arith.constant 32 : i32
    %38 = tpu.dynamic_rotate %37 by %c32_i32 dim 1 : vector<64x128xf32>, i32 -> vector<64x128xf32>
    %39 = arith.addf %32, %38 : vector<64x128xf32>
    %c7_i32 = arith.constant 7 : i32
    %40 = tpu.dynamic_rotate %27 by %c7_i32 dim 0 : vector<64x128xf32>, i32 -> vector<64x128xf32>
    %c2 = arith.constant 2 : index
    %c0_24 = arith.constant 0 : index
    %c0_25 = arith.constant 0 : index
    %41 = vector.load %arg9[%c2, %c0_24, %c0_25] : memref<9x64x1xf32, #tpu.memory_space<vmem>>, vector<1x64x1xf32>
    %42 = vector.shape_cast %41 : vector<1x64x1xf32> to vector<64x1xf32>
    %43 = vector.broadcast %42 : vector<64x1xf32> to vector<64x128xf32>
    %44 = arith.mulf %40, %43 : vector<64x128xf32>
    %c64_i32 = arith.constant 64 : i32
    %45 = tpu.dynamic_rotate %44 by %c64_i32 dim 1 : vector<64x128xf32>, i32 -> vector<64x128xf32>
    %46 = arith.addf %39, %45 : vector<64x128xf32>
    %c1_i32 = arith.constant 1 : i32
    %47 = tpu.dynamic_rotate %27 by %c1_i32 dim 0 : vector<64x128xf32>, i32 -> vector<64x128xf32>
    %c3 = arith.constant 3 : index
    %c0_26 = arith.constant 0 : index
    %c0_27 = arith.constant 0 : index
    %48 = vector.load %arg9[%c3, %c0_26, %c0_27] : memref<9x64x1xf32, #tpu.memory_space<vmem>>, vector<1x64x1xf32>
    %49 = vector.shape_cast %48 : vector<1x64x1xf32> to vector<64x1xf32>
    %50 = vector.broadcast %49 : vector<64x1xf32> to vector<64x128xf32>
    %51 = arith.mulf %47, %50 : vector<64x128xf32>
    %c96_i32 = arith.constant 96 : i32
    %52 = tpu.dynamic_rotate %51 by %c96_i32 dim 1 : vector<64x128xf32>, i32 -> vector<64x128xf32>
    %53 = arith.addf %46, %52 : vector<64x128xf32>
    %c63_i32 = arith.constant 63 : i32
    %54 = tpu.dynamic_rotate %27 by %c63_i32 dim 0 : vector<64x128xf32>, i32 -> vector<64x128xf32>
    %c5 = arith.constant 5 : index
    %c0_28 = arith.constant 0 : index
    %c0_29 = arith.constant 0 : index
    %55 = vector.load %arg9[%c5, %c0_28, %c0_29] : memref<9x64x1xf32, #tpu.memory_space<vmem>>, vector<1x64x1xf32>
    %56 = vector.shape_cast %55 : vector<1x64x1xf32> to vector<64x1xf32>
    %57 = vector.broadcast %56 : vector<64x1xf32> to vector<64x128xf32>
    %58 = arith.mulf %54, %57 : vector<64x128xf32>
    %c32_i32_30 = arith.constant 32 : i32
    %59 = tpu.dynamic_rotate %58 by %c32_i32_30 dim 1 : vector<64x128xf32>, i32 -> vector<64x128xf32>
    %60 = arith.addf %27, %59 : vector<64x128xf32>
    %c57_i32 = arith.constant 57 : i32
    %61 = tpu.dynamic_rotate %27 by %c57_i32 dim 0 : vector<64x128xf32>, i32 -> vector<64x128xf32>
    %c6 = arith.constant 6 : index
    %c0_31 = arith.constant 0 : index
    %c0_32 = arith.constant 0 : index
    %62 = vector.load %arg9[%c6, %c0_31, %c0_32] : memref<9x64x1xf32, #tpu.memory_space<vmem>>, vector<1x64x1xf32>
    %63 = vector.shape_cast %62 : vector<1x64x1xf32> to vector<64x1xf32>
    %64 = vector.broadcast %63 : vector<64x1xf32> to vector<64x128xf32>
    %65 = arith.mulf %61, %64 : vector<64x128xf32>
    %c64_i32_33 = arith.constant 64 : i32
    %66 = tpu.dynamic_rotate %65 by %c64_i32_33 dim 1 : vector<64x128xf32>, i32 -> vector<64x128xf32>
    %67 = arith.addf %60, %66 : vector<64x128xf32>
    %c56_i32 = arith.constant 56 : i32
    %68 = tpu.dynamic_rotate %27 by %c56_i32 dim 0 : vector<64x128xf32>, i32 -> vector<64x128xf32>
    %c7 = arith.constant 7 : index
    %c0_34 = arith.constant 0 : index
    %c0_35 = arith.constant 0 : index
    %69 = vector.load %arg9[%c7, %c0_34, %c0_35] : memref<9x64x1xf32, #tpu.memory_space<vmem>>, vector<1x64x1xf32>
    %70 = vector.shape_cast %69 : vector<1x64x1xf32> to vector<64x1xf32>
    %71 = vector.broadcast %70 : vector<64x1xf32> to vector<64x128xf32>
    %72 = arith.mulf %68, %71 : vector<64x128xf32>
    %c96_i32_36 = arith.constant 96 : i32
    %73 = tpu.dynamic_rotate %72 by %c96_i32_36 dim 1 : vector<64x128xf32>, i32 -> vector<64x128xf32>
    %74 = arith.addf %67, %73 : vector<64x128xf32>
    %c55_i32 = arith.constant 55 : i32
    %75 = tpu.dynamic_rotate %27 by %c55_i32 dim 0 : vector<64x128xf32>, i32 -> vector<64x128xf32>
    %c8 = arith.constant 8 : index
    %c0_37 = arith.constant 0 : index
    %c0_38 = arith.constant 0 : index
    %76 = vector.load %arg9[%c8, %c0_37, %c0_38] : memref<9x64x1xf32, #tpu.memory_space<vmem>>, vector<1x64x1xf32>
    %77 = vector.shape_cast %76 : vector<1x64x1xf32> to vector<64x1xf32>
    %78 = vector.broadcast %77 : vector<64x1xf32> to vector<64x128xf32>
    %79 = arith.mulf %75, %78 : vector<64x128xf32>
    %80 = tpu.concatenate %53, %74, %79 in 1 : vector<64x128xf32>, vector<64x128xf32>, vector<64x128xf32> -> vector<64x384xf32>
    %81 = arith.truncf %80 : vector<64x384xf32> to vector<64x384xbf16>
    %c0_39 = arith.constant 0 : index
    %c0_40 = arith.constant 0 : index
    %c0_41 = arith.constant 0 : index
    %82 = vector.load %arg8[%c0_39, %c0_40, %c0_41] : memref<1x384x128xbf16, #tpu.memory_space<vmem>>, vector<1x384x128xbf16>
    %83 = vector.shape_cast %82 : vector<1x384x128xbf16> to vector<384x128xbf16>
    %cst_42 = arith.constant dense<0.000000e+00> : vector<64x128xf32>
    %84 = tpu.matmul %81, %83, %cst_42 {dimension_numbers = #tpu.dot_dimension_numbers<[1], [0], [0], [1], [0, 0, 1, 1], [], []>} : vector<64x384xbf16>, vector<384x128xbf16>, vector<64x128xf32> -> vector<64x128xf32>
    %85 = arith.addf %3, %84 : vector<64x128xf32>
    %c0_43 = arith.constant 0 : index
    %c0_44 = arith.constant 0 : index
    %86 = vector.load %arg11[%c0_43, %c0_44] : memref<64x128xf32, #tpu.memory_space<vmem>>, vector<64x128xf32>
    tpu.vector_store %arg11[%c0_43, %c0_44], %85 {strides = array<i32>} : memref<64x128xf32, #tpu.memory_space<vmem>>, vector<64x128xf32>,
    %c1_i32_45 = arith.constant 1 : i32
    %87 = arith.cmpi eq, %arg1, %c1_i32_45 : i32
    %88 = arith.extui %87 : i1 to i32
    %c0_i32_46 = arith.constant 0 : i32
    %89 = arith.cmpi ne, %88, %c0_i32_46 : i32
    scf.if %89 {
      %c0_47 = arith.constant 0 : index
      %c0_48 = arith.constant 0 : index
      %90 = vector.load %arg11[%c0_47, %c0_48] : memref<64x128xf32, #tpu.memory_space<vmem>>, vector<64x128xf32>
      %91 = arith.truncf %90 : vector<64x128xf32> to vector<64x128xbf16>
      %c0_49 = arith.constant 0 : index
      %c0_50 = arith.constant 0 : index
      %92 = vector.load %arg10[%c0_49, %c0_50] : memref<64x128xbf16, #tpu.memory_space<vmem>>, vector<64x128xbf16>
      tpu.vector_store %arg10[%c0_49, %c0_50], %91 {strides = array<i32>} : memref<64x128xbf16, #tpu.memory_space<vmem>>, vector<64x128xbf16>,
    } else {
    }
    return
  }
  func.func @transform_0(%arg0: i32, %arg1: i32) -> (i32, i32) {
    %c0_i32 = arith.constant 0 : i32
    %c0_i32_0 = arith.constant 0 : i32
    return %arg0, %c0_i32 : i32, i32
  }
  func.func @transform_1(%arg0: i32, %arg1: i32) -> (i32, i32, i32) {
    %c0_i32 = arith.constant 0 : i32
    %c0_i32_0 = arith.constant 0 : i32
    %c0_i32_1 = arith.constant 0 : i32
    return %arg1, %c0_i32, %c0_i32_0 : i32, i32, i32
  }
  func.func @transform_2(%arg0: i32, %arg1: i32) -> (i32, i32, i32) {
    %c0_i32 = arith.constant 0 : i32
    %c0_i32_0 = arith.constant 0 : i32
    %c0_i32_1 = arith.constant 0 : i32
    return %arg1, %c0_i32, %c0_i32_0 : i32, i32, i32
  }
  func.func @transform_3(%arg0: i32, %arg1: i32) -> (i32, i32, i32) {
    %c0_i32 = arith.constant 0 : i32
    %c0_i32_0 = arith.constant 0 : i32
    %c0_i32_1 = arith.constant 0 : i32
    return %arg1, %c0_i32, %c0_i32_0 : i32, i32, i32
  }
  func.func @transform_4(%arg0: i32, %arg1: i32) -> (i32, i32, i32) {
    %c0_i32 = arith.constant 0 : i32
    %c0_i32_0 = arith.constant 0 : i32
    %c0_i32_1 = arith.constant 0 : i32
    return %arg1, %c0_i32, %c0_i32_0 : i32, i32, i32
  }
  func.func @transform_5(%arg0: i32, %arg1: i32) -> (i32, i32, i32) {
    %c0_i32 = arith.constant 0 : i32
    %c0_i32_0 = arith.constant 0 : i32
    %c0_i32_1 = arith.constant 0 : i32
    return %arg1, %c0_i32, %c0_i32_0 : i32, i32, i32
  }
  func.func @transform_6(%arg0: i32, %arg1: i32) -> (i32, i32, i32) {
    %c0_i32 = arith.constant 0 : i32
    %c0_i32_0 = arith.constant 0 : i32
    %c0_i32_1 = arith.constant 0 : i32
    return %arg1, %c0_i32, %c0_i32_0 : i32, i32, i32
  }
  func.func @transform_7(%arg0: i32, %arg1: i32) -> (i32, i32, i32) {
    %c0_i32 = arith.constant 0 : i32
    %c0_i32_0 = arith.constant 0 : i32
    %c0_i32_1 = arith.constant 0 : i32
    %c0_i32_2 = arith.constant 0 : i32
    return %c0_i32, %c0_i32_0, %c0_i32_1 : i32, i32, i32
  }
  func.func @transform_8(%arg0: i32, %arg1: i32) -> (i32, i32) {
    %c0_i32 = arith.constant 0 : i32
    %c0_i32_0 = arith.constant 0 : i32
    return %arg0, %c0_i32 : i32, i32
  }
}

module attributes {stable_mosaic.version = 11 : i64} {
  func.func @_transition_kernel(%arg0: i32, %arg1: memref<64x128xbf16, #tpu.memory_space<vmem>>, %arg2: memref<1x128xf32, #tpu.memory_space<vmem>>, %arg3: memref<1x128xf32, #tpu.memory_space<vmem>>, %arg4: memref<128x128xbf16, #tpu.memory_space<vmem>>, %arg5: memref<16x128xbf16, #tpu.memory_space<vmem>>, %arg6: memref<64x128xf32, #tpu.memory_space<vmem>>) attributes {dimension_semantics = [#tpu.dimension_semantics<parallel>], iteration_bounds = array<i64: 2>, scalar_prefetch = 0 : i64, scratch_operands = 1 : i64, tpu.core_type = #tpu.core_type<tc>, window_params = [{transform_indices = @transform_0, window_bounds = array<i64: 64, 128>}, {pipeline_mode = #tpu.pipeline_mode<synchronous>, transform_indices = @transform_1, window_bounds = array<i64: 1, 128>}, {pipeline_mode = #tpu.pipeline_mode<synchronous>, transform_indices = @transform_2, window_bounds = array<i64: 1, 128>}, {pipeline_mode = #tpu.pipeline_mode<synchronous>, transform_indices = @transform_3, window_bounds = array<i64: 128, 128>}, {transform_indices = @transform_4, window_bounds = array<i64: 16, 128>}]} {
    %c0 = arith.constant 0 : index
    %c0_0 = arith.constant 0 : index
    %0 = vector.load %arg1[%c0, %c0_0] : memref<64x128xbf16, #tpu.memory_space<vmem>>, vector<64x128xbf16>
    %1 = arith.extf %0 : vector<64x128xbf16> to vector<64x128xf32>
    %c0_1 = arith.constant 0 : index
    %c0_2 = arith.constant 0 : index
    %2 = vector.load %arg2[%c0_1, %c0_2] : memref<1x128xf32, #tpu.memory_space<vmem>>, vector<1x128xf32>
    %3 = vector.broadcast %2 : vector<1x128xf32> to vector<64x128xf32>
    %4 = arith.mulf %1, %3 : vector<64x128xf32>
    %c0_3 = arith.constant 0 : index
    %c0_4 = arith.constant 0 : index
    %5 = vector.load %arg3[%c0_3, %c0_4] : memref<1x128xf32, #tpu.memory_space<vmem>>, vector<1x128xf32>
    %6 = vector.broadcast %5 : vector<1x128xf32> to vector<64x128xf32>
    %7 = arith.addf %4, %6 : vector<64x128xf32>
    %cst = arith.constant 0.000000e+00 : f32
    %8 = vector.broadcast %cst : f32 to vector<64x128xf32>
    %9 = arith.maximumf %7, %8 : vector<64x128xf32>
    %10 = arith.truncf %9 : vector<64x128xf32> to vector<64x128xbf16>
    %c0_5 = arith.constant 0 : index
    %c0_6 = arith.constant 0 : index
    %11 = vector.load %arg4[%c0_5, %c0_6] : memref<128x128xbf16, #tpu.memory_space<vmem>>, vector<128x128xbf16>
    %cst_7 = arith.constant dense<0.000000e+00> : vector<64x128xf32>
    %12 = tpu.matmul %10, %11, %cst_7 {dimension_numbers = #tpu.dot_dimension_numbers<[1], [0], [0], [1], [0, 0, 1, 1], [], []>} : vector<64x128xbf16>, vector<128x128xbf16>, vector<64x128xf32> -> vector<64x128xf32>
    %c63_i32 = arith.constant 63 : i32
    %13 = tpu.dynamic_rotate %12 by %c63_i32 dim 0 : vector<64x128xf32>, i32 -> vector<64x128xf32>
    %14 = arith.addf %12, %13 : vector<64x128xf32>
    %c56_i32 = arith.constant 56 : i32
    %15 = tpu.dynamic_rotate %12 by %c56_i32 dim 0 : vector<64x128xf32>, i32 -> vector<64x128xf32>
    %16 = arith.addf %14, %15 : vector<64x128xf32>
    %c55_i32 = arith.constant 55 : i32
    %17 = tpu.dynamic_rotate %12 by %c55_i32 dim 0 : vector<64x128xf32>, i32 -> vector<64x128xf32>
    %18 = arith.addf %16, %17 : vector<64x128xf32>
    %cst_8 = arith.constant 2.500000e-01 : f32
    %19 = vector.broadcast %cst_8 : f32 to vector<64x128xf32>
    %20 = arith.mulf %18, %19 : vector<64x128xf32>
    %c0_9 = arith.constant 0 : index
    %c0_10 = arith.constant 0 : index
    %21 = vector.load %arg6[%c0_9, %c0_10] : memref<64x128xf32, #tpu.memory_space<vmem>>, vector<64x128xf32>
    tpu.vector_store %arg6[%c0_9, %c0_10], %20 {strides = array<i32>} : memref<64x128xf32, #tpu.memory_space<vmem>>, vector<64x128xf32>,
    %c0_11 = arith.constant 0 : index
    %c0_12 = arith.constant 0 : index
    %22 = tpu.strided_load %arg6[%c0_11, %c0_12] {strides = array<i32: 2, 1>} : memref<64x128xf32, #tpu.memory_space<vmem>>, vector<4x128xf32>
    %c16 = arith.constant 16 : index
    %c0_13 = arith.constant 0 : index
    %23 = tpu.strided_load %arg6[%c16, %c0_13] {strides = array<i32: 2, 1>} : memref<64x128xf32, #tpu.memory_space<vmem>>, vector<4x128xf32>
    %c32 = arith.constant 32 : index
    %c0_14 = arith.constant 0 : index
    %24 = tpu.strided_load %arg6[%c32, %c0_14] {strides = array<i32: 2, 1>} : memref<64x128xf32, #tpu.memory_space<vmem>>, vector<4x128xf32>
    %c48 = arith.constant 48 : index
    %c0_15 = arith.constant 0 : index
    %25 = tpu.strided_load %arg6[%c48, %c0_15] {strides = array<i32: 2, 1>} : memref<64x128xf32, #tpu.memory_space<vmem>>, vector<4x128xf32>
    %26 = tpu.concatenate %22, %23, %24, %25 in 0 : vector<4x128xf32>, vector<4x128xf32>, vector<4x128xf32>, vector<4x128xf32> -> vector<16x128xf32>
    %27 = arith.truncf %26 : vector<16x128xf32> to vector<16x128xbf16>
    %c0_16 = arith.constant 0 : index
    %c0_17 = arith.constant 0 : index
    %28 = vector.load %arg5[%c0_16, %c0_17] : memref<16x128xbf16, #tpu.memory_space<vmem>>, vector<16x128xbf16>
    tpu.vector_store %arg5[%c0_16, %c0_17], %27 {strides = array<i32>} : memref<16x128xbf16, #tpu.memory_space<vmem>>, vector<16x128xbf16>,
    return
  }
  func.func @transform_0(%arg0: i32) -> (i32, i32) {
    %c0_i32 = arith.constant 0 : i32
    %c0_i32_0 = arith.constant 0 : i32
    return %arg0, %c0_i32 : i32, i32
  }
  func.func @transform_1(%arg0: i32) -> (i32, i32) {
    %c0_i32 = arith.constant 0 : i32
    %c0_i32_0 = arith.constant 0 : i32
    %c0_i32_1 = arith.constant 0 : i32
    return %c0_i32, %c0_i32_0 : i32, i32
  }
  func.func @transform_2(%arg0: i32) -> (i32, i32) {
    %c0_i32 = arith.constant 0 : i32
    %c0_i32_0 = arith.constant 0 : i32
    %c0_i32_1 = arith.constant 0 : i32
    return %c0_i32, %c0_i32_0 : i32, i32
  }
  func.func @transform_3(%arg0: i32) -> (i32, i32) {
    %c0_i32 = arith.constant 0 : i32
    %c0_i32_0 = arith.constant 0 : i32
    %c0_i32_1 = arith.constant 0 : i32
    return %c0_i32, %c0_i32_0 : i32, i32
  }
  func.func @transform_4(%arg0: i32) -> (i32, i32) {
    %c0_i32 = arith.constant 0 : i32
    %c0_i32_0 = arith.constant 0 : i32
    return %arg0, %c0_i32 : i32, i32
  }
}

module attributes {stable_mosaic.version = 11 : i64} {
  func.func @_dense_block_kernel(%arg0: i32, %arg1: i32, %arg2: memref<16x128xbf16, #tpu.memory_space<vmem>>, %arg3: memref<1x1x128xf32, #tpu.memory_space<vmem>>, %arg4: memref<1x1x128xf32, #tpu.memory_space<vmem>>, %arg5: memref<1x128x128xbf16, #tpu.memory_space<vmem>>, %arg6: memref<1x1x128xf32, #tpu.memory_space<vmem>>, %arg7: memref<1x1x128xf32, #tpu.memory_space<vmem>>, %arg8: memref<1x384x128xbf16, #tpu.memory_space<vmem>>, %arg9: memref<9x16x1xf32, #tpu.memory_space<vmem>>, %arg10: memref<16x128xbf16, #tpu.memory_space<vmem>>, %arg11: memref<16x128xf32, #tpu.memory_space<vmem>>) attributes {dimension_semantics = [#tpu.dimension_semantics<parallel>, #tpu.dimension_semantics<arbitrary>], iteration_bounds = array<i64: 2, 2>, scalar_prefetch = 0 : i64, scratch_operands = 1 : i64, tpu.core_type = #tpu.core_type<tc>, window_params = [{transform_indices = @transform_0, window_bounds = array<i64: 16, 128>}, {transform_indices = @transform_1, window_bounds = array<i64: 1, 1, 128>}, {transform_indices = @transform_2, window_bounds = array<i64: 1, 1, 128>}, {transform_indices = @transform_3, window_bounds = array<i64: 1, 128, 128>}, {transform_indices = @transform_4, window_bounds = array<i64: 1, 1, 128>}, {transform_indices = @transform_5, window_bounds = array<i64: 1, 1, 128>}, {transform_indices = @transform_6, window_bounds = array<i64: 1, 384, 128>}, {pipeline_mode = #tpu.pipeline_mode<synchronous>, transform_indices = @transform_7, window_bounds = array<i64: 9, 16, 1>}, {transform_indices = @transform_8, window_bounds = array<i64: 16, 128>}]} {
    %c0_i32 = arith.constant 0 : i32
    %0 = arith.cmpi eq, %arg1, %c0_i32 : i32
    %1 = arith.extui %0 : i1 to i32
    %c0_i32_0 = arith.constant 0 : i32
    %2 = arith.cmpi ne, %1, %c0_i32_0 : i32
    scf.if %2 {
      %c0_47 = arith.constant 0 : index
      %c0_48 = arith.constant 0 : index
      %90 = vector.load %arg2[%c0_47, %c0_48] : memref<16x128xbf16, #tpu.memory_space<vmem>>, vector<16x128xbf16>
      %91 = arith.extf %90 : vector<16x128xbf16> to vector<16x128xf32>
      %c0_49 = arith.constant 0 : index
      %c0_50 = arith.constant 0 : index
      %92 = vector.load %arg11[%c0_49, %c0_50] : memref<16x128xf32, #tpu.memory_space<vmem>>, vector<16x128xf32>
      tpu.vector_store %arg11[%c0_49, %c0_50], %91 {strides = array<i32>} : memref<16x128xf32, #tpu.memory_space<vmem>>, vector<16x128xf32>,
    } else {
    }
    %c0 = arith.constant 0 : index
    %c0_1 = arith.constant 0 : index
    %3 = vector.load %arg11[%c0, %c0_1] : memref<16x128xf32, #tpu.memory_space<vmem>>, vector<16x128xf32>
    %c0_2 = arith.constant 0 : index
    %c0_3 = arith.constant 0 : index
    %c0_4 = arith.constant 0 : index
    %4 = vector.load %arg3[%c0_2, %c0_3, %c0_4] : memref<1x1x128xf32, #tpu.memory_space<vmem>>, vector<1x1x128xf32>
    %5 = vector.shape_cast %4 : vector<1x1x128xf32> to vector<1x128xf32>
    %6 = vector.broadcast %5 : vector<1x128xf32> to vector<16x128xf32>
    %7 = arith.mulf %3, %6 : vector<16x128xf32>
    %c0_5 = arith.constant 0 : index
    %c0_6 = arith.constant 0 : index
    %c0_7 = arith.constant 0 : index
    %8 = vector.load %arg4[%c0_5, %c0_6, %c0_7] : memref<1x1x128xf32, #tpu.memory_space<vmem>>, vector<1x1x128xf32>
    %9 = vector.shape_cast %8 : vector<1x1x128xf32> to vector<1x128xf32>
    %10 = vector.broadcast %9 : vector<1x128xf32> to vector<16x128xf32>
    %11 = arith.addf %7, %10 : vector<16x128xf32>
    %cst = arith.constant 0.000000e+00 : f32
    %12 = vector.broadcast %cst : f32 to vector<16x128xf32>
    %13 = arith.maximumf %11, %12 : vector<16x128xf32>
    %14 = arith.truncf %13 : vector<16x128xf32> to vector<16x128xbf16>
    %c0_8 = arith.constant 0 : index
    %c0_9 = arith.constant 0 : index
    %c0_10 = arith.constant 0 : index
    %15 = vector.load %arg5[%c0_8, %c0_9, %c0_10] : memref<1x128x128xbf16, #tpu.memory_space<vmem>>, vector<1x128x128xbf16>
    %16 = vector.shape_cast %15 : vector<1x128x128xbf16> to vector<128x128xbf16>
    %cst_11 = arith.constant dense<0.000000e+00> : vector<16x128xf32>
    %17 = tpu.matmul %14, %16, %cst_11 {dimension_numbers = #tpu.dot_dimension_numbers<[1], [0], [0], [1], [0, 0, 1, 1], [], []>} : vector<16x128xbf16>, vector<128x128xbf16>, vector<16x128xf32> -> vector<16x128xf32>
    %c0_12 = arith.constant 0 : index
    %c0_13 = arith.constant 0 : index
    %c0_14 = arith.constant 0 : index
    %18 = vector.load %arg6[%c0_12, %c0_13, %c0_14] : memref<1x1x128xf32, #tpu.memory_space<vmem>>, vector<1x1x128xf32>
    %19 = vector.shape_cast %18 : vector<1x1x128xf32> to vector<1x128xf32>
    %20 = vector.broadcast %19 : vector<1x128xf32> to vector<16x128xf32>
    %21 = arith.mulf %17, %20 : vector<16x128xf32>
    %c0_15 = arith.constant 0 : index
    %c0_16 = arith.constant 0 : index
    %c0_17 = arith.constant 0 : index
    %22 = vector.load %arg7[%c0_15, %c0_16, %c0_17] : memref<1x1x128xf32, #tpu.memory_space<vmem>>, vector<1x1x128xf32>
    %23 = vector.shape_cast %22 : vector<1x1x128xf32> to vector<1x128xf32>
    %24 = vector.broadcast %23 : vector<1x128xf32> to vector<16x128xf32>
    %25 = arith.addf %21, %24 : vector<16x128xf32>
    %cst_18 = arith.constant 0.000000e+00 : f32
    %26 = vector.broadcast %cst_18 : f32 to vector<16x128xf32>
    %27 = arith.maximumf %25, %26 : vector<16x128xf32>
    %c5_i32 = arith.constant 5 : i32
    %28 = tpu.dynamic_rotate %27 by %c5_i32 dim 0 : vector<16x128xf32>, i32 -> vector<16x128xf32>
    %c0_19 = arith.constant 0 : index
    %c0_20 = arith.constant 0 : index
    %c0_21 = arith.constant 0 : index
    %29 = vector.load %arg9[%c0_19, %c0_20, %c0_21] : memref<9x16x1xf32, #tpu.memory_space<vmem>>, vector<1x16x1xf32>
    %30 = vector.shape_cast %29 : vector<1x16x1xf32> to vector<16x1xf32>
    %31 = vector.broadcast %30 : vector<16x1xf32> to vector<16x128xf32>
    %32 = arith.mulf %28, %31 : vector<16x128xf32>
    %c4_i32 = arith.constant 4 : i32
    %33 = tpu.dynamic_rotate %27 by %c4_i32 dim 0 : vector<16x128xf32>, i32 -> vector<16x128xf32>
    %c1 = arith.constant 1 : index
    %c0_22 = arith.constant 0 : index
    %c0_23 = arith.constant 0 : index
    %34 = vector.load %arg9[%c1, %c0_22, %c0_23] : memref<9x16x1xf32, #tpu.memory_space<vmem>>, vector<1x16x1xf32>
    %35 = vector.shape_cast %34 : vector<1x16x1xf32> to vector<16x1xf32>
    %36 = vector.broadcast %35 : vector<16x1xf32> to vector<16x128xf32>
    %37 = arith.mulf %33, %36 : vector<16x128xf32>
    %c32_i32 = arith.constant 32 : i32
    %38 = tpu.dynamic_rotate %37 by %c32_i32 dim 1 : vector<16x128xf32>, i32 -> vector<16x128xf32>
    %39 = arith.addf %32, %38 : vector<16x128xf32>
    %c3_i32 = arith.constant 3 : i32
    %40 = tpu.dynamic_rotate %27 by %c3_i32 dim 0 : vector<16x128xf32>, i32 -> vector<16x128xf32>
    %c2 = arith.constant 2 : index
    %c0_24 = arith.constant 0 : index
    %c0_25 = arith.constant 0 : index
    %41 = vector.load %arg9[%c2, %c0_24, %c0_25] : memref<9x16x1xf32, #tpu.memory_space<vmem>>, vector<1x16x1xf32>
    %42 = vector.shape_cast %41 : vector<1x16x1xf32> to vector<16x1xf32>
    %43 = vector.broadcast %42 : vector<16x1xf32> to vector<16x128xf32>
    %44 = arith.mulf %40, %43 : vector<16x128xf32>
    %c64_i32 = arith.constant 64 : i32
    %45 = tpu.dynamic_rotate %44 by %c64_i32 dim 1 : vector<16x128xf32>, i32 -> vector<16x128xf32>
    %46 = arith.addf %39, %45 : vector<16x128xf32>
    %c1_i32 = arith.constant 1 : i32
    %47 = tpu.dynamic_rotate %27 by %c1_i32 dim 0 : vector<16x128xf32>, i32 -> vector<16x128xf32>
    %c3 = arith.constant 3 : index
    %c0_26 = arith.constant 0 : index
    %c0_27 = arith.constant 0 : index
    %48 = vector.load %arg9[%c3, %c0_26, %c0_27] : memref<9x16x1xf32, #tpu.memory_space<vmem>>, vector<1x16x1xf32>
    %49 = vector.shape_cast %48 : vector<1x16x1xf32> to vector<16x1xf32>
    %50 = vector.broadcast %49 : vector<16x1xf32> to vector<16x128xf32>
    %51 = arith.mulf %47, %50 : vector<16x128xf32>
    %c96_i32 = arith.constant 96 : i32
    %52 = tpu.dynamic_rotate %51 by %c96_i32 dim 1 : vector<16x128xf32>, i32 -> vector<16x128xf32>
    %53 = arith.addf %46, %52 : vector<16x128xf32>
    %c15_i32 = arith.constant 15 : i32
    %54 = tpu.dynamic_rotate %27 by %c15_i32 dim 0 : vector<16x128xf32>, i32 -> vector<16x128xf32>
    %c5 = arith.constant 5 : index
    %c0_28 = arith.constant 0 : index
    %c0_29 = arith.constant 0 : index
    %55 = vector.load %arg9[%c5, %c0_28, %c0_29] : memref<9x16x1xf32, #tpu.memory_space<vmem>>, vector<1x16x1xf32>
    %56 = vector.shape_cast %55 : vector<1x16x1xf32> to vector<16x1xf32>
    %57 = vector.broadcast %56 : vector<16x1xf32> to vector<16x128xf32>
    %58 = arith.mulf %54, %57 : vector<16x128xf32>
    %c32_i32_30 = arith.constant 32 : i32
    %59 = tpu.dynamic_rotate %58 by %c32_i32_30 dim 1 : vector<16x128xf32>, i32 -> vector<16x128xf32>
    %60 = arith.addf %27, %59 : vector<16x128xf32>
    %c13_i32 = arith.constant 13 : i32
    %61 = tpu.dynamic_rotate %27 by %c13_i32 dim 0 : vector<16x128xf32>, i32 -> vector<16x128xf32>
    %c6 = arith.constant 6 : index
    %c0_31 = arith.constant 0 : index
    %c0_32 = arith.constant 0 : index
    %62 = vector.load %arg9[%c6, %c0_31, %c0_32] : memref<9x16x1xf32, #tpu.memory_space<vmem>>, vector<1x16x1xf32>
    %63 = vector.shape_cast %62 : vector<1x16x1xf32> to vector<16x1xf32>
    %64 = vector.broadcast %63 : vector<16x1xf32> to vector<16x128xf32>
    %65 = arith.mulf %61, %64 : vector<16x128xf32>
    %c64_i32_33 = arith.constant 64 : i32
    %66 = tpu.dynamic_rotate %65 by %c64_i32_33 dim 1 : vector<16x128xf32>, i32 -> vector<16x128xf32>
    %67 = arith.addf %60, %66 : vector<16x128xf32>
    %c12_i32 = arith.constant 12 : i32
    %68 = tpu.dynamic_rotate %27 by %c12_i32 dim 0 : vector<16x128xf32>, i32 -> vector<16x128xf32>
    %c7 = arith.constant 7 : index
    %c0_34 = arith.constant 0 : index
    %c0_35 = arith.constant 0 : index
    %69 = vector.load %arg9[%c7, %c0_34, %c0_35] : memref<9x16x1xf32, #tpu.memory_space<vmem>>, vector<1x16x1xf32>
    %70 = vector.shape_cast %69 : vector<1x16x1xf32> to vector<16x1xf32>
    %71 = vector.broadcast %70 : vector<16x1xf32> to vector<16x128xf32>
    %72 = arith.mulf %68, %71 : vector<16x128xf32>
    %c96_i32_36 = arith.constant 96 : i32
    %73 = tpu.dynamic_rotate %72 by %c96_i32_36 dim 1 : vector<16x128xf32>, i32 -> vector<16x128xf32>
    %74 = arith.addf %67, %73 : vector<16x128xf32>
    %c11_i32 = arith.constant 11 : i32
    %75 = tpu.dynamic_rotate %27 by %c11_i32 dim 0 : vector<16x128xf32>, i32 -> vector<16x128xf32>
    %c8 = arith.constant 8 : index
    %c0_37 = arith.constant 0 : index
    %c0_38 = arith.constant 0 : index
    %76 = vector.load %arg9[%c8, %c0_37, %c0_38] : memref<9x16x1xf32, #tpu.memory_space<vmem>>, vector<1x16x1xf32>
    %77 = vector.shape_cast %76 : vector<1x16x1xf32> to vector<16x1xf32>
    %78 = vector.broadcast %77 : vector<16x1xf32> to vector<16x128xf32>
    %79 = arith.mulf %75, %78 : vector<16x128xf32>
    %80 = tpu.concatenate %53, %74, %79 in 1 : vector<16x128xf32>, vector<16x128xf32>, vector<16x128xf32> -> vector<16x384xf32>
    %81 = arith.truncf %80 : vector<16x384xf32> to vector<16x384xbf16>
    %c0_39 = arith.constant 0 : index
    %c0_40 = arith.constant 0 : index
    %c0_41 = arith.constant 0 : index
    %82 = vector.load %arg8[%c0_39, %c0_40, %c0_41] : memref<1x384x128xbf16, #tpu.memory_space<vmem>>, vector<1x384x128xbf16>
    %83 = vector.shape_cast %82 : vector<1x384x128xbf16> to vector<384x128xbf16>
    %cst_42 = arith.constant dense<0.000000e+00> : vector<16x128xf32>
    %84 = tpu.matmul %81, %83, %cst_42 {dimension_numbers = #tpu.dot_dimension_numbers<[1], [0], [0], [1], [0, 0, 1, 1], [], []>} : vector<16x384xbf16>, vector<384x128xbf16>, vector<16x128xf32> -> vector<16x128xf32>
    %85 = arith.addf %3, %84 : vector<16x128xf32>
    %c0_43 = arith.constant 0 : index
    %c0_44 = arith.constant 0 : index
    %86 = vector.load %arg11[%c0_43, %c0_44] : memref<16x128xf32, #tpu.memory_space<vmem>>, vector<16x128xf32>
    tpu.vector_store %arg11[%c0_43, %c0_44], %85 {strides = array<i32>} : memref<16x128xf32, #tpu.memory_space<vmem>>, vector<16x128xf32>,
    %c1_i32_45 = arith.constant 1 : i32
    %87 = arith.cmpi eq, %arg1, %c1_i32_45 : i32
    %88 = arith.extui %87 : i1 to i32
    %c0_i32_46 = arith.constant 0 : i32
    %89 = arith.cmpi ne, %88, %c0_i32_46 : i32
    scf.if %89 {
      %c0_47 = arith.constant 0 : index
      %c0_48 = arith.constant 0 : index
      %90 = vector.load %arg11[%c0_47, %c0_48] : memref<16x128xf32, #tpu.memory_space<vmem>>, vector<16x128xf32>
      %91 = arith.truncf %90 : vector<16x128xf32> to vector<16x128xbf16>
      %c0_49 = arith.constant 0 : index
      %c0_50 = arith.constant 0 : index
      %92 = vector.load %arg10[%c0_49, %c0_50] : memref<16x128xbf16, #tpu.memory_space<vmem>>, vector<16x128xbf16>
      tpu.vector_store %arg10[%c0_49, %c0_50], %91 {strides = array<i32>} : memref<16x128xbf16, #tpu.memory_space<vmem>>, vector<16x128xbf16>,
    } else {
    }
    return
  }
  func.func @transform_0(%arg0: i32, %arg1: i32) -> (i32, i32) {
    %c0_i32 = arith.constant 0 : i32
    %c0_i32_0 = arith.constant 0 : i32
    return %arg0, %c0_i32 : i32, i32
  }
  func.func @transform_1(%arg0: i32, %arg1: i32) -> (i32, i32, i32) {
    %c0_i32 = arith.constant 0 : i32
    %c0_i32_0 = arith.constant 0 : i32
    %c0_i32_1 = arith.constant 0 : i32
    return %arg1, %c0_i32, %c0_i32_0 : i32, i32, i32
  }
  func.func @transform_2(%arg0: i32, %arg1: i32) -> (i32, i32, i32) {
    %c0_i32 = arith.constant 0 : i32
    %c0_i32_0 = arith.constant 0 : i32
    %c0_i32_1 = arith.constant 0 : i32
    return %arg1, %c0_i32, %c0_i32_0 : i32, i32, i32
  }
  func.func @transform_3(%arg0: i32, %arg1: i32) -> (i32, i32, i32) {
    %c0_i32 = arith.constant 0 : i32
    %c0_i32_0 = arith.constant 0 : i32
    %c0_i32_1 = arith.constant 0 : i32
    return %arg1, %c0_i32, %c0_i32_0 : i32, i32, i32
  }
  func.func @transform_4(%arg0: i32, %arg1: i32) -> (i32, i32, i32) {
    %c0_i32 = arith.constant 0 : i32
    %c0_i32_0 = arith.constant 0 : i32
    %c0_i32_1 = arith.constant 0 : i32
    return %arg1, %c0_i32, %c0_i32_0 : i32, i32, i32
  }
  func.func @transform_5(%arg0: i32, %arg1: i32) -> (i32, i32, i32) {
    %c0_i32 = arith.constant 0 : i32
    %c0_i32_0 = arith.constant 0 : i32
    %c0_i32_1 = arith.constant 0 : i32
    return %arg1, %c0_i32, %c0_i32_0 : i32, i32, i32
  }
  func.func @transform_6(%arg0: i32, %arg1: i32) -> (i32, i32, i32) {
    %c0_i32 = arith.constant 0 : i32
    %c0_i32_0 = arith.constant 0 : i32
    %c0_i32_1 = arith.constant 0 : i32
    return %arg1, %c0_i32, %c0_i32_0 : i32, i32, i32
  }
  func.func @transform_7(%arg0: i32, %arg1: i32) -> (i32, i32, i32) {
    %c0_i32 = arith.constant 0 : i32
    %c0_i32_0 = arith.constant 0 : i32
    %c0_i32_1 = arith.constant 0 : i32
    %c0_i32_2 = arith.constant 0 : i32
    return %c0_i32, %c0_i32_0, %c0_i32_1 : i32, i32, i32
  }
  func.func @transform_8(%arg0: i32, %arg1: i32) -> (i32, i32) {
    %c0_i32 = arith.constant 0 : i32
    %c0_i32_0 = arith.constant 0 : i32
    return %arg0, %c0_i32 : i32, i32
  }
}

module attributes {stable_mosaic.version = 11 : i64} {
  func.func @_head_kernel(%arg0: i32, %arg1: memref<32x128xbf16, #tpu.memory_space<vmem>>, %arg2: memref<1x128xf32, #tpu.memory_space<vmem>>, %arg3: memref<1x128xf32, #tpu.memory_space<vmem>>, %arg4: memref<128x128xbf16, #tpu.memory_space<vmem>>, %arg5: memref<1x128xf32, #tpu.memory_space<vmem>>, %arg6: memref<2x128xf32, #tpu.memory_space<vmem>>) attributes {dimension_semantics = [#tpu.dimension_semantics<arbitrary>], iteration_bounds = array<i64: 1>, scalar_prefetch = 0 : i64, scratch_operands = 0 : i64, tpu.core_type = #tpu.core_type<tc>, window_params = [{pipeline_mode = #tpu.pipeline_mode<synchronous>, transform_indices = @transform_0, window_bounds = array<i64: 32, 128>}, {pipeline_mode = #tpu.pipeline_mode<synchronous>, transform_indices = @transform_1, window_bounds = array<i64: 1, 128>}, {pipeline_mode = #tpu.pipeline_mode<synchronous>, transform_indices = @transform_2, window_bounds = array<i64: 1, 128>}, {pipeline_mode = #tpu.pipeline_mode<synchronous>, transform_indices = @transform_3, window_bounds = array<i64: 128, 128>}, {pipeline_mode = #tpu.pipeline_mode<synchronous>, transform_indices = @transform_4, window_bounds = array<i64: 1, 128>}, {pipeline_mode = #tpu.pipeline_mode<synchronous>, transform_indices = @transform_5, window_bounds = array<i64: 2, 128>}]} {
    %c0 = arith.constant 0 : index
    %c0_0 = arith.constant 0 : index
    %0 = vector.load %arg1[%c0, %c0_0] : memref<32x128xbf16, #tpu.memory_space<vmem>>, vector<32x128xbf16>
    %1 = arith.extf %0 : vector<32x128xbf16> to vector<32x128xf32>
    %c0_1 = arith.constant 0 : index
    %c0_2 = arith.constant 0 : index
    %2 = vector.load %arg2[%c0_1, %c0_2] : memref<1x128xf32, #tpu.memory_space<vmem>>, vector<1x128xf32>
    %3 = vector.broadcast %2 : vector<1x128xf32> to vector<32x128xf32>
    %4 = arith.mulf %1, %3 : vector<32x128xf32>
    %c0_3 = arith.constant 0 : index
    %c0_4 = arith.constant 0 : index
    %5 = vector.load %arg3[%c0_3, %c0_4] : memref<1x128xf32, #tpu.memory_space<vmem>>, vector<1x128xf32>
    %6 = vector.broadcast %5 : vector<1x128xf32> to vector<32x128xf32>
    %7 = arith.addf %4, %6 : vector<32x128xf32>
    %cst = arith.constant 0.000000e+00 : f32
    %8 = vector.broadcast %cst : f32 to vector<32x128xf32>
    %9 = arith.maximumf %7, %8 : vector<32x128xf32>
    %10 = vector.extract_strided_slice %9 {offsets = [0, 0], sizes = [16, 128], strides = [1, 1]} : vector<32x128xf32> to vector<16x128xf32>
    %cst_5 = arith.constant dense<0.000000e+00> : vector<128xf32>
    %11 = vector.multi_reduction <add>, %10, %cst_5 [0] : vector<16x128xf32> to vector<128xf32>
    %12 = vector.shape_cast %11 : vector<128xf32> to vector<1x128xf32>
    %cst_6 = arith.constant 1.600000e+01 : f32
    %13 = vector.broadcast %cst_6 : f32 to vector<1x128xf32>
    %14 = arith.divf %12, %13 : vector<1x128xf32>
    %15 = vector.extract_strided_slice %9 {offsets = [16, 0], sizes = [16, 128], strides = [1, 1]} : vector<32x128xf32> to vector<16x128xf32>
    %cst_7 = arith.constant dense<0.000000e+00> : vector<128xf32>
    %16 = vector.multi_reduction <add>, %15, %cst_7 [0] : vector<16x128xf32> to vector<128xf32>
    %17 = vector.shape_cast %16 : vector<128xf32> to vector<1x128xf32>
    %cst_8 = arith.constant 1.600000e+01 : f32
    %18 = vector.broadcast %cst_8 : f32 to vector<1x128xf32>
    %19 = arith.divf %17, %18 : vector<1x128xf32>
    %20 = tpu.concatenate %14, %19 in 0 : vector<1x128xf32>, vector<1x128xf32> -> vector<2x128xf32>
    %21 = arith.truncf %20 : vector<2x128xf32> to vector<2x128xbf16>
    %c0_9 = arith.constant 0 : index
    %c0_10 = arith.constant 0 : index
    %22 = vector.load %arg4[%c0_9, %c0_10] : memref<128x128xbf16, #tpu.memory_space<vmem>>, vector<128x128xbf16>
    %cst_11 = arith.constant dense<0.000000e+00> : vector<2x128xf32>
    %23 = tpu.matmul %21, %22, %cst_11 {dimension_numbers = #tpu.dot_dimension_numbers<[1], [0], [0], [1], [0, 0, 1, 1], [], []>} : vector<2x128xbf16>, vector<128x128xbf16>, vector<2x128xf32> -> vector<2x128xf32>
    %c0_12 = arith.constant 0 : index
    %c0_13 = arith.constant 0 : index
    %24 = vector.load %arg5[%c0_12, %c0_13] : memref<1x128xf32, #tpu.memory_space<vmem>>, vector<1x128xf32>
    %25 = vector.broadcast %24 : vector<1x128xf32> to vector<2x128xf32>
    %26 = arith.addf %23, %25 : vector<2x128xf32>
    %c0_14 = arith.constant 0 : index
    %c0_15 = arith.constant 0 : index
    %27 = vector.load %arg6[%c0_14, %c0_15] : memref<2x128xf32, #tpu.memory_space<vmem>>, vector<2x128xf32>
    tpu.vector_store %arg6[%c0_14, %c0_15], %26 {strides = array<i32>} : memref<2x128xf32, #tpu.memory_space<vmem>>, vector<2x128xf32>,
    return
  }
  func.func @transform_0(%arg0: i32) -> (i32, i32) {
    %c0_i32 = arith.constant 0 : i32
    %c0_i32_0 = arith.constant 0 : i32
    %c0_i32_1 = arith.constant 0 : i32
    return %c0_i32, %c0_i32_0 : i32, i32
  }
  func.func @transform_1(%arg0: i32) -> (i32, i32) {
    %c0_i32 = arith.constant 0 : i32
    %c0_i32_0 = arith.constant 0 : i32
    %c0_i32_1 = arith.constant 0 : i32
    return %c0_i32, %c0_i32_0 : i32, i32
  }
  func.func @transform_2(%arg0: i32) -> (i32, i32) {
    %c0_i32 = arith.constant 0 : i32
    %c0_i32_0 = arith.constant 0 : i32
    %c0_i32_1 = arith.constant 0 : i32
    return %c0_i32, %c0_i32_0 : i32, i32
  }
  func.func @transform_3(%arg0: i32) -> (i32, i32) {
    %c0_i32 = arith.constant 0 : i32
    %c0_i32_0 = arith.constant 0 : i32
    %c0_i32_1 = arith.constant 0 : i32
    return %c0_i32, %c0_i32_0 : i32, i32
  }
  func.func @transform_4(%arg0: i32) -> (i32, i32) {
    %c0_i32 = arith.constant 0 : i32
    %c0_i32_0 = arith.constant 0 : i32
    %c0_i32_1 = arith.constant 0 : i32
    return %c0_i32, %c0_i32_0 : i32, i32
  }
  func.func @transform_5(%arg0: i32) -> (i32, i32) {
    %c0_i32 = arith.constant 0 : i32
    %c0_i32_0 = arith.constant 0 : i32
    %c0_i32_1 = arith.constant 0 : i32
    return %c0_i32, %c0_i32_0 : i32, i32
  }
}

</mosaic_0001>

<llo_original>
// kernel: densenet_forward.6
$region0: #{densenet_forward.6}
  #allocation0 [shape = 'u32[]', space=smem, size = 0x4, offset = 0x4, fixed_abs, tag = 'smem constant byte address 0x4 - core index']
  #allocation1 [shape = 'u32[144,128]{1,0:T(1,128)}', space=vmem, size = 0x12000, scoped, tag = 'internal scratch']
  #allocation2 [shape = 'f32[64,128]{1,0:T(8,128)}', space=vmem, size = 0x8000, scoped, tag = 'scratch operand']
  %s0 = inlined_call_operand.vmem [shape: bf16[128,128], index: 0, kind: input, shape index: {}]
  %s1 = inlined_call_operand.vmem [shape: f32[2,1,128], index: 1, kind: input, shape index: {}]
  %s2 = inlined_call_operand.vmem [shape: f32[2,1,128], index: 2, kind: input, shape index: {}]
  %s3 = inlined_call_operand.vmem [shape: bf16[2,128,128], index: 3, kind: input, shape index: {}]
  %s4 = inlined_call_operand.vmem [shape: f32[2,1,128], index: 4, kind: input, shape index: {}]
  %s5 = inlined_call_operand.vmem [shape: f32[2,1,128], index: 5, kind: input, shape index: {}]
  %s6 = inlined_call_operand.vmem [shape: bf16[2,384,128], index: 6, kind: input, shape index: {}]
  %s7 = inlined_call_operand.vmem [shape: f32[9,64,1], index: 7, kind: input, shape index: {}]
  %s8 = inlined_call_operand.vmem [shape: bf16[128,128], index: 8, kind: output, shape index: {}]
  %s9 = sld [smem:[#allocation0]]
  $region73: #{densenet_forward.6} parent=0
    _
  %s11 = ssub.s32 1, %s9
  %s12 = scalar_select 0, %s11, %s9
  loop: start=0, step=1, limit=6
  $region2: #{densenet_forward.6} parent=0 // loop_pre_header
    _
  $region3: #{densenet_forward.6} parent=0 // loop_header
    %s14 = sphi 0, %s18
    %p15 = scmp.ge.s32.totalorder %s14, 6
    %s21 = sphi 0, %s33
    %s22 = sphi 0, %s29
    %s23 = sphi 0, %s21
    %s24 = sphi 0, %s22
    %s25 = sphi 0, %s23
    %s26 = sphi 0, %s24
    %s36 = sphi 0, %s38
    %s39 = sphi 0, %s36
    %s40 = sphi 0, %s39
    %s56 = sphi 0, %s40
    %s62 = sphi 0, %s64
    %s65 = sphi 0, %s62
    %s66 = sphi 0, %s65
    %s82 = sphi 0, %s66
    %s88 = sphi 0, %s90
    %s91 = sphi 0, %s88
    %s92 = sphi 0, %s91
    %s108 = sphi 0, %s92
    %s114 = sphi 0, %s116
    %s117 = sphi 0, %s114
    %s118 = sphi 0, %s117
    %s134 = sphi 0, %s118
    %s140 = sphi 0, %s142
    %s143 = sphi 0, %s140
    %s144 = sphi 0, %s143
    %s160 = sphi 0, %s144
    %s166 = sphi 0, %s168
    %s169 = sphi 0, %s166
    %s170 = sphi 0, %s169
    %s186 = sphi 0, %s170
    %s192 = sphi 0, %s194
    %s195 = sphi 0, %s192
    %s196 = sphi 0, %s195
    %s212 = sphi 0, %s196
    %s216 = sphi 0, %s216
    %s218 = sphi 0, %s216
    %s219 = sphi 0, %s218
    %s233 = sphi 0, %s219
    %s239 = sphi 0, %s241
    %s242 = sphi 0, %s239
    %s243 = sphi 0, %s242
    %s259 = sphi 0, %s243
  $region4: #{densenet_forward.6} parent=0 // loop_header_branch
    %17 = sbr.rel (%p15) target = $region8
  $region5: #{densenet_forward.6} parent=0 // loop_body
    %s19 = ssub.s32 %s14, 1
    %s20 = ssub.s32 %s14, 2
    %s27 = sadd.s32 1, %s22
    %p28 = scmp.ge.s32.totalorder %s27, 2
    %s29 = scalar_select %p28, 0, %s27
    %s30 = sadd.s32 1, %s21
    %s31 = scalar_select %p28, %s30, %s21
    %p32 = scmp.ge.s32.totalorder %s31, 2
    %s33 = scalar_select %p32, 0, %s31
    %s34 = ssub.s32 %s21, %s33
    %p35 = scmp.eq.s32.totalorder %s34, 0
    %s37 = sadd.s32 %s36, 1
    %s38 = scalar_select %p35, %s36, %s37
    %p41 = pneg %p35
    %p42 = scmp.eq.s32.totalorder %s14, 3
    %p43 = por %p41, %p42
    %p44 = scmp.ne.s32.totalorder %s36, %s39
    %p45 = scmp.eq.s32.totalorder %s14, 0
    %p46 = por %p44, %p45
    %p47 = scmp.ne.s32.totalorder %s36, %s39
    %p48 = scmp.eq.s32.totalorder %s19, 3
    %p49 = por %p47, %p48
    %p50 = scmp.ne.s32.totalorder %s39, %s40
    %p51 = scmp.eq.s32.totalorder %s19, 0
    %p52 = por %p50, %p51
    %p53 = scmp.ne.s32.totalorder %s39, %s40
    %p54 = scmp.eq.s32.totalorder %s20, 3
    %p55 = por %p53, %p54
    %p57 = scmp.ne.s32.totalorder %s40, %s56
    %p58 = scmp.eq.s32.totalorder %s20, 0
    %p59 = por %p57, %p58
    %s60 = ssub.s32 %s22, %s29
    %p61 = scmp.eq.s32.totalorder %s60, 0
    %s63 = sadd.s32 %s62, 1
    %s64 = scalar_select %p61, %s62, %s63
    %p67 = pneg %p61
    %p68 = scmp.eq.s32.totalorder %s14, 3
    %p69 = por %p67, %p68
    %p70 = scmp.ne.s32.totalorder %s62, %s65
    %p71 = scmp.eq.s32.totalorder %s14, 0
    %p72 = por %p70, %p71
    %p73 = scmp.ne.s32.totalorder %s62, %s65
    %p74 = scmp.eq.s32.totalorder %s19, 3
    %p75 = por %p73, %p74
    %p76 = scmp.ne.s32.totalorder %s65, %s66
    %p77 = scmp.eq.s32.totalorder %s19, 0
    %p78 = por %p76, %p77
    %p79 = scmp.ne.s32.totalorder %s65, %s66
    %p80 = scmp.eq.s32.totalorder %s20, 3
    %p81 = por %p79, %p80
    %p83 = scmp.ne.s32.totalorder %s66, %s82
    %p84 = scmp.eq.s32.totalorder %s20, 0
    %p85 = por %p83, %p84
    %s86 = ssub.s32 %s22, %s29
    %p87 = scmp.eq.s32.totalorder %s86, 0
    %s89 = sadd.s32 %s88, 1
    %s90 = scalar_select %p87, %s88, %s89
    %p93 = pneg %p87
    %p94 = scmp.eq.s32.totalorder %s14, 3
    %p95 = por %p93, %p94
    %p96 = scmp.ne.s32.totalorder %s88, %s91
    %p97 = scmp.eq.s32.totalorder %s14, 0
    %p98 = por %p96, %p97
    %p99 = scmp.ne.s32.totalorder %s88, %s91
    %p100 = scmp.eq.s32.totalorder %s19, 3
    %p101 = por %p99, %p100
    %p102 = scmp.ne.s32.totalorder %s91, %s92
    %p103 = scmp.eq.s32.totalorder %s19, 0
    %p104 = por %p102, %p103
    %p105 = scmp.ne.s32.totalorder %s91, %s92
    %p106 = scmp.eq.s32.totalorder %s20, 3
    %p107 = por %p105, %p106
    %p109 = scmp.ne.s32.totalorder %s92, %s108
    %p110 = scmp.eq.s32.totalorder %s20, 0
    %p111 = por %p109, %p110
    %s112 = ssub.s32 %s22, %s29
    %p113 = scmp.eq.s32.totalorder %s112, 0
    %s115 = sadd.s32 %s114, 1
    %s116 = scalar_select %p113, %s114, %s115
    %p119 = pneg %p113
    %p120 = scmp.eq.s32.totalorder %s14, 3
    %p121 = por %p119, %p120
    %p122 = scmp.ne.s32.totalorder %s114, %s117
    %p123 = scmp.eq.s32.totalorder %s14, 0
    %p124 = por %p122, %p123
    %p125 = scmp.ne.s32.totalorder %s114, %s117
    %p126 = scmp.eq.s32.totalorder %s19, 3
    %p127 = por %p125, %p126
    %p128 = scmp.ne.s32.totalorder %s117, %s118
    %p129 = scmp.eq.s32.totalorder %s19, 0
    %p130 = por %p128, %p129
    %p131 = scmp.ne.s32.totalorder %s117, %s118
    %p132 = scmp.eq.s32.totalorder %s20, 3
    %p133 = por %p131, %p132
    %p135 = scmp.ne.s32.totalorder %s118, %s134
    %p136 = scmp.eq.s32.totalorder %s20, 0
    %p137 = por %p135, %p136
    %s138 = ssub.s32 %s22, %s29
    %p139 = scmp.eq.s32.totalorder %s138, 0
    %s141 = sadd.s32 %s140, 1
    %s142 = scalar_select %p139, %s140, %s141
    %p145 = pneg %p139
    %p146 = scmp.eq.s32.totalorder %s14, 3
    %p147 = por %p145, %p146
    %p148 = scmp.ne.s32.totalorder %s140, %s143
    %p149 = scmp.eq.s32.totalorder %s14, 0
    %p150 = por %p148, %p149
    %p151 = scmp.ne.s32.totalorder %s140, %s143
    %p152 = scmp.eq.s32.totalorder %s19, 3
    %p153 = por %p151, %p152
    %p154 = scmp.ne.s32.totalorder %s143, %s144
    %p155 = scmp.eq.s32.totalorder %s19, 0
    %p156 = por %p154, %p155
    %p157 = scmp.ne.s32.totalorder %s143, %s144
    %p158 = scmp.eq.s32.totalorder %s20, 3
    %p159 = por %p157, %p158
    %p161 = scmp.ne.s32.totalorder %s144, %s160
    %p162 = scmp.eq.s32.totalorder %s20, 0
    %p163 = por %p161, %p162
    %s164 = ssub.s32 %s22, %s29
    %p165 = scmp.eq.s32.totalorder %s164, 0
    %s167 = sadd.s32 %s166, 1
    %s168 = scalar_select %p165, %s166, %s167
    %p171 = pneg %p165
    %p172 = scmp.eq.s32.totalorder %s14, 3
    %p173 = por %p171, %p172
    %p174 = scmp.ne.s32.totalorder %s166, %s169
    %p175 = scmp.eq.s32.totalorder %s14, 0
    %p176 = por %p174, %p175
    %p177 = scmp.ne.s32.totalorder %s166, %s169
    %p178 = scmp.eq.s32.totalorder %s19, 3
    %p179 = por %p177, %p178
    %p180 = scmp.ne.s32.totalorder %s169, %s170
    %p181 = scmp.eq.s32.totalorder %s19, 0
    %p182 = por %p180, %p181
    %p183 = scmp.ne.s32.totalorder %s169, %s170
    %p184 = scmp.eq.s32.totalorder %s20, 3
    %p185 = por %p183, %p184
    %p187 = scmp.ne.s32.totalorder %s170, %s186
    %p188 = scmp.eq.s32.totalorder %s20, 0
    %p189 = por %p187, %p188
    %s190 = ssub.s32 %s22, %s29
    %p191 = scmp.eq.s32.totalorder %s190, 0
    %s193 = sadd.s32 %s192, 1
    %s194 = scalar_select %p191, %s192, %s193
    %p197 = pneg %p191
    %p198 = scmp.eq.s32.totalorder %s14, 3
    %p199 = por %p197, %p198
    %p200 = scmp.ne.s32.totalorder %s192, %s195
    %p201 = scmp.eq.s32.totalorder %s14, 0
    %p202 = por %p200, %p201
    %p203 = scmp.ne.s32.totalorder %s192, %s195
    %p204 = scmp.eq.s32.totalorder %s19, 3
    %p205 = por %p203, %p204
    %p206 = scmp.ne.s32.totalorder %s195, %s196
    %p207 = scmp.eq.s32.totalorder %s19, 0
    %p208 = por %p206, %p207
    %p209 = scmp.ne.s32.totalorder %s195, %s196
    %p210 = scmp.eq.s32.totalorder %s20, 3
    %p211 = por %p209, %p210
    %p213 = scmp.ne.s32.totalorder %s196, %s212
    %p214 = scmp.eq.s32.totalorder %s20, 0
    %p215 = por %p213, %p214
    %s217 = sadd.s32 %s216, 1
    %p220 = scmp.eq.s32.totalorder %s14, 3
    %p221 = scmp.ne.s32.totalorder %s216, %s218
    %p222 = scmp.eq.s32.totalorder %s14, 0
    %p223 = por %p221, %p222
    %p224 = scmp.ne.s32.totalorder %s216, %s218
    %p225 = scmp.eq.s32.totalorder %s19, 3
    %p226 = por %p224, %p225
    %p227 = scmp.ne.s32.totalorder %s218, %s219
    %p228 = scmp.eq.s32.totalorder %s19, 0
    %p229 = por %p227, %p228
    %p230 = scmp.ne.s32.totalorder %s218, %s219
    %p231 = scmp.eq.s32.totalorder %s20, 3
    %p232 = por %p230, %p231
    %p234 = scmp.ne.s32.totalorder %s219, %s233
    %p235 = scmp.eq.s32.totalorder %s20, 0
    %p236 = por %p234, %p235
    %s237 = ssub.s32 %s21, %s33
    %p238 = scmp.eq.s32.totalorder %s237, 0
    %s240 = sadd.s32 %s239, 1
    %s241 = scalar_select %p238, %s239, %s240
    %p244 = pneg %p238
    %p245 = scmp.eq.s32.totalorder %s14, 3
    %p246 = por %p244, %p245
    %p247 = scmp.ne.s32.totalorder %s239, %s242
    %p248 = scmp.eq.s32.totalorder %s14, 0
    %p249 = por %p247, %p248
    %p250 = scmp.ne.s32.totalorder %s239, %s242
    %p251 = scmp.eq.s32.totalorder %s19, 3
    %p252 = por %p250, %p251
    %p253 = scmp.ne.s32.totalorder %s242, %s243
    %p254 = scmp.eq.s32.totalorder %s19, 0
    %p255 = por %p253, %p254
    %p256 = scmp.ne.s32.totalorder %s242, %s243
    %p257 = scmp.eq.s32.totalorder %s20, 3
    %p258 = por %p256, %p257
    %p260 = scmp.ne.s32.totalorder %s243, %s259
    %p261 = scmp.eq.s32.totalorder %s20, 0
    %p262 = por %p260, %p261
    %p263 = scmp.le.s32.totalorder 1, %s14
    %p264 = scmp.lt.s32.totalorder %s14, 5
    %p265 = pnand %p263, %p264
    %p266 = pneg %p265
    // Predicated region
    $region9: #{densenet_forward.6} parent=5 // pred_check
      _
    $region10: #{densenet_forward.6} parent=5 // pred_check_branch
      %268 = sbr.rel (%p265) target = $region12
    $region11: #{densenet_forward.6} parent=5 // pred_region
      %s269 = ssub.s32 %s14, 1
      // Predicated region
      $region13: #{densenet_forward.6} parent=11 // pred_check
        %p270 = pneg %p229
      $region14: #{densenet_forward.6} parent=11 // pred_check_branch
        %272 = sbr.rel (%p270) target = $region16
      $region15: #{densenet_forward.6} parent=11 // pred_region
        _
      $region16: #{densenet_forward.6} parent=11 // pred_fallthru
        _
    $region12: #{densenet_forward.6} parent=5 // pred_fallthru
      _
    %p273 = scmp.lt.s32.totalorder %s14, 4
    // Predicated region
    $region17: #{densenet_forward.6} parent=5 // pred_check
      %p274 = pneg %p273
    $region18: #{densenet_forward.6} parent=5 // pred_check_branch
      %276 = sbr.rel (%p274) target = $region20
    $region19: #{densenet_forward.6} parent=5 // pred_region
      // Predicated region
      $region21: #{densenet_forward.6} parent=19 // pred_check
        %p277 = pneg %p46
      $region22: #{densenet_forward.6} parent=19 // pred_check_branch
        %279 = sbr.rel (%p277) target = $region24
      $region23: #{densenet_forward.6} parent=19 // pred_region
        %s280 = smul.u32 8, %s21
        %p281 = scmp.lt.s32.totalorder %s280, 15
        %s282 = scalar_select %p281, %s280, 15
        %s283 = smul.addr %s282, 4
        %s284 = scalar_lea.vmem %s0, %s283
        %s285 = smul.u32 8, %s21
      $region24: #{densenet_forward.6} parent=19 // pred_fallthru
        _
      // Predicated region
      $region25: #{densenet_forward.6} parent=19 // pred_check
        %p286 = pneg %p72
      $region26: #{densenet_forward.6} parent=19 // pred_check_branch
        %288 = sbr.rel (%p286) target = $region28
      $region27: #{densenet_forward.6} parent=19 // pred_region
        %p289 = scmp.lt.s32.totalorder %s22, 1
        %s290 = scalar_select %p289, %s22, 1
        %s291 = scalar_lea.vmem %s1, %s290
      $region28: #{densenet_forward.6} parent=19 // pred_fallthru
        _
      // Predicated region
      $region29: #{densenet_forward.6} parent=19 // pred_check
        %p292 = pneg %p98
      $region30: #{densenet_forward.6} parent=19 // pred_check_branch
        %294 = sbr.rel (%p292) target = $region32
      $region31: #{densenet_forward.6} parent=19 // pred_region
        %p295 = scmp.lt.s32.totalorder %s22, 1
        %s296 = scalar_select %p295, %s22, 1
        %s297 = scalar_lea.vmem %s2, %s296
      $region32: #{densenet_forward.6} parent=19 // pred_fallthru
        _
      // Predicated region
      $region33: #{densenet_forward.6} parent=19 // pred_check
        %p298 = pneg %p124
      $region34: #{densenet_forward.6} parent=19 // pred_check_branch
        %300 = sbr.rel (%p298) target = $region36
      $region35: #{densenet_forward.6} parent=19 // pred_region
        %p301 = scmp.lt.s32.totalorder %s22, 1
        %s302 = scalar_select %p301, %s22, 1
        %s303 = smul.addr %s302, 16
        %s304 = smul.addr %s303, 4
        %s305 = scalar_lea.vmem %s3, %s304
      $region36: #{densenet_forward.6} parent=19 // pred_fallthru
        _
      // Predicated region
      $region37: #{densenet_forward.6} parent=19 // pred_check
        %p306 = pneg %p150
      $region38: #{densenet_forward.6} parent=19 // pred_check_branch
        %308 = sbr.rel (%p306) target = $region40
      $region39: #{densenet_forward.6} parent=19 // pred_region
        %p309 = scmp.lt.s32.totalorder %s22, 1
        %s310 = scalar_select %p309, %s22, 1
        %s311 = scalar_lea.vmem %s4, %s310
      $region40: #{densenet_forward.6} parent=19 // pred_fallthru
        _
      // Predicated region
      $region41: #{densenet_forward.6} parent=19 // pred_check
        %p312 = pneg %p176
      $region42: #{densenet_forward.6} parent=19 // pred_check_branch
        %314 = sbr.rel (%p312) target = $region44
      $region43: #{densenet_forward.6} parent=19 // pred_region
        %p315 = scmp.lt.s32.totalorder %s22, 1
        %s316 = scalar_select %p315, %s22, 1
        %s317 = scalar_lea.vmem %s5, %s316
      $region44: #{densenet_forward.6} parent=19 // pred_fallthru
        _
      // Predicated region
      $region45: #{densenet_forward.6} parent=19 // pred_check
        %p318 = pneg %p202
      $region46: #{densenet_forward.6} parent=19 // pred_check_branch
        %320 = sbr.rel (%p318) target = $region48
      $region47: #{densenet_forward.6} parent=19 // pred_region
        %p321 = scmp.lt.s32.totalorder %s22, 1
        %s322 = scalar_select %p321, %s22, 1
        %s323 = smul.addr %s322, 48
        %s324 = smul.addr %s323, 4
        %s325 = scalar_lea.vmem %s6, %s324
      $region48: #{densenet_forward.6} parent=19 // pred_fallthru
        _
    $region20: #{densenet_forward.6} parent=5 // pred_fallthru
      _
    %p326 = scmp.le.s32.totalorder 1, %s14
    %p327 = scmp.lt.s32.totalorder %s14, 5
    %p328 = pnand %p326, %p327
    %p329 = pneg %p328
    // Predicated region
    $region49: #{densenet_forward.6} parent=5 // pred_check
      _
    $region50: #{densenet_forward.6} parent=5 // pred_check_branch
      %331 = sbr.rel (%p328) target = $region52
    $region51: #{densenet_forward.6} parent=5 // pred_region
      %s332 = ssub.s32 %s14, 1
      %s333 = smul.u32 8, %s23
      %p334 = scmp.lt.s32.totalorder %s333, 15
      %s335 = scalar_select %p334, %s333, 15
      %s336 = smul.addr %s335, 4
      %s337 = scalar_lea.vmem %s0, %s336
      %p338 = pneg %p52
      %p339 = pneg %p49
      %p340 = scmp.lt.s32.totalorder %s24, 1
      %s341 = scalar_select %p340, %s24, 1
      %s342 = scalar_lea.vmem %s1, %s341
      %p343 = pneg %p78
      %p344 = pneg %p75
      %p345 = scmp.lt.s32.totalorder %s24, 1
      %s346 = scalar_select %p345, %s24, 1
      %s347 = scalar_lea.vmem %s2, %s346
      %p348 = pneg %p104
      %p349 = pneg %p101
      %p350 = scmp.lt.s32.totalorder %s24, 1
      %s351 = scalar_select %p350, %s24, 1
      %s352 = smul.addr %s351, 16
      %s353 = smul.addr %s352, 4
      %s354 = scalar_lea.vmem %s3, %s353
      %p355 = pneg %p130
      %p356 = pneg %p127
      %p357 = scmp.lt.s32.totalorder %s24, 1
      %s358 = scalar_select %p357, %s24, 1
      %s359 = scalar_lea.vmem %s4, %s358
      %p360 = pneg %p156
      %p361 = pneg %p153
      %p362 = scmp.lt.s32.totalorder %s24, 1
      %s363 = scalar_select %p362, %s24, 1
      %s364 = scalar_lea.vmem %s5, %s363
      %p365 = pneg %p182
      %p366 = pneg %p179
      %p367 = scmp.lt.s32.totalorder %s24, 1
      %s368 = scalar_select %p367, %s24, 1
      %s369 = smul.addr %s368, 48
      %s370 = smul.addr %s369, 4
      %s371 = scalar_lea.vmem %s6, %s370
      %p372 = pneg %p208
      %p373 = pneg %p205
      %p374 = pneg %p229
      %p375 = pneg %p226
      %p376 = pneg %p255
      %p377 = pneg %p252
      %s378 = smul.u32 8, %s23
      %p379 = scmp.lt.s32.totalorder %s378, 15
      %s380 = scalar_select %p379, %s378, 15
      %s381 = smul.addr %s380, 4
      %s382 = scalar_lea.vmem %s8, %s381
      %s383 = smul.u32 8, %s23
      %p384 = scmp.lt.s32.totalorder %s383, 15
      %s385 = scalar_select %p384, %s383, 15
      %s386 = smul.addr %s385, 4
      %s387 = scalar_lea.vmem %s0, %s386
      %s388 = smul.u32 8, %s23
      %p389 = scmp.lt.s32.totalorder %s24, 1
      %s390 = scalar_select %p389, %s24, 1
      %s391 = scalar_lea.vmem %s1, %s390
      %p392 = scmp.lt.s32.totalorder %s24, 1
      %s393 = scalar_select %p392, %s24, 1
      %s394 = scalar_lea.vmem %s2, %s393
      %p395 = scmp.lt.s32.totalorder %s24, 1
      %s396 = scalar_select %p395, %s24, 1
      %s397 = smul.addr %s396, 16
      %s398 = smul.addr %s397, 4
      %s399 = scalar_lea.vmem %s3, %s398
      %p400 = scmp.lt.s32.totalorder %s24, 1
      %s401 = scalar_select %p400, %s24, 1
      %s402 = scalar_lea.vmem %s4, %s401
      %p403 = scmp.lt.s32.totalorder %s24, 1
      %s404 = scalar_select %p403, %s24, 1
      %s405 = scalar_lea.vmem %s5, %s404
      %p406 = scmp.lt.s32.totalorder %s24, 1
      %s407 = scalar_select %p406, %s24, 1
      %s408 = smul.addr %s407, 48
      %s409 = smul.addr %s408, 4
      %s410 = scalar_lea.vmem %s6, %s409
      %s411 = smul.u32 8, %s23
      %p412 = scmp.lt.s32.totalorder %s411, 15
      %s413 = scalar_select %p412, %s411, 15
      %s414 = smul.addr %s413, 4
      %s415 = scalar_lea.vmem %s8, %s414
      %s416 = smul.u32 8, %s23
      %p418 = scmp.eq.s32.totalorder %s24, 0
      // Predicated region
      $region53: #{densenet_forward.6} parent=51 // pred_check
        %p419 = pneg %p418
      $region54: #{densenet_forward.6} parent=51 // pred_check_branch
        %421 = sbr.rel (%p419) target = $region56
      $region55: #{densenet_forward.6} parent=51 // pred_region
        %v422 = vld [vmem:[%s387] sm:$0xf]
        %v423 = vld [vmem:[%s387 + $0x4] sm:$0xf]
        %v424 = vld [vmem:[%s387 + $0x8] sm:$0xf]
        %v425 = vld [vmem:[%s387 + $0xc] sm:$0xf]
        %v426 = vld [vmem:[%s387 + $0x10] sm:$0xf]
        %v427 = vld [vmem:[%s387 + $0x14] sm:$0xf]
        %v428 = vld [vmem:[%s387 + $0x18] sm:$0xf]
        %v429 = vld [vmem:[%s387 + $0x1c] sm:$0xf]
        %v430 = vunpack.c.l.bf16 %v422
        %v431 = vunpack.c.l.bf16 %v423
        %v432 = vunpack.c.l.bf16 %v424
        %v433 = vunpack.c.l.bf16 %v425
        %v434 = vunpack.c.l.bf16 %v426
        %v435 = vunpack.c.l.bf16 %v427
        %v436 = vunpack.c.l.bf16 %v428
        %v437 = vunpack.c.l.bf16 %v429
        %438 = vst [vmem:[#allocation2] sm:$0xff] %v430
        %439 = vst [vmem:[#allocation2 + $0x8] sm:$0xff] %v431
        %440 = vst [vmem:[#allocation2 + $0x10] sm:$0xff] %v432
        %441 = vst [vmem:[#allocation2 + $0x18] sm:$0xff] %v433
        %442 = vst [vmem:[#allocation2 + $0x20] sm:$0xff] %v434
        %443 = vst [vmem:[#allocation2 + $0x28] sm:$0xff] %v435
        %444 = vst [vmem:[#allocation2 + $0x30] sm:$0xff] %v436
        %445 = vst [vmem:[#allocation2 + $0x38] sm:$0xff] %v437
      $region56: #{densenet_forward.6} parent=51 // pred_fallthru
        _
      %v446 = vld [vmem:[#allocation2] sm:$0xff]
      %v447 = vld [vmem:[#allocation2 + $0x8] sm:$0xff]
      %v448 = vld [vmem:[#allocation2 + $0x10] sm:$0xff]
      %v449 = vld [vmem:[#allocation2 + $0x18] sm:$0xff]
      %v450 = vld [vmem:[#allocation2 + $0x20] sm:$0xff]
      %v451 = vld [vmem:[#allocation2 + $0x28] sm:$0xff]
      %v452 = vld [vmem:[#allocation2 + $0x30] sm:$0xff]
      %v453 = vld [vmem:[#allocation2 + $0x38] sm:$0xff]
      %v454 = vld [vmem:[%s391] sm:$0x1]
      %v456 = vlaneseq
      %v457 = vshrl.u32 %v456, 7
      %v458 = vsub.s32 0, %v457
      %v459 = vrot.slane %v454, %v458
      %v461 = vmul.f32 %v446, %v459
      %v462 = vmul.f32 %v447, %v459
      %v463 = vmul.f32 %v448, %v459
      %v464 = vmul.f32 %v449, %v459
      %v465 = vmul.f32 %v450, %v459
      %v466 = vmul.f32 %v451, %v459
      %v467 = vmul.f32 %v452, %v459
      %v468 = vmul.f32 %v453, %v459
      %v469 = vld [vmem:[%s394] sm:$0x1]
      %v471 = vlaneseq
      %v472 = vshrl.u32 %v471, 7
      %v473 = vsub.s32 0, %v472
      %v474 = vrot.slane %v469, %v473
      %v476 = vadd.f32 %v461, %v474
      %v477 = vadd.f32 %v462, %v474
      %v478 = vadd.f32 %v463, %v474
      %v479 = vadd.f32 %v464, %v474
      %v480 = vadd.f32 %v465, %v474
      %v481 = vadd.f32 %v466, %v474
      %v482 = vadd.f32 %v467, %v474
      %v483 = vadd.f32 %v468, %v474
      %v484 = vmax.f32 %v476, 0.0
      %v485 = vmax.f32 %v477, 0.0
      %v486 = vmax.f32 %v478, 0.0
      %v487 = vmax.f32 %v479, 0.0
      %v488 = vmax.f32 %v480, 0.0
      %v489 = vmax.f32 %v481, 0.0
      %v490 = vmax.f32 %v482, 0.0
      %v491 = vmax.f32 %v483, 0.0
      %v492 = vpack.c.bf16 %v485, %v484
      %v493 = vpack.c.bf16 %v487, %v486
      %v494 = vpack.c.bf16 %v489, %v488
      %v495 = vpack.c.bf16 %v491, %v490
      %v496 = vld [vmem:[%s399] sm:$0xf]
      %v497 = vld [vmem:[%s399 + $0x4] sm:$0xf]
      %v498 = vld [vmem:[%s399 + $0x8] sm:$0xf]
      %v499 = vld [vmem:[%s399 + $0xc] sm:$0xf]
      %v500 = vld [vmem:[%s399 + $0x10] sm:$0xf]
      %v501 = vld [vmem:[%s399 + $0x14] sm:$0xf]
      %v502 = vld [vmem:[%s399 + $0x18] sm:$0xf]
      %v503 = vld [vmem:[%s399 + $0x1c] sm:$0xf]
      %v504 = vld [vmem:[%s399 + $0x20] sm:$0xf]
      %v505 = vld [vmem:[%s399 + $0x24] sm:$0xf]
      %v506 = vld [vmem:[%s399 + $0x28] sm:$0xf]
      %v507 = vld [vmem:[%s399 + $0x2c] sm:$0xf]
      %v508 = vld [vmem:[%s399 + $0x30] sm:$0xf]
      %v509 = vld [vmem:[%s399 + $0x34] sm:$0xf]
      %v510 = vld [vmem:[%s399 + $0x38] sm:$0xf]
      %v511 = vld [vmem:[%s399 + $0x3c] sm:$0xf]
      %v528 = vunpack.c.l.b16 %v496
      %v529 = vunpack.c.l.b16 %v497
      %v530 = vunpack.c.l.b16 %v498
      %v531 = vunpack.c.l.b16 %v499
      %v532 = vunpack.c.l.b16 %v500
      %v533 = vunpack.c.l.b16 %v501
      %v534 = vunpack.c.l.b16 %v502
      %v535 = vunpack.c.l.b16 %v503
      %v536 = vunpack.c.l.b16 %v504
      %v537 = vunpack.c.l.b16 %v505
      %v538 = vunpack.c.l.b16 %v506
      %v539 = vunpack.c.l.b16 %v507
      %v540 = vunpack.c.l.b16 %v508
      %v541 = vunpack.c.l.b16 %v509
      %v542 = vunpack.c.l.b16 %v510
      %v543 = vunpack.c.l.b16 %v511
      %v544 = vpack.c.b16 %v529, %v528
      %v545 = vpack.c.b16 %v531, %v530
      %v546 = vpack.c.b16 %v533, %v532
      %v547 = vpack.c.b16 %v535, %v534
      %v548 = vpack.c.b16 %v537, %v536
      %v549 = vpack.c.b16 %v539, %v538
      %v550 = vpack.c.b16 %v541, %v540
      %v551 = vpack.c.b16 %v543, %v542
      %560 = vmatprep.subr.bf16.mxu0 0
      %561 = vmatpush1.bf16.msra.mxu0 %v551
      %562 = vmatprep.subr.bf16.mxu0 0
      %563 = vmatpush1.bf16.msra.mxu0 %v550
      %564 = vmatprep.subr.bf16.mxu0 0
      %565 = vmatpush1.bf16.msra.mxu0 %v549
      %566 = vmatprep.subr.bf16.mxu0 0
      %567 = vmatpush1.bf16.msra.mxu0 %v548
      %568 = vmatprep.subr.bf16.mxu0 0
      %569 = vmatpush1.bf16.msra.mxu0 %v547
      %570 = vmatprep.subr.bf16.mxu0 0
      %571 = vmatpush1.bf16.msra.mxu0 %v546
      %572 = vmatprep.subr.bf16.mxu0 0
      %573 = vmatpush1.bf16.msra.mxu0 %v545
      %574 = vmatprep.subr.bf16.mxu0 0
      %575 = vmatpush1.bf16.msra.mxu0 %v544
      %576 = vmatprep.subr.bf16.mxu0 0
      %577 = vmatpush2.bf16.msra.mxu0 0
      %578 = vmatprep.subr.bf16.mxu0 0
      %579 = vmatpush2.bf16.msra.mxu0 0
      %580 = vmatprep.subr.bf16.mxu0 0
      %581 = vmatpush2.bf16.msra.mxu0 0
      %582 = vmatprep.subr.bf16.mxu0 0
      %583 = vmatpush2.bf16.msra.mxu0 0
      %584 = vmatprep.subr.bf16.mxu0 0
      %585 = vmatpush2.bf16.msra.mxu0 0
      %586 = vmatprep.subr.bf16.mxu0 0
      %587 = vmatpush2.bf16.msra.mxu0 0
      %588 = vmatprep.subr.bf16.mxu0 0
      %589 = vmatpush2.bf16.msra.mxu0 0
      %590 = vmatprep.subr.bf16.mxu0 0
      %591 = vmatpush2.bf16.msra.mxu0 0
      %592 = vmatprep.mubr.bf16.mxu0 0
      %593 = vmatmul.mubr.bf16.gmra.mxu0 %v492
      %v594 = vpop.f32.mrf.mxu0
      %v595 = vadd.f32 0.0, %v594
      %v596 = vpop.f32.mrf.mxu0
      %v597 = vpop.f32.mrf.mxu0
      %v598 = vadd.f32 0.0, %v597
      %v599 = vpop.f32.mrf.mxu0
      %600 = vmatprep.mubr.bf16.mxu0 0
      %601 = vmatmul.mubr.bf16.gmra.mxu0 %v493
      %v602 = vpop.f32.mrf.mxu0
      %v603 = vadd.f32 0.0, %v602
      %v604 = vpop.f32.mrf.mxu0
      %v605 = vpop.f32.mrf.mxu0
      %v606 = vadd.f32 0.0, %v605
      %v607 = vpop.f32.mrf.mxu0
      %608 = vmatprep.mubr.bf16.mxu0 0
      %609 = vmatmul.mubr.bf16.gmra.mxu0 %v494
      %v610 = vpop.f32.mrf.mxu0
      %v611 = vadd.f32 0.0, %v610
      %v612 = vpop.f32.mrf.mxu0
      %v613 = vpop.f32.mrf.mxu0
      %v614 = vadd.f32 0.0, %v613
      %v615 = vpop.f32.mrf.mxu0
      %616 = vmatprep.mubr.bf16.mxu0 0
      %617 = vmatmul.mubr.bf16.gmra.mxu0 %v495
      %v618 = vpop.f32.mrf.mxu0
      %v619 = vadd.f32 0.0, %v618
      %v620 = vpop.f32.mrf.mxu0
      %v621 = vpop.f32.mrf.mxu0
      %v622 = vadd.f32 0.0, %v621
      %v623 = vpop.f32.mrf.mxu0
      %624 = vdwg.mxu0
      %v625 = vld [vmem:[%s402] sm:$0x1]
      %v627 = vlaneseq
      %v628 = vshrl.u32 %v627, 7
      %v629 = vsub.s32 0, %v628
      %v630 = vrot.slane %v625, %v629
      %v632 = vmul.f32 %v595, %v630
      %v633 = vmul.f32 %v598, %v630
      %v634 = vmul.f32 %v603, %v630
      %v635 = vmul.f32 %v606, %v630
      %v636 = vmul.f32 %v611, %v630
      %v637 = vmul.f32 %v614, %v630
      %v638 = vmul.f32 %v619, %v630
      %v639 = vmul.f32 %v622, %v630
      %v640 = vld [vmem:[%s405] sm:$0x1]
      %v642 = vlaneseq
      %v643 = vshrl.u32 %v642, 7
      %v644 = vsub.s32 0, %v643
      %v645 = vrot.slane %v640, %v644
      %v647 = vadd.f32 %v632, %v645
      %v648 = vadd.f32 %v633, %v645
      %v649 = vadd.f32 %v634, %v645
      %v650 = vadd.f32 %v635, %v645
      %v651 = vadd.f32 %v636, %v645
      %v652 = vadd.f32 %v637, %v645
      %v653 = vadd.f32 %v638, %v645
      %v654 = vadd.f32 %v639, %v645
      %v655 = vmax.f32 %v647, 0.0
      %v656 = vmax.f32 %v648, 0.0
      %v657 = vmax.f32 %v649, 0.0
      %v658 = vmax.f32 %v650, 0.0
      %v659 = vmax.f32 %v651, 0.0
      %v660 = vmax.f32 %v652, 0.0
      %v661 = vmax.f32 %v653, 0.0
      %v662 = vmax.f32 %v654, 0.0
      %v663 = vrot.slane %v655, 7
      %v664 = vrot.slane %v656, 7
      %v665 = vrot.slane %v657, 7
      %v666 = vrot.slane %v658, 7
      %v667 = vrot.slane %v659, 7
      %v668 = vrot.slane %v660, 7
      %v669 = vrot.slane %v661, 7
      %v670 = vrot.slane %v662, 7
      %v671 = vlaneseq
      %v672 = vshrl.u32 %v671, 7
      %vm673 = vcmp.lt.s32.totalorder %v672, 1
      %v674 = vsel %vm673, %v669, %v670
      %v675 = vsel %vm673, %v668, %v669
      %v676 = vsel %vm673, %v667, %v668
      %v677 = vsel %vm673, %v666, %v667
      %v678 = vsel %vm673, %v665, %v666
      %v679 = vsel %vm673, %v664, %v665
      %v680 = vsel %vm673, %v663, %v664
      %v681 = vsel %vm673, %v670, %v663
      %v682 = vld [vmem:[%s7] sm:$0xff]
      %v683 = vld [vmem:[%s7 + $0x8] sm:$0xff]
      %v684 = vld [vmem:[%s7 + $0x10] sm:$0xff]
      %v685 = vld [vmem:[%s7 + $0x18] sm:$0xff]
      %v686 = vld [vmem:[%s7 + $0x20] sm:$0xff]
      %v687 = vld [vmem:[%s7 + $0x28] sm:$0xff]
      %v688 = vld [vmem:[%s7 + $0x30] sm:$0xff]
      %v689 = vld [vmem:[%s7 + $0x38] sm:$0xff]
      %691 = vset.pattern.permute.xlu0 0
      %692 = vperm.xlu0 %691, %v682
      %v693 = vpop.permute.xlu0 %692
      %696 = vset.pattern.permute.xlu0 0
      %697 = vperm.xlu0 %696, %v683
      %v698 = vpop.permute.xlu0 %697
      %701 = vset.pattern.permute.xlu0 0
      %702 = vperm.xlu0 %701, %v684
      %v703 = vpop.permute.xlu0 %702
      %706 = vset.pattern.permute.xlu0 0
      %707 = vperm.xlu0 %706, %v685
      %v708 = vpop.permute.xlu0 %707
      %711 = vset.pattern.permute.xlu0 0
      %712 = vperm.xlu0 %711, %v686
      %v713 = vpop.permute.xlu0 %712
      %716 = vset.pattern.permute.xlu0 0
      %717 = vperm.xlu0 %716, %v687
      %v718 = vpop.permute.xlu0 %717
      %721 = vset.pattern.permute.xlu0 0
      %722 = vperm.xlu0 %721, %v688
      %v723 = vpop.permute.xlu0 %722
      %726 = vset.pattern.permute.xlu0 0
      %727 = vperm.xlu0 %726, %v689
      %v728 = vpop.permute.xlu0 %727
      %v730 = vmul.f32 %v674, %v693
      %v731 = vmul.f32 %v681, %v698
      %v732 = vmul.f32 %v680, %v703
      %v733 = vmul.f32 %v679, %v708
      %v734 = vmul.f32 %v678, %v713
      %v735 = vmul.f32 %v677, %v718
      %v736 = vmul.f32 %v676, %v723
      %v737 = vmul.f32 %v675, %v728
      %s738 = scalar_lea.vmem %s7, 64
      %v739 = vld [vmem:[%s738] sm:$0xff]
      %v740 = vld [vmem:[%s738 + $0x8] sm:$0xff]
      %v741 = vld [vmem:[%s738 + $0x10] sm:$0xff]
      %v742 = vld [vmem:[%s738 + $0x18] sm:$0xff]
      %v743 = vld [vmem:[%s738 + $0x20] sm:$0xff]
      %v744 = vld [vmem:[%s738 + $0x28] sm:$0xff]
      %v745 = vld [vmem:[%s738 + $0x30] sm:$0xff]
      %v746 = vld [vmem:[%s738 + $0x38] sm:$0xff]
      %748 = vset.pattern.permute.xlu0 0
      %749 = vperm.xlu0 %748, %v739
      %v750 = vpop.permute.xlu0 %749
      %753 = vset.pattern.permute.xlu0 0
      %754 = vperm.xlu0 %753, %v740
      %v755 = vpop.permute.xlu0 %754
      %758 = vset.pattern.permute.xlu0 0
      %759 = vperm.xlu0 %758, %v741
      %v760 = vpop.permute.xlu0 %759
      %763 = vset.pattern.permute.xlu0 0
      %764 = vperm.xlu0 %763, %v742
      %v765 = vpop.permute.xlu0 %764
      %768 = vset.pattern.permute.xlu0 0
      %769 = vperm.xlu0 %768, %v743
      %v770 = vpop.permute.xlu0 %769
      %773 = vset.pattern.permute.xlu0 0
      %774 = vperm.xlu0 %773, %v744
      %v775 = vpop.permute.xlu0 %774
      %778 = vset.pattern.permute.xlu0 0
      %779 = vperm.xlu0 %778, %v745
      %v780 = vpop.permute.xlu0 %779
      %783 = vset.pattern.permute.xlu0 0
      %784 = vperm.xlu0 %783, %v746
      %v785 = vpop.permute.xlu0 %784
      %v787 = vmul.f32 %v662, %v750
      %v788 = vmul.f32 %v655, %v755
      %v789 = vmul.f32 %v656, %v760
      %v790 = vmul.f32 %v657, %v765
      %v791 = vmul.f32 %v658, %v770
      %v792 = vmul.f32 %v659, %v775
      %v793 = vmul.f32 %v660, %v780
      %v794 = vmul.f32 %v661, %v785
      %795 = vrot.lane.b32.xlu0 %v787, 32
      %v796 = vpop.permute.xlu0 %795
      %797 = vrot.lane.b32.xlu0 %v788, 32
      %v798 = vpop.permute.xlu0 %797
      %799 = vrot.lane.b32.xlu0 %v789, 32
      %v800 = vpop.permute.xlu0 %799
      %801 = vrot.lane.b32.xlu0 %v790, 32
      %v802 = vpop.permute.xlu0 %801
      %803 = vrot.lane.b32.xlu0 %v791, 32
      %v804 = vpop.permute.xlu0 %803
      %805 = vrot.lane.b32.xlu0 %v792, 32
      %v806 = vpop.permute.xlu0 %805
      %807 = vrot.lane.b32.xlu0 %v793, 32
      %v808 = vpop.permute.xlu0 %807
      %809 = vrot.lane.b32.xlu0 %v794, 32
      %v810 = vpop.permute.xlu0 %809
      %v811 = vadd.f32 %v730, %v796
      %v812 = vadd.f32 %v731, %v798
      %v813 = vadd.f32 %v732, %v800
      %v814 = vadd.f32 %v733, %v802
      %v815 = vadd.f32 %v734, %v804
      %v816 = vadd.f32 %v735, %v806
      %v817 = vadd.f32 %v736, %v808
      %v818 = vadd.f32 %v737, %v810
      %v819 = vrot.slane %v655, 1
      %v820 = vrot.slane %v656, 1
      %v821 = vrot.slane %v657, 1
      %v822 = vrot.slane %v658, 1
      %v823 = vrot.slane %v659, 1
      %v824 = vrot.slane %v660, 1
      %v825 = vrot.slane %v661, 1
      %v826 = vrot.slane %v662, 1
      %vm827 = vcmp.lt.s32.totalorder %v672, 7
      %v828 = vsel %vm827, %v825, %v826
      %v829 = vsel %vm827, %v824, %v825
      %v830 = vsel %vm827, %v823, %v824
      %v831 = vsel %vm827, %v822, %v823
      %v832 = vsel %vm827, %v821, %v822
      %v833 = vsel %vm827, %v820, %v821
      %v834 = vsel %vm827, %v819, %v820
      %v835 = vsel %vm827, %v826, %v819
      %s836 = scalar_lea.vmem %s7, 128
      %v837 = vld [vmem:[%s836] sm:$0xff]
      %v838 = vld [vmem:[%s836 + $0x8] sm:$0xff]
      %v839 = vld [vmem:[%s836 + $0x10] sm:$0xff]
      %v840 = vld [vmem:[%s836 + $0x18] sm:$0xff]
      %v841 = vld [vmem:[%s836 + $0x20] sm:$0xff]
      %v842 = vld [vmem:[%s836 + $0x28] sm:$0xff]
      %v843 = vld [vmem:[%s836 + $0x30] sm:$0xff]
      %v844 = vld [vmem:[%s836 + $0x38] sm:$0xff]
      %846 = vset.pattern.permute.xlu0 0
      %847 = vperm.xlu0 %846, %v837
      %v848 = vpop.permute.xlu0 %847
      %851 = vset.pattern.permute.xlu0 0
      %852 = vperm.xlu0 %851, %v838
      %v853 = vpop.permute.xlu0 %852
      %856 = vset.pattern.permute.xlu0 0
      %857 = vperm.xlu0 %856, %v839
      %v858 = vpop.permute.xlu0 %857
      %861 = vset.pattern.permute.xlu0 0
      %862 = vperm.xlu0 %861, %v840
      %v863 = vpop.permute.xlu0 %862
      %866 = vset.pattern.permute.xlu0 0
      %867 = vperm.xlu0 %866, %v841
      %v868 = vpop.permute.xlu0 %867
      %871 = vset.pattern.permute.xlu0 0
      %872 = vperm.xlu0 %871, %v842
      %v873 = vpop.permute.xlu0 %872
      %876 = vset.pattern.permute.xlu0 0
      %877 = vperm.xlu0 %876, %v843
      %v878 = vpop.permute.xlu0 %877
      %881 = vset.pattern.permute.xlu0 0
      %882 = vperm.xlu0 %881, %v844
      %v883 = vpop.permute.xlu0 %882
      %v885 = vmul.f32 %v835, %v848
      %v886 = vmul.f32 %v834, %v853
      %v887 = vmul.f32 %v833, %v858
      %v888 = vmul.f32 %v832, %v863
      %v889 = vmul.f32 %v831, %v868
      %v890 = vmul.f32 %v830, %v873
      %v891 = vmul.f32 %v829, %v878
      %v892 = vmul.f32 %v828, %v883
      %893 = vrot.lane.b32.xlu0 %v885, 64
      %v894 = vpop.permute.xlu0 %893
      %895 = vrot.lane.b32.xlu0 %v886, 64
      %v896 = vpop.permute.xlu0 %895
      %897 = vrot.lane.b32.xlu0 %v887, 64
      %v898 = vpop.permute.xlu0 %897
      %899 = vrot.lane.b32.xlu0 %v888, 64
      %v900 = vpop.permute.xlu0 %899
      %901 = vrot.lane.b32.xlu0 %v889, 64
      %v902 = vpop.permute.xlu0 %901
      %903 = vrot.lane.b32.xlu0 %v890, 64
      %v904 = vpop.permute.xlu0 %903
      %905 = vrot.lane.b32.xlu0 %v891, 64
      %v906 = vpop.permute.xlu0 %905
      %907 = vrot.lane.b32.xlu0 %v892, 64
      %v908 = vpop.permute.xlu0 %907
      %v909 = vadd.f32 %v811, %v894
      %v910 = vadd.f32 %v812, %v896
      %v911 = vadd.f32 %v813, %v898
      %v912 = vadd.f32 %v814, %v900
      %v913 = vadd.f32 %v815, %v902
      %v914 = vadd.f32 %v816, %v904
      %v915 = vadd.f32 %v817, %v906
      %v916 = vadd.f32 %v818, %v908
      %s917 = scalar_lea.vmem %s7, 192
      %v918 = vld [vmem:[%s917] sm:$0xff]
      %v919 = vld [vmem:[%s917 + $0x8] sm:$0xff]
      %v920 = vld [vmem:[%s917 + $0x10] sm:$0xff]
      %v921 = vld [vmem:[%s917 + $0x18] sm:$0xff]
      %v922 = vld [vmem:[%s917 + $0x20] sm:$0xff]
      %v923 = vld [vmem:[%s917 + $0x28] sm:$0xff]
      %v924 = vld [vmem:[%s917 + $0x30] sm:$0xff]
      %v925 = vld [vmem:[%s917 + $0x38] sm:$0xff]
      %927 = vset.pattern.permute.xlu0 0
      %928 = vperm.xlu0 %927, %v918
      %v929 = vpop.permute.xlu0 %928
      %932 = vset.pattern.permute.xlu0 0
      %933 = vperm.xlu0 %932, %v919
      %v934 = vpop.permute.xlu0 %933
      %937 = vset.pattern.permute.xlu0 0
      %938 = vperm.xlu0 %937, %v920
      %v939 = vpop.permute.xlu0 %938
      %942 = vset.pattern.permute.xlu0 0
      %943 = vperm.xlu0 %942, %v921
      %v944 = vpop.permute.xlu0 %943
      %947 = vset.pattern.permute.xlu0 0
      %948 = vperm.xlu0 %947, %v922
      %v949 = vpop.permute.xlu0 %948
      %952 = vset.pattern.permute.xlu0 0
      %953 = vperm.xlu0 %952, %v923
      %v954 = vpop.permute.xlu0 %953
      %957 = vset.pattern.permute.xlu0 0
      %958 = vperm.xlu0 %957, %v924
      %v959 = vpop.permute.xlu0 %958
      %962 = vset.pattern.permute.xlu0 0
      %963 = vperm.xlu0 %962, %v925
      %v964 = vpop.permute.xlu0 %963
      %v966 = vmul.f32 %v681, %v929
      %v967 = vmul.f32 %v680, %v934
      %v968 = vmul.f32 %v679, %v939
      %v969 = vmul.f32 %v678, %v944
      %v970 = vmul.f32 %v677, %v949
      %v971 = vmul.f32 %v676, %v954
      %v972 = vmul.f32 %v675, %v959
      %v973 = vmul.f32 %v674, %v964
      %974 = vrot.lane.b32.xlu0 %v966, 96
      %v975 = vpop.permute.xlu0 %974
      %976 = vrot.lane.b32.xlu0 %v967, 96
      %v977 = vpop.permute.xlu0 %976
      %978 = vrot.lane.b32.xlu0 %v968, 96
      %v979 = vpop.permute.xlu0 %978
      %980 = vrot.lane.b32.xlu0 %v969, 96
      %v981 = vpop.permute.xlu0 %980
      %982 = vrot.lane.b32.xlu0 %v970, 96
      %v983 = vpop.permute.xlu0 %982
      %984 = vrot.lane.b32.xlu0 %v971, 96
      %v985 = vpop.permute.xlu0 %984
      %986 = vrot.lane.b32.xlu0 %v972, 96
      %v987 = vpop.permute.xlu0 %986
      %988 = vrot.lane.b32.xlu0 %v973, 96
      %v989 = vpop.permute.xlu0 %988
      %v990 = vadd.f32 %v909, %v975
      %v991 = vadd.f32 %v910, %v977
      %v992 = vadd.f32 %v911, %v979
      %v993 = vadd.f32 %v912, %v981
      %v994 = vadd.f32 %v913, %v983
      %v995 = vadd.f32 %v914, %v985
      %v996 = vadd.f32 %v915, %v987
      %v997 = vadd.f32 %v916, %v989
      %s998 = scalar_lea.vmem %s7, 320
      %v999 = vld [vmem:[%s998] sm:$0xff]
      %v1000 = vld [vmem:[%s998 + $0x8] sm:$0xff]
      %v1001 = vld [vmem:[%s998 + $0x10] sm:$0xff]
      %v1002 = vld [vmem:[%s998 + $0x18] sm:$0xff]
      %v1003 = vld [vmem:[%s998 + $0x20] sm:$0xff]
      %v1004 = vld [vmem:[%s998 + $0x28] sm:$0xff]
      %v1005 = vld [vmem:[%s998 + $0x30] sm:$0xff]
      %v1006 = vld [vmem:[%s998 + $0x38] sm:$0xff]
      %1008 = vset.pattern.permute.xlu0 0
      %1009 = vperm.xlu0 %1008, %v999
      %v1010 = vpop.permute.xlu0 %1009
      %1013 = vset.pattern.permute.xlu0 0
      %1014 = vperm.xlu0 %1013, %v1000
      %v1015 = vpop.permute.xlu0 %1014
      %1018 = vset.pattern.permute.xlu0 0
      %1019 = vperm.xlu0 %1018, %v1001
      %v1020 = vpop.permute.xlu0 %1019
      %1023 = vset.pattern.permute.xlu0 0
      %1024 = vperm.xlu0 %1023, %v1002
      %v1025 = vpop.permute.xlu0 %1024
      %1028 = vset.pattern.permute.xlu0 0
      %1029 = vperm.xlu0 %1028, %v1003
      %v1030 = vpop.permute.xlu0 %1029
      %1033 = vset.pattern.permute.xlu0 0
      %1034 = vperm.xlu0 %1033, %v1004
      %v1035 = vpop.permute.xlu0 %1034
      %1038 = vset.pattern.permute.xlu0 0
      %1039 = vperm.xlu0 %1038, %v1005
      %v1040 = vpop.permute.xlu0 %1039
      %1043 = vset.pattern.permute.xlu0 0
      %1044 = vperm.xlu0 %1043, %v1006
      %v1045 = vpop.permute.xlu0 %1044
      %v1047 = vmul.f32 %v834, %v1010
      %v1048 = vmul.f32 %v833, %v1015
      %v1049 = vmul.f32 %v832, %v1020
      %v1050 = vmul.f32 %v831, %v1025
      %v1051 = vmul.f32 %v830, %v1030
      %v1052 = vmul.f32 %v829, %v1035
      %v1053 = vmul.f32 %v828, %v1040
      %v1054 = vmul.f32 %v835, %v1045
      %1055 = vrot.lane.b32.xlu0 %v1047, 32
      %v1056 = vpop.permute.xlu0 %1055
      %1057 = vrot.lane.b32.xlu0 %v1048, 32
      %v1058 = vpop.permute.xlu0 %1057
      %1059 = vrot.lane.b32.xlu0 %v1049, 32
      %v1060 = vpop.permute.xlu0 %1059
      %1061 = vrot.lane.b32.xlu0 %v1050, 32
      %v1062 = vpop.permute.xlu0 %1061
      %1063 = vrot.lane.b32.xlu0 %v1051, 32
      %v1064 = vpop.permute.xlu0 %1063
      %1065 = vrot.lane.b32.xlu0 %v1052, 32
      %v1066 = vpop.permute.xlu0 %1065
      %1067 = vrot.lane.b32.xlu0 %v1053, 32
      %v1068 = vpop.permute.xlu0 %1067
      %1069 = vrot.lane.b32.xlu0 %v1054, 32
      %v1070 = vpop.permute.xlu0 %1069
      %v1071 = vadd.f32 %v655, %v1056
      %v1072 = vadd.f32 %v656, %v1058
      %v1073 = vadd.f32 %v657, %v1060
      %v1074 = vadd.f32 %v658, %v1062
      %v1075 = vadd.f32 %v659, %v1064
      %v1076 = vadd.f32 %v660, %v1066
      %v1077 = vadd.f32 %v661, %v1068
      %v1078 = vadd.f32 %v662, %v1070
      %s1079 = scalar_lea.vmem %s7, 384
      %v1080 = vld [vmem:[%s1079] sm:$0xff]
      %v1081 = vld [vmem:[%s1079 + $0x8] sm:$0xff]
      %v1082 = vld [vmem:[%s1079 + $0x10] sm:$0xff]
      %v1083 = vld [vmem:[%s1079 + $0x18] sm:$0xff]
      %v1084 = vld [vmem:[%s1079 + $0x20] sm:$0xff]
      %v1085 = vld [vmem:[%s1079 + $0x28] sm:$0xff]
      %v1086 = vld [vmem:[%s1079 + $0x30] sm:$0xff]
      %v1087 = vld [vmem:[%s1079 + $0x38] sm:$0xff]
      %1089 = vset.pattern.permute.xlu0 0
      %1090 = vperm.xlu0 %1089, %v1080
      %v1091 = vpop.permute.xlu0 %1090
      %1094 = vset.pattern.permute.xlu0 0
      %1095 = vperm.xlu0 %1094, %v1081
      %v1096 = vpop.permute.xlu0 %1095
      %1099 = vset.pattern.permute.xlu0 0
      %1100 = vperm.xlu0 %1099, %v1082
      %v1101 = vpop.permute.xlu0 %1100
      %1104 = vset.pattern.permute.xlu0 0
      %1105 = vperm.xlu0 %1104, %v1083
      %v1106 = vpop.permute.xlu0 %1105
      %1109 = vset.pattern.permute.xlu0 0
      %1110 = vperm.xlu0 %1109, %v1084
      %v1111 = vpop.permute.xlu0 %1110
      %1114 = vset.pattern.permute.xlu0 0
      %1115 = vperm.xlu0 %1114, %v1085
      %v1116 = vpop.permute.xlu0 %1115
      %1119 = vset.pattern.permute.xlu0 0
      %1120 = vperm.xlu0 %1119, %v1086
      %v1121 = vpop.permute.xlu0 %1120
      %1124 = vset.pattern.permute.xlu0 0
      %1125 = vperm.xlu0 %1124, %v1087
      %v1126 = vpop.permute.xlu0 %1125
      %v1128 = vmul.f32 %v680, %v1091
      %v1129 = vmul.f32 %v679, %v1096
      %v1130 = vmul.f32 %v678, %v1101
      %v1131 = vmul.f32 %v677, %v1106
      %v1132 = vmul.f32 %v676, %v1111
      %v1133 = vmul.f32 %v675, %v1116
      %v1134 = vmul.f32 %v674, %v1121
      %v1135 = vmul.f32 %v681, %v1126
      %1136 = vrot.lane.b32.xlu0 %v1128, 64
      %v1137 = vpop.permute.xlu0 %1136
      %1138 = vrot.lane.b32.xlu0 %v1129, 64
      %v1139 = vpop.permute.xlu0 %1138
      %1140 = vrot.lane.b32.xlu0 %v1130, 64
      %v1141 = vpop.permute.xlu0 %1140
      %1142 = vrot.lane.b32.xlu0 %v1131, 64
      %v1143 = vpop.permute.xlu0 %1142
      %1144 = vrot.lane.b32.xlu0 %v1132, 64
      %v1145 = vpop.permute.xlu0 %1144
      %1146 = vrot.lane.b32.xlu0 %v1133, 64
      %v1147 = vpop.permute.xlu0 %1146
      %1148 = vrot.lane.b32.xlu0 %v1134, 64
      %v1149 = vpop.permute.xlu0 %1148
      %1150 = vrot.lane.b32.xlu0 %v1135, 64
      %v1151 = vpop.permute.xlu0 %1150
      %v1152 = vadd.f32 %v1071, %v1137
      %v1153 = vadd.f32 %v1072, %v1139
      %v1154 = vadd.f32 %v1073, %v1141
      %v1155 = vadd.f32 %v1074, %v1143
      %v1156 = vadd.f32 %v1075, %v1145
      %v1157 = vadd.f32 %v1076, %v1147
      %v1158 = vadd.f32 %v1077, %v1149
      %v1159 = vadd.f32 %v1078, %v1151
      %s1160 = scalar_lea.vmem %s7, 448
      %v1161 = vld [vmem:[%s1160] sm:$0xff]
      %v1162 = vld [vmem:[%s1160 + $0x8] sm:$0xff]
      %v1163 = vld [vmem:[%s1160 + $0x10] sm:$0xff]
      %v1164 = vld [vmem:[%s1160 + $0x18] sm:$0xff]
      %v1165 = vld [vmem:[%s1160 + $0x20] sm:$0xff]
      %v1166 = vld [vmem:[%s1160 + $0x28] sm:$0xff]
      %v1167 = vld [vmem:[%s1160 + $0x30] sm:$0xff]
      %v1168 = vld [vmem:[%s1160 + $0x38] sm:$0xff]
      %1170 = vset.pattern.permute.xlu0 0
      %1171 = vperm.xlu0 %1170, %v1161
      %v1172 = vpop.permute.xlu0 %1171
      %1175 = vset.pattern.permute.xlu0 0
      %1176 = vperm.xlu0 %1175, %v1162
      %v1177 = vpop.permute.xlu0 %1176
      %1180 = vset.pattern.permute.xlu0 0
      %1181 = vperm.xlu0 %1180, %v1163
      %v1182 = vpop.permute.xlu0 %1181
      %1185 = vset.pattern.permute.xlu0 0
      %1186 = vperm.xlu0 %1185, %v1164
      %v1187 = vpop.permute.xlu0 %1186
      %1190 = vset.pattern.permute.xlu0 0
      %1191 = vperm.xlu0 %1190, %v1165
      %v1192 = vpop.permute.xlu0 %1191
      %1195 = vset.pattern.permute.xlu0 0
      %1196 = vperm.xlu0 %1195, %v1166
      %v1197 = vpop.permute.xlu0 %1196
      %1200 = vset.pattern.permute.xlu0 0
      %1201 = vperm.xlu0 %1200, %v1167
      %v1202 = vpop.permute.xlu0 %1201
      %1205 = vset.pattern.permute.xlu0 0
      %1206 = vperm.xlu0 %1205, %v1168
      %v1207 = vpop.permute.xlu0 %1206
      %v1209 = vmul.f32 %v656, %v1172
      %v1210 = vmul.f32 %v657, %v1177
      %v1211 = vmul.f32 %v658, %v1182
      %v1212 = vmul.f32 %v659, %v1187
      %v1213 = vmul.f32 %v660, %v1192
      %v1214 = vmul.f32 %v661, %v1197
      %v1215 = vmul.f32 %v662, %v1202
      %v1216 = vmul.f32 %v655, %v1207
      %1217 = vrot.lane.b32.xlu0 %v1209, 96
      %v1218 = vpop.permute.xlu0 %1217
      %1219 = vrot.lane.b32.xlu0 %v1210, 96
      %v1220 = vpop.permute.xlu0 %1219
      %1221 = vrot.lane.b32.xlu0 %v1211, 96
      %v1222 = vpop.permute.xlu0 %1221
      %1223 = vrot.lane.b32.xlu0 %v1212, 96
      %v1224 = vpop.permute.xlu0 %1223
      %1225 = vrot.lane.b32.xlu0 %v1213, 96
      %v1226 = vpop.permute.xlu0 %1225
      %1227 = vrot.lane.b32.xlu0 %v1214, 96
      %v1228 = vpop.permute.xlu0 %1227
      %1229 = vrot.lane.b32.xlu0 %v1215, 96
      %v1230 = vpop.permute.xlu0 %1229
      %1231 = vrot.lane.b32.xlu0 %v1216, 96
      %v1232 = vpop.permute.xlu0 %1231
      %v1233 = vadd.f32 %v1152, %v1218
      %v1234 = vadd.f32 %v1153, %v1220
      %v1235 = vadd.f32 %v1154, %v1222
      %v1236 = vadd.f32 %v1155, %v1224
      %v1237 = vadd.f32 %v1156, %v1226
      %v1238 = vadd.f32 %v1157, %v1228
      %v1239 = vadd.f32 %v1158, %v1230
      %v1240 = vadd.f32 %v1159, %v1232
      %s1241 = scalar_lea.vmem %s7, 512
      %v1242 = vld [vmem:[%s1241] sm:$0xff]
      %v1243 = vld [vmem:[%s1241 + $0x8] sm:$0xff]
      %v1244 = vld [vmem:[%s1241 + $0x10] sm:$0xff]
      %v1245 = vld [vmem:[%s1241 + $0x18] sm:$0xff]
      %v1246 = vld [vmem:[%s1241 + $0x20] sm:$0xff]
      %v1247 = vld [vmem:[%s1241 + $0x28] sm:$0xff]
      %v1248 = vld [vmem:[%s1241 + $0x30] sm:$0xff]
      %v1249 = vld [vmem:[%s1241 + $0x38] sm:$0xff]
      %1251 = vset.pattern.permute.xlu0 0
      %1252 = vperm.xlu0 %1251, %v1242
      %v1253 = vpop.permute.xlu0 %1252
      %1256 = vset.pattern.permute.xlu0 0
      %1257 = vperm.xlu0 %1256, %v1243
      %v1258 = vpop.permute.xlu0 %1257
      %1261 = vset.pattern.permute.xlu0 0
      %1262 = vperm.xlu0 %1261, %v1244
      %v1263 = vpop.permute.xlu0 %1262
      %1266 = vset.pattern.permute.xlu0 0
      %1267 = vperm.xlu0 %1266, %v1245
      %v1268 = vpop.permute.xlu0 %1267
      %1271 = vset.pattern.permute.xlu0 0
      %1272 = vperm.xlu0 %1271, %v1246
      %v1273 = vpop.permute.xlu0 %1272
      %1276 = vset.pattern.permute.xlu0 0
      %1277 = vperm.xlu0 %1276, %v1247
      %v1278 = vpop.permute.xlu0 %1277
      %1281 = vset.pattern.permute.xlu0 0
      %1282 = vperm.xlu0 %1281, %v1248
      %v1283 = vpop.permute.xlu0 %1282
      %1286 = vset.pattern.permute.xlu0 0
      %1287 = vperm.xlu0 %1286, %v1249
      %v1288 = vpop.permute.xlu0 %1287
      %v1290 = vmul.f32 %v833, %v1253
      %v1291 = vmul.f32 %v832, %v1258
      %v1292 = vmul.f32 %v831, %v1263
      %v1293 = vmul.f32 %v830, %v1268
      %v1294 = vmul.f32 %v829, %v1273
      %v1295 = vmul.f32 %v828, %v1278
      %v1296 = vmul.f32 %v835, %v1283
      %v1297 = vmul.f32 %v834, %v1288
      %v1298 = vpack.c.bf16 %v991, %v990
      %v1299 = vpack.c.bf16 %v1234, %v1233
      %v1300 = vpack.c.bf16 %v1291, %v1290
      %v1301 = vpack.c.bf16 %v993, %v992
      %v1302 = vpack.c.bf16 %v1236, %v1235
      %v1303 = vpack.c.bf16 %v1293, %v1292
      %v1304 = vpack.c.bf16 %v995, %v994
      %v1305 = vpack.c.bf16 %v1238, %v1237
      %v1306 = vpack.c.bf16 %v1295, %v1294
      %v1307 = vpack.c.bf16 %v997, %v996
      %v1308 = vpack.c.bf16 %v1240, %v1239
      %v1309 = vpack.c.bf16 %v1297, %v1296
      %v1310 = vld [vmem:[%s410] sm:$0xf]
      %v1311 = vld [vmem:[%s410 + $0x4] sm:$0xf]
      %v1312 = vld [vmem:[%s410 + $0x8] sm:$0xf]
      %v1313 = vld [vmem:[%s410 + $0xc] sm:$0xf]
      %v1314 = vld [vmem:[%s410 + $0x10] sm:$0xf]
      %v1315 = vld [vmem:[%s410 + $0x14] sm:$0xf]
      %v1316 = vld [vmem:[%s410 + $0x18] sm:$0xf]
      %v1317 = vld [vmem:[%s410 + $0x1c] sm:$0xf]
      %v1318 = vld [vmem:[%s410 + $0x20] sm:$0xf]
      %v1319 = vld [vmem:[%s410 + $0x24] sm:$0xf]
      %v1320 = vld [vmem:[%s410 + $0x28] sm:$0xf]
      %v1321 = vld [vmem:[%s410 + $0x2c] sm:$0xf]
      %v1322 = vld [vmem:[%s410 + $0x30] sm:$0xf]
      %v1323 = vld [vmem:[%s410 + $0x34] sm:$0xf]
      %v1324 = vld [vmem:[%s410 + $0x38] sm:$0xf]
      %v1325 = vld [vmem:[%s410 + $0x3c] sm:$0xf]
      %v1326 = vld [vmem:[%s410 + $0x40] sm:$0xf]
      %v1327 = vld [vmem:[%s410 + $0x44] sm:$0xf]
      %v1328 = vld [vmem:[%s410 + $0x48] sm:$0xf]
      %v1329 = vld [vmem:[%s410 + $0x4c] sm:$0xf]
      %v1330 = vld [vmem:[%s410 + $0x50] sm:$0xf]
      %v1331 = vld [vmem:[%s410 + $0x54] sm:$0xf]
      %v1332 = vld [vmem:[%s410 + $0x58] sm:$0xf]
      %v1333 = vld [vmem:[%s410 + $0x5c] sm:$0xf]
      %v1334 = vld [vmem:[%s410 + $0x60] sm:$0xf]
      %v1335 = vld [vmem:[%s410 + $0x64] sm:$0xf]
      %v1336 = vld [vmem:[%s410 + $0x68] sm:$0xf]
      %v1337 = vld [vmem:[%s410 + $0x6c] sm:$0xf]
      %v1338 = vld [vmem:[%s410 + $0x70] sm:$0xf]
      %v1339 = vld [vmem:[%s410 + $0x74] sm:$0xf]
      %v1340 = vld [vmem:[%s410 + $0x78] sm:$0xf]
      %v1341 = vld [vmem:[%s410 + $0x7c] sm:$0xf]
      %v1342 = vld [vmem:[%s410 + $0x80] sm:$0xf]
      %v1343 = vld [vmem:[%s410 + $0x84] sm:$0xf]
      %v1344 = vld [vmem:[%s410 + $0x88] sm:$0xf]
      %v1345 = vld [vmem:[%s410 + $0x8c] sm:$0xf]
      %v1346 = vld [vmem:[%s410 + $0x90] sm:$0xf]
      %v1347 = vld [vmem:[%s410 + $0x94] sm:$0xf]
      %v1348 = vld [vmem:[%s410 + $0x98] sm:$0xf]
      %v1349 = vld [vmem:[%s410 + $0x9c] sm:$0xf]
      %v1350 = vld [vmem:[%s410 + $0xa0] sm:$0xf]
      %v1351 = vld [vmem:[%s410 + $0xa4] sm:$0xf]
      %v1352 = vld [vmem:[%s410 + $0xa8] sm:$0xf]
      %v1353 = vld [vmem:[%s410 + $0xac] sm:$0xf]
      %v1354 = vld [vmem:[%s410 + $0xb0] sm:$0xf]
      %v1355 = vld [vmem:[%s410 + $0xb4] sm:$0xf]
      %v1356 = vld [vmem:[%s410 + $0xb8] sm:$0xf]
      %v1357 = vld [vmem:[%s410 + $0xbc] sm:$0xf]
      %v1406 = vunpack.c.l.b16 %v1310
      %v1407 = vunpack.c.l.b16 %v1311
      %v1408 = vunpack.c.l.b16 %v1312
      %v1409 = vunpack.c.l.b16 %v1313
      %v1410 = vunpack.c.l.b16 %v1314
      %v1411 = vunpack.c.l.b16 %v1315
      %v1412 = vunpack.c.l.b16 %v1316
      %v1413 = vunpack.c.l.b16 %v1317
      %v1414 = vunpack.c.l.b16 %v1318
      %v1415 = vunpack.c.l.b16 %v1319
      %v1416 = vunpack.c.l.b16 %v1320
      %v1417 = vunpack.c.l.b16 %v1321
      %v1418 = vunpack.c.l.b16 %v1322
      %v1419 = vunpack.c.l.b16 %v1323
      %v1420 = vunpack.c.l.b16 %v1324
      %v1421 = vunpack.c.l.b16 %v1325
      %v1422 = vunpack.c.l.b16 %v1326
      %v1423 = vunpack.c.l.b16 %v1327
      %v1424 = vunpack.c.l.b16 %v1328
      %v1425 = vunpack.c.l.b16 %v1329
      %v1426 = vunpack.c.l.b16 %v1330
      %v1427 = vunpack.c.l.b16 %v1331
      %v1428 = vunpack.c.l.b16 %v1332
      %v1429 = vunpack.c.l.b16 %v1333
      %v1430 = vunpack.c.l.b16 %v1334
      %v1431 = vunpack.c.l.b16 %v1335
      %v1432 = vunpack.c.l.b16 %v1336
      %v1433 = vunpack.c.l.b16 %v1337
      %v1434 = vunpack.c.l.b16 %v1338
      %v1435 = vunpack.c.l.b16 %v1339
      %v1436 = vunpack.c.l.b16 %v1340
      %v1437 = vunpack.c.l.b16 %v1341
      %v1438 = vunpack.c.l.b16 %v1342
      %v1439 = vunpack.c.l.b16 %v1343
      %v1440 = vunpack.c.l.b16 %v1344
      %v1441 = vunpack.c.l.b16 %v1345
      %v1442 = vunpack.c.l.b16 %v1346
      %v1443 = vunpack.c.l.b16 %v1347
      %v1444 = vunpack.c.l.b16 %v1348
      %v1445 = vunpack.c.l.b16 %v1349
      %v1446 = vunpack.c.l.b16 %v1350
      %v1447 = vunpack.c.l.b16 %v1351
      %v1448 = vunpack.c.l.b16 %v1352
      %v1449 = vunpack.c.l.b16 %v1353
      %v1450 = vunpack.c.l.b16 %v1354
      %v1451 = vunpack.c.l.b16 %v1355
      %v1452 = vunpack.c.l.b16 %v1356
      %v1453 = vunpack.c.l.b16 %v1357
      %v1454 = vpack.c.b16 %v1407, %v1406
      %v1455 = vpack.c.b16 %v1409, %v1408
      %v1456 = vpack.c.b16 %v1411, %v1410
      %v1457 = vpack.c.b16 %v1413, %v1412
      %v1458 = vpack.c.b16 %v1415, %v1414
      %v1459 = vpack.c.b16 %v1417, %v1416
      %v1460 = vpack.c.b16 %v1419, %v1418
      %v1461 = vpack.c.b16 %v1421, %v1420
      %v1462 = vpack.c.b16 %v1423, %v1422
      %v1463 = vpack.c.b16 %v1425, %v1424
      %v1464 = vpack.c.b16 %v1427, %v1426
      %v1465 = vpack.c.b16 %v1429, %v1428
      %v1466 = vpack.c.b16 %v1431, %v1430
      %v1467 = vpack.c.b16 %v1433, %v1432
      %v1468 = vpack.c.b16 %v1435, %v1434
      %v1469 = vpack.c.b16 %v1437, %v1436
      %v1470 = vpack.c.b16 %v1439, %v1438
      %v1471 = vpack.c.b16 %v1441, %v1440
      %v1472 = vpack.c.b16 %v1443, %v1442
      %v1473 = vpack.c.b16 %v1445, %v1444
      %v1474 = vpack.c.b16 %v1447, %v1446
      %v1475 = vpack.c.b16 %v1449, %v1448
      %v1476 = vpack.c.b16 %v1451, %v1450
      %v1477 = vpack.c.b16 %v1453, %v1452
      %1502 = vmatprep.subr.bf16.mxu0 0
      %1503 = vmatpush1.bf16.msra.mxu0 %v1461
      %1504 = vmatprep.subr.bf16.mxu0 0
      %1505 = vmatpush1.bf16.msra.mxu0 %v1460
      %1506 = vmatprep.subr.bf16.mxu0 0
      %1507 = vmatpush1.bf16.msra.mxu0 %v1459
      %1508 = vmatprep.subr.bf16.mxu0 0
      %1509 = vmatpush1.bf16.msra.mxu0 %v1458
      %1510 = vmatprep.subr.bf16.mxu0 0
      %1511 = vmatpush1.bf16.msra.mxu0 %v1457
      %1512 = vmatprep.subr.bf16.mxu0 0
      %1513 = vmatpush1.bf16.msra.mxu0 %v1456
      %1514 = vmatprep.subr.bf16.mxu0 0
      %1515 = vmatpush1.bf16.msra.mxu0 %v1455
      %1516 = vmatprep.subr.bf16.mxu0 0
      %1517 = vmatpush1.bf16.msra.mxu0 %v1454
      %1518 = vmatprep.subr.bf16.mxu0 0
      %1519 = vmatpush2.bf16.msra.mxu0 %v1469
      %1520 = vmatprep.subr.bf16.mxu0 0
      %1521 = vmatpush2.bf16.msra.mxu0 %v1468
      %1522 = vmatprep.subr.bf16.mxu0 0
      %1523 = vmatpush2.bf16.msra.mxu0 %v1467
      %1524 = vmatprep.subr.bf16.mxu0 0
      %1525 = vmatpush2.bf16.msra.mxu0 %v1466
      %1526 = vmatprep.subr.bf16.mxu0 0
      %1527 = vmatpush2.bf16.msra.mxu0 %v1465
      %1528 = vmatprep.subr.bf16.mxu0 0
      %1529 = vmatpush2.bf16.msra.mxu0 %v1464
      %1530 = vmatprep.subr.bf16.mxu0 0
      %1531 = vmatpush2.bf16.msra.mxu0 %v1463
      %1532 = vmatprep.subr.bf16.mxu0 0
      %1533 = vmatpush2.bf16.msra.mxu0 %v1462
      %1534 = vmatprep.mubr.bf16.mxu0 %v1299
      %1535 = vmatmul.mubr.bf16.gmra.mxu0 %v1298
      %v1536 = vpop.f32.mrf.mxu0
      %v1537 = vadd.f32 0.0, %v1536
      %v1538 = vpop.f32.mrf.mxu0
      %v1539 = vpop.f32.mrf.mxu0
      %v1540 = vadd.f32 0.0, %v1539
      %v1541 = vpop.f32.mrf.mxu0
      %1542 = vmatprep.mubr.bf16.mxu0 %v1302
      %1543 = vmatmul.mubr.bf16.gmra.mxu0 %v1301
      %v1544 = vpop.f32.mrf.mxu0
      %v1545 = vadd.f32 0.0, %v1544
      %v1546 = vpop.f32.mrf.mxu0
      %v1547 = vpop.f32.mrf.mxu0
      %v1548 = vadd.f32 0.0, %v1547
      %v1549 = vpop.f32.mrf.mxu0
      %1550 = vmatprep.mubr.bf16.mxu0 %v1305
      %1551 = vmatmul.mubr.bf16.gmra.mxu0 %v1304
      %v1552 = vpop.f32.mrf.mxu0
      %v1553 = vadd.f32 0.0, %v1552
      %v1554 = vpop.f32.mrf.mxu0
      %v1555 = vpop.f32.mrf.mxu0
      %v1556 = vadd.f32 0.0, %v1555
      %v1557 = vpop.f32.mrf.mxu0
      %1558 = vmatprep.mubr.bf16.mxu0 %v1308
      %1559 = vmatmul.mubr.bf16.gmra.mxu0 %v1307
      %v1560 = vpop.f32.mrf.mxu0
      %v1561 = vadd.f32 0.0, %v1560
      %v1562 = vpop.f32.mrf.mxu0
      %v1563 = vpop.f32.mrf.mxu0
      %v1564 = vadd.f32 0.0, %v1563
      %v1565 = vpop.f32.mrf.mxu0
      %1566 = vdwg.mxu0
      %1567 = vmatprep.subr.bf16.mxu0 0
      %1568 = vmatpush1.bf16.msra.mxu0 %v1477
      %1569 = vmatprep.subr.bf16.mxu0 0
      %1570 = vmatpush1.bf16.msra.mxu0 %v1476
      %1571 = vmatprep.subr.bf16.mxu0 0
      %1572 = vmatpush1.bf16.msra.mxu0 %v1475
      %1573 = vmatprep.subr.bf16.mxu0 0
      %1574 = vmatpush1.bf16.msra.mxu0 %v1474
      %1575 = vmatprep.subr.bf16.mxu0 0
      %1576 = vmatpush1.bf16.msra.mxu0 %v1473
      %1577 = vmatprep.subr.bf16.mxu0 0
      %1578 = vmatpush1.bf16.msra.mxu0 %v1472
      %1579 = vmatprep.subr.bf16.mxu0 0
      %1580 = vmatpush1.bf16.msra.mxu0 %v1471
      %1581 = vmatprep.subr.bf16.mxu0 0
      %1582 = vmatpush1.bf16.msra.mxu0 %v1470
      %1583 = vmatprep.subr.bf16.mxu0 0
      %1584 = vmatpush2.bf16.msra.mxu0 0
      %1585 = vmatprep.subr.bf16.mxu0 0
      %1586 = vmatpush2.bf16.msra.mxu0 0
      %1587 = vmatprep.subr.bf16.mxu0 0
      %1588 = vmatpush2.bf16.msra.mxu0 0
      %1589 = vmatprep.subr.bf16.mxu0 0
      %1590 = vmatpush2.bf16.msra.mxu0 0
      %1591 = vmatprep.subr.bf16.mxu0 0
      %1592 = vmatpush2.bf16.msra.mxu0 0
      %1593 = vmatprep.subr.bf16.mxu0 0
      %1594 = vmatpush2.bf16.msra.mxu0 0
      %1595 = vmatprep.subr.bf16.mxu0 0
      %1596 = vmatpush2.bf16.msra.mxu0 0
      %1597 = vmatprep.subr.bf16.mxu0 0
      %1598 = vmatpush2.bf16.msra.mxu0 0
      %1599 = vmatprep.mubr.bf16.mxu0 0
      %1600 = vmatmul.mubr.bf16.gmra.mxu0 %v1300
      %v1601 = vpop.f32.mrf.mxu0
      %v1602 = vadd.f32 %v1537, %v1601
      %v1603 = vpop.f32.mrf.mxu0
      %v1604 = vpop.f32.mrf.mxu0
      %v1605 = vadd.f32 %v1540, %v1604
      %v1606 = vpop.f32.mrf.mxu0
      %1607 = vmatprep.mubr.bf16.mxu0 0
      %1608 = vmatmul.mubr.bf16.gmra.mxu0 %v1303
      %v1609 = vpop.f32.mrf.mxu0
      %v1610 = vadd.f32 %v1545, %v1609
      %v1611 = vpop.f32.mrf.mxu0
      %v1612 = vpop.f32.mrf.mxu0
      %v1613 = vadd.f32 %v1548, %v1612
      %v1614 = vpop.f32.mrf.mxu0
      %1615 = vmatprep.mubr.bf16.mxu0 0
      %1616 = vmatmul.mubr.bf16.gmra.mxu0 %v1306
      %v1617 = vpop.f32.mrf.mxu0
      %v1618 = vadd.f32 %v1553, %v1617
      %v1619 = vpop.f32.mrf.mxu0
      %v1620 = vpop.f32.mrf.mxu0
      %v1621 = vadd.f32 %v1556, %v1620
      %v1622 = vpop.f32.mrf.mxu0
      %1623 = vmatprep.mubr.bf16.mxu0 0
      %1624 = vmatmul.mubr.bf16.gmra.mxu0 %v1309
      %v1625 = vpop.f32.mrf.mxu0
      %v1626 = vadd.f32 %v1561, %v1625
      %v1627 = vpop.f32.mrf.mxu0
      %v1628 = vpop.f32.mrf.mxu0
      %v1629 = vadd.f32 %v1564, %v1628
      %v1630 = vpop.f32.mrf.mxu0
      %1631 = vdwg.mxu0
      %v1632 = vadd.f32 %v446, %v1602
      %v1633 = vadd.f32 %v447, %v1605
      %v1634 = vadd.f32 %v448, %v1610
      %v1635 = vadd.f32 %v449, %v1613
      %v1636 = vadd.f32 %v450, %v1618
      %v1637 = vadd.f32 %v451, %v1621
      %v1638 = vadd.f32 %v452, %v1626
      %v1639 = vadd.f32 %v453, %v1629
      %1640 = vst [vmem:[#allocation2] sm:$0xff] %v1632
      %1641 = vst [vmem:[#allocation2 + $0x8] sm:$0xff] %v1633
      %1642 = vst [vmem:[#allocation2 + $0x10] sm:$0xff] %v1634
      %1643 = vst [vmem:[#allocation2 + $0x18] sm:$0xff] %v1635
      %1644 = vst [vmem:[#allocation2 + $0x20] sm:$0xff] %v1636
      %1645 = vst [vmem:[#allocation2 + $0x28] sm:$0xff] %v1637
      %1646 = vst [vmem:[#allocation2 + $0x30] sm:$0xff] %v1638
      %1647 = vst [vmem:[#allocation2 + $0x38] sm:$0xff] %v1639
      %p1648 = scmp.eq.s32.totalorder %s24, 1
      // Predicated region
      $region57: #{densenet_forward.6} parent=51 // pred_check
        %p1649 = pneg %p1648
      $region58: #{densenet_forward.6} parent=51 // pred_check_branch
        %1651 = sbr.rel (%p1649) target = $region60
      $region59: #{densenet_forward.6} parent=51 // pred_region
        %v1652 = vld [vmem:[#allocation2] sm:$0xff]
        %v1653 = vld [vmem:[#allocation2 + $0x8] sm:$0xff]
        %v1654 = vld [vmem:[#allocation2 + $0x10] sm:$0xff]
        %v1655 = vld [vmem:[#allocation2 + $0x18] sm:$0xff]
        %v1656 = vld [vmem:[#allocation2 + $0x20] sm:$0xff]
        %v1657 = vld [vmem:[#allocation2 + $0x28] sm:$0xff]
        %v1658 = vld [vmem:[#allocation2 + $0x30] sm:$0xff]
        %v1659 = vld [vmem:[#allocation2 + $0x38] sm:$0xff]
        %v1660 = vpack.c.bf16 %v1653, %v1652
        %v1661 = vpack.c.bf16 %v1655, %v1654
        %v1662 = vpack.c.bf16 %v1657, %v1656
        %v1663 = vpack.c.bf16 %v1659, %v1658
        %v1668 = vunpack.c.l.b16 %v1660
        %v1669 = vunpack.c.h.b16 %v1660
        %v1670 = vunpack.c.l.b16 %v1661
        %v1671 = vunpack.c.h.b16 %v1661
        %v1672 = vunpack.c.l.b16 %v1662
        %v1673 = vunpack.c.h.b16 %v1662
        %v1674 = vunpack.c.l.b16 %v1663
        %v1675 = vunpack.c.h.b16 %v1663
        %v1676 = vpack.c.b16 %v1668, %v1668
        %v1677 = vpack.c.b16 %v1669, %v1669
        %v1678 = vpack.c.b16 %v1670, %v1670
        %v1679 = vpack.c.b16 %v1671, %v1671
        %v1680 = vpack.c.b16 %v1672, %v1672
        %v1681 = vpack.c.b16 %v1673, %v1673
        %v1682 = vpack.c.b16 %v1674, %v1674
        %v1683 = vpack.c.b16 %v1675, %v1675
        %1692 = vst [vmem:[%s415] sm:$0xf] %v1676
        %1693 = vst [vmem:[%s415 + $0x4] sm:$0xf] %v1677
        %1694 = vst [vmem:[%s415 + $0x8] sm:$0xf] %v1678
        %1695 = vst [vmem:[%s415 + $0xc] sm:$0xf] %v1679
        %1696 = vst [vmem:[%s415 + $0x10] sm:$0xf] %v1680
        %1697 = vst [vmem:[%s415 + $0x14] sm:$0xf] %v1681
        %1698 = vst [vmem:[%s415 + $0x18] sm:$0xf] %v1682
        %1699 = vst [vmem:[%s415 + $0x1c] sm:$0xf] %v1683
      $region60: #{densenet_forward.6} parent=51 // pred_fallthru
        _
      %s1700 = smul.u32 8, %s23
      %p1701 = scmp.lt.s32.totalorder %s1700, 15
      %s1702 = scalar_select %p1701, %s1700, 15
      %s1703 = smul.addr %s1702, 4
      %s1704 = scalar_lea.vmem %s8, %s1703
      // Predicated region
      $region61: #{densenet_forward.6} parent=51 // pred_check
        %p1705 = pneg %p252
      $region62: #{densenet_forward.6} parent=51 // pred_check_branch
        %1707 = sbr.rel (%p1705) target = $region64
      $region63: #{densenet_forward.6} parent=51 // pred_region
        %s1708 = smul.u32 8, %s23
      $region64: #{densenet_forward.6} parent=51 // pred_fallthru
        _
    $region52: #{densenet_forward.6} parent=5 // pred_fallthru
      _
    %p1709 = scmp.le.s32.totalorder 2, %s14
    // Predicated region
    $region65: #{densenet_forward.6} parent=5 // pred_check
      %p1710 = pneg %p1709
    $region66: #{densenet_forward.6} parent=5 // pred_check_branch
      %1712 = sbr.rel (%p1710) target = $region68
    $region67: #{densenet_forward.6} parent=5 // pred_region
      %s1713 = ssub.s32 %s14, 2
      // Predicated region
      $region69: #{densenet_forward.6} parent=67 // pred_check
        %p1714 = pneg %p258
      $region70: #{densenet_forward.6} parent=67 // pred_check_branch
        %1716 = sbr.rel (%p1714) target = $region72
      $region71: #{densenet_forward.6} parent=67 // pred_region
        %s1717 = smul.u32 8, %s25
        %p1718 = scmp.lt.s32.totalorder %s1717, 15
        %s1719 = scalar_select %p1718, %s1717, 15
        %s1720 = smul.addr %s1719, 4
        %s1721 = scalar_lea.vmem %s8, %s1720
      $region72: #{densenet_forward.6} parent=67 // pred_fallthru
        _
    $region68: #{densenet_forward.6} parent=5 // pred_fallthru
      _
  $region6: #{densenet_forward.6} parent=0 // loop_footer
    %s18 = sadd.s32 1, %s14
  $region7: #{densenet_forward.6} parent=0 // loop_footer_branch
    %13 = sbr.rel target = $region3
  $region8: #{densenet_forward.6} parent=0 // loop_exit
    _

// kernel: densenet_forward.5
$region0: #{densenet_forward.5}
  #allocation0 [shape = 'u32[]', space=smem, size = 0x4, offset = 0x4, fixed_abs, tag = 'smem constant byte address 0x4 - core index']
  #allocation1 [shape = 'u32[144,128]{1,0:T(1,128)}', space=vmem, size = 0x12000, scoped, tag = 'internal scratch']
  #allocation2 [shape = 'f32[256,128]{1,0:T(8,128)}', space=vmem, size = 0x20000, scoped, tag = 'scratch operand']
  %s0 = inlined_call_operand.vmem [shape: bf16[512,1536], index: 0, kind: input, shape index: {}]
  %s1 = inlined_call_operand.vmem [shape: bf16[1536,128], index: 1, kind: input, shape index: {}]
  %s2 = inlined_call_operand.vmem [shape: f32[1,128], index: 2, kind: input, shape index: {}]
  %s3 = inlined_call_operand.vmem [shape: f32[1,128], index: 3, kind: input, shape index: {}]
  %s4 = inlined_call_operand.vmem [shape: f32[9,256,1], index: 4, kind: input, shape index: {}]
  %s5 = inlined_call_operand.vmem [shape: bf16[128,128], index: 5, kind: output, shape index: {}]
  %s6 = sld [smem:[#allocation0]]
  $region53: #{densenet_forward.5} parent=0
    _
  %s8 = ssub.s32 1, %s6
  %s9 = scalar_select 0, %s8, %s6
  loop: start=0, step=1, limit=4
  $region2: #{densenet_forward.5} parent=0 // loop_pre_header
    _
  $region3: #{densenet_forward.5} parent=0 // loop_header
    %s11 = sphi 0, %s15
    %p12 = scmp.ge.s32.totalorder %s11, 4
    %s21 = sphi 0, %s23
    %s24 = sphi 0, %s21
    %s25 = sphi 0, %s24
    %s41 = sphi 0, %s25
    %s45 = sphi 0, %s45
    %s47 = sphi 0, %s45
    %s48 = sphi 0, %s47
    %s62 = sphi 0, %s48
    %s66 = sphi 0, %s66
    %s68 = sphi 0, %s66
    %s69 = sphi 0, %s68
    %s83 = sphi 0, %s69
    %s87 = sphi 0, %s87
    %s89 = sphi 0, %s87
    %s90 = sphi 0, %s89
    %s104 = sphi 0, %s90
    %s108 = sphi 0, %s108
    %s110 = sphi 0, %s108
    %s111 = sphi 0, %s110
    %s125 = sphi 0, %s111
    %s131 = sphi 0, %s133
    %s134 = sphi 0, %s131
    %s135 = sphi 0, %s134
    %s151 = sphi 0, %s135
  $region4: #{densenet_forward.5} parent=0 // loop_header_branch
    %14 = sbr.rel (%p12) target = $region8
  $region5: #{densenet_forward.5} parent=0 // loop_body
    %s16 = ssub.s32 %s11, 1
    %s17 = ssub.s32 %s11, 2
    %s18 = sadd.s32 %s11, 1
    %s19 = ssub.s32 %s11, %s18
    %p20 = scmp.eq.s32.totalorder %s19, 0
    %s22 = sadd.s32 %s21, 1
    %s23 = scalar_select %p20, %s21, %s22
    %p26 = pneg %p20
    %p27 = scmp.eq.s32.totalorder %s11, 1
    %p28 = por %p26, %p27
    %p29 = scmp.ne.s32.totalorder %s21, %s24
    %p30 = scmp.eq.s32.totalorder %s11, 0
    %p31 = por %p29, %p30
    %p32 = scmp.ne.s32.totalorder %s21, %s24
    %p33 = scmp.eq.s32.totalorder %s16, 1
    %p34 = por %p32, %p33
    %p35 = scmp.ne.s32.totalorder %s24, %s25
    %p36 = scmp.eq.s32.totalorder %s16, 0
    %p37 = por %p35, %p36
    %p38 = scmp.ne.s32.totalorder %s24, %s25
    %p39 = scmp.eq.s32.totalorder %s17, 1
    %p40 = por %p38, %p39
    %p42 = scmp.ne.s32.totalorder %s25, %s41
    %p43 = scmp.eq.s32.totalorder %s17, 0
    %p44 = por %p42, %p43
    %s46 = sadd.s32 %s45, 1
    %p49 = scmp.eq.s32.totalorder %s11, 1
    %p50 = scmp.ne.s32.totalorder %s45, %s47
    %p51 = scmp.eq.s32.totalorder %s11, 0
    %p52 = por %p50, %p51
    %p53 = scmp.ne.s32.totalorder %s45, %s47
    %p54 = scmp.eq.s32.totalorder %s16, 1
    %p55 = por %p53, %p54
    %p56 = scmp.ne.s32.totalorder %s47, %s48
    %p57 = scmp.eq.s32.totalorder %s16, 0
    %p58 = por %p56, %p57
    %p59 = scmp.ne.s32.totalorder %s47, %s48
    %p60 = scmp.eq.s32.totalorder %s17, 1
    %p61 = por %p59, %p60
    %p63 = scmp.ne.s32.totalorder %s48, %s62
    %p64 = scmp.eq.s32.totalorder %s17, 0
    %p65 = por %p63, %p64
    %s67 = sadd.s32 %s66, 1
    %p70 = scmp.eq.s32.totalorder %s11, 1
    %p71 = scmp.ne.s32.totalorder %s66, %s68
    %p72 = scmp.eq.s32.totalorder %s11, 0
    %p73 = por %p71, %p72
    %p74 = scmp.ne.s32.totalorder %s66, %s68
    %p75 = scmp.eq.s32.totalorder %s16, 1
    %p76 = por %p74, %p75
    %p77 = scmp.ne.s32.totalorder %s68, %s69
    %p78 = scmp.eq.s32.totalorder %s16, 0
    %p79 = por %p77, %p78
    %p80 = scmp.ne.s32.totalorder %s68, %s69
    %p81 = scmp.eq.s32.totalorder %s17, 1
    %p82 = por %p80, %p81
    %p84 = scmp.ne.s32.totalorder %s69, %s83
    %p85 = scmp.eq.s32.totalorder %s17, 0
    %p86 = por %p84, %p85
    %s88 = sadd.s32 %s87, 1
    %p91 = scmp.eq.s32.totalorder %s11, 1
    %p92 = scmp.ne.s32.totalorder %s87, %s89
    %p93 = scmp.eq.s32.totalorder %s11, 0
    %p94 = por %p92, %p93
    %p95 = scmp.ne.s32.totalorder %s87, %s89
    %p96 = scmp.eq.s32.totalorder %s16, 1
    %p97 = por %p95, %p96
    %p98 = scmp.ne.s32.totalorder %s89, %s90
    %p99 = scmp.eq.s32.totalorder %s16, 0
    %p100 = por %p98, %p99
    %p101 = scmp.ne.s32.totalorder %s89, %s90
    %p102 = scmp.eq.s32.totalorder %s17, 1
    %p103 = por %p101, %p102
    %p105 = scmp.ne.s32.totalorder %s90, %s104
    %p106 = scmp.eq.s32.totalorder %s17, 0
    %p107 = por %p105, %p106
    %s109 = sadd.s32 %s108, 1
    %p112 = scmp.eq.s32.totalorder %s11, 1
    %p113 = scmp.ne.s32.totalorder %s108, %s110
    %p114 = scmp.eq.s32.totalorder %s11, 0
    %p115 = por %p113, %p114
    %p116 = scmp.ne.s32.totalorder %s108, %s110
    %p117 = scmp.eq.s32.totalorder %s16, 1
    %p118 = por %p116, %p117
    %p119 = scmp.ne.s32.totalorder %s110, %s111
    %p120 = scmp.eq.s32.totalorder %s16, 0
    %p121 = por %p119, %p120
    %p122 = scmp.ne.s32.totalorder %s110, %s111
    %p123 = scmp.eq.s32.totalorder %s17, 1
    %p124 = por %p122, %p123
    %p126 = scmp.ne.s32.totalorder %s111, %s125
    %p127 = scmp.eq.s32.totalorder %s17, 0
    %p128 = por %p126, %p127
    %s129 = ssub.s32 %s11, %s18
    %p130 = scmp.eq.s32.totalorder %s129, 0
    %s132 = sadd.s32 %s131, 1
    %s133 = scalar_select %p130, %s131, %s132
    %p136 = pneg %p130
    %p137 = scmp.eq.s32.totalorder %s11, 1
    %p138 = por %p136, %p137
    %p139 = scmp.ne.s32.totalorder %s131, %s134
    %p140 = scmp.eq.s32.totalorder %s11, 0
    %p141 = por %p139, %p140
    %p142 = scmp.ne.s32.totalorder %s131, %s134
    %p143 = scmp.eq.s32.totalorder %s16, 1
    %p144 = por %p142, %p143
    %p145 = scmp.ne.s32.totalorder %s134, %s135
    %p146 = scmp.eq.s32.totalorder %s16, 0
    %p147 = por %p145, %p146
    %p148 = scmp.ne.s32.totalorder %s134, %s135
    %p149 = scmp.eq.s32.totalorder %s17, 1
    %p150 = por %p148, %p149
    %p152 = scmp.ne.s32.totalorder %s135, %s151
    %p153 = scmp.eq.s32.totalorder %s17, 0
    %p154 = por %p152, %p153
    %p155 = scmp.le.s32.totalorder 1, %s11
    %p156 = scmp.lt.s32.totalorder %s11, 3
    %p157 = pnand %p155, %p156
    %p158 = pneg %p157
    // Predicated region
    $region9: #{densenet_forward.5} parent=5 // pred_check
      _
    $region10: #{densenet_forward.5} parent=5 // pred_check_branch
      %160 = sbr.rel (%p157) target = $region12
    $region11: #{densenet_forward.5} parent=5 // pred_region
      %s161 = ssub.s32 %s11, 1
      // Predicated region
      $region13: #{densenet_forward.5} parent=11 // pred_check
        %p162 = pneg %p58
      $region14: #{densenet_forward.5} parent=11 // pred_check_branch
        %164 = sbr.rel (%p162) target = $region16
      $region15: #{densenet_forward.5} parent=11 // pred_region
        _
      $region16: #{densenet_forward.5} parent=11 // pred_fallthru
        _
      // Predicated region
      $region17: #{densenet_forward.5} parent=11 // pred_check
        %p165 = pneg %p79
      $region18: #{densenet_forward.5} parent=11 // pred_check_branch
        %167 = sbr.rel (%p165) target = $region20
      $region19: #{densenet_forward.5} parent=11 // pred_region
        _
      $region20: #{densenet_forward.5} parent=11 // pred_fallthru
        _
      // Predicated region
      $region21: #{densenet_forward.5} parent=11 // pred_check
        %p168 = pneg %p100
      $region22: #{densenet_forward.5} parent=11 // pred_check_branch
        %170 = sbr.rel (%p168) target = $region24
      $region23: #{densenet_forward.5} parent=11 // pred_region
        _
      $region24: #{densenet_forward.5} parent=11 // pred_fallthru
        _
      // Predicated region
      $region25: #{densenet_forward.5} parent=11 // pred_check
        %p171 = pneg %p121
      $region26: #{densenet_forward.5} parent=11 // pred_check_branch
        %173 = sbr.rel (%p171) target = $region28
      $region27: #{densenet_forward.5} parent=11 // pred_region
        _
      $region28: #{densenet_forward.5} parent=11 // pred_fallthru
        _
    $region12: #{densenet_forward.5} parent=5 // pred_fallthru
      _
    %p174 = scmp.lt.s32.totalorder %s11, 2
    // Predicated region
    $region29: #{densenet_forward.5} parent=5 // pred_check
      %p175 = pneg %p174
    $region30: #{densenet_forward.5} parent=5 // pred_check_branch
      %177 = sbr.rel (%p175) target = $region32
    $region31: #{densenet_forward.5} parent=5 // pred_region
      // Predicated region
      $region33: #{densenet_forward.5} parent=31 // pred_check
        %p178 = pneg %p31
      $region34: #{densenet_forward.5} parent=31 // pred_check_branch
        %180 = sbr.rel (%p178) target = $region36
      $region35: #{densenet_forward.5} parent=31 // pred_region
        %s181 = smul.u32 32, %s11
        %p182 = scmp.lt.s32.totalorder %s181, 63
        %s183 = scalar_select %p182, %s181, 63
        %s184 = smul.addr %s183, 12
        %s185 = smul.addr %s184, 4
        %s186 = scalar_lea.vmem %s0, %s185
        %s187 = smul.u32 32, %s11
      $region36: #{densenet_forward.5} parent=31 // pred_fallthru
        _
    $region32: #{densenet_forward.5} parent=5 // pred_fallthru
      _
    %p188 = scmp.le.s32.totalorder 1, %s11
    %p189 = scmp.lt.s32.totalorder %s11, 3
    %p190 = pnand %p188, %p189
    %p191 = pneg %p190
    // Predicated region
    $region37: #{densenet_forward.5} parent=5 // pred_check
      _
    $region38: #{densenet_forward.5} parent=5 // pred_check_branch
      %193 = sbr.rel (%p190) target = $region40
    $region39: #{densenet_forward.5} parent=5 // pred_region
      %s194 = ssub.s32 %s11, 1
      %s195 = smul.u32 32, %s16
      %p196 = scmp.lt.s32.totalorder %s195, 63
      %s197 = scalar_select %p196, %s195, 63
      %s198 = smul.addr %s197, 12
      %s199 = smul.addr %s198, 4
      %s200 = scalar_lea.vmem %s0, %s199
      %p201 = pneg %p37
      %p202 = pneg %p34
      %p203 = pneg %p58
      %p204 = pneg %p55
      %p205 = pneg %p79
      %p206 = pneg %p76
      %p207 = pneg %p100
      %p208 = pneg %p97
      %p209 = pneg %p121
      %p210 = pneg %p118
      %p211 = pneg %p147
      %p212 = pneg %p144
      %s213 = smul.u32 8, %s16
      %p214 = scmp.lt.s32.totalorder %s213, 15
      %s215 = scalar_select %p214, %s213, 15
      %s216 = smul.addr %s215, 4
      %s217 = scalar_lea.vmem %s5, %s216
      %s218 = smul.u32 32, %s16
      %p219 = scmp.lt.s32.totalorder %s218, 63
      %s220 = scalar_select %p219, %s218, 63
      %s221 = smul.addr %s220, 12
      %s222 = smul.addr %s221, 4
      %s223 = scalar_lea.vmem %s0, %s222
      %s224 = smul.u32 32, %s16
      %s225 = smul.u32 8, %s16
      %p226 = scmp.lt.s32.totalorder %s225, 15
      %s227 = scalar_select %p226, %s225, 15
      %s228 = smul.addr %s227, 4
      %s229 = scalar_lea.vmem %s5, %s228
      %s230 = smul.u32 8, %s16
      %v232 = vld [vmem:[%s223] sm:$0xff]
      %v233 = vld [vmem:[%s223 + $0x8] sm:$0xff]
      %v234 = vld [vmem:[%s223 + $0x10] sm:$0xff]
      %v235 = vld [vmem:[%s223 + $0x18] sm:$0xff]
      %v236 = vld [vmem:[%s223 + $0x20] sm:$0xff]
      %v237 = vld [vmem:[%s223 + $0x28] sm:$0xff]
      %v238 = vld [vmem:[%s223 + $0x30] sm:$0xff]
      %v239 = vld [vmem:[%s223 + $0x38] sm:$0xff]
      %v240 = vld [vmem:[%s223 + $0x40] sm:$0xff]
      %v241 = vld [vmem:[%s223 + $0x48] sm:$0xff]
      %v242 = vld [vmem:[%s223 + $0x50] sm:$0xff]
      %v243 = vld [vmem:[%s223 + $0x58] sm:$0xff]
      %v244 = vld [vmem:[%s223 + $0x60] sm:$0xff]
      %v245 = vld [vmem:[%s223 + $0x68] sm:$0xff]
      %v246 = vld [vmem:[%s223 + $0x70] sm:$0xff]
      %v247 = vld [vmem:[%s223 + $0x78] sm:$0xff]
      %v248 = vld [vmem:[%s223 + $0x80] sm:$0xff]
      %v249 = vld [vmem:[%s223 + $0x88] sm:$0xff]
      %v250 = vld [vmem:[%s223 + $0x90] sm:$0xff]
      %v251 = vld [vmem:[%s223 + $0x98] sm:$0xff]
      %v252 = vld [vmem:[%s223 + $0xa0] sm:$0xff]
      %v253 = vld [vmem:[%s223 + $0xa8] sm:$0xff]
      %v254 = vld [vmem:[%s223 + $0xb0] sm:$0xff]
      %v255 = vld [vmem:[%s223 + $0xb8] sm:$0xff]
      %v256 = vld [vmem:[%s223 + $0xc0] sm:$0xff]
      %v257 = vld [vmem:[%s223 + $0xc8] sm:$0xff]
      %v258 = vld [vmem:[%s223 + $0xd0] sm:$0xff]
      %v259 = vld [vmem:[%s223 + $0xd8] sm:$0xff]
      %v260 = vld [vmem:[%s223 + $0xe0] sm:$0xff]
      %v261 = vld [vmem:[%s223 + $0xe8] sm:$0xff]
      %v262 = vld [vmem:[%s223 + $0xf0] sm:$0xff]
      %v263 = vld [vmem:[%s223 + $0xf8] sm:$0xff]
      %v264 = vld [vmem:[%s223 + $0x100] sm:$0xff]
      %v265 = vld [vmem:[%s223 + $0x108] sm:$0xff]
      %v266 = vld [vmem:[%s223 + $0x110] sm:$0xff]
      %v267 = vld [vmem:[%s223 + $0x118] sm:$0xff]
      %v268 = vld [vmem:[%s223 + $0x120] sm:$0xff]
      %v269 = vld [vmem:[%s223 + $0x128] sm:$0xff]
      %v270 = vld [vmem:[%s223 + $0x130] sm:$0xff]
      %v271 = vld [vmem:[%s223 + $0x138] sm:$0xff]
      %v272 = vld [vmem:[%s223 + $0x140] sm:$0xff]
      %v273 = vld [vmem:[%s223 + $0x148] sm:$0xff]
      %v274 = vld [vmem:[%s223 + $0x150] sm:$0xff]
      %v275 = vld [vmem:[%s223 + $0x158] sm:$0xff]
      %v276 = vld [vmem:[%s223 + $0x160] sm:$0xff]
      %v277 = vld [vmem:[%s223 + $0x168] sm:$0xff]
      %v278 = vld [vmem:[%s223 + $0x170] sm:$0xff]
      %v279 = vld [vmem:[%s223 + $0x178] sm:$0xff]
      %v280 = vld [vmem:[%s223 + $0x180] sm:$0xff]
      %v281 = vld [vmem:[%s223 + $0x188] sm:$0xff]
      %v282 = vld [vmem:[%s223 + $0x190] sm:$0xff]
      %v283 = vld [vmem:[%s223 + $0x198] sm:$0xff]
      %v284 = vld [vmem:[%s223 + $0x1a0] sm:$0xff]
      %v285 = vld [vmem:[%s223 + $0x1a8] sm:$0xff]
      %v286 = vld [vmem:[%s223 + $0x1b0] sm:$0xff]
      %v287 = vld [vmem:[%s223 + $0x1b8] sm:$0xff]
      %v288 = vld [vmem:[%s223 + $0x1c0] sm:$0xff]
      %v289 = vld [vmem:[%s223 + $0x1c8] sm:$0xff]
      %v290 = vld [vmem:[%s223 + $0x1d0] sm:$0xff]
      %v291 = vld [vmem:[%s223 + $0x1d8] sm:$0xff]
      %v292 = vld [vmem:[%s223 + $0x1e0] sm:$0xff]
      %v293 = vld [vmem:[%s223 + $0x1e8] sm:$0xff]
      %v294 = vld [vmem:[%s223 + $0x1f0] sm:$0xff]
      %v295 = vld [vmem:[%s223 + $0x1f8] sm:$0xff]
      %v296 = vld [vmem:[%s223 + $0x200] sm:$0xff]
      %v297 = vld [vmem:[%s223 + $0x208] sm:$0xff]
      %v298 = vld [vmem:[%s223 + $0x210] sm:$0xff]
      %v299 = vld [vmem:[%s223 + $0x218] sm:$0xff]
      %v300 = vld [vmem:[%s223 + $0x220] sm:$0xff]
      %v301 = vld [vmem:[%s223 + $0x228] sm:$0xff]
      %v302 = vld [vmem:[%s223 + $0x230] sm:$0xff]
      %v303 = vld [vmem:[%s223 + $0x238] sm:$0xff]
      %v304 = vld [vmem:[%s223 + $0x240] sm:$0xff]
      %v305 = vld [vmem:[%s223 + $0x248] sm:$0xff]
      %v306 = vld [vmem:[%s223 + $0x250] sm:$0xff]
      %v307 = vld [vmem:[%s223 + $0x258] sm:$0xff]
      %v308 = vld [vmem:[%s223 + $0x260] sm:$0xff]
      %v309 = vld [vmem:[%s223 + $0x268] sm:$0xff]
      %v310 = vld [vmem:[%s223 + $0x270] sm:$0xff]
      %v311 = vld [vmem:[%s223 + $0x278] sm:$0xff]
      %v312 = vld [vmem:[%s223 + $0x280] sm:$0xff]
      %v313 = vld [vmem:[%s223 + $0x288] sm:$0xff]
      %v314 = vld [vmem:[%s223 + $0x290] sm:$0xff]
      %v315 = vld [vmem:[%s223 + $0x298] sm:$0xff]
      %v316 = vld [vmem:[%s223 + $0x2a0] sm:$0xff]
      %v317 = vld [vmem:[%s223 + $0x2a8] sm:$0xff]
      %v318 = vld [vmem:[%s223 + $0x2b0] sm:$0xff]
      %v319 = vld [vmem:[%s223 + $0x2b8] sm:$0xff]
      %v320 = vld [vmem:[%s223 + $0x2c0] sm:$0xff]
      %v321 = vld [vmem:[%s223 + $0x2c8] sm:$0xff]
      %v322 = vld [vmem:[%s223 + $0x2d0] sm:$0xff]
      %v323 = vld [vmem:[%s223 + $0x2d8] sm:$0xff]
      %v324 = vld [vmem:[%s223 + $0x2e0] sm:$0xff]
      %v325 = vld [vmem:[%s223 + $0x2e8] sm:$0xff]
      %v326 = vld [vmem:[%s223 + $0x2f0] sm:$0xff]
      %v327 = vld [vmem:[%s223 + $0x2f8] sm:$0xff]
      %v328 = vld [vmem:[%s223 + $0x300] sm:$0xff]
      %v329 = vld [vmem:[%s223 + $0x308] sm:$0xff]
      %v330 = vld [vmem:[%s223 + $0x310] sm:$0xff]
      %v331 = vld [vmem:[%s223 + $0x318] sm:$0xff]
      %v332 = vld [vmem:[%s223 + $0x320] sm:$0xff]
      %v333 = vld [vmem:[%s223 + $0x328] sm:$0xff]
      %v334 = vld [vmem:[%s223 + $0x330] sm:$0xff]
      %v335 = vld [vmem:[%s223 + $0x338] sm:$0xff]
      %v336 = vld [vmem:[%s223 + $0x340] sm:$0xff]
      %v337 = vld [vmem:[%s223 + $0x348] sm:$0xff]
      %v338 = vld [vmem:[%s223 + $0x350] sm:$0xff]
      %v339 = vld [vmem:[%s223 + $0x358] sm:$0xff]
      %v340 = vld [vmem:[%s223 + $0x360] sm:$0xff]
      %v341 = vld [vmem:[%s223 + $0x368] sm:$0xff]
      %v342 = vld [vmem:[%s223 + $0x370] sm:$0xff]
      %v343 = vld [vmem:[%s223 + $0x378] sm:$0xff]
      %v344 = vld [vmem:[%s223 + $0x380] sm:$0xff]
      %v345 = vld [vmem:[%s223 + $0x388] sm:$0xff]
      %v346 = vld [vmem:[%s223 + $0x390] sm:$0xff]
      %v347 = vld [vmem:[%s223 + $0x398] sm:$0xff]
      %v348 = vld [vmem:[%s223 + $0x3a0] sm:$0xff]
      %v349 = vld [vmem:[%s223 + $0x3a8] sm:$0xff]
      %v350 = vld [vmem:[%s223 + $0x3b0] sm:$0xff]
      %v351 = vld [vmem:[%s223 + $0x3b8] sm:$0xff]
      %v352 = vld [vmem:[%s223 + $0x3c0] sm:$0xff]
      %v353 = vld [vmem:[%s223 + $0x3c8] sm:$0xff]
      %v354 = vld [vmem:[%s223 + $0x3d0] sm:$0xff]
      %v355 = vld [vmem:[%s223 + $0x3d8] sm:$0xff]
      %v356 = vld [vmem:[%s223 + $0x3e0] sm:$0xff]
      %v357 = vld [vmem:[%s223 + $0x3e8] sm:$0xff]
      %v358 = vld [vmem:[%s223 + $0x3f0] sm:$0xff]
      %v359 = vld [vmem:[%s223 + $0x3f8] sm:$0xff]
      %v360 = vld [vmem:[%s223 + $0x400] sm:$0xff]
      %v361 = vld [vmem:[%s223 + $0x408] sm:$0xff]
      %v362 = vld [vmem:[%s223 + $0x410] sm:$0xff]
      %v363 = vld [vmem:[%s223 + $0x418] sm:$0xff]
      %v364 = vld [vmem:[%s223 + $0x420] sm:$0xff]
      %v365 = vld [vmem:[%s223 + $0x428] sm:$0xff]
      %v366 = vld [vmem:[%s223 + $0x430] sm:$0xff]
      %v367 = vld [vmem:[%s223 + $0x438] sm:$0xff]
      %v368 = vld [vmem:[%s223 + $0x440] sm:$0xff]
      %v369 = vld [vmem:[%s223 + $0x448] sm:$0xff]
      %v370 = vld [vmem:[%s223 + $0x450] sm:$0xff]
      %v371 = vld [vmem:[%s223 + $0x458] sm:$0xff]
      %v372 = vld [vmem:[%s223 + $0x460] sm:$0xff]
      %v373 = vld [vmem:[%s223 + $0x468] sm:$0xff]
      %v374 = vld [vmem:[%s223 + $0x470] sm:$0xff]
      %v375 = vld [vmem:[%s223 + $0x478] sm:$0xff]
      %v376 = vld [vmem:[%s223 + $0x480] sm:$0xff]
      %v377 = vld [vmem:[%s223 + $0x488] sm:$0xff]
      %v378 = vld [vmem:[%s223 + $0x490] sm:$0xff]
      %v379 = vld [vmem:[%s223 + $0x498] sm:$0xff]
      %v380 = vld [vmem:[%s223 + $0x4a0] sm:$0xff]
      %v381 = vld [vmem:[%s223 + $0x4a8] sm:$0xff]
      %v382 = vld [vmem:[%s223 + $0x4b0] sm:$0xff]
      %v383 = vld [vmem:[%s223 + $0x4b8] sm:$0xff]
      %v384 = vld [vmem:[%s223 + $0x4c0] sm:$0xff]
      %v385 = vld [vmem:[%s223 + $0x4c8] sm:$0xff]
      %v386 = vld [vmem:[%s223 + $0x4d0] sm:$0xff]
      %v387 = vld [vmem:[%s223 + $0x4d8] sm:$0xff]
      %v388 = vld [vmem:[%s223 + $0x4e0] sm:$0xff]
      %v389 = vld [vmem:[%s223 + $0x4e8] sm:$0xff]
      %v390 = vld [vmem:[%s223 + $0x4f0] sm:$0xff]
      %v391 = vld [vmem:[%s223 + $0x4f8] sm:$0xff]
      %v392 = vld [vmem:[%s223 + $0x500] sm:$0xff]
      %v393 = vld [vmem:[%s223 + $0x508] sm:$0xff]
      %v394 = vld [vmem:[%s223 + $0x510] sm:$0xff]
      %v395 = vld [vmem:[%s223 + $0x518] sm:$0xff]
      %v396 = vld [vmem:[%s223 + $0x520] sm:$0xff]
      %v397 = vld [vmem:[%s223 + $0x528] sm:$0xff]
      %v398 = vld [vmem:[%s223 + $0x530] sm:$0xff]
      %v399 = vld [vmem:[%s223 + $0x538] sm:$0xff]
      %v400 = vld [vmem:[%s223 + $0x540] sm:$0xff]
      %v401 = vld [vmem:[%s223 + $0x548] sm:$0xff]
      %v402 = vld [vmem:[%s223 + $0x550] sm:$0xff]
      %v403 = vld [vmem:[%s223 + $0x558] sm:$0xff]
      %v404 = vld [vmem:[%s223 + $0x560] sm:$0xff]
      %v405 = vld [vmem:[%s223 + $0x568] sm:$0xff]
      %v406 = vld [vmem:[%s223 + $0x570] sm:$0xff]
      %v407 = vld [vmem:[%s223 + $0x578] sm:$0xff]
      %v408 = vld [vmem:[%s223 + $0x580] sm:$0xff]
      %v409 = vld [vmem:[%s223 + $0x588] sm:$0xff]
      %v410 = vld [vmem:[%s223 + $0x590] sm:$0xff]
      %v411 = vld [vmem:[%s223 + $0x598] sm:$0xff]
      %v412 = vld [vmem:[%s223 + $0x5a0] sm:$0xff]
      %v413 = vld [vmem:[%s223 + $0x5a8] sm:$0xff]
      %v414 = vld [vmem:[%s223 + $0x5b0] sm:$0xff]
      %v415 = vld [vmem:[%s223 + $0x5b8] sm:$0xff]
      %v416 = vld [vmem:[%s223 + $0x5c0] sm:$0xff]
      %v417 = vld [vmem:[%s223 + $0x5c8] sm:$0xff]
      %v418 = vld [vmem:[%s223 + $0x5d0] sm:$0xff]
      %v419 = vld [vmem:[%s223 + $0x5d8] sm:$0xff]
      %v420 = vld [vmem:[%s223 + $0x5e0] sm:$0xff]
      %v421 = vld [vmem:[%s223 + $0x5e8] sm:$0xff]
      %v422 = vld [vmem:[%s223 + $0x5f0] sm:$0xff]
      %v423 = vld [vmem:[%s223 + $0x5f8] sm:$0xff]
      %v424 = vld [vmem:[%s1] sm:$0xf]
      %v425 = vld [vmem:[%s1 + $0x4] sm:$0xf]
      %v426 = vld [vmem:[%s1 + $0x8] sm:$0xf]
      %v427 = vld [vmem:[%s1 + $0xc] sm:$0xf]
      %v428 = vld [vmem:[%s1 + $0x10] sm:$0xf]
      %v429 = vld [vmem:[%s1 + $0x14] sm:$0xf]
      %v430 = vld [vmem:[%s1 + $0x18] sm:$0xf]
      %v431 = vld [vmem:[%s1 + $0x1c] sm:$0xf]
      %v432 = vld [vmem:[%s1 + $0x20] sm:$0xf]
      %v433 = vld [vmem:[%s1 + $0x24] sm:$0xf]
      %v434 = vld [vmem:[%s1 + $0x28] sm:$0xf]
      %v435 = vld [vmem:[%s1 + $0x2c] sm:$0xf]
      %v436 = vld [vmem:[%s1 + $0x30] sm:$0xf]
      %v437 = vld [vmem:[%s1 + $0x34] sm:$0xf]
      %v438 = vld [vmem:[%s1 + $0x38] sm:$0xf]
      %v439 = vld [vmem:[%s1 + $0x3c] sm:$0xf]
      %v440 = vld [vmem:[%s1 + $0x40] sm:$0xf]
      %v441 = vld [vmem:[%s1 + $0x44] sm:$0xf]
      %v442 = vld [vmem:[%s1 + $0x48] sm:$0xf]
      %v443 = vld [vmem:[%s1 + $0x4c] sm:$0xf]
      %v444 = vld [vmem:[%s1 + $0x50] sm:$0xf]
      %v445 = vld [vmem:[%s1 + $0x54] sm:$0xf]
      %v446 = vld [vmem:[%s1 + $0x58] sm:$0xf]
      %v447 = vld [vmem:[%s1 + $0x5c] sm:$0xf]
      %v448 = vld [vmem:[%s1 + $0x60] sm:$0xf]
      %v449 = vld [vmem:[%s1 + $0x64] sm:$0xf]
      %v450 = vld [vmem:[%s1 + $0x68] sm:$0xf]
      %v451 = vld [vmem:[%s1 + $0x6c] sm:$0xf]
      %v452 = vld [vmem:[%s1 + $0x70] sm:$0xf]
      %v453 = vld [vmem:[%s1 + $0x74] sm:$0xf]
      %v454 = vld [vmem:[%s1 + $0x78] sm:$0xf]
      %v455 = vld [vmem:[%s1 + $0x7c] sm:$0xf]
      %v456 = vld [vmem:[%s1 + $0x80] sm:$0xf]
      %v457 = vld [vmem:[%s1 + $0x84] sm:$0xf]
      %v458 = vld [vmem:[%s1 + $0x88] sm:$0xf]
      %v459 = vld [vmem:[%s1 + $0x8c] sm:$0xf]
      %v460 = vld [vmem:[%s1 + $0x90] sm:$0xf]
      %v461 = vld [vmem:[%s1 + $0x94] sm:$0xf]
      %v462 = vld [vmem:[%s1 + $0x98] sm:$0xf]
      %v463 = vld [vmem:[%s1 + $0x9c] sm:$0xf]
      %v464 = vld [vmem:[%s1 + $0xa0] sm:$0xf]
      %v465 = vld [vmem:[%s1 + $0xa4] sm:$0xf]
      %v466 = vld [vmem:[%s1 + $0xa8] sm:$0xf]
      %v467 = vld [vmem:[%s1 + $0xac] sm:$0xf]
      %v468 = vld [vmem:[%s1 + $0xb0] sm:$0xf]
      %v469 = vld [vmem:[%s1 + $0xb4] sm:$0xf]
      %v470 = vld [vmem:[%s1 + $0xb8] sm:$0xf]
      %v471 = vld [vmem:[%s1 + $0xbc] sm:$0xf]
      %v472 = vld [vmem:[%s1 + $0xc0] sm:$0xf]
      %v473 = vld [vmem:[%s1 + $0xc4] sm:$0xf]
      %v474 = vld [vmem:[%s1 + $0xc8] sm:$0xf]
      %v475 = vld [vmem:[%s1 + $0xcc] sm:$0xf]
      %v476 = vld [vmem:[%s1 + $0xd0] sm:$0xf]
      %v477 = vld [vmem:[%s1 + $0xd4] sm:$0xf]
      %v478 = vld [vmem:[%s1 + $0xd8] sm:$0xf]
      %v479 = vld [vmem:[%s1 + $0xdc] sm:$0xf]
      %v480 = vld [vmem:[%s1 + $0xe0] sm:$0xf]
      %v481 = vld [vmem:[%s1 + $0xe4] sm:$0xf]
      %v482 = vld [vmem:[%s1 + $0xe8] sm:$0xf]
      %v483 = vld [vmem:[%s1 + $0xec] sm:$0xf]
      %v484 = vld [vmem:[%s1 + $0xf0] sm:$0xf]
      %v485 = vld [vmem:[%s1 + $0xf4] sm:$0xf]
      %v486 = vld [vmem:[%s1 + $0xf8] sm:$0xf]
      %v487 = vld [vmem:[%s1 + $0xfc] sm:$0xf]
      %v488 = vld [vmem:[%s1 + $0x100] sm:$0xf]
      %v489 = vld [vmem:[%s1 + $0x104] sm:$0xf]
      %v490 = vld [vmem:[%s1 + $0x108] sm:$0xf]
      %v491 = vld [vmem:[%s1 + $0x10c] sm:$0xf]
      %v492 = vld [vmem:[%s1 + $0x110] sm:$0xf]
      %v493 = vld [vmem:[%s1 + $0x114] sm:$0xf]
      %v494 = vld [vmem:[%s1 + $0x118] sm:$0xf]
      %v495 = vld [vmem:[%s1 + $0x11c] sm:$0xf]
      %v496 = vld [vmem:[%s1 + $0x120] sm:$0xf]
      %v497 = vld [vmem:[%s1 + $0x124] sm:$0xf]
      %v498 = vld [vmem:[%s1 + $0x128] sm:$0xf]
      %v499 = vld [vmem:[%s1 + $0x12c] sm:$0xf]
      %v500 = vld [vmem:[%s1 + $0x130] sm:$0xf]
      %v501 = vld [vmem:[%s1 + $0x134] sm:$0xf]
      %v502 = vld [vmem:[%s1 + $0x138] sm:$0xf]
      %v503 = vld [vmem:[%s1 + $0x13c] sm:$0xf]
      %v504 = vld [vmem:[%s1 + $0x140] sm:$0xf]
      %v505 = vld [vmem:[%s1 + $0x144] sm:$0xf]
      %v506 = vld [vmem:[%s1 + $0x148] sm:$0xf]
      %v507 = vld [vmem:[%s1 + $0x14c] sm:$0xf]
      %v508 = vld [vmem:[%s1 + $0x150] sm:$0xf]
      %v509 = vld [vmem:[%s1 + $0x154] sm:$0xf]
      %v510 = vld [vmem:[%s1 + $0x158] sm:$0xf]
      %v511 = vld [vmem:[%s1 + $0x15c] sm:$0xf]
      %v512 = vld [vmem:[%s1 + $0x160] sm:$0xf]
      %v513 = vld [vmem:[%s1 + $0x164] sm:$0xf]
      %v514 = vld [vmem:[%s1 + $0x168] sm:$0xf]
      %v515 = vld [vmem:[%s1 + $0x16c] sm:$0xf]
      %v516 = vld [vmem:[%s1 + $0x170] sm:$0xf]
      %v517 = vld [vmem:[%s1 + $0x174] sm:$0xf]
      %v518 = vld [vmem:[%s1 + $0x178] sm:$0xf]
      %v519 = vld [vmem:[%s1 + $0x17c] sm:$0xf]
      %v520 = vld [vmem:[%s1 + $0x180] sm:$0xf]
      %v521 = vld [vmem:[%s1 + $0x184] sm:$0xf]
      %v522 = vld [vmem:[%s1 + $0x188] sm:$0xf]
      %v523 = vld [vmem:[%s1 + $0x18c] sm:$0xf]
      %v524 = vld [vmem:[%s1 + $0x190] sm:$0xf]
      %v525 = vld [vmem:[%s1 + $0x194] sm:$0xf]
      %v526 = vld [vmem:[%s1 + $0x198] sm:$0xf]
      %v527 = vld [vmem:[%s1 + $0x19c] sm:$0xf]
      %v528 = vld [vmem:[%s1 + $0x1a0] sm:$0xf]
      %v529 = vld [vmem:[%s1 + $0x1a4] sm:$0xf]
      %v530 = vld [vmem:[%s1 + $0x1a8] sm:$0xf]
      %v531 = vld [vmem:[%s1 + $0x1ac] sm:$0xf]
      %v532 = vld [vmem:[%s1 + $0x1b0] sm:$0xf]
      %v533 = vld [vmem:[%s1 + $0x1b4] sm:$0xf]
      %v534 = vld [vmem:[%s1 + $0x1b8] sm:$0xf]
      %v535 = vld [vmem:[%s1 + $0x1bc] sm:$0xf]
      %v536 = vld [vmem:[%s1 + $0x1c0] sm:$0xf]
      %v537 = vld [vmem:[%s1 + $0x1c4] sm:$0xf]
      %v538 = vld [vmem:[%s1 + $0x1c8] sm:$0xf]
      %v539 = vld [vmem:[%s1 + $0x1cc] sm:$0xf]
      %v540 = vld [vmem:[%s1 + $0x1d0] sm:$0xf]
      %v541 = vld [vmem:[%s1 + $0x1d4] sm:$0xf]
      %v542 = vld [vmem:[%s1 + $0x1d8] sm:$0xf]
      %v543 = vld [vmem:[%s1 + $0x1dc] sm:$0xf]
      %v544 = vld [vmem:[%s1 + $0x1e0] sm:$0xf]
      %v545 = vld [vmem:[%s1 + $0x1e4] sm:$0xf]
      %v546 = vld [vmem:[%s1 + $0x1e8] sm:$0xf]
      %v547 = vld [vmem:[%s1 + $0x1ec] sm:$0xf]
      %v548 = vld [vmem:[%s1 + $0x1f0] sm:$0xf]
      %v549 = vld [vmem:[%s1 + $0x1f4] sm:$0xf]
      %v550 = vld [vmem:[%s1 + $0x1f8] sm:$0xf]
      %v551 = vld [vmem:[%s1 + $0x1fc] sm:$0xf]
      %v552 = vld [vmem:[%s1 + $0x200] sm:$0xf]
      %v553 = vld [vmem:[%s1 + $0x204] sm:$0xf]
      %v554 = vld [vmem:[%s1 + $0x208] sm:$0xf]
      %v555 = vld [vmem:[%s1 + $0x20c] sm:$0xf]
      %v556 = vld [vmem:[%s1 + $0x210] sm:$0xf]
      %v557 = vld [vmem:[%s1 + $0x214] sm:$0xf]
      %v558 = vld [vmem:[%s1 + $0x218] sm:$0xf]
      %v559 = vld [vmem:[%s1 + $0x21c] sm:$0xf]
      %v560 = vld [vmem:[%s1 + $0x220] sm:$0xf]
      %v561 = vld [vmem:[%s1 + $0x224] sm:$0xf]
      %v562 = vld [vmem:[%s1 + $0x228] sm:$0xf]
      %v563 = vld [vmem:[%s1 + $0x22c] sm:$0xf]
      %v564 = vld [vmem:[%s1 + $0x230] sm:$0xf]
      %v565 = vld [vmem:[%s1 + $0x234] sm:$0xf]
      %v566 = vld [vmem:[%s1 + $0x238] sm:$0xf]
      %v567 = vld [vmem:[%s1 + $0x23c] sm:$0xf]
      %v568 = vld [vmem:[%s1 + $0x240] sm:$0xf]
      %v569 = vld [vmem:[%s1 + $0x244] sm:$0xf]
      %v570 = vld [vmem:[%s1 + $0x248] sm:$0xf]
      %v571 = vld [vmem:[%s1 + $0x24c] sm:$0xf]
      %v572 = vld [vmem:[%s1 + $0x250] sm:$0xf]
      %v573 = vld [vmem:[%s1 + $0x254] sm:$0xf]
      %v574 = vld [vmem:[%s1 + $0x258] sm:$0xf]
      %v575 = vld [vmem:[%s1 + $0x25c] sm:$0xf]
      %v576 = vld [vmem:[%s1 + $0x260] sm:$0xf]
      %v577 = vld [vmem:[%s1 + $0x264] sm:$0xf]
      %v578 = vld [vmem:[%s1 + $0x268] sm:$0xf]
      %v579 = vld [vmem:[%s1 + $0x26c] sm:$0xf]
      %v580 = vld [vmem:[%s1 + $0x270] sm:$0xf]
      %v581 = vld [vmem:[%s1 + $0x274] sm:$0xf]
      %v582 = vld [vmem:[%s1 + $0x278] sm:$0xf]
      %v583 = vld [vmem:[%s1 + $0x27c] sm:$0xf]
      %v584 = vld [vmem:[%s1 + $0x280] sm:$0xf]
      %v585 = vld [vmem:[%s1 + $0x284] sm:$0xf]
      %v586 = vld [vmem:[%s1 + $0x288] sm:$0xf]
      %v587 = vld [vmem:[%s1 + $0x28c] sm:$0xf]
      %v588 = vld [vmem:[%s1 + $0x290] sm:$0xf]
      %v589 = vld [vmem:[%s1 + $0x294] sm:$0xf]
      %v590 = vld [vmem:[%s1 + $0x298] sm:$0xf]
      %v591 = vld [vmem:[%s1 + $0x29c] sm:$0xf]
      %v592 = vld [vmem:[%s1 + $0x2a0] sm:$0xf]
      %v593 = vld [vmem:[%s1 + $0x2a4] sm:$0xf]
      %v594 = vld [vmem:[%s1 + $0x2a8] sm:$0xf]
      %v595 = vld [vmem:[%s1 + $0x2ac] sm:$0xf]
      %v596 = vld [vmem:[%s1 + $0x2b0] sm:$0xf]
      %v597 = vld [vmem:[%s1 + $0x2b4] sm:$0xf]
      %v598 = vld [vmem:[%s1 + $0x2b8] sm:$0xf]
      %v599 = vld [vmem:[%s1 + $0x2bc] sm:$0xf]
      %v600 = vld [vmem:[%s1 + $0x2c0] sm:$0xf]
      %v601 = vld [vmem:[%s1 + $0x2c4] sm:$0xf]
      %v602 = vld [vmem:[%s1 + $0x2c8] sm:$0xf]
      %v603 = vld [vmem:[%s1 + $0x2cc] sm:$0xf]
      %v604 = vld [vmem:[%s1 + $0x2d0] sm:$0xf]
      %v605 = vld [vmem:[%s1 + $0x2d4] sm:$0xf]
      %v606 = vld [vmem:[%s1 + $0x2d8] sm:$0xf]
      %v607 = vld [vmem:[%s1 + $0x2dc] sm:$0xf]
      %v608 = vld [vmem:[%s1 + $0x2e0] sm:$0xf]
      %v609 = vld [vmem:[%s1 + $0x2e4] sm:$0xf]
      %v610 = vld [vmem:[%s1 + $0x2e8] sm:$0xf]
      %v611 = vld [vmem:[%s1 + $0x2ec] sm:$0xf]
      %v612 = vld [vmem:[%s1 + $0x2f0] sm:$0xf]
      %v613 = vld [vmem:[%s1 + $0x2f4] sm:$0xf]
      %v614 = vld [vmem:[%s1 + $0x2f8] sm:$0xf]
      %v615 = vld [vmem:[%s1 + $0x2fc] sm:$0xf]
      %v808 = vunpack.c.l.b16 %v232
      %v809 = vunpack.c.h.b16 %v232
      %v810 = vunpack.c.l.b16 %v233
      %v811 = vunpack.c.h.b16 %v233
      %v812 = vunpack.c.l.b16 %v234
      %v813 = vunpack.c.h.b16 %v234
      %v814 = vunpack.c.l.b16 %v235
      %v815 = vunpack.c.h.b16 %v235
      %v816 = vunpack.c.l.b16 %v236
      %v817 = vunpack.c.h.b16 %v236
      %v818 = vunpack.c.l.b16 %v237
      %v819 = vunpack.c.h.b16 %v237
      %v820 = vunpack.c.l.b16 %v238
      %v821 = vunpack.c.h.b16 %v238
      %v822 = vunpack.c.l.b16 %v239
      %v823 = vunpack.c.h.b16 %v239
      %v824 = vunpack.c.l.b16 %v240
      %v825 = vunpack.c.h.b16 %v240
      %v826 = vunpack.c.l.b16 %v241
      %v827 = vunpack.c.h.b16 %v241
      %v828 = vunpack.c.l.b16 %v242
      %v829 = vunpack.c.h.b16 %v242
      %v830 = vunpack.c.l.b16 %v243
      %v831 = vunpack.c.h.b16 %v243
      %v832 = vunpack.c.l.b16 %v244
      %v833 = vunpack.c.h.b16 %v244
      %v834 = vunpack.c.l.b16 %v245
      %v835 = vunpack.c.h.b16 %v245
      %v836 = vunpack.c.l.b16 %v246
      %v837 = vunpack.c.h.b16 %v246
      %v838 = vunpack.c.l.b16 %v247
      %v839 = vunpack.c.h.b16 %v247
      %v840 = vunpack.c.l.b16 %v248
      %v841 = vunpack.c.h.b16 %v248
      %v842 = vunpack.c.l.b16 %v249
      %v843 = vunpack.c.h.b16 %v249
      %v844 = vunpack.c.l.b16 %v250
      %v845 = vunpack.c.h.b16 %v250
      %v846 = vunpack.c.l.b16 %v251
      %v847 = vunpack.c.h.b16 %v251
      %v848 = vunpack.c.l.b16 %v252
      %v849 = vunpack.c.h.b16 %v252
      %v850 = vunpack.c.l.b16 %v253
      %v851 = vunpack.c.h.b16 %v253
      %v852 = vunpack.c.l.b16 %v254
      %v853 = vunpack.c.h.b16 %v254
      %v854 = vunpack.c.l.b16 %v255
      %v855 = vunpack.c.h.b16 %v255
      %v856 = vunpack.c.l.b16 %v256
      %v857 = vunpack.c.h.b16 %v256
      %v858 = vunpack.c.l.b16 %v257
      %v859 = vunpack.c.h.b16 %v257
      %v860 = vunpack.c.l.b16 %v258
      %v861 = vunpack.c.h.b16 %v258
      %v862 = vunpack.c.l.b16 %v259
      %v863 = vunpack.c.h.b16 %v259
      %v864 = vunpack.c.l.b16 %v260
      %v865 = vunpack.c.h.b16 %v260
      %v866 = vunpack.c.l.b16 %v261
      %v867 = vunpack.c.h.b16 %v261
      %v868 = vunpack.c.l.b16 %v262
      %v869 = vunpack.c.h.b16 %v262
      %v870 = vunpack.c.l.b16 %v263
      %v871 = vunpack.c.h.b16 %v263
      %v872 = vunpack.c.l.b16 %v264
      %v873 = vunpack.c.h.b16 %v264
      %v874 = vunpack.c.l.b16 %v265
      %v875 = vunpack.c.h.b16 %v265
      %v876 = vunpack.c.l.b16 %v266
      %v877 = vunpack.c.h.b16 %v266
      %v878 = vunpack.c.l.b16 %v267
      %v879 = vunpack.c.h.b16 %v267
      %v880 = vunpack.c.l.b16 %v268
      %v881 = vunpack.c.h.b16 %v268
      %v882 = vunpack.c.l.b16 %v269
      %v883 = vunpack.c.h.b16 %v269
      %v884 = vunpack.c.l.b16 %v270
      %v885 = vunpack.c.h.b16 %v270
      %v886 = vunpack.c.l.b16 %v271
      %v887 = vunpack.c.h.b16 %v271
      %v888 = vunpack.c.l.b16 %v272
      %v889 = vunpack.c.h.b16 %v272
      %v890 = vunpack.c.l.b16 %v273
      %v891 = vunpack.c.h.b16 %v273
      %v892 = vunpack.c.l.b16 %v274
      %v893 = vunpack.c.h.b16 %v274
      %v894 = vunpack.c.l.b16 %v275
      %v895 = vunpack.c.h.b16 %v275
      %v896 = vunpack.c.l.b16 %v276
      %v897 = vunpack.c.h.b16 %v276
      %v898 = vunpack.c.l.b16 %v277
      %v899 = vunpack.c.h.b16 %v277
      %v900 = vunpack.c.l.b16 %v278
      %v901 = vunpack.c.h.b16 %v278
      %v902 = vunpack.c.l.b16 %v279
      %v903 = vunpack.c.h.b16 %v279
      %v904 = vunpack.c.l.b16 %v280
      %v905 = vunpack.c.h.b16 %v280
      %v906 = vunpack.c.l.b16 %v281
      %v907 = vunpack.c.h.b16 %v281
      %v908 = vunpack.c.l.b16 %v282
      %v909 = vunpack.c.h.b16 %v282
      %v910 = vunpack.c.l.b16 %v283
      %v911 = vunpack.c.h.b16 %v283
      %v912 = vunpack.c.l.b16 %v284
      %v913 = vunpack.c.h.b16 %v284
      %v914 = vunpack.c.l.b16 %v285
      %v915 = vunpack.c.h.b16 %v285
      %v916 = vunpack.c.l.b16 %v286
      %v917 = vunpack.c.h.b16 %v286
      %v918 = vunpack.c.l.b16 %v287
      %v919 = vunpack.c.h.b16 %v287
      %v920 = vunpack.c.l.b16 %v288
      %v921 = vunpack.c.h.b16 %v288
      %v922 = vunpack.c.l.b16 %v289
      %v923 = vunpack.c.h.b16 %v289
      %v924 = vunpack.c.l.b16 %v290
      %v925 = vunpack.c.h.b16 %v290
      %v926 = vunpack.c.l.b16 %v291
      %v927 = vunpack.c.h.b16 %v291
      %v928 = vunpack.c.l.b16 %v292
      %v929 = vunpack.c.h.b16 %v292
      %v930 = vunpack.c.l.b16 %v293
      %v931 = vunpack.c.h.b16 %v293
      %v932 = vunpack.c.l.b16 %v294
      %v933 = vunpack.c.h.b16 %v294
      %v934 = vunpack.c.l.b16 %v295
      %v935 = vunpack.c.h.b16 %v295
      %v936 = vunpack.c.l.b16 %v296
      %v937 = vunpack.c.h.b16 %v296
      %v938 = vunpack.c.l.b16 %v297
      %v939 = vunpack.c.h.b16 %v297
      %v940 = vunpack.c.l.b16 %v298
      %v941 = vunpack.c.h.b16 %v298
      %v942 = vunpack.c.l.b16 %v299
      %v943 = vunpack.c.h.b16 %v299
      %v944 = vunpack.c.l.b16 %v300
      %v945 = vunpack.c.h.b16 %v300
      %v946 = vunpack.c.l.b16 %v301
      %v947 = vunpack.c.h.b16 %v301
      %v948 = vunpack.c.l.b16 %v302
      %v949 = vunpack.c.h.b16 %v302
      %v950 = vunpack.c.l.b16 %v303
      %v951 = vunpack.c.h.b16 %v303
      %v952 = vunpack.c.l.b16 %v304
      %v953 = vunpack.c.h.b16 %v304
      %v954 = vunpack.c.l.b16 %v305
      %v955 = vunpack.c.h.b16 %v305
      %v956 = vunpack.c.l.b16 %v306
      %v957 = vunpack.c.h.b16 %v306
      %v958 = vunpack.c.l.b16 %v307
      %v959 = vunpack.c.h.b16 %v307
      %v960 = vunpack.c.l.b16 %v308
      %v961 = vunpack.c.h.b16 %v308
      %v962 = vunpack.c.l.b16 %v309
      %v963 = vunpack.c.h.b16 %v309
      %v964 = vunpack.c.l.b16 %v310
      %v965 = vunpack.c.h.b16 %v310
      %v966 = vunpack.c.l.b16 %v311
      %v967 = vunpack.c.h.b16 %v311
      %v968 = vunpack.c.l.b16 %v312
      %v969 = vunpack.c.h.b16 %v312
      %v970 = vunpack.c.l.b16 %v313
      %v971 = vunpack.c.h.b16 %v313
      %v972 = vunpack.c.l.b16 %v314
      %v973 = vunpack.c.h.b16 %v314
      %v974 = vunpack.c.l.b16 %v315
      %v975 = vunpack.c.h.b16 %v315
      %v976 = vunpack.c.l.b16 %v316
      %v977 = vunpack.c.h.b16 %v316
      %v978 = vunpack.c.l.b16 %v317
      %v979 = vunpack.c.h.b16 %v317
      %v980 = vunpack.c.l.b16 %v318
      %v981 = vunpack.c.h.b16 %v318
      %v982 = vunpack.c.l.b16 %v319
      %v983 = vunpack.c.h.b16 %v319
      %v984 = vunpack.c.l.b16 %v320
      %v985 = vunpack.c.h.b16 %v320
      %v986 = vunpack.c.l.b16 %v321
      %v987 = vunpack.c.h.b16 %v321
      %v988 = vunpack.c.l.b16 %v322
      %v989 = vunpack.c.h.b16 %v322
      %v990 = vunpack.c.l.b16 %v323
      %v991 = vunpack.c.h.b16 %v323
      %v992 = vunpack.c.l.b16 %v324
      %v993 = vunpack.c.h.b16 %v324
      %v994 = vunpack.c.l.b16 %v325
      %v995 = vunpack.c.h.b16 %v325
      %v996 = vunpack.c.l.b16 %v326
      %v997 = vunpack.c.h.b16 %v326
      %v998 = vunpack.c.l.b16 %v327
      %v999 = vunpack.c.h.b16 %v327
      %v1000 = vunpack.c.l.b16 %v328
      %v1001 = vunpack.c.h.b16 %v328
      %v1002 = vunpack.c.l.b16 %v329
      %v1003 = vunpack.c.h.b16 %v329
      %v1004 = vunpack.c.l.b16 %v330
      %v1005 = vunpack.c.h.b16 %v330
      %v1006 = vunpack.c.l.b16 %v331
      %v1007 = vunpack.c.h.b16 %v331
      %v1008 = vunpack.c.l.b16 %v332
      %v1009 = vunpack.c.h.b16 %v332
      %v1010 = vunpack.c.l.b16 %v333
      %v1011 = vunpack.c.h.b16 %v333
      %v1012 = vunpack.c.l.b16 %v334
      %v1013 = vunpack.c.h.b16 %v334
      %v1014 = vunpack.c.l.b16 %v335
      %v1015 = vunpack.c.h.b16 %v335
      %v1016 = vunpack.c.l.b16 %v336
      %v1017 = vunpack.c.h.b16 %v336
      %v1018 = vunpack.c.l.b16 %v337
      %v1019 = vunpack.c.h.b16 %v337
      %v1020 = vunpack.c.l.b16 %v338
      %v1021 = vunpack.c.h.b16 %v338
      %v1022 = vunpack.c.l.b16 %v339
      %v1023 = vunpack.c.h.b16 %v339
      %v1024 = vunpack.c.l.b16 %v340
      %v1025 = vunpack.c.h.b16 %v340
      %v1026 = vunpack.c.l.b16 %v341
      %v1027 = vunpack.c.h.b16 %v341
      %v1028 = vunpack.c.l.b16 %v342
      %v1029 = vunpack.c.h.b16 %v342
      %v1030 = vunpack.c.l.b16 %v343
      %v1031 = vunpack.c.h.b16 %v343
      %v1032 = vunpack.c.l.b16 %v344
      %v1033 = vunpack.c.h.b16 %v344
      %v1034 = vunpack.c.l.b16 %v345
      %v1035 = vunpack.c.h.b16 %v345
      %v1036 = vunpack.c.l.b16 %v346
      %v1037 = vunpack.c.h.b16 %v346
      %v1038 = vunpack.c.l.b16 %v347
      %v1039 = vunpack.c.h.b16 %v347
      %v1040 = vunpack.c.l.b16 %v348
      %v1041 = vunpack.c.h.b16 %v348
      %v1042 = vunpack.c.l.b16 %v349
      %v1043 = vunpack.c.h.b16 %v349
      %v1044 = vunpack.c.l.b16 %v350
      %v1045 = vunpack.c.h.b16 %v350
      %v1046 = vunpack.c.l.b16 %v351
      %v1047 = vunpack.c.h.b16 %v351
      %v1048 = vunpack.c.l.b16 %v352
      %v1049 = vunpack.c.h.b16 %v352
      %v1050 = vunpack.c.l.b16 %v353
      %v1051 = vunpack.c.h.b16 %v353
      %v1052 = vunpack.c.l.b16 %v354
      %v1053 = vunpack.c.h.b16 %v354
      %v1054 = vunpack.c.l.b16 %v355
      %v1055 = vunpack.c.h.b16 %v355
      %v1056 = vunpack.c.l.b16 %v356
      %v1057 = vunpack.c.h.b16 %v356
      %v1058 = vunpack.c.l.b16 %v357
      %v1059 = vunpack.c.h.b16 %v357
      %v1060 = vunpack.c.l.b16 %v358
      %v1061 = vunpack.c.h.b16 %v358
      %v1062 = vunpack.c.l.b16 %v359
      %v1063 = vunpack.c.h.b16 %v359
      %v1064 = vunpack.c.l.b16 %v360
      %v1065 = vunpack.c.h.b16 %v360
      %v1066 = vunpack.c.l.b16 %v361
      %v1067 = vunpack.c.h.b16 %v361
      %v1068 = vunpack.c.l.b16 %v362
      %v1069 = vunpack.c.h.b16 %v362
      %v1070 = vunpack.c.l.b16 %v363
      %v1071 = vunpack.c.h.b16 %v363
      %v1072 = vunpack.c.l.b16 %v364
      %v1073 = vunpack.c.h.b16 %v364
      %v1074 = vunpack.c.l.b16 %v365
      %v1075 = vunpack.c.h.b16 %v365
      %v1076 = vunpack.c.l.b16 %v366
      %v1077 = vunpack.c.h.b16 %v366
      %v1078 = vunpack.c.l.b16 %v367
      %v1079 = vunpack.c.h.b16 %v367
      %v1080 = vunpack.c.l.b16 %v368
      %v1081 = vunpack.c.h.b16 %v368
      %v1082 = vunpack.c.l.b16 %v369
      %v1083 = vunpack.c.h.b16 %v369
      %v1084 = vunpack.c.l.b16 %v370
      %v1085 = vunpack.c.h.b16 %v370
      %v1086 = vunpack.c.l.b16 %v371
      %v1087 = vunpack.c.h.b16 %v371
      %v1088 = vunpack.c.l.b16 %v372
      %v1089 = vunpack.c.h.b16 %v372
      %v1090 = vunpack.c.l.b16 %v373
      %v1091 = vunpack.c.h.b16 %v373
      %v1092 = vunpack.c.l.b16 %v374
      %v1093 = vunpack.c.h.b16 %v374
      %v1094 = vunpack.c.l.b16 %v375
      %v1095 = vunpack.c.h.b16 %v375
      %v1096 = vunpack.c.l.b16 %v376
      %v1097 = vunpack.c.h.b16 %v376
      %v1098 = vunpack.c.l.b16 %v377
      %v1099 = vunpack.c.h.b16 %v377
      %v1100 = vunpack.c.l.b16 %v378
      %v1101 = vunpack.c.h.b16 %v378
      %v1102 = vunpack.c.l.b16 %v379
      %v1103 = vunpack.c.h.b16 %v379
      %v1104 = vunpack.c.l.b16 %v380
      %v1105 = vunpack.c.h.b16 %v380
      %v1106 = vunpack.c.l.b16 %v381
      %v1107 = vunpack.c.h.b16 %v381
      %v1108 = vunpack.c.l.b16 %v382
      %v1109 = vunpack.c.h.b16 %v382
      %v1110 = vunpack.c.l.b16 %v383
      %v1111 = vunpack.c.h.b16 %v383
      %v1112 = vunpack.c.l.b16 %v384
      %v1113 = vunpack.c.h.b16 %v384
      %v1114 = vunpack.c.l.b16 %v385
      %v1115 = vunpack.c.h.b16 %v385
      %v1116 = vunpack.c.l.b16 %v386
      %v1117 = vunpack.c.h.b16 %v386
      %v1118 = vunpack.c.l.b16 %v387
      %v1119 = vunpack.c.h.b16 %v387
      %v1120 = vunpack.c.l.b16 %v388
      %v1121 = vunpack.c.h.b16 %v388
      %v1122 = vunpack.c.l.b16 %v389
      %v1123 = vunpack.c.h.b16 %v389
      %v1124 = vunpack.c.l.b16 %v390
      %v1125 = vunpack.c.h.b16 %v390
      %v1126 = vunpack.c.l.b16 %v391
      %v1127 = vunpack.c.h.b16 %v391
      %v1128 = vunpack.c.l.b16 %v392
      %v1129 = vunpack.c.h.b16 %v392
      %v1130 = vunpack.c.l.b16 %v393
      %v1131 = vunpack.c.h.b16 %v393
      %v1132 = vunpack.c.l.b16 %v394
      %v1133 = vunpack.c.h.b16 %v394
      %v1134 = vunpack.c.l.b16 %v395
      %v1135 = vunpack.c.h.b16 %v395
      %v1136 = vunpack.c.l.b16 %v396
      %v1137 = vunpack.c.h.b16 %v396
      %v1138 = vunpack.c.l.b16 %v397
      %v1139 = vunpack.c.h.b16 %v397
      %v1140 = vunpack.c.l.b16 %v398
      %v1141 = vunpack.c.h.b16 %v398
      %v1142 = vunpack.c.l.b16 %v399
      %v1143 = vunpack.c.h.b16 %v399
      %v1144 = vunpack.c.l.b16 %v400
      %v1145 = vunpack.c.h.b16 %v400
      %v1146 = vunpack.c.l.b16 %v401
      %v1147 = vunpack.c.h.b16 %v401
      %v1148 = vunpack.c.l.b16 %v402
      %v1149 = vunpack.c.h.b16 %v402
      %v1150 = vunpack.c.l.b16 %v403
      %v1151 = vunpack.c.h.b16 %v403
      %v1152 = vunpack.c.l.b16 %v404
      %v1153 = vunpack.c.h.b16 %v404
      %v1154 = vunpack.c.l.b16 %v405
      %v1155 = vunpack.c.h.b16 %v405
      %v1156 = vunpack.c.l.b16 %v406
      %v1157 = vunpack.c.h.b16 %v406
      %v1158 = vunpack.c.l.b16 %v407
      %v1159 = vunpack.c.h.b16 %v407
      %v1160 = vunpack.c.l.b16 %v408
      %v1161 = vunpack.c.h.b16 %v408
      %v1162 = vunpack.c.l.b16 %v409
      %v1163 = vunpack.c.h.b16 %v409
      %v1164 = vunpack.c.l.b16 %v410
      %v1165 = vunpack.c.h.b16 %v410
      %v1166 = vunpack.c.l.b16 %v411
      %v1167 = vunpack.c.h.b16 %v411
      %v1168 = vunpack.c.l.b16 %v412
      %v1169 = vunpack.c.h.b16 %v412
      %v1170 = vunpack.c.l.b16 %v413
      %v1171 = vunpack.c.h.b16 %v413
      %v1172 = vunpack.c.l.b16 %v414
      %v1173 = vunpack.c.h.b16 %v414
      %v1174 = vunpack.c.l.b16 %v415
      %v1175 = vunpack.c.h.b16 %v415
      %v1176 = vunpack.c.l.b16 %v416
      %v1177 = vunpack.c.h.b16 %v416
      %v1178 = vunpack.c.l.b16 %v417
      %v1179 = vunpack.c.h.b16 %v417
      %v1180 = vunpack.c.l.b16 %v418
      %v1181 = vunpack.c.h.b16 %v418
      %v1182 = vunpack.c.l.b16 %v419
      %v1183 = vunpack.c.h.b16 %v419
      %v1184 = vunpack.c.l.b16 %v420
      %v1185 = vunpack.c.h.b16 %v420
      %v1186 = vunpack.c.l.b16 %v421
      %v1187 = vunpack.c.h.b16 %v421
      %v1188 = vunpack.c.l.b16 %v422
      %v1189 = vunpack.c.h.b16 %v422
      %v1190 = vunpack.c.l.b16 %v423
      %v1191 = vunpack.c.h.b16 %v423
      %v1192 = vpack.c.b16 %v820, %v808
      %v1193 = vpack.c.b16 %v821, %v809
      %v1194 = vpack.c.b16 %v822, %v810
      %v1195 = vpack.c.b16 %v823, %v811
      %v1196 = vpack.c.b16 %v824, %v812
      %v1197 = vpack.c.b16 %v825, %v813
      %v1198 = vpack.c.b16 %v826, %v814
      %v1199 = vpack.c.b16 %v827, %v815
      %v1200 = vpack.c.b16 %v828, %v816
      %v1201 = vpack.c.b16 %v829, %v817
      %v1202 = vpack.c.b16 %v830, %v818
      %v1203 = vpack.c.b16 %v831, %v819
      %v1204 = vpack.c.b16 %v844, %v832
      %v1205 = vpack.c.b16 %v845, %v833
      %v1206 = vpack.c.b16 %v846, %v834
      %v1207 = vpack.c.b16 %v847, %v835
      %v1208 = vpack.c.b16 %v848, %v836
      %v1209 = vpack.c.b16 %v849, %v837
      %v1210 = vpack.c.b16 %v850, %v838
      %v1211 = vpack.c.b16 %v851, %v839
      %v1212 = vpack.c.b16 %v852, %v840
      %v1213 = vpack.c.b16 %v853, %v841
      %v1214 = vpack.c.b16 %v854, %v842
      %v1215 = vpack.c.b16 %v855, %v843
      %v1216 = vpack.c.b16 %v868, %v856
      %v1217 = vpack.c.b16 %v869, %v857
      %v1218 = vpack.c.b16 %v870, %v858
      %v1219 = vpack.c.b16 %v871, %v859
      %v1220 = vpack.c.b16 %v872, %v860
      %v1221 = vpack.c.b16 %v873, %v861
      %v1222 = vpack.c.b16 %v874, %v862
      %v1223 = vpack.c.b16 %v875, %v863
      %v1224 = vpack.c.b16 %v876, %v864
      %v1225 = vpack.c.b16 %v877, %v865
      %v1226 = vpack.c.b16 %v878, %v866
      %v1227 = vpack.c.b16 %v879, %v867
      %v1228 = vpack.c.b16 %v892, %v880
      %v1229 = vpack.c.b16 %v893, %v881
      %v1230 = vpack.c.b16 %v894, %v882
      %v1231 = vpack.c.b16 %v895, %v883
      %v1232 = vpack.c.b16 %v896, %v884
      %v1233 = vpack.c.b16 %v897, %v885
      %v1234 = vpack.c.b16 %v898, %v886
      %v1235 = vpack.c.b16 %v899, %v887
      %v1236 = vpack.c.b16 %v900, %v888
      %v1237 = vpack.c.b16 %v901, %v889
      %v1238 = vpack.c.b16 %v902, %v890
      %v1239 = vpack.c.b16 %v903, %v891
      %v1240 = vpack.c.b16 %v916, %v904
      %v1241 = vpack.c.b16 %v917, %v905
      %v1242 = vpack.c.b16 %v918, %v906
      %v1243 = vpack.c.b16 %v919, %v907
      %v1244 = vpack.c.b16 %v920, %v908
      %v1245 = vpack.c.b16 %v921, %v909
      %v1246 = vpack.c.b16 %v922, %v910
      %v1247 = vpack.c.b16 %v923, %v911
      %v1248 = vpack.c.b16 %v924, %v912
      %v1249 = vpack.c.b16 %v925, %v913
      %v1250 = vpack.c.b16 %v926, %v914
      %v1251 = vpack.c.b16 %v927, %v915
      %v1252 = vpack.c.b16 %v940, %v928
      %v1253 = vpack.c.b16 %v941, %v929
      %v1254 = vpack.c.b16 %v942, %v930
      %v1255 = vpack.c.b16 %v943, %v931
      %v1256 = vpack.c.b16 %v944, %v932
      %v1257 = vpack.c.b16 %v945, %v933
      %v1258 = vpack.c.b16 %v946, %v934
      %v1259 = vpack.c.b16 %v947, %v935
      %v1260 = vpack.c.b16 %v948, %v936
      %v1261 = vpack.c.b16 %v949, %v937
      %v1262 = vpack.c.b16 %v950, %v938
      %v1263 = vpack.c.b16 %v951, %v939
      %v1264 = vpack.c.b16 %v964, %v952
      %v1265 = vpack.c.b16 %v965, %v953
      %v1266 = vpack.c.b16 %v966, %v954
      %v1267 = vpack.c.b16 %v967, %v955
      %v1268 = vpack.c.b16 %v968, %v956
      %v1269 = vpack.c.b16 %v969, %v957
      %v1270 = vpack.c.b16 %v970, %v958
      %v1271 = vpack.c.b16 %v971, %v959
      %v1272 = vpack.c.b16 %v972, %v960
      %v1273 = vpack.c.b16 %v973, %v961
      %v1274 = vpack.c.b16 %v974, %v962
      %v1275 = vpack.c.b16 %v975, %v963
      %v1276 = vpack.c.b16 %v988, %v976
      %v1277 = vpack.c.b16 %v989, %v977
      %v1278 = vpack.c.b16 %v990, %v978
      %v1279 = vpack.c.b16 %v991, %v979
      %v1280 = vpack.c.b16 %v992, %v980
      %v1281 = vpack.c.b16 %v993, %v981
      %v1282 = vpack.c.b16 %v994, %v982
      %v1283 = vpack.c.b16 %v995, %v983
      %v1284 = vpack.c.b16 %v996, %v984
      %v1285 = vpack.c.b16 %v997, %v985
      %v1286 = vpack.c.b16 %v998, %v986
      %v1287 = vpack.c.b16 %v999, %v987
      %v1288 = vpack.c.b16 %v1012, %v1000
      %v1289 = vpack.c.b16 %v1013, %v1001
      %v1290 = vpack.c.b16 %v1014, %v1002
      %v1291 = vpack.c.b16 %v1015, %v1003
      %v1292 = vpack.c.b16 %v1016, %v1004
      %v1293 = vpack.c.b16 %v1017, %v1005
      %v1294 = vpack.c.b16 %v1018, %v1006
      %v1295 = vpack.c.b16 %v1019, %v1007
      %v1296 = vpack.c.b16 %v1020, %v1008
      %v1297 = vpack.c.b16 %v1021, %v1009
      %v1298 = vpack.c.b16 %v1022, %v1010
      %v1299 = vpack.c.b16 %v1023, %v1011
      %v1300 = vpack.c.b16 %v1036, %v1024
      %v1301 = vpack.c.b16 %v1037, %v1025
      %v1302 = vpack.c.b16 %v1038, %v1026
      %v1303 = vpack.c.b16 %v1039, %v1027
      %v1304 = vpack.c.b16 %v1040, %v1028
      %v1305 = vpack.c.b16 %v1041, %v1029
      %v1306 = vpack.c.b16 %v1042, %v1030
      %v1307 = vpack.c.b16 %v1043, %v1031
      %v1308 = vpack.c.b16 %v1044, %v1032
      %v1309 = vpack.c.b16 %v1045, %v1033
      %v1310 = vpack.c.b16 %v1046, %v1034
      %v1311 = vpack.c.b16 %v1047, %v1035
      %v1312 = vpack.c.b16 %v1060, %v1048
      %v1313 = vpack.c.b16 %v1061, %v1049
      %v1314 = vpack.c.b16 %v1062, %v1050
      %v1315 = vpack.c.b16 %v1063, %v1051
      %v1316 = vpack.c.b16 %v1064, %v1052
      %v1317 = vpack.c.b16 %v1065, %v1053
      %v1318 = vpack.c.b16 %v1066, %v1054
      %v1319 = vpack.c.b16 %v1067, %v1055
      %v1320 = vpack.c.b16 %v1068, %v1056
      %v1321 = vpack.c.b16 %v1069, %v1057
      %v1322 = vpack.c.b16 %v1070, %v1058
      %v1323 = vpack.c.b16 %v1071, %v1059
      %v1324 = vpack.c.b16 %v1084, %v1072
      %v1325 = vpack.c.b16 %v1085, %v1073
      %v1326 = vpack.c.b16 %v1086, %v1074
      %v1327 = vpack.c.b16 %v1087, %v1075
      %v1328 = vpack.c.b16 %v1088, %v1076
      %v1329 = vpack.c.b16 %v1089, %v1077
      %v1330 = vpack.c.b16 %v1090, %v1078
      %v1331 = vpack.c.b16 %v1091, %v1079
      %v1332 = vpack.c.b16 %v1092, %v1080
      %v1333 = vpack.c.b16 %v1093, %v1081
      %v1334 = vpack.c.b16 %v1094, %v1082
      %v1335 = vpack.c.b16 %v1095, %v1083
      %v1336 = vpack.c.b16 %v1108, %v1096
      %v1337 = vpack.c.b16 %v1109, %v1097
      %v1338 = vpack.c.b16 %v1110, %v1098
      %v1339 = vpack.c.b16 %v1111, %v1099
      %v1340 = vpack.c.b16 %v1112, %v1100
      %v1341 = vpack.c.b16 %v1113, %v1101
      %v1342 = vpack.c.b16 %v1114, %v1102
      %v1343 = vpack.c.b16 %v1115, %v1103
      %v1344 = vpack.c.b16 %v1116, %v1104
      %v1345 = vpack.c.b16 %v1117, %v1105
      %v1346 = vpack.c.b16 %v1118, %v1106
      %v1347 = vpack.c.b16 %v1119, %v1107
      %v1348 = vpack.c.b16 %v1132, %v1120
      %v1349 = vpack.c.b16 %v1133, %v1121
      %v1350 = vpack.c.b16 %v1134, %v1122
      %v1351 = vpack.c.b16 %v1135, %v1123
      %v1352 = vpack.c.b16 %v1136, %v1124
      %v1353 = vpack.c.b16 %v1137, %v1125
      %v1354 = vpack.c.b16 %v1138, %v1126
      %v1355 = vpack.c.b16 %v1139, %v1127
      %v1356 = vpack.c.b16 %v1140, %v1128
      %v1357 = vpack.c.b16 %v1141, %v1129
      %v1358 = vpack.c.b16 %v1142, %v1130
      %v1359 = vpack.c.b16 %v1143, %v1131
      %v1360 = vpack.c.b16 %v1156, %v1144
      %v1361 = vpack.c.b16 %v1157, %v1145
      %v1362 = vpack.c.b16 %v1158, %v1146
      %v1363 = vpack.c.b16 %v1159, %v1147
      %v1364 = vpack.c.b16 %v1160, %v1148
      %v1365 = vpack.c.b16 %v1161, %v1149
      %v1366 = vpack.c.b16 %v1162, %v1150
      %v1367 = vpack.c.b16 %v1163, %v1151
      %v1368 = vpack.c.b16 %v1164, %v1152
      %v1369 = vpack.c.b16 %v1165, %v1153
      %v1370 = vpack.c.b16 %v1166, %v1154
      %v1371 = vpack.c.b16 %v1167, %v1155
      %v1372 = vpack.c.b16 %v1180, %v1168
      %v1373 = vpack.c.b16 %v1181, %v1169
      %v1374 = vpack.c.b16 %v1182, %v1170
      %v1375 = vpack.c.b16 %v1183, %v1171
      %v1376 = vpack.c.b16 %v1184, %v1172
      %v1377 = vpack.c.b16 %v1185, %v1173
      %v1378 = vpack.c.b16 %v1186, %v1174
      %v1379 = vpack.c.b16 %v1187, %v1175
      %v1380 = vpack.c.b16 %v1188, %v1176
      %v1381 = vpack.c.b16 %v1189, %v1177
      %v1382 = vpack.c.b16 %v1190, %v1178
      %v1383 = vpack.c.b16 %v1191, %v1179
      %v1768 = vunpack.c.l.b16 %v424
      %v1769 = vunpack.c.l.b16 %v425
      %v1770 = vunpack.c.l.b16 %v426
      %v1771 = vunpack.c.l.b16 %v427
      %v1772 = vunpack.c.l.b16 %v428
      %v1773 = vunpack.c.l.b16 %v429
      %v1774 = vunpack.c.l.b16 %v430
      %v1775 = vunpack.c.l.b16 %v431
      %v1776 = vunpack.c.l.b16 %v432
      %v1777 = vunpack.c.l.b16 %v433
      %v1778 = vunpack.c.l.b16 %v434
      %v1779 = vunpack.c.l.b16 %v435
      %v1780 = vunpack.c.l.b16 %v436
      %v1781 = vunpack.c.l.b16 %v437
      %v1782 = vunpack.c.l.b16 %v438
      %v1783 = vunpack.c.l.b16 %v439
      %v1784 = vunpack.c.l.b16 %v440
      %v1785 = vunpack.c.l.b16 %v441
      %v1786 = vunpack.c.l.b16 %v442
      %v1787 = vunpack.c.l.b16 %v443
      %v1788 = vunpack.c.l.b16 %v444
      %v1789 = vunpack.c.l.b16 %v445
      %v1790 = vunpack.c.l.b16 %v446
      %v1791 = vunpack.c.l.b16 %v447
      %v1792 = vunpack.c.l.b16 %v448
      %v1793 = vunpack.c.l.b16 %v449
      %v1794 = vunpack.c.l.b16 %v450
      %v1795 = vunpack.c.l.b16 %v451
      %v1796 = vunpack.c.l.b16 %v452
      %v1797 = vunpack.c.l.b16 %v453
      %v1798 = vunpack.c.l.b16 %v454
      %v1799 = vunpack.c.l.b16 %v455
      %v1800 = vunpack.c.l.b16 %v456
      %v1801 = vunpack.c.l.b16 %v457
      %v1802 = vunpack.c.l.b16 %v458
      %v1803 = vunpack.c.l.b16 %v459
      %v1804 = vunpack.c.l.b16 %v460
      %v1805 = vunpack.c.l.b16 %v461
      %v1806 = vunpack.c.l.b16 %v462
      %v1807 = vunpack.c.l.b16 %v463
      %v1808 = vunpack.c.l.b16 %v464
      %v1809 = vunpack.c.l.b16 %v465
      %v1810 = vunpack.c.l.b16 %v466
      %v1811 = vunpack.c.l.b16 %v467
      %v1812 = vunpack.c.l.b16 %v468
      %v1813 = vunpack.c.l.b16 %v469
      %v1814 = vunpack.c.l.b16 %v470
      %v1815 = vunpack.c.l.b16 %v471
      %v1816 = vunpack.c.l.b16 %v472
      %v1817 = vunpack.c.l.b16 %v473
      %v1818 = vunpack.c.l.b16 %v474
      %v1819 = vunpack.c.l.b16 %v475
      %v1820 = vunpack.c.l.b16 %v476
      %v1821 = vunpack.c.l.b16 %v477
      %v1822 = vunpack.c.l.b16 %v478
      %v1823 = vunpack.c.l.b16 %v479
      %v1824 = vunpack.c.l.b16 %v480
      %v1825 = vunpack.c.l.b16 %v481
      %v1826 = vunpack.c.l.b16 %v482
      %v1827 = vunpack.c.l.b16 %v483
      %v1828 = vunpack.c.l.b16 %v484
      %v1829 = vunpack.c.l.b16 %v485
      %v1830 = vunpack.c.l.b16 %v486
      %v1831 = vunpack.c.l.b16 %v487
      %v1832 = vunpack.c.l.b16 %v488
      %v1833 = vunpack.c.l.b16 %v489
      %v1834 = vunpack.c.l.b16 %v490
      %v1835 = vunpack.c.l.b16 %v491
      %v1836 = vunpack.c.l.b16 %v492
      %v1837 = vunpack.c.l.b16 %v493
      %v1838 = vunpack.c.l.b16 %v494
      %v1839 = vunpack.c.l.b16 %v495
      %v1840 = vunpack.c.l.b16 %v496
      %v1841 = vunpack.c.l.b16 %v497
      %v1842 = vunpack.c.l.b16 %v498
      %v1843 = vunpack.c.l.b16 %v499
      %v1844 = vunpack.c.l.b16 %v500
      %v1845 = vunpack.c.l.b16 %v501
      %v1846 = vunpack.c.l.b16 %v502
      %v1847 = vunpack.c.l.b16 %v503
      %v1848 = vunpack.c.l.b16 %v504
      %v1849 = vunpack.c.l.b16 %v505
      %v1850 = vunpack.c.l.b16 %v506
      %v1851 = vunpack.c.l.b16 %v507
      %v1852 = vunpack.c.l.b16 %v508
      %v1853 = vunpack.c.l.b16 %v509
      %v1854 = vunpack.c.l.b16 %v510
      %v1855 = vunpack.c.l.b16 %v511
      %v1856 = vunpack.c.l.b16 %v512
      %v1857 = vunpack.c.l.b16 %v513
      %v1858 = vunpack.c.l.b16 %v514
      %v1859 = vunpack.c.l.b16 %v515
      %v1860 = vunpack.c.l.b16 %v516
      %v1861 = vunpack.c.l.b16 %v517
      %v1862 = vunpack.c.l.b16 %v518
      %v1863 = vunpack.c.l.b16 %v519
      %v1864 = vunpack.c.l.b16 %v520
      %v1865 = vunpack.c.l.b16 %v521
      %v1866 = vunpack.c.l.b16 %v522
      %v1867 = vunpack.c.l.b16 %v523
      %v1868 = vunpack.c.l.b16 %v524
      %v1869 = vunpack.c.l.b16 %v525
      %v1870 = vunpack.c.l.b16 %v526
      %v1871 = vunpack.c.l.b16 %v527
      %v1872 = vunpack.c.l.b16 %v528
      %v1873 = vunpack.c.l.b16 %v529
      %v1874 = vunpack.c.l.b16 %v530
      %v1875 = vunpack.c.l.b16 %v531
      %v1876 = vunpack.c.l.b16 %v532
      %v1877 = vunpack.c.l.b16 %v533
      %v1878 = vunpack.c.l.b16 %v534
      %v1879 = vunpack.c.l.b16 %v535
      %v1880 = vunpack.c.l.b16 %v536
      %v1881 = vunpack.c.l.b16 %v537
      %v1882 = vunpack.c.l.b16 %v538
      %v1883 = vunpack.c.l.b16 %v539
      %v1884 = vunpack.c.l.b16 %v540
      %v1885 = vunpack.c.l.b16 %v541
      %v1886 = vunpack.c.l.b16 %v542
      %v1887 = vunpack.c.l.b16 %v543
      %v1888 = vunpack.c.l.b16 %v544
      %v1889 = vunpack.c.l.b16 %v545
      %v1890 = vunpack.c.l.b16 %v546
      %v1891 = vunpack.c.l.b16 %v547
      %v1892 = vunpack.c.l.b16 %v548
      %v1893 = vunpack.c.l.b16 %v549
      %v1894 = vunpack.c.l.b16 %v550
      %v1895 = vunpack.c.l.b16 %v551
      %v1896 = vunpack.c.l.b16 %v552
      %v1897 = vunpack.c.l.b16 %v553
      %v1898 = vunpack.c.l.b16 %v554
      %v1899 = vunpack.c.l.b16 %v555
      %v1900 = vunpack.c.l.b16 %v556
      %v1901 = vunpack.c.l.b16 %v557
      %v1902 = vunpack.c.l.b16 %v558
      %v1903 = vunpack.c.l.b16 %v559
      %v1904 = vunpack.c.l.b16 %v560
      %v1905 = vunpack.c.l.b16 %v561
      %v1906 = vunpack.c.l.b16 %v562
      %v1907 = vunpack.c.l.b16 %v563
      %v1908 = vunpack.c.l.b16 %v564
      %v1909 = vunpack.c.l.b16 %v565
      %v1910 = vunpack.c.l.b16 %v566
      %v1911 = vunpack.c.l.b16 %v567
      %v1912 = vunpack.c.l.b16 %v568
      %v1913 = vunpack.c.l.b16 %v569
      %v1914 = vunpack.c.l.b16 %v570
      %v1915 = vunpack.c.l.b16 %v571
      %v1916 = vunpack.c.l.b16 %v572
      %v1917 = vunpack.c.l.b16 %v573
      %v1918 = vunpack.c.l.b16 %v574
      %v1919 = vunpack.c.l.b16 %v575
      %v1920 = vunpack.c.l.b16 %v576
      %v1921 = vunpack.c.l.b16 %v577
      %v1922 = vunpack.c.l.b16 %v578
      %v1923 = vunpack.c.l.b16 %v579
      %v1924 = vunpack.c.l.b16 %v580
      %v1925 = vunpack.c.l.b16 %v581
      %v1926 = vunpack.c.l.b16 %v582
      %v1927 = vunpack.c.l.b16 %v583
      %v1928 = vunpack.c.l.b16 %v584
      %v1929 = vunpack.c.l.b16 %v585
      %v1930 = vunpack.c.l.b16 %v586
      %v1931 = vunpack.c.l.b16 %v587
      %v1932 = vunpack.c.l.b16 %v588
      %v1933 = vunpack.c.l.b16 %v589
      %v1934 = vunpack.c.l.b16 %v590
      %v1935 = vunpack.c.l.b16 %v591
      %v1936 = vunpack.c.l.b16 %v592
      %v1937 = vunpack.c.l.b16 %v593
      %v1938 = vunpack.c.l.b16 %v594
      %v1939 = vunpack.c.l.b16 %v595
      %v1940 = vunpack.c.l.b16 %v596
      %v1941 = vunpack.c.l.b16 %v597
      %v1942 = vunpack.c.l.b16 %v598
      %v1943 = vunpack.c.l.b16 %v599
      %v1944 = vunpack.c.l.b16 %v600
      %v1945 = vunpack.c.l.b16 %v601
      %v1946 = vunpack.c.l.b16 %v602
      %v1947 = vunpack.c.l.b16 %v603
      %v1948 = vunpack.c.l.b16 %v604
      %v1949 = vunpack.c.l.b16 %v605
      %v1950 = vunpack.c.l.b16 %v606
      %v1951 = vunpack.c.l.b16 %v607
      %v1952 = vunpack.c.l.b16 %v608
      %v1953 = vunpack.c.l.b16 %v609
      %v1954 = vunpack.c.l.b16 %v610
      %v1955 = vunpack.c.l.b16 %v611
      %v1956 = vunpack.c.l.b16 %v612
      %v1957 = vunpack.c.l.b16 %v613
      %v1958 = vunpack.c.l.b16 %v614
      %v1959 = vunpack.c.l.b16 %v615
      %v1960 = vpack.c.b16 %v1769, %v1768
      %v1961 = vpack.c.b16 %v1771, %v1770
      %v1962 = vpack.c.b16 %v1773, %v1772
      %v1963 = vpack.c.b16 %v1775, %v1774
      %v1964 = vpack.c.b16 %v1777, %v1776
      %v1965 = vpack.c.b16 %v1779, %v1778
      %v1966 = vpack.c.b16 %v1781, %v1780
      %v1967 = vpack.c.b16 %v1783, %v1782
      %v1968 = vpack.c.b16 %v1785, %v1784
      %v1969 = vpack.c.b16 %v1787, %v1786
      %v1970 = vpack.c.b16 %v1789, %v1788
      %v1971 = vpack.c.b16 %v1791, %v1790
      %v1972 = vpack.c.b16 %v1793, %v1792
      %v1973 = vpack.c.b16 %v1795, %v1794
      %v1974 = vpack.c.b16 %v1797, %v1796
      %v1975 = vpack.c.b16 %v1799, %v1798
      %v1976 = vpack.c.b16 %v1801, %v1800
      %v1977 = vpack.c.b16 %v1803, %v1802
      %v1978 = vpack.c.b16 %v1805, %v1804
      %v1979 = vpack.c.b16 %v1807, %v1806
      %v1980 = vpack.c.b16 %v1809, %v1808
      %v1981 = vpack.c.b16 %v1811, %v1810
      %v1982 = vpack.c.b16 %v1813, %v1812
      %v1983 = vpack.c.b16 %v1815, %v1814
      %v1984 = vpack.c.b16 %v1817, %v1816
      %v1985 = vpack.c.b16 %v1819, %v1818
      %v1986 = vpack.c.b16 %v1821, %v1820
      %v1987 = vpack.c.b16 %v1823, %v1822
      %v1988 = vpack.c.b16 %v1825, %v1824
      %v1989 = vpack.c.b16 %v1827, %v1826
      %v1990 = vpack.c.b16 %v1829, %v1828
      %v1991 = vpack.c.b16 %v1831, %v1830
      %v1992 = vpack.c.b16 %v1833, %v1832
      %v1993 = vpack.c.b16 %v1835, %v1834
      %v1994 = vpack.c.b16 %v1837, %v1836
      %v1995 = vpack.c.b16 %v1839, %v1838
      %v1996 = vpack.c.b16 %v1841, %v1840
      %v1997 = vpack.c.b16 %v1843, %v1842
      %v1998 = vpack.c.b16 %v1845, %v1844
      %v1999 = vpack.c.b16 %v1847, %v1846
      %v2000 = vpack.c.b16 %v1849, %v1848
      %v2001 = vpack.c.b16 %v1851, %v1850
      %v2002 = vpack.c.b16 %v1853, %v1852
      %v2003 = vpack.c.b16 %v1855, %v1854
      %v2004 = vpack.c.b16 %v1857, %v1856
      %v2005 = vpack.c.b16 %v1859, %v1858
      %v2006 = vpack.c.b16 %v1861, %v1860
      %v2007 = vpack.c.b16 %v1863, %v1862
      %v2008 = vpack.c.b16 %v1865, %v1864
      %v2009 = vpack.c.b16 %v1867, %v1866
      %v2010 = vpack.c.b16 %v1869, %v1868
      %v2011 = vpack.c.b16 %v1871, %v1870
      %v2012 = vpack.c.b16 %v1873, %v1872
      %v2013 = vpack.c.b16 %v1875, %v1874
      %v2014 = vpack.c.b16 %v1877, %v1876
      %v2015 = vpack.c.b16 %v1879, %v1878
      %v2016 = vpack.c.b16 %v1881, %v1880
      %v2017 = vpack.c.b16 %v1883, %v1882
      %v2018 = vpack.c.b16 %v1885, %v1884
      %v2019 = vpack.c.b16 %v1887, %v1886
      %v2020 = vpack.c.b16 %v1889, %v1888
      %v2021 = vpack.c.b16 %v1891, %v1890
      %v2022 = vpack.c.b16 %v1893, %v1892
      %v2023 = vpack.c.b16 %v1895, %v1894
      %v2024 = vpack.c.b16 %v1897, %v1896
      %v2025 = vpack.c.b16 %v1899, %v1898
      %v2026 = vpack.c.b16 %v1901, %v1900
      %v2027 = vpack.c.b16 %v1903, %v1902
      %v2028 = vpack.c.b16 %v1905, %v1904
      %v2029 = vpack.c.b16 %v1907, %v1906
      %v2030 = vpack.c.b16 %v1909, %v1908
      %v2031 = vpack.c.b16 %v1911, %v1910
      %v2032 = vpack.c.b16 %v1913, %v1912
      %v2033 = vpack.c.b16 %v1915, %v1914
      %v2034 = vpack.c.b16 %v1917, %v1916
      %v2035 = vpack.c.b16 %v1919, %v1918
      %v2036 = vpack.c.b16 %v1921, %v1920
      %v2037 = vpack.c.b16 %v1923, %v1922
      %v2038 = vpack.c.b16 %v1925, %v1924
      %v2039 = vpack.c.b16 %v1927, %v1926
      %v2040 = vpack.c.b16 %v1929, %v1928
      %v2041 = vpack.c.b16 %v1931, %v1930
      %v2042 = vpack.c.b16 %v1933, %v1932
      %v2043 = vpack.c.b16 %v1935, %v1934
      %v2044 = vpack.c.b16 %v1937, %v1936
      %v2045 = vpack.c.b16 %v1939, %v1938
      %v2046 = vpack.c.b16 %v1941, %v1940
      %v2047 = vpack.c.b16 %v1943, %v1942
      %v2048 = vpack.c.b16 %v1945, %v1944
      %v2049 = vpack.c.b16 %v1947, %v1946
      %v2050 = vpack.c.b16 %v1949, %v1948
      %v2051 = vpack.c.b16 %v1951, %v1950
      %v2052 = vpack.c.b16 %v1953, %v1952
      %v2053 = vpack.c.b16 %v1955, %v1954
      %v2054 = vpack.c.b16 %v1957, %v1956
      %v2055 = vpack.c.b16 %v1959, %v1958
      %2152 = vmatprep.subr.bf16.mxu0 0
      %2153 = vmatpush1.bf16.msra.mxu0 %v1967
      %2154 = vmatprep.subr.bf16.mxu0 0
      %2155 = vmatpush1.bf16.msra.mxu0 %v1966
      %2156 = vmatprep.subr.bf16.mxu0 0
      %2157 = vmatpush1.bf16.msra.mxu0 %v1965
      %2158 = vmatprep.subr.bf16.mxu0 0
      %2159 = vmatpush1.bf16.msra.mxu0 %v1964
      %2160 = vmatprep.subr.bf16.mxu0 0
      %2161 = vmatpush1.bf16.msra.mxu0 %v1963
      %2162 = vmatprep.subr.bf16.mxu0 0
      %2163 = vmatpush1.bf16.msra.mxu0 %v1962
      %2164 = vmatprep.subr.bf16.mxu0 0
      %2165 = vmatpush1.bf16.msra.mxu0 %v1961
      %2166 = vmatprep.subr.bf16.mxu0 0
      %2167 = vmatpush1.bf16.msra.mxu0 %v1960
      %2168 = vmatprep.subr.bf16.mxu0 0
      %2169 = vmatpush2.bf16.msra.mxu0 %v1975
      %2170 = vmatprep.subr.bf16.mxu0 0
      %2171 = vmatpush2.bf16.msra.mxu0 %v1974
      %2172 = vmatprep.subr.bf16.mxu0 0
      %2173 = vmatpush2.bf16.msra.mxu0 %v1973
      %2174 = vmatprep.subr.bf16.mxu0 0
      %2175 = vmatpush2.bf16.msra.mxu0 %v1972
      %2176 = vmatprep.subr.bf16.mxu0 0
      %2177 = vmatpush2.bf16.msra.mxu0 %v1971
      %2178 = vmatprep.subr.bf16.mxu0 0
      %2179 = vmatpush2.bf16.msra.mxu0 %v1970
      %2180 = vmatprep.subr.bf16.mxu0 0
      %2181 = vmatpush2.bf16.msra.mxu0 %v1969
      %2182 = vmatprep.subr.bf16.mxu0 0
      %2183 = vmatpush2.bf16.msra.mxu0 %v1968
      %2184 = vmatprep.mubr.bf16.mxu0 %v1193
      %2185 = vmatmul.mubr.bf16.gmra.mxu0 %v1192
      %v2186 = vpop.f32.mrf.mxu0
      %v2187 = vadd.f32 0.0, %v2186
      %v2188 = vpop.f32.mrf.mxu0
      %v2189 = vpop.f32.mrf.mxu0
      %v2190 = vadd.f32 0.0, %v2189
      %v2191 = vpop.f32.mrf.mxu0
      %2192 = vmatprep.mubr.bf16.mxu0 %v1205
      %2193 = vmatmul.mubr.bf16.gmra.mxu0 %v1204
      %v2194 = vpop.f32.mrf.mxu0
      %v2195 = vadd.f32 0.0, %v2194
      %v2196 = vpop.f32.mrf.mxu0
      %v2197 = vpop.f32.mrf.mxu0
      %v2198 = vadd.f32 0.0, %v2197
      %v2199 = vpop.f32.mrf.mxu0
      %2200 = vmatprep.mubr.bf16.mxu0 %v1217
      %2201 = vmatmul.mubr.bf16.gmra.mxu0 %v1216
      %v2202 = vpop.f32.mrf.mxu0
      %v2203 = vadd.f32 0.0, %v2202
      %v2204 = vpop.f32.mrf.mxu0
      %v2205 = vpop.f32.mrf.mxu0
      %v2206 = vadd.f32 0.0, %v2205
      %v2207 = vpop.f32.mrf.mxu0
      %2208 = vmatprep.mubr.bf16.mxu0 %v1229
      %2209 = vmatmul.mubr.bf16.gmra.mxu0 %v1228
      %v2210 = vpop.f32.mrf.mxu0
      %v2211 = vadd.f32 0.0, %v2210
      %v2212 = vpop.f32.mrf.mxu0
      %v2213 = vpop.f32.mrf.mxu0
      %v2214 = vadd.f32 0.0, %v2213
      %v2215 = vpop.f32.mrf.mxu0
      %2216 = vmatprep.mubr.bf16.mxu0 %v1241
      %2217 = vmatmul.mubr.bf16.gmra.mxu0 %v1240
      %v2218 = vpop.f32.mrf.mxu0
      %v2219 = vadd.f32 0.0, %v2218
      %v2220 = vpop.f32.mrf.mxu0
      %v2221 = vpop.f32.mrf.mxu0
      %v2222 = vadd.f32 0.0, %v2221
      %v2223 = vpop.f32.mrf.mxu0
      %2224 = vmatprep.mubr.bf16.mxu0 %v1253
      %2225 = vmatmul.mubr.bf16.gmra.mxu0 %v1252
      %v2226 = vpop.f32.mrf.mxu0
      %v2227 = vadd.f32 0.0, %v2226
      %v2228 = vpop.f32.mrf.mxu0
      %v2229 = vpop.f32.mrf.mxu0
      %v2230 = vadd.f32 0.0, %v2229
      %v2231 = vpop.f32.mrf.mxu0
      %2232 = vmatprep.mubr.bf16.mxu0 %v1265
      %2233 = vmatmul.mubr.bf16.gmra.mxu0 %v1264
      %v2234 = vpop.f32.mrf.mxu0
      %v2235 = vadd.f32 0.0, %v2234
      %v2236 = vpop.f32.mrf.mxu0
      %v2237 = vpop.f32.mrf.mxu0
      %v2238 = vadd.f32 0.0, %v2237
      %v2239 = vpop.f32.mrf.mxu0
      %2240 = vmatprep.mubr.bf16.mxu0 %v1277
      %2241 = vmatmul.mubr.bf16.gmra.mxu0 %v1276
      %v2242 = vpop.f32.mrf.mxu0
      %v2243 = vadd.f32 0.0, %v2242
      %v2244 = vpop.f32.mrf.mxu0
      %v2245 = vpop.f32.mrf.mxu0
      %v2246 = vadd.f32 0.0, %v2245
      %v2247 = vpop.f32.mrf.mxu0
      %2248 = vmatprep.mubr.bf16.mxu0 %v1289
      %2249 = vmatmul.mubr.bf16.gmra.mxu0 %v1288
      %v2250 = vpop.f32.mrf.mxu0
      %v2251 = vadd.f32 0.0, %v2250
      %v2252 = vpop.f32.mrf.mxu0
      %v2253 = vpop.f32.mrf.mxu0
      %v2254 = vadd.f32 0.0, %v2253
      %v2255 = vpop.f32.mrf.mxu0
      %2256 = vmatprep.mubr.bf16.mxu0 %v1301
      %2257 = vmatmul.mubr.bf16.gmra.mxu0 %v1300
      %v2258 = vpop.f32.mrf.mxu0
      %v2259 = vadd.f32 0.0, %v2258
      %v2260 = vpop.f32.mrf.mxu0
      %v2261 = vpop.f32.mrf.mxu0
      %v2262 = vadd.f32 0.0, %v2261
      %v2263 = vpop.f32.mrf.mxu0
      %2264 = vmatprep.mubr.bf16.mxu0 %v1313
      %2265 = vmatmul.mubr.bf16.gmra.mxu0 %v1312
      %v2266 = vpop.f32.mrf.mxu0
      %v2267 = vadd.f32 0.0, %v2266
      %v2268 = vpop.f32.mrf.mxu0
      %v2269 = vpop.f32.mrf.mxu0
      %v2270 = vadd.f32 0.0, %v2269
      %v2271 = vpop.f32.mrf.mxu0
      %2272 = vmatprep.mubr.bf16.mxu0 %v1325
      %2273 = vmatmul.mubr.bf16.gmra.mxu0 %v1324
      %v2274 = vpop.f32.mrf.mxu0
      %v2275 = vadd.f32 0.0, %v2274
      %v2276 = vpop.f32.mrf.mxu0
      %v2277 = vpop.f32.mrf.mxu0
      %v2278 = vadd.f32 0.0, %v2277
      %v2279 = vpop.f32.mrf.mxu0
      %2280 = vmatprep.mubr.bf16.mxu0 %v1337
      %2281 = vmatmul.mubr.bf16.gmra.mxu0 %v1336
      %v2282 = vpop.f32.mrf.mxu0
      %v2283 = vadd.f32 0.0, %v2282
      %v2284 = vpop.f32.mrf.mxu0
      %v2285 = vpop.f32.mrf.mxu0
      %v2286 = vadd.f32 0.0, %v2285
      %v2287 = vpop.f32.mrf.mxu0
      %2288 = vmatprep.mubr.bf16.mxu0 %v1349
      %2289 = vmatmul.mubr.bf16.gmra.mxu0 %v1348
      %v2290 = vpop.f32.mrf.mxu0
      %v2291 = vadd.f32 0.0, %v2290
      %v2292 = vpop.f32.mrf.mxu0
      %v2293 = vpop.f32.mrf.mxu0
      %v2294 = vadd.f32 0.0, %v2293
      %v2295 = vpop.f32.mrf.mxu0
      %2296 = vmatprep.mubr.bf16.mxu0 %v1361
      %2297 = vmatmul.mubr.bf16.gmra.mxu0 %v1360
      %v2298 = vpop.f32.mrf.mxu0
      %v2299 = vadd.f32 0.0, %v2298
      %v2300 = vpop.f32.mrf.mxu0
      %v2301 = vpop.f32.mrf.mxu0
      %v2302 = vadd.f32 0.0, %v2301
      %v2303 = vpop.f32.mrf.mxu0
      %2304 = vmatprep.mubr.bf16.mxu0 %v1373
      %2305 = vmatmul.mubr.bf16.gmra.mxu0 %v1372
      %v2306 = vpop.f32.mrf.mxu0
      %v2307 = vadd.f32 0.0, %v2306
      %v2308 = vpop.f32.mrf.mxu0
      %v2309 = vpop.f32.mrf.mxu0
      %v2310 = vadd.f32 0.0, %v2309
      %v2311 = vpop.f32.mrf.mxu0
      %2312 = vdwg.mxu0
      %2313 = vmatprep.subr.bf16.mxu0 0
      %2314 = vmatpush1.bf16.msra.mxu0 %v1983
      %2315 = vmatprep.subr.bf16.mxu0 0
      %2316 = vmatpush1.bf16.msra.mxu0 %v1982
      %2317 = vmatprep.subr.bf16.mxu0 0
      %2318 = vmatpush1.bf16.msra.mxu0 %v1981
      %2319 = vmatprep.subr.bf16.mxu0 0
      %2320 = vmatpush1.bf16.msra.mxu0 %v1980
      %2321 = vmatprep.subr.bf16.mxu0 0
      %2322 = vmatpush1.bf16.msra.mxu0 %v1979
      %2323 = vmatprep.subr.bf16.mxu0 0
      %2324 = vmatpush1.bf16.msra.mxu0 %v1978
      %2325 = vmatprep.subr.bf16.mxu0 0
      %2326 = vmatpush1.bf16.msra.mxu0 %v1977
      %2327 = vmatprep.subr.bf16.mxu0 0
      %2328 = vmatpush1.bf16.msra.mxu0 %v1976
      %2329 = vmatprep.subr.bf16.mxu0 0
      %2330 = vmatpush2.bf16.msra.mxu0 %v1991
      %2331 = vmatprep.subr.bf16.mxu0 0
      %2332 = vmatpush2.bf16.msra.mxu0 %v1990
      %2333 = vmatprep.subr.bf16.mxu0 0
      %2334 = vmatpush2.bf16.msra.mxu0 %v1989
      %2335 = vmatprep.subr.bf16.mxu0 0
      %2336 = vmatpush2.bf16.msra.mxu0 %v1988
      %2337 = vmatprep.subr.bf16.mxu0 0
      %2338 = vmatpush2.bf16.msra.mxu0 %v1987
      %2339 = vmatprep.subr.bf16.mxu0 0
      %2340 = vmatpush2.bf16.msra.mxu0 %v1986
      %2341 = vmatprep.subr.bf16.mxu0 0
      %2342 = vmatpush2.bf16.msra.mxu0 %v1985
      %2343 = vmatprep.subr.bf16.mxu0 0
      %2344 = vmatpush2.bf16.msra.mxu0 %v1984
      %2345 = vmatprep.mubr.bf16.mxu0 %v1195
      %2346 = vmatmul.mubr.bf16.gmra.mxu0 %v1194
      %v2347 = vpop.f32.mrf.mxu0
      %v2348 = vadd.f32 %v2187, %v2347
      %v2349 = vpop.f32.mrf.mxu0
      %v2350 = vpop.f32.mrf.mxu0
      %v2351 = vadd.f32 %v2190, %v2350
      %v2352 = vpop.f32.mrf.mxu0
      %2353 = vmatprep.mubr.bf16.mxu0 %v1207
      %2354 = vmatmul.mubr.bf16.gmra.mxu0 %v1206
      %v2355 = vpop.f32.mrf.mxu0
      %v2356 = vadd.f32 %v2195, %v2355
      %v2357 = vpop.f32.mrf.mxu0
      %v2358 = vpop.f32.mrf.mxu0
      %v2359 = vadd.f32 %v2198, %v2358
      %v2360 = vpop.f32.mrf.mxu0
      %2361 = vmatprep.mubr.bf16.mxu0 %v1219
      %2362 = vmatmul.mubr.bf16.gmra.mxu0 %v1218
      %v2363 = vpop.f32.mrf.mxu0
      %v2364 = vadd.f32 %v2203, %v2363
      %v2365 = vpop.f32.mrf.mxu0
      %v2366 = vpop.f32.mrf.mxu0
      %v2367 = vadd.f32 %v2206, %v2366
      %v2368 = vpop.f32.mrf.mxu0
      %2369 = vmatprep.mubr.bf16.mxu0 %v1231
      %2370 = vmatmul.mubr.bf16.gmra.mxu0 %v1230
      %v2371 = vpop.f32.mrf.mxu0
      %v2372 = vadd.f32 %v2211, %v2371
      %v2373 = vpop.f32.mrf.mxu0
      %v2374 = vpop.f32.mrf.mxu0
      %v2375 = vadd.f32 %v2214, %v2374
      %v2376 = vpop.f32.mrf.mxu0
      %2377 = vmatprep.mubr.bf16.mxu0 %v1243
      %2378 = vmatmul.mubr.bf16.gmra.mxu0 %v1242
      %v2379 = vpop.f32.mrf.mxu0
      %v2380 = vadd.f32 %v2219, %v2379
      %v2381 = vpop.f32.mrf.mxu0
      %v2382 = vpop.f32.mrf.mxu0
      %v2383 = vadd.f32 %v2222, %v2382
      %v2384 = vpop.f32.mrf.mxu0
      %2385 = vmatprep.mubr.bf16.mxu0 %v1255
      %2386 = vmatmul.mubr.bf16.gmra.mxu0 %v1254
      %v2387 = vpop.f32.mrf.mxu0
      %v2388 = vadd.f32 %v2227, %v2387
      %v2389 = vpop.f32.mrf.mxu0
      %v2390 = vpop.f32.mrf.mxu0
      %v2391 = vadd.f32 %v2230, %v2390
      %v2392 = vpop.f32.mrf.mxu0
      %2393 = vmatprep.mubr.bf16.mxu0 %v1267
      %2394 = vmatmul.mubr.bf16.gmra.mxu0 %v1266
      %v2395 = vpop.f32.mrf.mxu0
      %v2396 = vadd.f32 %v2235, %v2395
      %v2397 = vpop.f32.mrf.mxu0
      %v2398 = vpop.f32.mrf.mxu0
      %v2399 = vadd.f32 %v2238, %v2398
      %v2400 = vpop.f32.mrf.mxu0
      %2401 = vmatprep.mubr.bf16.mxu0 %v1279
      %2402 = vmatmul.mubr.bf16.gmra.mxu0 %v1278
      %v2403 = vpop.f32.mrf.mxu0
      %v2404 = vadd.f32 %v2243, %v2403
      %v2405 = vpop.f32.mrf.mxu0
      %v2406 = vpop.f32.mrf.mxu0
      %v2407 = vadd.f32 %v2246, %v2406
      %v2408 = vpop.f32.mrf.mxu0
      %2409 = vmatprep.mubr.bf16.mxu0 %v1291
      %2410 = vmatmul.mubr.bf16.gmra.mxu0 %v1290
      %v2411 = vpop.f32.mrf.mxu0
      %v2412 = vadd.f32 %v2251, %v2411
      %v2413 = vpop.f32.mrf.mxu0
      %v2414 = vpop.f32.mrf.mxu0
      %v2415 = vadd.f32 %v2254, %v2414
      %v2416 = vpop.f32.mrf.mxu0
      %2417 = vmatprep.mubr.bf16.mxu0 %v1303
      %2418 = vmatmul.mubr.bf16.gmra.mxu0 %v1302
      %v2419 = vpop.f32.mrf.mxu0
      %v2420 = vadd.f32 %v2259, %v2419
      %v2421 = vpop.f32.mrf.mxu0
      %v2422 = vpop.f32.mrf.mxu0
      %v2423 = vadd.f32 %v2262, %v2422
      %v2424 = vpop.f32.mrf.mxu0
      %2425 = vmatprep.mubr.bf16.mxu0 %v1315
      %2426 = vmatmul.mubr.bf16.gmra.mxu0 %v1314
      %v2427 = vpop.f32.mrf.mxu0
      %v2428 = vadd.f32 %v2267, %v2427
      %v2429 = vpop.f32.mrf.mxu0
      %v2430 = vpop.f32.mrf.mxu0
      %v2431 = vadd.f32 %v2270, %v2430
      %v2432 = vpop.f32.mrf.mxu0
      %2433 = vmatprep.mubr.bf16.mxu0 %v1327
      %2434 = vmatmul.mubr.bf16.gmra.mxu0 %v1326
      %v2435 = vpop.f32.mrf.mxu0
      %v2436 = vadd.f32 %v2275, %v2435
      %v2437 = vpop.f32.mrf.mxu0
      %v2438 = vpop.f32.mrf.mxu0
      %v2439 = vadd.f32 %v2278, %v2438
      %v2440 = vpop.f32.mrf.mxu0
      %2441 = vmatprep.mubr.bf16.mxu0 %v1339
      %2442 = vmatmul.mubr.bf16.gmra.mxu0 %v1338
      %v2443 = vpop.f32.mrf.mxu0
      %v2444 = vadd.f32 %v2283, %v2443
      %v2445 = vpop.f32.mrf.mxu0
      %v2446 = vpop.f32.mrf.mxu0
      %v2447 = vadd.f32 %v2286, %v2446
      %v2448 = vpop.f32.mrf.mxu0
      %2449 = vmatprep.mubr.bf16.mxu0 %v1351
      %2450 = vmatmul.mubr.bf16.gmra.mxu0 %v1350
      %v2451 = vpop.f32.mrf.mxu0
      %v2452 = vadd.f32 %v2291, %v2451
      %v2453 = vpop.f32.mrf.mxu0
      %v2454 = vpop.f32.mrf.mxu0
      %v2455 = vadd.f32 %v2294, %v2454
      %v2456 = vpop.f32.mrf.mxu0
      %2457 = vmatprep.mubr.bf16.mxu0 %v1363
      %2458 = vmatmul.mubr.bf16.gmra.mxu0 %v1362
      %v2459 = vpop.f32.mrf.mxu0
      %v2460 = vadd.f32 %v2299, %v2459
      %v2461 = vpop.f32.mrf.mxu0
      %v2462 = vpop.f32.mrf.mxu0
      %v2463 = vadd.f32 %v2302, %v2462
      %v2464 = vpop.f32.mrf.mxu0
      %2465 = vmatprep.mubr.bf16.mxu0 %v1375
      %2466 = vmatmul.mubr.bf16.gmra.mxu0 %v1374
      %v2467 = vpop.f32.mrf.mxu0
      %v2468 = vadd.f32 %v2307, %v2467
      %v2469 = vpop.f32.mrf.mxu0
      %v2470 = vpop.f32.mrf.mxu0
      %v2471 = vadd.f32 %v2310, %v2470
      %v2472 = vpop.f32.mrf.mxu0
      %2473 = vdwg.mxu0
      %2474 = vmatprep.subr.bf16.mxu0 0
      %2475 = vmatpush1.bf16.msra.mxu0 %v1999
      %2476 = vmatprep.subr.bf16.mxu0 0
      %2477 = vmatpush1.bf16.msra.mxu0 %v1998
      %2478 = vmatprep.subr.bf16.mxu0 0
      %2479 = vmatpush1.bf16.msra.mxu0 %v1997
      %2480 = vmatprep.subr.bf16.mxu0 0
      %2481 = vmatpush1.bf16.msra.mxu0 %v1996
      %2482 = vmatprep.subr.bf16.mxu0 0
      %2483 = vmatpush1.bf16.msra.mxu0 %v1995
      %2484 = vmatprep.subr.bf16.mxu0 0
      %2485 = vmatpush1.bf16.msra.mxu0 %v1994
      %2486 = vmatprep.subr.bf16.mxu0 0
      %2487 = vmatpush1.bf16.msra.mxu0 %v1993
      %2488 = vmatprep.subr.bf16.mxu0 0
      %2489 = vmatpush1.bf16.msra.mxu0 %v1992
      %2490 = vmatprep.subr.bf16.mxu0 0
      %2491 = vmatpush2.bf16.msra.mxu0 %v2007
      %2492 = vmatprep.subr.bf16.mxu0 0
      %2493 = vmatpush2.bf16.msra.mxu0 %v2006
      %2494 = vmatprep.subr.bf16.mxu0 0
      %2495 = vmatpush2.bf16.msra.mxu0 %v2005
      %2496 = vmatprep.subr.bf16.mxu0 0
      %2497 = vmatpush2.bf16.msra.mxu0 %v2004
      %2498 = vmatprep.subr.bf16.mxu0 0
      %2499 = vmatpush2.bf16.msra.mxu0 %v2003
      %2500 = vmatprep.subr.bf16.mxu0 0
      %2501 = vmatpush2.bf16.msra.mxu0 %v2002
      %2502 = vmatprep.subr.bf16.mxu0 0
      %2503 = vmatpush2.bf16.msra.mxu0 %v2001
      %2504 = vmatprep.subr.bf16.mxu0 0
      %2505 = vmatpush2.bf16.msra.mxu0 %v2000
      %2506 = vmatprep.mubr.bf16.mxu0 %v1197
      %2507 = vmatmul.mubr.bf16.gmra.mxu0 %v1196
      %v2508 = vpop.f32.mrf.mxu0
      %v2509 = vadd.f32 %v2348, %v2508
      %v2510 = vpop.f32.mrf.mxu0
      %v2511 = vpop.f32.mrf.mxu0
      %v2512 = vadd.f32 %v2351, %v2511
      %v2513 = vpop.f32.mrf.mxu0
      %2514 = vmatprep.mubr.bf16.mxu0 %v1209
      %2515 = vmatmul.mubr.bf16.gmra.mxu0 %v1208
      %v2516 = vpop.f32.mrf.mxu0
      %v2517 = vadd.f32 %v2356, %v2516
      %v2518 = vpop.f32.mrf.mxu0
      %v2519 = vpop.f32.mrf.mxu0
      %v2520 = vadd.f32 %v2359, %v2519
      %v2521 = vpop.f32.mrf.mxu0
      %2522 = vmatprep.mubr.bf16.mxu0 %v1221
      %2523 = vmatmul.mubr.bf16.gmra.mxu0 %v1220
      %v2524 = vpop.f32.mrf.mxu0
      %v2525 = vadd.f32 %v2364, %v2524
      %v2526 = vpop.f32.mrf.mxu0
      %v2527 = vpop.f32.mrf.mxu0
      %v2528 = vadd.f32 %v2367, %v2527
      %v2529 = vpop.f32.mrf.mxu0
      %2530 = vmatprep.mubr.bf16.mxu0 %v1233
      %2531 = vmatmul.mubr.bf16.gmra.mxu0 %v1232
      %v2532 = vpop.f32.mrf.mxu0
      %v2533 = vadd.f32 %v2372, %v2532
      %v2534 = vpop.f32.mrf.mxu0
      %v2535 = vpop.f32.mrf.mxu0
      %v2536 = vadd.f32 %v2375, %v2535
      %v2537 = vpop.f32.mrf.mxu0
      %2538 = vmatprep.mubr.bf16.mxu0 %v1245
      %2539 = vmatmul.mubr.bf16.gmra.mxu0 %v1244
      %v2540 = vpop.f32.mrf.mxu0
      %v2541 = vadd.f32 %v2380, %v2540
      %v2542 = vpop.f32.mrf.mxu0
      %v2543 = vpop.f32.mrf.mxu0
      %v2544 = vadd.f32 %v2383, %v2543
      %v2545 = vpop.f32.mrf.mxu0
      %2546 = vmatprep.mubr.bf16.mxu0 %v1257
      %2547 = vmatmul.mubr.bf16.gmra.mxu0 %v1256
      %v2548 = vpop.f32.mrf.mxu0
      %v2549 = vadd.f32 %v2388, %v2548
      %v2550 = vpop.f32.mrf.mxu0
      %v2551 = vpop.f32.mrf.mxu0
      %v2552 = vadd.f32 %v2391, %v2551
      %v2553 = vpop.f32.mrf.mxu0
      %2554 = vmatprep.mubr.bf16.mxu0 %v1269
      %2555 = vmatmul.mubr.bf16.gmra.mxu0 %v1268
      %v2556 = vpop.f32.mrf.mxu0
      %v2557 = vadd.f32 %v2396, %v2556
      %v2558 = vpop.f32.mrf.mxu0
      %v2559 = vpop.f32.mrf.mxu0
      %v2560 = vadd.f32 %v2399, %v2559
      %v2561 = vpop.f32.mrf.mxu0
      %2562 = vmatprep.mubr.bf16.mxu0 %v1281
      %2563 = vmatmul.mubr.bf16.gmra.mxu0 %v1280
      %v2564 = vpop.f32.mrf.mxu0
      %v2565 = vadd.f32 %v2404, %v2564
      %v2566 = vpop.f32.mrf.mxu0
      %v2567 = vpop.f32.mrf.mxu0
      %v2568 = vadd.f32 %v2407, %v2567
      %v2569 = vpop.f32.mrf.mxu0
      %2570 = vmatprep.mubr.bf16.mxu0 %v1293
      %2571 = vmatmul.mubr.bf16.gmra.mxu0 %v1292
      %v2572 = vpop.f32.mrf.mxu0
      %v2573 = vadd.f32 %v2412, %v2572
      %v2574 = vpop.f32.mrf.mxu0
      %v2575 = vpop.f32.mrf.mxu0
      %v2576 = vadd.f32 %v2415, %v2575
      %v2577 = vpop.f32.mrf.mxu0
      %2578 = vmatprep.mubr.bf16.mxu0 %v1305
      %2579 = vmatmul.mubr.bf16.gmra.mxu0 %v1304
      %v2580 = vpop.f32.mrf.mxu0
      %v2581 = vadd.f32 %v2420, %v2580
      %v2582 = vpop.f32.mrf.mxu0
      %v2583 = vpop.f32.mrf.mxu0
      %v2584 = vadd.f32 %v2423, %v2583
      %v2585 = vpop.f32.mrf.mxu0
      %2586 = vmatprep.mubr.bf16.mxu0 %v1317
      %2587 = vmatmul.mubr.bf16.gmra.mxu0 %v1316
      %v2588 = vpop.f32.mrf.mxu0
      %v2589 = vadd.f32 %v2428, %v2588
      %v2590 = vpop.f32.mrf.mxu0
      %v2591 = vpop.f32.mrf.mxu0
      %v2592 = vadd.f32 %v2431, %v2591
      %v2593 = vpop.f32.mrf.mxu0
      %2594 = vmatprep.mubr.bf16.mxu0 %v1329
      %2595 = vmatmul.mubr.bf16.gmra.mxu0 %v1328
      %v2596 = vpop.f32.mrf.mxu0
      %v2597 = vadd.f32 %v2436, %v2596
      %v2598 = vpop.f32.mrf.mxu0
      %v2599 = vpop.f32.mrf.mxu0
      %v2600 = vadd.f32 %v2439, %v2599
      %v2601 = vpop.f32.mrf.mxu0
      %2602 = vmatprep.mubr.bf16.mxu0 %v1341
      %2603 = vmatmul.mubr.bf16.gmra.mxu0 %v1340
      %v2604 = vpop.f32.mrf.mxu0
      %v2605 = vadd.f32 %v2444, %v2604
      %v2606 = vpop.f32.mrf.mxu0
      %v2607 = vpop.f32.mrf.mxu0
      %v2608 = vadd.f32 %v2447, %v2607
      %v2609 = vpop.f32.mrf.mxu0
      %2610 = vmatprep.mubr.bf16.mxu0 %v1353
      %2611 = vmatmul.mubr.bf16.gmra.mxu0 %v1352
      %v2612 = vpop.f32.mrf.mxu0
      %v2613 = vadd.f32 %v2452, %v2612
      %v2614 = vpop.f32.mrf.mxu0
      %v2615 = vpop.f32.mrf.mxu0
      %v2616 = vadd.f32 %v2455, %v2615
      %v2617 = vpop.f32.mrf.mxu0
      %2618 = vmatprep.mubr.bf16.mxu0 %v1365
      %2619 = vmatmul.mubr.bf16.gmra.mxu0 %v1364
      %v2620 = vpop.f32.mrf.mxu0
      %v2621 = vadd.f32 %v2460, %v2620
      %v2622 = vpop.f32.mrf.mxu0
      %v2623 = vpop.f32.mrf.mxu0
      %v2624 = vadd.f32 %v2463, %v2623
      %v2625 = vpop.f32.mrf.mxu0
      %2626 = vmatprep.mubr.bf16.mxu0 %v1377
      %2627 = vmatmul.mubr.bf16.gmra.mxu0 %v1376
      %v2628 = vpop.f32.mrf.mxu0
      %v2629 = vadd.f32 %v2468, %v2628
      %v2630 = vpop.f32.mrf.mxu0
      %v2631 = vpop.f32.mrf.mxu0
      %v2632 = vadd.f32 %v2471, %v2631
      %v2633 = vpop.f32.mrf.mxu0
      %2634 = vdwg.mxu0
      %2635 = vmatprep.subr.bf16.mxu0 0
      %2636 = vmatpush1.bf16.msra.mxu0 %v2015
      %2637 = vmatprep.subr.bf16.mxu0 0
      %2638 = vmatpush1.bf16.msra.mxu0 %v2014
      %2639 = vmatprep.subr.bf16.mxu0 0
      %2640 = vmatpush1.bf16.msra.mxu0 %v2013
      %2641 = vmatprep.subr.bf16.mxu0 0
      %2642 = vmatpush1.bf16.msra.mxu0 %v2012
      %2643 = vmatprep.subr.bf16.mxu0 0
      %2644 = vmatpush1.bf16.msra.mxu0 %v2011
      %2645 = vmatprep.subr.bf16.mxu0 0
      %2646 = vmatpush1.bf16.msra.mxu0 %v2010
      %2647 = vmatprep.subr.bf16.mxu0 0
      %2648 = vmatpush1.bf16.msra.mxu0 %v2009
      %2649 = vmatprep.subr.bf16.mxu0 0
      %2650 = vmatpush1.bf16.msra.mxu0 %v2008
      %2651 = vmatprep.subr.bf16.mxu0 0
      %2652 = vmatpush2.bf16.msra.mxu0 %v2023
      %2653 = vmatprep.subr.bf16.mxu0 0
      %2654 = vmatpush2.bf16.msra.mxu0 %v2022
      %2655 = vmatprep.subr.bf16.mxu0 0
      %2656 = vmatpush2.bf16.msra.mxu0 %v2021
      %2657 = vmatprep.subr.bf16.mxu0 0
      %2658 = vmatpush2.bf16.msra.mxu0 %v2020
      %2659 = vmatprep.subr.bf16.mxu0 0
      %2660 = vmatpush2.bf16.msra.mxu0 %v2019
      %2661 = vmatprep.subr.bf16.mxu0 0
      %2662 = vmatpush2.bf16.msra.mxu0 %v2018
      %2663 = vmatprep.subr.bf16.mxu0 0
      %2664 = vmatpush2.bf16.msra.mxu0 %v2017
      %2665 = vmatprep.subr.bf16.mxu0 0
      %2666 = vmatpush2.bf16.msra.mxu0 %v2016
      %2667 = vmatprep.mubr.bf16.mxu0 %v1199
      %2668 = vmatmul.mubr.bf16.gmra.mxu0 %v1198
      %v2669 = vpop.f32.mrf.mxu0
      %v2670 = vadd.f32 %v2509, %v2669
      %v2671 = vpop.f32.mrf.mxu0
      %v2672 = vpop.f32.mrf.mxu0
      %v2673 = vadd.f32 %v2512, %v2672
      %v2674 = vpop.f32.mrf.mxu0
      %2675 = vmatprep.mubr.bf16.mxu0 %v1211
      %2676 = vmatmul.mubr.bf16.gmra.mxu0 %v1210
      %v2677 = vpop.f32.mrf.mxu0
      %v2678 = vadd.f32 %v2517, %v2677
      %v2679 = vpop.f32.mrf.mxu0
      %v2680 = vpop.f32.mrf.mxu0
      %v2681 = vadd.f32 %v2520, %v2680
      %v2682 = vpop.f32.mrf.mxu0
      %2683 = vmatprep.mubr.bf16.mxu0 %v1223
      %2684 = vmatmul.mubr.bf16.gmra.mxu0 %v1222
      %v2685 = vpop.f32.mrf.mxu0
      %v2686 = vadd.f32 %v2525, %v2685
      %v2687 = vpop.f32.mrf.mxu0
      %v2688 = vpop.f32.mrf.mxu0
      %v2689 = vadd.f32 %v2528, %v2688
      %v2690 = vpop.f32.mrf.mxu0
      %2691 = vmatprep.mubr.bf16.mxu0 %v1235
      %2692 = vmatmul.mubr.bf16.gmra.mxu0 %v1234
      %v2693 = vpop.f32.mrf.mxu0
      %v2694 = vadd.f32 %v2533, %v2693
      %v2695 = vpop.f32.mrf.mxu0
      %v2696 = vpop.f32.mrf.mxu0
      %v2697 = vadd.f32 %v2536, %v2696
      %v2698 = vpop.f32.mrf.mxu0
      %2699 = vmatprep.mubr.bf16.mxu0 %v1247
      %2700 = vmatmul.mubr.bf16.gmra.mxu0 %v1246
      %v2701 = vpop.f32.mrf.mxu0
      %v2702 = vadd.f32 %v2541, %v2701
      %v2703 = vpop.f32.mrf.mxu0
      %v2704 = vpop.f32.mrf.mxu0
      %v2705 = vadd.f32 %v2544, %v2704
      %v2706 = vpop.f32.mrf.mxu0
      %2707 = vmatprep.mubr.bf16.mxu0 %v1259
      %2708 = vmatmul.mubr.bf16.gmra.mxu0 %v1258
      %v2709 = vpop.f32.mrf.mxu0
      %v2710 = vadd.f32 %v2549, %v2709
      %v2711 = vpop.f32.mrf.mxu0
      %v2712 = vpop.f32.mrf.mxu0
      %v2713 = vadd.f32 %v2552, %v2712
      %v2714 = vpop.f32.mrf.mxu0
      %2715 = vmatprep.mubr.bf16.mxu0 %v1271
      %2716 = vmatmul.mubr.bf16.gmra.mxu0 %v1270
      %v2717 = vpop.f32.mrf.mxu0
      %v2718 = vadd.f32 %v2557, %v2717
      %v2719 = vpop.f32.mrf.mxu0
      %v2720 = vpop.f32.mrf.mxu0
      %v2721 = vadd.f32 %v2560, %v2720
      %v2722 = vpop.f32.mrf.mxu0
      %2723 = vmatprep.mubr.bf16.mxu0 %v1283
      %2724 = vmatmul.mubr.bf16.gmra.mxu0 %v1282
      %v2725 = vpop.f32.mrf.mxu0
      %v2726 = vadd.f32 %v2565, %v2725
      %v2727 = vpop.f32.mrf.mxu0
      %v2728 = vpop.f32.mrf.mxu0
      %v2729 = vadd.f32 %v2568, %v2728
      %v2730 = vpop.f32.mrf.mxu0
      %2731 = vmatprep.mubr.bf16.mxu0 %v1295
      %2732 = vmatmul.mubr.bf16.gmra.mxu0 %v1294
      %v2733 = vpop.f32.mrf.mxu0
      %v2734 = vadd.f32 %v2573, %v2733
      %v2735 = vpop.f32.mrf.mxu0
      %v2736 = vpop.f32.mrf.mxu0
      %v2737 = vadd.f32 %v2576, %v2736
      %v2738 = vpop.f32.mrf.mxu0
      %2739 = vmatprep.mubr.bf16.mxu0 %v1307
      %2740 = vmatmul.mubr.bf16.gmra.mxu0 %v1306
      %v2741 = vpop.f32.mrf.mxu0
      %v2742 = vadd.f32 %v2581, %v2741
      %v2743 = vpop.f32.mrf.mxu0
      %v2744 = vpop.f32.mrf.mxu0
      %v2745 = vadd.f32 %v2584, %v2744
      %v2746 = vpop.f32.mrf.mxu0
      %2747 = vmatprep.mubr.bf16.mxu0 %v1319
      %2748 = vmatmul.mubr.bf16.gmra.mxu0 %v1318
      %v2749 = vpop.f32.mrf.mxu0
      %v2750 = vadd.f32 %v2589, %v2749
      %v2751 = vpop.f32.mrf.mxu0
      %v2752 = vpop.f32.mrf.mxu0
      %v2753 = vadd.f32 %v2592, %v2752
      %v2754 = vpop.f32.mrf.mxu0
      %2755 = vmatprep.mubr.bf16.mxu0 %v1331
      %2756 = vmatmul.mubr.bf16.gmra.mxu0 %v1330
      %v2757 = vpop.f32.mrf.mxu0
      %v2758 = vadd.f32 %v2597, %v2757
      %v2759 = vpop.f32.mrf.mxu0
      %v2760 = vpop.f32.mrf.mxu0
      %v2761 = vadd.f32 %v2600, %v2760
      %v2762 = vpop.f32.mrf.mxu0
      %2763 = vmatprep.mubr.bf16.mxu0 %v1343
      %2764 = vmatmul.mubr.bf16.gmra.mxu0 %v1342
      %v2765 = vpop.f32.mrf.mxu0
      %v2766 = vadd.f32 %v2605, %v2765
      %v2767 = vpop.f32.mrf.mxu0
      %v2768 = vpop.f32.mrf.mxu0
      %v2769 = vadd.f32 %v2608, %v2768
      %v2770 = vpop.f32.mrf.mxu0
      %2771 = vmatprep.mubr.bf16.mxu0 %v1355
      %2772 = vmatmul.mubr.bf16.gmra.mxu0 %v1354
      %v2773 = vpop.f32.mrf.mxu0
      %v2774 = vadd.f32 %v2613, %v2773
      %v2775 = vpop.f32.mrf.mxu0
      %v2776 = vpop.f32.mrf.mxu0
      %v2777 = vadd.f32 %v2616, %v2776
      %v2778 = vpop.f32.mrf.mxu0
      %2779 = vmatprep.mubr.bf16.mxu0 %v1367
      %2780 = vmatmul.mubr.bf16.gmra.mxu0 %v1366
      %v2781 = vpop.f32.mrf.mxu0
      %v2782 = vadd.f32 %v2621, %v2781
      %v2783 = vpop.f32.mrf.mxu0
      %v2784 = vpop.f32.mrf.mxu0
      %v2785 = vadd.f32 %v2624, %v2784
      %v2786 = vpop.f32.mrf.mxu0
      %2787 = vmatprep.mubr.bf16.mxu0 %v1379
      %2788 = vmatmul.mubr.bf16.gmra.mxu0 %v1378
      %v2789 = vpop.f32.mrf.mxu0
      %v2790 = vadd.f32 %v2629, %v2789
      %v2791 = vpop.f32.mrf.mxu0
      %v2792 = vpop.f32.mrf.mxu0
      %v2793 = vadd.f32 %v2632, %v2792
      %v2794 = vpop.f32.mrf.mxu0
      %2795 = vdwg.mxu0
      %2796 = vmatprep.subr.bf16.mxu0 0
      %2797 = vmatpush1.bf16.msra.mxu0 %v2031
      %2798 = vmatprep.subr.bf16.mxu0 0
      %2799 = vmatpush1.bf16.msra.mxu0 %v2030
      %2800 = vmatprep.subr.bf16.mxu0 0
      %2801 = vmatpush1.bf16.msra.mxu0 %v2029
      %2802 = vmatprep.subr.bf16.mxu0 0
      %2803 = vmatpush1.bf16.msra.mxu0 %v2028
      %2804 = vmatprep.subr.bf16.mxu0 0
      %2805 = vmatpush1.bf16.msra.mxu0 %v2027
      %2806 = vmatprep.subr.bf16.mxu0 0
      %2807 = vmatpush1.bf16.msra.mxu0 %v2026
      %2808 = vmatprep.subr.bf16.mxu0 0
      %2809 = vmatpush1.bf16.msra.mxu0 %v2025
      %2810 = vmatprep.subr.bf16.mxu0 0
      %2811 = vmatpush1.bf16.msra.mxu0 %v2024
      %2812 = vmatprep.subr.bf16.mxu0 0
      %2813 = vmatpush2.bf16.msra.mxu0 %v2039
      %2814 = vmatprep.subr.bf16.mxu0 0
      %2815 = vmatpush2.bf16.msra.mxu0 %v2038
      %2816 = vmatprep.subr.bf16.mxu0 0
      %2817 = vmatpush2.bf16.msra.mxu0 %v2037
      %2818 = vmatprep.subr.bf16.mxu0 0
      %2819 = vmatpush2.bf16.msra.mxu0 %v2036
      %2820 = vmatprep.subr.bf16.mxu0 0
      %2821 = vmatpush2.bf16.msra.mxu0 %v2035
      %2822 = vmatprep.subr.bf16.mxu0 0
      %2823 = vmatpush2.bf16.msra.mxu0 %v2034
      %2824 = vmatprep.subr.bf16.mxu0 0
      %2825 = vmatpush2.bf16.msra.mxu0 %v2033
      %2826 = vmatprep.subr.bf16.mxu0 0
      %2827 = vmatpush2.bf16.msra.mxu0 %v2032
      %2828 = vmatprep.mubr.bf16.mxu0 %v1201
      %2829 = vmatmul.mubr.bf16.gmra.mxu0 %v1200
      %v2830 = vpop.f32.mrf.mxu0
      %v2831 = vadd.f32 %v2670, %v2830
      %v2832 = vpop.f32.mrf.mxu0
      %v2833 = vpop.f32.mrf.mxu0
      %v2834 = vadd.f32 %v2673, %v2833
      %v2835 = vpop.f32.mrf.mxu0
      %2836 = vmatprep.mubr.bf16.mxu0 %v1213
      %2837 = vmatmul.mubr.bf16.gmra.mxu0 %v1212
      %v2838 = vpop.f32.mrf.mxu0
      %v2839 = vadd.f32 %v2678, %v2838
      %v2840 = vpop.f32.mrf.mxu0
      %v2841 = vpop.f32.mrf.mxu0
      %v2842 = vadd.f32 %v2681, %v2841
      %v2843 = vpop.f32.mrf.mxu0
      %2844 = vmatprep.mubr.bf16.mxu0 %v1225
      %2845 = vmatmul.mubr.bf16.gmra.mxu0 %v1224
      %v2846 = vpop.f32.mrf.mxu0
      %v2847 = vadd.f32 %v2686, %v2846
      %v2848 = vpop.f32.mrf.mxu0
      %v2849 = vpop.f32.mrf.mxu0
      %v2850 = vadd.f32 %v2689, %v2849
      %v2851 = vpop.f32.mrf.mxu0
      %2852 = vmatprep.mubr.bf16.mxu0 %v1237
      %2853 = vmatmul.mubr.bf16.gmra.mxu0 %v1236
      %v2854 = vpop.f32.mrf.mxu0
      %v2855 = vadd.f32 %v2694, %v2854
      %v2856 = vpop.f32.mrf.mxu0
      %v2857 = vpop.f32.mrf.mxu0
      %v2858 = vadd.f32 %v2697, %v2857
      %v2859 = vpop.f32.mrf.mxu0
      %2860 = vmatprep.mubr.bf16.mxu0 %v1249
      %2861 = vmatmul.mubr.bf16.gmra.mxu0 %v1248
      %v2862 = vpop.f32.mrf.mxu0
      %v2863 = vadd.f32 %v2702, %v2862
      %v2864 = vpop.f32.mrf.mxu0
      %v2865 = vpop.f32.mrf.mxu0
      %v2866 = vadd.f32 %v2705, %v2865
      %v2867 = vpop.f32.mrf.mxu0
      %2868 = vmatprep.mubr.bf16.mxu0 %v1261
      %2869 = vmatmul.mubr.bf16.gmra.mxu0 %v1260
      %v2870 = vpop.f32.mrf.mxu0
      %v2871 = vadd.f32 %v2710, %v2870
      %v2872 = vpop.f32.mrf.mxu0
      %v2873 = vpop.f32.mrf.mxu0
      %v2874 = vadd.f32 %v2713, %v2873
      %v2875 = vpop.f32.mrf.mxu0
      %2876 = vmatprep.mubr.bf16.mxu0 %v1273
      %2877 = vmatmul.mubr.bf16.gmra.mxu0 %v1272
      %v2878 = vpop.f32.mrf.mxu0
      %v2879 = vadd.f32 %v2718, %v2878
      %v2880 = vpop.f32.mrf.mxu0
      %v2881 = vpop.f32.mrf.mxu0
      %v2882 = vadd.f32 %v2721, %v2881
      %v2883 = vpop.f32.mrf.mxu0
      %2884 = vmatprep.mubr.bf16.mxu0 %v1285
      %2885 = vmatmul.mubr.bf16.gmra.mxu0 %v1284
      %v2886 = vpop.f32.mrf.mxu0
      %v2887 = vadd.f32 %v2726, %v2886
      %v2888 = vpop.f32.mrf.mxu0
      %v2889 = vpop.f32.mrf.mxu0
      %v2890 = vadd.f32 %v2729, %v2889
      %v2891 = vpop.f32.mrf.mxu0
      %2892 = vmatprep.mubr.bf16.mxu0 %v1297
      %2893 = vmatmul.mubr.bf16.gmra.mxu0 %v1296
      %v2894 = vpop.f32.mrf.mxu0
      %v2895 = vadd.f32 %v2734, %v2894
      %v2896 = vpop.f32.mrf.mxu0
      %v2897 = vpop.f32.mrf.mxu0
      %v2898 = vadd.f32 %v2737, %v2897
      %v2899 = vpop.f32.mrf.mxu0
      %2900 = vmatprep.mubr.bf16.mxu0 %v1309
      %2901 = vmatmul.mubr.bf16.gmra.mxu0 %v1308
      %v2902 = vpop.f32.mrf.mxu0
      %v2903 = vadd.f32 %v2742, %v2902
      %v2904 = vpop.f32.mrf.mxu0
      %v2905 = vpop.f32.mrf.mxu0
      %v2906 = vadd.f32 %v2745, %v2905
      %v2907 = vpop.f32.mrf.mxu0
      %2908 = vmatprep.mubr.bf16.mxu0 %v1321
      %2909 = vmatmul.mubr.bf16.gmra.mxu0 %v1320
      %v2910 = vpop.f32.mrf.mxu0
      %v2911 = vadd.f32 %v2750, %v2910
      %v2912 = vpop.f32.mrf.mxu0
      %v2913 = vpop.f32.mrf.mxu0
      %v2914 = vadd.f32 %v2753, %v2913
      %v2915 = vpop.f32.mrf.mxu0
      %2916 = vmatprep.mubr.bf16.mxu0 %v1333
      %2917 = vmatmul.mubr.bf16.gmra.mxu0 %v1332
      %v2918 = vpop.f32.mrf.mxu0
      %v2919 = vadd.f32 %v2758, %v2918
      %v2920 = vpop.f32.mrf.mxu0
      %v2921 = vpop.f32.mrf.mxu0
      %v2922 = vadd.f32 %v2761, %v2921
      %v2923 = vpop.f32.mrf.mxu0
      %2924 = vmatprep.mubr.bf16.mxu0 %v1345
      %2925 = vmatmul.mubr.bf16.gmra.mxu0 %v1344
      %v2926 = vpop.f32.mrf.mxu0
      %v2927 = vadd.f32 %v2766, %v2926
      %v2928 = vpop.f32.mrf.mxu0
      %v2929 = vpop.f32.mrf.mxu0
      %v2930 = vadd.f32 %v2769, %v2929
      %v2931 = vpop.f32.mrf.mxu0
      %2932 = vmatprep.mubr.bf16.mxu0 %v1357
      %2933 = vmatmul.mubr.bf16.gmra.mxu0 %v1356
      %v2934 = vpop.f32.mrf.mxu0
      %v2935 = vadd.f32 %v2774, %v2934
      %v2936 = vpop.f32.mrf.mxu0
      %v2937 = vpop.f32.mrf.mxu0
      %v2938 = vadd.f32 %v2777, %v2937
      %v2939 = vpop.f32.mrf.mxu0
      %2940 = vmatprep.mubr.bf16.mxu0 %v1369
      %2941 = vmatmul.mubr.bf16.gmra.mxu0 %v1368
      %v2942 = vpop.f32.mrf.mxu0
      %v2943 = vadd.f32 %v2782, %v2942
      %v2944 = vpop.f32.mrf.mxu0
      %v2945 = vpop.f32.mrf.mxu0
      %v2946 = vadd.f32 %v2785, %v2945
      %v2947 = vpop.f32.mrf.mxu0
      %2948 = vmatprep.mubr.bf16.mxu0 %v1381
      %2949 = vmatmul.mubr.bf16.gmra.mxu0 %v1380
      %v2950 = vpop.f32.mrf.mxu0
      %v2951 = vadd.f32 %v2790, %v2950
      %v2952 = vpop.f32.mrf.mxu0
      %v2953 = vpop.f32.mrf.mxu0
      %v2954 = vadd.f32 %v2793, %v2953
      %v2955 = vpop.f32.mrf.mxu0
      %2956 = vdwg.mxu0
      %2957 = vmatprep.subr.bf16.mxu0 0
      %2958 = vmatpush1.bf16.msra.mxu0 %v2047
      %2959 = vmatprep.subr.bf16.mxu0 0
      %2960 = vmatpush1.bf16.msra.mxu0 %v2046
      %2961 = vmatprep.subr.bf16.mxu0 0
      %2962 = vmatpush1.bf16.msra.mxu0 %v2045
      %2963 = vmatprep.subr.bf16.mxu0 0
      %2964 = vmatpush1.bf16.msra.mxu0 %v2044
      %2965 = vmatprep.subr.bf16.mxu0 0
      %2966 = vmatpush1.bf16.msra.mxu0 %v2043
      %2967 = vmatprep.subr.bf16.mxu0 0
      %2968 = vmatpush1.bf16.msra.mxu0 %v2042
      %2969 = vmatprep.subr.bf16.mxu0 0
      %2970 = vmatpush1.bf16.msra.mxu0 %v2041
      %2971 = vmatprep.subr.bf16.mxu0 0
      %2972 = vmatpush1.bf16.msra.mxu0 %v2040
      %2973 = vmatprep.subr.bf16.mxu0 0
      %2974 = vmatpush2.bf16.msra.mxu0 %v2055
      %2975 = vmatprep.subr.bf16.mxu0 0
      %2976 = vmatpush2.bf16.msra.mxu0 %v2054
      %2977 = vmatprep.subr.bf16.mxu0 0
      %2978 = vmatpush2.bf16.msra.mxu0 %v2053
      %2979 = vmatprep.subr.bf16.mxu0 0
      %2980 = vmatpush2.bf16.msra.mxu0 %v2052
      %2981 = vmatprep.subr.bf16.mxu0 0
      %2982 = vmatpush2.bf16.msra.mxu0 %v2051
      %2983 = vmatprep.subr.bf16.mxu0 0
      %2984 = vmatpush2.bf16.msra.mxu0 %v2050
      %2985 = vmatprep.subr.bf16.mxu0 0
      %2986 = vmatpush2.bf16.msra.mxu0 %v2049
      %2987 = vmatprep.subr.bf16.mxu0 0
      %2988 = vmatpush2.bf16.msra.mxu0 %v2048
      %2989 = vmatprep.mubr.bf16.mxu0 %v1203
      %2990 = vmatmul.mubr.bf16.gmra.mxu0 %v1202
      %v2991 = vpop.f32.mrf.mxu0
      %v2992 = vadd.f32 %v2831, %v2991
      %v2993 = vpop.f32.mrf.mxu0
      %v2994 = vpop.f32.mrf.mxu0
      %v2995 = vadd.f32 %v2834, %v2994
      %v2996 = vpop.f32.mrf.mxu0
      %2997 = vmatprep.mubr.bf16.mxu0 %v1215
      %2998 = vmatmul.mubr.bf16.gmra.mxu0 %v1214
      %v2999 = vpop.f32.mrf.mxu0
      %v3000 = vadd.f32 %v2839, %v2999
      %v3001 = vpop.f32.mrf.mxu0
      %v3002 = vpop.f32.mrf.mxu0
      %v3003 = vadd.f32 %v2842, %v3002
      %v3004 = vpop.f32.mrf.mxu0
      %3005 = vmatprep.mubr.bf16.mxu0 %v1227
      %3006 = vmatmul.mubr.bf16.gmra.mxu0 %v1226
      %v3007 = vpop.f32.mrf.mxu0
      %v3008 = vadd.f32 %v2847, %v3007
      %v3009 = vpop.f32.mrf.mxu0
      %v3010 = vpop.f32.mrf.mxu0
      %v3011 = vadd.f32 %v2850, %v3010
      %v3012 = vpop.f32.mrf.mxu0
      %3013 = vmatprep.mubr.bf16.mxu0 %v1239
      %3014 = vmatmul.mubr.bf16.gmra.mxu0 %v1238
      %v3015 = vpop.f32.mrf.mxu0
      %v3016 = vadd.f32 %v2855, %v3015
      %v3017 = vpop.f32.mrf.mxu0
      %v3018 = vpop.f32.mrf.mxu0
      %v3019 = vadd.f32 %v2858, %v3018
      %v3020 = vpop.f32.mrf.mxu0
      %3021 = vmatprep.mubr.bf16.mxu0 %v1251
      %3022 = vmatmul.mubr.bf16.gmra.mxu0 %v1250
      %v3023 = vpop.f32.mrf.mxu0
      %v3024 = vadd.f32 %v2863, %v3023
      %v3025 = vpop.f32.mrf.mxu0
      %v3026 = vpop.f32.mrf.mxu0
      %v3027 = vadd.f32 %v2866, %v3026
      %v3028 = vpop.f32.mrf.mxu0
      %3029 = vmatprep.mubr.bf16.mxu0 %v1263
      %3030 = vmatmul.mubr.bf16.gmra.mxu0 %v1262
      %v3031 = vpop.f32.mrf.mxu0
      %v3032 = vadd.f32 %v2871, %v3031
      %v3033 = vpop.f32.mrf.mxu0
      %v3034 = vpop.f32.mrf.mxu0
      %v3035 = vadd.f32 %v2874, %v3034
      %v3036 = vpop.f32.mrf.mxu0
      %3037 = vmatprep.mubr.bf16.mxu0 %v1275
      %3038 = vmatmul.mubr.bf16.gmra.mxu0 %v1274
      %v3039 = vpop.f32.mrf.mxu0
      %v3040 = vadd.f32 %v2879, %v3039
      %v3041 = vpop.f32.mrf.mxu0
      %v3042 = vpop.f32.mrf.mxu0
      %v3043 = vadd.f32 %v2882, %v3042
      %v3044 = vpop.f32.mrf.mxu0
      %3045 = vmatprep.mubr.bf16.mxu0 %v1287
      %3046 = vmatmul.mubr.bf16.gmra.mxu0 %v1286
      %v3047 = vpop.f32.mrf.mxu0
      %v3048 = vadd.f32 %v2887, %v3047
      %v3049 = vpop.f32.mrf.mxu0
      %v3050 = vpop.f32.mrf.mxu0
      %v3051 = vadd.f32 %v2890, %v3050
      %v3052 = vpop.f32.mrf.mxu0
      %3053 = vmatprep.mubr.bf16.mxu0 %v1299
      %3054 = vmatmul.mubr.bf16.gmra.mxu0 %v1298
      %v3055 = vpop.f32.mrf.mxu0
      %v3056 = vadd.f32 %v2895, %v3055
      %v3057 = vpop.f32.mrf.mxu0
      %v3058 = vpop.f32.mrf.mxu0
      %v3059 = vadd.f32 %v2898, %v3058
      %v3060 = vpop.f32.mrf.mxu0
      %3061 = vmatprep.mubr.bf16.mxu0 %v1311
      %3062 = vmatmul.mubr.bf16.gmra.mxu0 %v1310
      %v3063 = vpop.f32.mrf.mxu0
      %v3064 = vadd.f32 %v2903, %v3063
      %v3065 = vpop.f32.mrf.mxu0
      %v3066 = vpop.f32.mrf.mxu0
      %v3067 = vadd.f32 %v2906, %v3066
      %v3068 = vpop.f32.mrf.mxu0
      %3069 = vmatprep.mubr.bf16.mxu0 %v1323
      %3070 = vmatmul.mubr.bf16.gmra.mxu0 %v1322
      %v3071 = vpop.f32.mrf.mxu0
      %v3072 = vadd.f32 %v2911, %v3071
      %v3073 = vpop.f32.mrf.mxu0
      %v3074 = vpop.f32.mrf.mxu0
      %v3075 = vadd.f32 %v2914, %v3074
      %v3076 = vpop.f32.mrf.mxu0
      %3077 = vmatprep.mubr.bf16.mxu0 %v1335
      %3078 = vmatmul.mubr.bf16.gmra.mxu0 %v1334
      %v3079 = vpop.f32.mrf.mxu0
      %v3080 = vadd.f32 %v2919, %v3079
      %v3081 = vpop.f32.mrf.mxu0
      %v3082 = vpop.f32.mrf.mxu0
      %v3083 = vadd.f32 %v2922, %v3082
      %v3084 = vpop.f32.mrf.mxu0
      %3085 = vmatprep.mubr.bf16.mxu0 %v1347
      %3086 = vmatmul.mubr.bf16.gmra.mxu0 %v1346
      %v3087 = vpop.f32.mrf.mxu0
      %v3088 = vadd.f32 %v2927, %v3087
      %v3089 = vpop.f32.mrf.mxu0
      %v3090 = vpop.f32.mrf.mxu0
      %v3091 = vadd.f32 %v2930, %v3090
      %v3092 = vpop.f32.mrf.mxu0
      %3093 = vmatprep.mubr.bf16.mxu0 %v1359
      %3094 = vmatmul.mubr.bf16.gmra.mxu0 %v1358
      %v3095 = vpop.f32.mrf.mxu0
      %v3096 = vadd.f32 %v2935, %v3095
      %v3097 = vpop.f32.mrf.mxu0
      %v3098 = vpop.f32.mrf.mxu0
      %v3099 = vadd.f32 %v2938, %v3098
      %v3100 = vpop.f32.mrf.mxu0
      %3101 = vmatprep.mubr.bf16.mxu0 %v1371
      %3102 = vmatmul.mubr.bf16.gmra.mxu0 %v1370
      %v3103 = vpop.f32.mrf.mxu0
      %v3104 = vadd.f32 %v2943, %v3103
      %v3105 = vpop.f32.mrf.mxu0
      %v3106 = vpop.f32.mrf.mxu0
      %v3107 = vadd.f32 %v2946, %v3106
      %v3108 = vpop.f32.mrf.mxu0
      %3109 = vmatprep.mubr.bf16.mxu0 %v1383
      %3110 = vmatmul.mubr.bf16.gmra.mxu0 %v1382
      %v3111 = vpop.f32.mrf.mxu0
      %v3112 = vadd.f32 %v2951, %v3111
      %v3113 = vpop.f32.mrf.mxu0
      %v3114 = vpop.f32.mrf.mxu0
      %v3115 = vadd.f32 %v2954, %v3114
      %v3116 = vpop.f32.mrf.mxu0
      %3117 = vdwg.mxu0
      %v3118 = vld [vmem:[%s2] sm:$0x1]
      %v3120 = vlaneseq
      %v3121 = vshrl.u32 %v3120, 7
      %v3122 = vsub.s32 0, %v3121
      %v3123 = vrot.slane %v3118, %v3122
      %v3125 = vmul.f32 %v2992, %v3123
      %v3126 = vmul.f32 %v2995, %v3123
      %v3127 = vmul.f32 %v3000, %v3123
      %v3128 = vmul.f32 %v3003, %v3123
      %v3129 = vmul.f32 %v3008, %v3123
      %v3130 = vmul.f32 %v3011, %v3123
      %v3131 = vmul.f32 %v3016, %v3123
      %v3132 = vmul.f32 %v3019, %v3123
      %v3133 = vmul.f32 %v3024, %v3123
      %v3134 = vmul.f32 %v3027, %v3123
      %v3135 = vmul.f32 %v3032, %v3123
      %v3136 = vmul.f32 %v3035, %v3123
      %v3137 = vmul.f32 %v3040, %v3123
      %v3138 = vmul.f32 %v3043, %v3123
      %v3139 = vmul.f32 %v3048, %v3123
      %v3140 = vmul.f32 %v3051, %v3123
      %v3141 = vmul.f32 %v3056, %v3123
      %v3142 = vmul.f32 %v3059, %v3123
      %v3143 = vmul.f32 %v3064, %v3123
      %v3144 = vmul.f32 %v3067, %v3123
      %v3145 = vmul.f32 %v3072, %v3123
      %v3146 = vmul.f32 %v3075, %v3123
      %v3147 = vmul.f32 %v3080, %v3123
      %v3148 = vmul.f32 %v3083, %v3123
      %v3149 = vmul.f32 %v3088, %v3123
      %v3150 = vmul.f32 %v3091, %v3123
      %v3151 = vmul.f32 %v3096, %v3123
      %v3152 = vmul.f32 %v3099, %v3123
      %v3153 = vmul.f32 %v3104, %v3123
      %v3154 = vmul.f32 %v3107, %v3123
      %v3155 = vmul.f32 %v3112, %v3123
      %v3156 = vmul.f32 %v3115, %v3123
      %v3157 = vld [vmem:[%s3] sm:$0x1]
      %v3159 = vlaneseq
      %v3160 = vshrl.u32 %v3159, 7
      %v3161 = vsub.s32 0, %v3160
      %v3162 = vrot.slane %v3157, %v3161
      %v3164 = vadd.f32 %v3125, %v3162
      %v3165 = vadd.f32 %v3126, %v3162
      %v3166 = vadd.f32 %v3127, %v3162
      %v3167 = vadd.f32 %v3128, %v3162
      %v3168 = vadd.f32 %v3129, %v3162
      %v3169 = vadd.f32 %v3130, %v3162
      %v3170 = vadd.f32 %v3131, %v3162
      %v3171 = vadd.f32 %v3132, %v3162
      %v3172 = vadd.f32 %v3133, %v3162
      %v3173 = vadd.f32 %v3134, %v3162
      %v3174 = vadd.f32 %v3135, %v3162
      %v3175 = vadd.f32 %v3136, %v3162
      %v3176 = vadd.f32 %v3137, %v3162
      %v3177 = vadd.f32 %v3138, %v3162
      %v3178 = vadd.f32 %v3139, %v3162
      %v3179 = vadd.f32 %v3140, %v3162
      %v3180 = vadd.f32 %v3141, %v3162
      %v3181 = vadd.f32 %v3142, %v3162
      %v3182 = vadd.f32 %v3143, %v3162
      %v3183 = vadd.f32 %v3144, %v3162
      %v3184 = vadd.f32 %v3145, %v3162
      %v3185 = vadd.f32 %v3146, %v3162
      %v3186 = vadd.f32 %v3147, %v3162
      %v3187 = vadd.f32 %v3148, %v3162
      %v3188 = vadd.f32 %v3149, %v3162
      %v3189 = vadd.f32 %v3150, %v3162
      %v3190 = vadd.f32 %v3151, %v3162
      %v3191 = vadd.f32 %v3152, %v3162
      %v3192 = vadd.f32 %v3153, %v3162
      %v3193 = vadd.f32 %v3154, %v3162
      %v3194 = vadd.f32 %v3155, %v3162
      %v3195 = vadd.f32 %v3156, %v3162
      %v3196 = vmax.f32 %v3164, 0.0
      %v3197 = vmax.f32 %v3165, 0.0
      %v3198 = vmax.f32 %v3166, 0.0
      %v3199 = vmax.f32 %v3167, 0.0
      %v3200 = vmax.f32 %v3168, 0.0
      %v3201 = vmax.f32 %v3169, 0.0
      %v3202 = vmax.f32 %v3170, 0.0
      %v3203 = vmax.f32 %v3171, 0.0
      %v3204 = vmax.f32 %v3172, 0.0
      %v3205 = vmax.f32 %v3173, 0.0
      %v3206 = vmax.f32 %v3174, 0.0
      %v3207 = vmax.f32 %v3175, 0.0
      %v3208 = vmax.f32 %v3176, 0.0
      %v3209 = vmax.f32 %v3177, 0.0
      %v3210 = vmax.f32 %v3178, 0.0
      %v3211 = vmax.f32 %v3179, 0.0
      %v3212 = vmax.f32 %v3180, 0.0
      %v3213 = vmax.f32 %v3181, 0.0
      %v3214 = vmax.f32 %v3182, 0.0
      %v3215 = vmax.f32 %v3183, 0.0
      %v3216 = vmax.f32 %v3184, 0.0
      %v3217 = vmax.f32 %v3185, 0.0
      %v3218 = vmax.f32 %v3186, 0.0
      %v3219 = vmax.f32 %v3187, 0.0
      %v3220 = vmax.f32 %v3188, 0.0
      %v3221 = vmax.f32 %v3189, 0.0
      %v3222 = vmax.f32 %v3190, 0.0
      %v3223 = vmax.f32 %v3191, 0.0
      %v3224 = vmax.f32 %v3192, 0.0
      %v3225 = vmax.f32 %v3193, 0.0
      %v3226 = vmax.f32 %v3194, 0.0
      %v3227 = vmax.f32 %v3195, 0.0
      %v3228 = vrot.slane %v3196, 7
      %v3229 = vrot.slane %v3197, 7
      %v3230 = vrot.slane %v3198, 7
      %v3231 = vrot.slane %v3199, 7
      %v3232 = vrot.slane %v3200, 7
      %v3233 = vrot.slane %v3201, 7
      %v3234 = vrot.slane %v3202, 7
      %v3235 = vrot.slane %v3203, 7
      %v3236 = vrot.slane %v3204, 7
      %v3237 = vrot.slane %v3205, 7
      %v3238 = vrot.slane %v3206, 7
      %v3239 = vrot.slane %v3207, 7
      %v3240 = vrot.slane %v3208, 7
      %v3241 = vrot.slane %v3209, 7
      %v3242 = vrot.slane %v3210, 7
      %v3243 = vrot.slane %v3211, 7
      %v3244 = vrot.slane %v3212, 7
      %v3245 = vrot.slane %v3213, 7
      %v3246 = vrot.slane %v3214, 7
      %v3247 = vrot.slane %v3215, 7
      %v3248 = vrot.slane %v3216, 7
      %v3249 = vrot.slane %v3217, 7
      %v3250 = vrot.slane %v3218, 7
      %v3251 = vrot.slane %v3219, 7
      %v3252 = vrot.slane %v3220, 7
      %v3253 = vrot.slane %v3221, 7
      %v3254 = vrot.slane %v3222, 7
      %v3255 = vrot.slane %v3223, 7
      %v3256 = vrot.slane %v3224, 7
      %v3257 = vrot.slane %v3225, 7
      %v3258 = vrot.slane %v3226, 7
      %v3259 = vrot.slane %v3227, 7
      %v3260 = vlaneseq
      %v3261 = vshrl.u32 %v3260, 7
      %vm3262 = vcmp.lt.s32.totalorder %v3261, 1
      %v3263 = vsel %vm3262, %v3258, %v3259
      %v3264 = vsel %vm3262, %v3257, %v3258
      %v3265 = vsel %vm3262, %v3256, %v3257
      %v3266 = vsel %vm3262, %v3255, %v3256
      %v3267 = vsel %vm3262, %v3254, %v3255
      %v3268 = vsel %vm3262, %v3253, %v3254
      %v3269 = vsel %vm3262, %v3252, %v3253
      %v3270 = vsel %vm3262, %v3251, %v3252
      %v3271 = vsel %vm3262, %v3250, %v3251
      %v3272 = vsel %vm3262, %v3249, %v3250
      %v3273 = vsel %vm3262, %v3248, %v3249
      %v3274 = vsel %vm3262, %v3247, %v3248
      %v3275 = vsel %vm3262, %v3246, %v3247
      %v3276 = vsel %vm3262, %v3245, %v3246
      %v3277 = vsel %vm3262, %v3244, %v3245
      %v3278 = vsel %vm3262, %v3243, %v3244
      %v3279 = vsel %vm3262, %v3242, %v3243
      %v3280 = vsel %vm3262, %v3241, %v3242
      %v3281 = vsel %vm3262, %v3240, %v3241
      %v3282 = vsel %vm3262, %v3239, %v3240
      %v3283 = vsel %vm3262, %v3238, %v3239
      %v3284 = vsel %vm3262, %v3237, %v3238
      %v3285 = vsel %vm3262, %v3236, %v3237
      %v3286 = vsel %vm3262, %v3235, %v3236
      %v3287 = vsel %vm3262, %v3234, %v3235
      %v3288 = vsel %vm3262, %v3233, %v3234
      %v3289 = vsel %vm3262, %v3232, %v3233
      %v3290 = vsel %vm3262, %v3231, %v3232
      %v3291 = vsel %vm3262, %v3230, %v3231
      %v3292 = vsel %vm3262, %v3229, %v3230
      %v3293 = vsel %vm3262, %v3228, %v3229
      %v3294 = vsel %vm3262, %v3259, %v3228
      %v3295 = vld [vmem:[%s4] sm:$0xff]
      %v3296 = vld [vmem:[%s4 + $0x8] sm:$0xff]
      %v3297 = vld [vmem:[%s4 + $0x10] sm:$0xff]
      %v3298 = vld [vmem:[%s4 + $0x18] sm:$0xff]
      %v3299 = vld [vmem:[%s4 + $0x20] sm:$0xff]
      %v3300 = vld [vmem:[%s4 + $0x28] sm:$0xff]
      %v3301 = vld [vmem:[%s4 + $0x30] sm:$0xff]
      %v3302 = vld [vmem:[%s4 + $0x38] sm:$0xff]
      %v3303 = vld [vmem:[%s4 + $0x40] sm:$0xff]
      %v3304 = vld [vmem:[%s4 + $0x48] sm:$0xff]
      %v3305 = vld [vmem:[%s4 + $0x50] sm:$0xff]
      %v3306 = vld [vmem:[%s4 + $0x58] sm:$0xff]
      %v3307 = vld [vmem:[%s4 + $0x60] sm:$0xff]
      %v3308 = vld [vmem:[%s4 + $0x68] sm:$0xff]
      %v3309 = vld [vmem:[%s4 + $0x70] sm:$0xff]
      %v3310 = vld [vmem:[%s4 + $0x78] sm:$0xff]
      %v3311 = vld [vmem:[%s4 + $0x80] sm:$0xff]
      %v3312 = vld [vmem:[%s4 + $0x88] sm:$0xff]
      %v3313 = vld [vmem:[%s4 + $0x90] sm:$0xff]
      %v3314 = vld [vmem:[%s4 + $0x98] sm:$0xff]
      %v3315 = vld [vmem:[%s4 + $0xa0] sm:$0xff]
      %v3316 = vld [vmem:[%s4 + $0xa8] sm:$0xff]
      %v3317 = vld [vmem:[%s4 + $0xb0] sm:$0xff]
      %v3318 = vld [vmem:[%s4 + $0xb8] sm:$0xff]
      %v3319 = vld [vmem:[%s4 + $0xc0] sm:$0xff]
      %v3320 = vld [vmem:[%s4 + $0xc8] sm:$0xff]
      %v3321 = vld [vmem:[%s4 + $0xd0] sm:$0xff]
      %v3322 = vld [vmem:[%s4 + $0xd8] sm:$0xff]
      %v3323 = vld [vmem:[%s4 + $0xe0] sm:$0xff]
      %v3324 = vld [vmem:[%s4 + $0xe8] sm:$0xff]
      %v3325 = vld [vmem:[%s4 + $0xf0] sm:$0xff]
      %v3326 = vld [vmem:[%s4 + $0xf8] sm:$0xff]
      %3328 = vset.pattern.permute.xlu0 0
      %3329 = vperm.xlu0 %3328, %v3295
      %v3330 = vpop.permute.xlu0 %3329
      %3333 = vset.pattern.permute.xlu0 0
      %3334 = vperm.xlu0 %3333, %v3296
      %v3335 = vpop.permute.xlu0 %3334
      %3338 = vset.pattern.permute.xlu0 0
      %3339 = vperm.xlu0 %3338, %v3297
      %v3340 = vpop.permute.xlu0 %3339
      %3343 = vset.pattern.permute.xlu0 0
      %3344 = vperm.xlu0 %3343, %v3298
      %v3345 = vpop.permute.xlu0 %3344
      %3348 = vset.pattern.permute.xlu0 0
      %3349 = vperm.xlu0 %3348, %v3299
      %v3350 = vpop.permute.xlu0 %3349
      %3353 = vset.pattern.permute.xlu0 0
      %3354 = vperm.xlu0 %3353, %v3300
      %v3355 = vpop.permute.xlu0 %3354
      %3358 = vset.pattern.permute.xlu0 0
      %3359 = vperm.xlu0 %3358, %v3301
      %v3360 = vpop.permute.xlu0 %3359
      %3363 = vset.pattern.permute.xlu0 0
      %3364 = vperm.xlu0 %3363, %v3302
      %v3365 = vpop.permute.xlu0 %3364
      %3368 = vset.pattern.permute.xlu0 0
      %3369 = vperm.xlu0 %3368, %v3303
      %v3370 = vpop.permute.xlu0 %3369
      %3373 = vset.pattern.permute.xlu0 0
      %3374 = vperm.xlu0 %3373, %v3304
      %v3375 = vpop.permute.xlu0 %3374
      %3378 = vset.pattern.permute.xlu0 0
      %3379 = vperm.xlu0 %3378, %v3305
      %v3380 = vpop.permute.xlu0 %3379
      %3383 = vset.pattern.permute.xlu0 0
      %3384 = vperm.xlu0 %3383, %v3306
      %v3385 = vpop.permute.xlu0 %3384
      %3388 = vset.pattern.permute.xlu0 0
      %3389 = vperm.xlu0 %3388, %v3307
      %v3390 = vpop.permute.xlu0 %3389
      %3393 = vset.pattern.permute.xlu0 0
      %3394 = vperm.xlu0 %3393, %v3308
      %v3395 = vpop.permute.xlu0 %3394
      %3398 = vset.pattern.permute.xlu0 0
      %3399 = vperm.xlu0 %3398, %v3309
      %v3400 = vpop.permute.xlu0 %3399
      %3403 = vset.pattern.permute.xlu0 0
      %3404 = vperm.xlu0 %3403, %v3310
      %v3405 = vpop.permute.xlu0 %3404
      %3408 = vset.pattern.permute.xlu0 0
      %3409 = vperm.xlu0 %3408, %v3311
      %v3410 = vpop.permute.xlu0 %3409
      %3413 = vset.pattern.permute.xlu0 0
      %3414 = vperm.xlu0 %3413, %v3312
      %v3415 = vpop.permute.xlu0 %3414
      %3418 = vset.pattern.permute.xlu0 0
      %3419 = vperm.xlu0 %3418, %v3313
      %v3420 = vpop.permute.xlu0 %3419
      %3423 = vset.pattern.permute.xlu0 0
      %3424 = vperm.xlu0 %3423, %v3314
      %v3425 = vpop.permute.xlu0 %3424
      %3428 = vset.pattern.permute.xlu0 0
      %3429 = vperm.xlu0 %3428, %v3315
      %v3430 = vpop.permute.xlu0 %3429
      %3433 = vset.pattern.permute.xlu0 0
      %3434 = vperm.xlu0 %3433, %v3316
      %v3435 = vpop.permute.xlu0 %3434
      %3438 = vset.pattern.permute.xlu0 0
      %3439 = vperm.xlu0 %3438, %v3317
      %v3440 = vpop.permute.xlu0 %3439
      %3443 = vset.pattern.permute.xlu0 0
      %3444 = vperm.xlu0 %3443, %v3318
      %v3445 = vpop.permute.xlu0 %3444
      %3448 = vset.pattern.permute.xlu0 0
      %3449 = vperm.xlu0 %3448, %v3319
      %v3450 = vpop.permute.xlu0 %3449
      %3453 = vset.pattern.permute.xlu0 0
      %3454 = vperm.xlu0 %3453, %v3320
      %v3455 = vpop.permute.xlu0 %3454
      %3458 = vset.pattern.permute.xlu0 0
      %3459 = vperm.xlu0 %3458, %v3321
      %v3460 = vpop.permute.xlu0 %3459
      %3463 = vset.pattern.permute.xlu0 0
      %3464 = vperm.xlu0 %3463, %v3322
      %v3465 = vpop.permute.xlu0 %3464
      %3468 = vset.pattern.permute.xlu0 0
      %3469 = vperm.xlu0 %3468, %v3323
      %v3470 = vpop.permute.xlu0 %3469
      %3473 = vset.pattern.permute.xlu0 0
      %3474 = vperm.xlu0 %3473, %v3324
      %v3475 = vpop.permute.xlu0 %3474
      %3478 = vset.pattern.permute.xlu0 0
      %3479 = vperm.xlu0 %3478, %v3325
      %v3480 = vpop.permute.xlu0 %3479
      %3483 = vset.pattern.permute.xlu0 0
      %3484 = vperm.xlu0 %3483, %v3326
      %v3485 = vpop.permute.xlu0 %3484
      %v3487 = vmul.f32 %v3264, %v3330
      %v3488 = vmul.f32 %v3263, %v3335
      %v3489 = vmul.f32 %v3294, %v3340
      %v3490 = vmul.f32 %v3293, %v3345
      %v3491 = vmul.f32 %v3292, %v3350
      %v3492 = vmul.f32 %v3291, %v3355
      %v3493 = vmul.f32 %v3290, %v3360
      %v3494 = vmul.f32 %v3289, %v3365
      %v3495 = vmul.f32 %v3288, %v3370
      %v3496 = vmul.f32 %v3287, %v3375
      %v3497 = vmul.f32 %v3286, %v3380
      %v3498 = vmul.f32 %v3285, %v3385
      %v3499 = vmul.f32 %v3284, %v3390
      %v3500 = vmul.f32 %v3283, %v3395
      %v3501 = vmul.f32 %v3282, %v3400
      %v3502 = vmul.f32 %v3281, %v3405
      %v3503 = vmul.f32 %v3280, %v3410
      %v3504 = vmul.f32 %v3279, %v3415
      %v3505 = vmul.f32 %v3278, %v3420
      %v3506 = vmul.f32 %v3277, %v3425
      %v3507 = vmul.f32 %v3276, %v3430
      %v3508 = vmul.f32 %v3275, %v3435
      %v3509 = vmul.f32 %v3274, %v3440
      %v3510 = vmul.f32 %v3273, %v3445
      %v3511 = vmul.f32 %v3272, %v3450
      %v3512 = vmul.f32 %v3271, %v3455
      %v3513 = vmul.f32 %v3270, %v3460
      %v3514 = vmul.f32 %v3269, %v3465
      %v3515 = vmul.f32 %v3268, %v3470
      %v3516 = vmul.f32 %v3267, %v3475
      %v3517 = vmul.f32 %v3266, %v3480
      %v3518 = vmul.f32 %v3265, %v3485
      %v3519 = vmax.f32 %v3196, %v3487
      %v3520 = vmax.f32 %v3197, %v3488
      %v3521 = vmax.f32 %v3198, %v3489
      %v3522 = vmax.f32 %v3199, %v3490
      %v3523 = vmax.f32 %v3200, %v3491
      %v3524 = vmax.f32 %v3201, %v3492
      %v3525 = vmax.f32 %v3202, %v3493
      %v3526 = vmax.f32 %v3203, %v3494
      %v3527 = vmax.f32 %v3204, %v3495
      %v3528 = vmax.f32 %v3205, %v3496
      %v3529 = vmax.f32 %v3206, %v3497
      %v3530 = vmax.f32 %v3207, %v3498
      %v3531 = vmax.f32 %v3208, %v3499
      %v3532 = vmax.f32 %v3209, %v3500
      %v3533 = vmax.f32 %v3210, %v3501
      %v3534 = vmax.f32 %v3211, %v3502
      %v3535 = vmax.f32 %v3212, %v3503
      %v3536 = vmax.f32 %v3213, %v3504
      %v3537 = vmax.f32 %v3214, %v3505
      %v3538 = vmax.f32 %v3215, %v3506
      %v3539 = vmax.f32 %v3216, %v3507
      %v3540 = vmax.f32 %v3217, %v3508
      %v3541 = vmax.f32 %v3218, %v3509
      %v3542 = vmax.f32 %v3219, %v3510
      %v3543 = vmax.f32 %v3220, %v3511
      %v3544 = vmax.f32 %v3221, %v3512
      %v3545 = vmax.f32 %v3222, %v3513
      %v3546 = vmax.f32 %v3223, %v3514
      %v3547 = vmax.f32 %v3224, %v3515
      %v3548 = vmax.f32 %v3225, %v3516
      %v3549 = vmax.f32 %v3226, %v3517
      %v3550 = vmax.f32 %v3227, %v3518
      %s3551 = scalar_lea.vmem %s4, 256
      %v3552 = vld [vmem:[%s3551] sm:$0xff]
      %v3553 = vld [vmem:[%s3551 + $0x8] sm:$0xff]
      %v3554 = vld [vmem:[%s3551 + $0x10] sm:$0xff]
      %v3555 = vld [vmem:[%s3551 + $0x18] sm:$0xff]
      %v3556 = vld [vmem:[%s3551 + $0x20] sm:$0xff]
      %v3557 = vld [vmem:[%s3551 + $0x28] sm:$0xff]
      %v3558 = vld [vmem:[%s3551 + $0x30] sm:$0xff]
      %v3559 = vld [vmem:[%s3551 + $0x38] sm:$0xff]
      %v3560 = vld [vmem:[%s3551 + $0x40] sm:$0xff]
      %v3561 = vld [vmem:[%s3551 + $0x48] sm:$0xff]
      %v3562 = vld [vmem:[%s3551 + $0x50] sm:$0xff]
      %v3563 = vld [vmem:[%s3551 + $0x58] sm:$0xff]
      %v3564 = vld [vmem:[%s3551 + $0x60] sm:$0xff]
      %v3565 = vld [vmem:[%s3551 + $0x68] sm:$0xff]
      %v3566 = vld [vmem:[%s3551 + $0x70] sm:$0xff]
      %v3567 = vld [vmem:[%s3551 + $0x78] sm:$0xff]
      %v3568 = vld [vmem:[%s3551 + $0x80] sm:$0xff]
      %v3569 = vld [vmem:[%s3551 + $0x88] sm:$0xff]
      %v3570 = vld [vmem:[%s3551 + $0x90] sm:$0xff]
      %v3571 = vld [vmem:[%s3551 + $0x98] sm:$0xff]
      %v3572 = vld [vmem:[%s3551 + $0xa0] sm:$0xff]
      %v3573 = vld [vmem:[%s3551 + $0xa8] sm:$0xff]
      %v3574 = vld [vmem:[%s3551 + $0xb0] sm:$0xff]
      %v3575 = vld [vmem:[%s3551 + $0xb8] sm:$0xff]
      %v3576 = vld [vmem:[%s3551 + $0xc0] sm:$0xff]
      %v3577 = vld [vmem:[%s3551 + $0xc8] sm:$0xff]
      %v3578 = vld [vmem:[%s3551 + $0xd0] sm:$0xff]
      %v3579 = vld [vmem:[%s3551 + $0xd8] sm:$0xff]
      %v3580 = vld [vmem:[%s3551 + $0xe0] sm:$0xff]
      %v3581 = vld [vmem:[%s3551 + $0xe8] sm:$0xff]
      %v3582 = vld [vmem:[%s3551 + $0xf0] sm:$0xff]
      %v3583 = vld [vmem:[%s3551 + $0xf8] sm:$0xff]
      %3585 = vset.pattern.permute.xlu0 0
      %3586 = vperm.xlu0 %3585, %v3552
      %v3587 = vpop.permute.xlu0 %3586
      %3590 = vset.pattern.permute.xlu0 0
      %3591 = vperm.xlu0 %3590, %v3553
      %v3592 = vpop.permute.xlu0 %3591
      %3595 = vset.pattern.permute.xlu0 0
      %3596 = vperm.xlu0 %3595, %v3554
      %v3597 = vpop.permute.xlu0 %3596
      %3600 = vset.pattern.permute.xlu0 0
      %3601 = vperm.xlu0 %3600, %v3555
      %v3602 = vpop.permute.xlu0 %3601
      %3605 = vset.pattern.permute.xlu0 0
      %3606 = vperm.xlu0 %3605, %v3556
      %v3607 = vpop.permute.xlu0 %3606
      %3610 = vset.pattern.permute.xlu0 0
      %3611 = vperm.xlu0 %3610, %v3557
      %v3612 = vpop.permute.xlu0 %3611
      %3615 = vset.pattern.permute.xlu0 0
      %3616 = vperm.xlu0 %3615, %v3558
      %v3617 = vpop.permute.xlu0 %3616
      %3620 = vset.pattern.permute.xlu0 0
      %3621 = vperm.xlu0 %3620, %v3559
      %v3622 = vpop.permute.xlu0 %3621
      %3625 = vset.pattern.permute.xlu0 0
      %3626 = vperm.xlu0 %3625, %v3560
      %v3627 = vpop.permute.xlu0 %3626
      %3630 = vset.pattern.permute.xlu0 0
      %3631 = vperm.xlu0 %3630, %v3561
      %v3632 = vpop.permute.xlu0 %3631
      %3635 = vset.pattern.permute.xlu0 0
      %3636 = vperm.xlu0 %3635, %v3562
      %v3637 = vpop.permute.xlu0 %3636
      %3640 = vset.pattern.permute.xlu0 0
      %3641 = vperm.xlu0 %3640, %v3563
      %v3642 = vpop.permute.xlu0 %3641
      %3645 = vset.pattern.permute.xlu0 0
      %3646 = vperm.xlu0 %3645, %v3564
      %v3647 = vpop.permute.xlu0 %3646
      %3650 = vset.pattern.permute.xlu0 0
      %3651 = vperm.xlu0 %3650, %v3565
      %v3652 = vpop.permute.xlu0 %3651
      %3655 = vset.pattern.permute.xlu0 0
      %3656 = vperm.xlu0 %3655, %v3566
      %v3657 = vpop.permute.xlu0 %3656
      %3660 = vset.pattern.permute.xlu0 0
      %3661 = vperm.xlu0 %3660, %v3567
      %v3662 = vpop.permute.xlu0 %3661
      %3665 = vset.pattern.permute.xlu0 0
      %3666 = vperm.xlu0 %3665, %v3568
      %v3667 = vpop.permute.xlu0 %3666
      %3670 = vset.pattern.permute.xlu0 0
      %3671 = vperm.xlu0 %3670, %v3569
      %v3672 = vpop.permute.xlu0 %3671
      %3675 = vset.pattern.permute.xlu0 0
      %3676 = vperm.xlu0 %3675, %v3570
      %v3677 = vpop.permute.xlu0 %3676
      %3680 = vset.pattern.permute.xlu0 0
      %3681 = vperm.xlu0 %3680, %v3571
      %v3682 = vpop.permute.xlu0 %3681
      %3685 = vset.pattern.permute.xlu0 0
      %3686 = vperm.xlu0 %3685, %v3572
      %v3687 = vpop.permute.xlu0 %3686
      %3690 = vset.pattern.permute.xlu0 0
      %3691 = vperm.xlu0 %3690, %v3573
      %v3692 = vpop.permute.xlu0 %3691
      %3695 = vset.pattern.permute.xlu0 0
      %3696 = vperm.xlu0 %3695, %v3574
      %v3697 = vpop.permute.xlu0 %3696
      %3700 = vset.pattern.permute.xlu0 0
      %3701 = vperm.xlu0 %3700, %v3575
      %v3702 = vpop.permute.xlu0 %3701
      %3705 = vset.pattern.permute.xlu0 0
      %3706 = vperm.xlu0 %3705, %v3576
      %v3707 = vpop.permute.xlu0 %3706
      %3710 = vset.pattern.permute.xlu0 0
      %3711 = vperm.xlu0 %3710, %v3577
      %v3712 = vpop.permute.xlu0 %3711
      %3715 = vset.pattern.permute.xlu0 0
      %3716 = vperm.xlu0 %3715, %v3578
      %v3717 = vpop.permute.xlu0 %3716
      %3720 = vset.pattern.permute.xlu0 0
      %3721 = vperm.xlu0 %3720, %v3579
      %v3722 = vpop.permute.xlu0 %3721
      %3725 = vset.pattern.permute.xlu0 0
      %3726 = vperm.xlu0 %3725, %v3580
      %v3727 = vpop.permute.xlu0 %3726
      %3730 = vset.pattern.permute.xlu0 0
      %3731 = vperm.xlu0 %3730, %v3581
      %v3732 = vpop.permute.xlu0 %3731
      %3735 = vset.pattern.permute.xlu0 0
      %3736 = vperm.xlu0 %3735, %v3582
      %v3737 = vpop.permute.xlu0 %3736
      %3740 = vset.pattern.permute.xlu0 0
      %3741 = vperm.xlu0 %3740, %v3583
      %v3742 = vpop.permute.xlu0 %3741
      %v3744 = vmul.f32 %v3226, %v3587
      %v3745 = vmul.f32 %v3227, %v3592
      %v3746 = vmul.f32 %v3196, %v3597
      %v3747 = vmul.f32 %v3197, %v3602
      %v3748 = vmul.f32 %v3198, %v3607
      %v3749 = vmul.f32 %v3199, %v3612
      %v3750 = vmul.f32 %v3200, %v3617
      %v3751 = vmul.f32 %v3201, %v3622
      %v3752 = vmul.f32 %v3202, %v3627
      %v3753 = vmul.f32 %v3203, %v3632
      %v3754 = vmul.f32 %v3204, %v3637
      %v3755 = vmul.f32 %v3205, %v3642
      %v3756 = vmul.f32 %v3206, %v3647
      %v3757 = vmul.f32 %v3207, %v3652
      %v3758 = vmul.f32 %v3208, %v3657
      %v3759 = vmul.f32 %v3209, %v3662
      %v3760 = vmul.f32 %v3210, %v3667
      %v3761 = vmul.f32 %v3211, %v3672
      %v3762 = vmul.f32 %v3212, %v3677
      %v3763 = vmul.f32 %v3213, %v3682
      %v3764 = vmul.f32 %v3214, %v3687
      %v3765 = vmul.f32 %v3215, %v3692
      %v3766 = vmul.f32 %v3216, %v3697
      %v3767 = vmul.f32 %v3217, %v3702
      %v3768 = vmul.f32 %v3218, %v3707
      %v3769 = vmul.f32 %v3219, %v3712
      %v3770 = vmul.f32 %v3220, %v3717
      %v3771 = vmul.f32 %v3221, %v3722
      %v3772 = vmul.f32 %v3222, %v3727
      %v3773 = vmul.f32 %v3223, %v3732
      %v3774 = vmul.f32 %v3224, %v3737
      %v3775 = vmul.f32 %v3225, %v3742
      %v3776 = vmax.f32 %v3519, %v3744
      %v3777 = vmax.f32 %v3520, %v3745
      %v3778 = vmax.f32 %v3521, %v3746
      %v3779 = vmax.f32 %v3522, %v3747
      %v3780 = vmax.f32 %v3523, %v3748
      %v3781 = vmax.f32 %v3524, %v3749
      %v3782 = vmax.f32 %v3525, %v3750
      %v3783 = vmax.f32 %v3526, %v3751
      %v3784 = vmax.f32 %v3527, %v3752
      %v3785 = vmax.f32 %v3528, %v3753
      %v3786 = vmax.f32 %v3529, %v3754
      %v3787 = vmax.f32 %v3530, %v3755
      %v3788 = vmax.f32 %v3531, %v3756
      %v3789 = vmax.f32 %v3532, %v3757
      %v3790 = vmax.f32 %v3533, %v3758
      %v3791 = vmax.f32 %v3534, %v3759
      %v3792 = vmax.f32 %v3535, %v3760
      %v3793 = vmax.f32 %v3536, %v3761
      %v3794 = vmax.f32 %v3537, %v3762
      %v3795 = vmax.f32 %v3538, %v3763
      %v3796 = vmax.f32 %v3539, %v3764
      %v3797 = vmax.f32 %v3540, %v3765
      %v3798 = vmax.f32 %v3541, %v3766
      %v3799 = vmax.f32 %v3542, %v3767
      %v3800 = vmax.f32 %v3543, %v3768
      %v3801 = vmax.f32 %v3544, %v3769
      %v3802 = vmax.f32 %v3545, %v3770
      %v3803 = vmax.f32 %v3546, %v3771
      %v3804 = vmax.f32 %v3547, %v3772
      %v3805 = vmax.f32 %v3548, %v3773
      %v3806 = vmax.f32 %v3549, %v3774
      %v3807 = vmax.f32 %v3550, %v3775
      %v3808 = vrot.slane %v3196, 1
      %v3809 = vrot.slane %v3197, 1
      %v3810 = vrot.slane %v3198, 1
      %v3811 = vrot.slane %v3199, 1
      %v3812 = vrot.slane %v3200, 1
      %v3813 = vrot.slane %v3201, 1
      %v3814 = vrot.slane %v3202, 1
      %v3815 = vrot.slane %v3203, 1
      %v3816 = vrot.slane %v3204, 1
      %v3817 = vrot.slane %v3205, 1
      %v3818 = vrot.slane %v3206, 1
      %v3819 = vrot.slane %v3207, 1
      %v3820 = vrot.slane %v3208, 1
      %v3821 = vrot.slane %v3209, 1
      %v3822 = vrot.slane %v3210, 1
      %v3823 = vrot.slane %v3211, 1
      %v3824 = vrot.slane %v3212, 1
      %v3825 = vrot.slane %v3213, 1
      %v3826 = vrot.slane %v3214, 1
      %v3827 = vrot.slane %v3215, 1
      %v3828 = vrot.slane %v3216, 1
      %v3829 = vrot.slane %v3217, 1
      %v3830 = vrot.slane %v3218, 1
      %v3831 = vrot.slane %v3219, 1
      %v3832 = vrot.slane %v3220, 1
      %v3833 = vrot.slane %v3221, 1
      %v3834 = vrot.slane %v3222, 1
      %v3835 = vrot.slane %v3223, 1
      %v3836 = vrot.slane %v3224, 1
      %v3837 = vrot.slane %v3225, 1
      %v3838 = vrot.slane %v3226, 1
      %v3839 = vrot.slane %v3227, 1
      %vm3840 = vcmp.lt.s32.totalorder %v3261, 7
      %v3841 = vsel %vm3840, %v3838, %v3839
      %v3842 = vsel %vm3840, %v3837, %v3838
      %v3843 = vsel %vm3840, %v3836, %v3837
      %v3844 = vsel %vm3840, %v3835, %v3836
      %v3845 = vsel %vm3840, %v3834, %v3835
      %v3846 = vsel %vm3840, %v3833, %v3834
      %v3847 = vsel %vm3840, %v3832, %v3833
      %v3848 = vsel %vm3840, %v3831, %v3832
      %v3849 = vsel %vm3840, %v3830, %v3831
      %v3850 = vsel %vm3840, %v3829, %v3830
      %v3851 = vsel %vm3840, %v3828, %v3829
      %v3852 = vsel %vm3840, %v3827, %v3828
      %v3853 = vsel %vm3840, %v3826, %v3827
      %v3854 = vsel %vm3840, %v3825, %v3826
      %v3855 = vsel %vm3840, %v3824, %v3825
      %v3856 = vsel %vm3840, %v3823, %v3824
      %v3857 = vsel %vm3840, %v3822, %v3823
      %v3858 = vsel %vm3840, %v3821, %v3822
      %v3859 = vsel %vm3840, %v3820, %v3821
      %v3860 = vsel %vm3840, %v3819, %v3820
      %v3861 = vsel %vm3840, %v3818, %v3819
      %v3862 = vsel %vm3840, %v3817, %v3818
      %v3863 = vsel %vm3840, %v3816, %v3817
      %v3864 = vsel %vm3840, %v3815, %v3816
      %v3865 = vsel %vm3840, %v3814, %v3815
      %v3866 = vsel %vm3840, %v3813, %v3814
      %v3867 = vsel %vm3840, %v3812, %v3813
      %v3868 = vsel %vm3840, %v3811, %v3812
      %v3869 = vsel %vm3840, %v3810, %v3811
      %v3870 = vsel %vm3840, %v3809, %v3810
      %v3871 = vsel %vm3840, %v3808, %v3809
      %v3872 = vsel %vm3840, %v3839, %v3808
      %s3873 = scalar_lea.vmem %s4, 512
      %v3874 = vld [vmem:[%s3873] sm:$0xff]
      %v3875 = vld [vmem:[%s3873 + $0x8] sm:$0xff]
      %v3876 = vld [vmem:[%s3873 + $0x10] sm:$0xff]
      %v3877 = vld [vmem:[%s3873 + $0x18] sm:$0xff]
      %v3878 = vld [vmem:[%s3873 + $0x20] sm:$0xff]
      %v3879 = vld [vmem:[%s3873 + $0x28] sm:$0xff]
      %v3880 = vld [vmem:[%s3873 + $0x30] sm:$0xff]
      %v3881 = vld [vmem:[%s3873 + $0x38] sm:$0xff]
      %v3882 = vld [vmem:[%s3873 + $0x40] sm:$0xff]
      %v3883 = vld [vmem:[%s3873 + $0x48] sm:$0xff]
      %v3884 = vld [vmem:[%s3873 + $0x50] sm:$0xff]
      %v3885 = vld [vmem:[%s3873 + $0x58] sm:$0xff]
      %v3886 = vld [vmem:[%s3873 + $0x60] sm:$0xff]
      %v3887 = vld [vmem:[%s3873 + $0x68] sm:$0xff]
      %v3888 = vld [vmem:[%s3873 + $0x70] sm:$0xff]
      %v3889 = vld [vmem:[%s3873 + $0x78] sm:$0xff]
      %v3890 = vld [vmem:[%s3873 + $0x80] sm:$0xff]
      %v3891 = vld [vmem:[%s3873 + $0x88] sm:$0xff]
      %v3892 = vld [vmem:[%s3873 + $0x90] sm:$0xff]
      %v3893 = vld [vmem:[%s3873 + $0x98] sm:$0xff]
      %v3894 = vld [vmem:[%s3873 + $0xa0] sm:$0xff]
      %v3895 = vld [vmem:[%s3873 + $0xa8] sm:$0xff]
      %v3896 = vld [vmem:[%s3873 + $0xb0] sm:$0xff]
      %v3897 = vld [vmem:[%s3873 + $0xb8] sm:$0xff]
      %v3898 = vld [vmem:[%s3873 + $0xc0] sm:$0xff]
      %v3899 = vld [vmem:[%s3873 + $0xc8] sm:$0xff]
      %v3900 = vld [vmem:[%s3873 + $0xd0] sm:$0xff]
      %v3901 = vld [vmem:[%s3873 + $0xd8] sm:$0xff]
      %v3902 = vld [vmem:[%s3873 + $0xe0] sm:$0xff]
      %v3903 = vld [vmem:[%s3873 + $0xe8] sm:$0xff]
      %v3904 = vld [vmem:[%s3873 + $0xf0] sm:$0xff]
      %v3905 = vld [vmem:[%s3873 + $0xf8] sm:$0xff]
      %3907 = vset.pattern.permute.xlu0 0
      %3908 = vperm.xlu0 %3907, %v3874
      %v3909 = vpop.permute.xlu0 %3908
      %3912 = vset.pattern.permute.xlu0 0
      %3913 = vperm.xlu0 %3912, %v3875
      %v3914 = vpop.permute.xlu0 %3913
      %3917 = vset.pattern.permute.xlu0 0
      %3918 = vperm.xlu0 %3917, %v3876
      %v3919 = vpop.permute.xlu0 %3918
      %3922 = vset.pattern.permute.xlu0 0
      %3923 = vperm.xlu0 %3922, %v3877
      %v3924 = vpop.permute.xlu0 %3923
      %3927 = vset.pattern.permute.xlu0 0
      %3928 = vperm.xlu0 %3927, %v3878
      %v3929 = vpop.permute.xlu0 %3928
      %3932 = vset.pattern.permute.xlu0 0
      %3933 = vperm.xlu0 %3932, %v3879
      %v3934 = vpop.permute.xlu0 %3933
      %3937 = vset.pattern.permute.xlu0 0
      %3938 = vperm.xlu0 %3937, %v3880
      %v3939 = vpop.permute.xlu0 %3938
      %3942 = vset.pattern.permute.xlu0 0
      %3943 = vperm.xlu0 %3942, %v3881
      %v3944 = vpop.permute.xlu0 %3943
      %3947 = vset.pattern.permute.xlu0 0
      %3948 = vperm.xlu0 %3947, %v3882
      %v3949 = vpop.permute.xlu0 %3948
      %3952 = vset.pattern.permute.xlu0 0
      %3953 = vperm.xlu0 %3952, %v3883
      %v3954 = vpop.permute.xlu0 %3953
      %3957 = vset.pattern.permute.xlu0 0
      %3958 = vperm.xlu0 %3957, %v3884
      %v3959 = vpop.permute.xlu0 %3958
      %3962 = vset.pattern.permute.xlu0 0
      %3963 = vperm.xlu0 %3962, %v3885
      %v3964 = vpop.permute.xlu0 %3963
      %3967 = vset.pattern.permute.xlu0 0
      %3968 = vperm.xlu0 %3967, %v3886
      %v3969 = vpop.permute.xlu0 %3968
      %3972 = vset.pattern.permute.xlu0 0
      %3973 = vperm.xlu0 %3972, %v3887
      %v3974 = vpop.permute.xlu0 %3973
      %3977 = vset.pattern.permute.xlu0 0
      %3978 = vperm.xlu0 %3977, %v3888
      %v3979 = vpop.permute.xlu0 %3978
      %3982 = vset.pattern.permute.xlu0 0
      %3983 = vperm.xlu0 %3982, %v3889
      %v3984 = vpop.permute.xlu0 %3983
      %3987 = vset.pattern.permute.xlu0 0
      %3988 = vperm.xlu0 %3987, %v3890
      %v3989 = vpop.permute.xlu0 %3988
      %3992 = vset.pattern.permute.xlu0 0
      %3993 = vperm.xlu0 %3992, %v3891
      %v3994 = vpop.permute.xlu0 %3993
      %3997 = vset.pattern.permute.xlu0 0
      %3998 = vperm.xlu0 %3997, %v3892
      %v3999 = vpop.permute.xlu0 %3998
      %4002 = vset.pattern.permute.xlu0 0
      %4003 = vperm.xlu0 %4002, %v3893
      %v4004 = vpop.permute.xlu0 %4003
      %4007 = vset.pattern.permute.xlu0 0
      %4008 = vperm.xlu0 %4007, %v3894
      %v4009 = vpop.permute.xlu0 %4008
      %4012 = vset.pattern.permute.xlu0 0
      %4013 = vperm.xlu0 %4012, %v3895
      %v4014 = vpop.permute.xlu0 %4013
      %4017 = vset.pattern.permute.xlu0 0
      %4018 = vperm.xlu0 %4017, %v3896
      %v4019 = vpop.permute.xlu0 %4018
      %4022 = vset.pattern.permute.xlu0 0
      %4023 = vperm.xlu0 %4022, %v3897
      %v4024 = vpop.permute.xlu0 %4023
      %4027 = vset.pattern.permute.xlu0 0
      %4028 = vperm.xlu0 %4027, %v3898
      %v4029 = vpop.permute.xlu0 %4028
      %4032 = vset.pattern.permute.xlu0 0
      %4033 = vperm.xlu0 %4032, %v3899
      %v4034 = vpop.permute.xlu0 %4033
      %4037 = vset.pattern.permute.xlu0 0
      %4038 = vperm.xlu0 %4037, %v3900
      %v4039 = vpop.permute.xlu0 %4038
      %4042 = vset.pattern.permute.xlu0 0
      %4043 = vperm.xlu0 %4042, %v3901
      %v4044 = vpop.permute.xlu0 %4043
      %4047 = vset.pattern.permute.xlu0 0
      %4048 = vperm.xlu0 %4047, %v3902
      %v4049 = vpop.permute.xlu0 %4048
      %4052 = vset.pattern.permute.xlu0 0
      %4053 = vperm.xlu0 %4052, %v3903
      %v4054 = vpop.permute.xlu0 %4053
      %4057 = vset.pattern.permute.xlu0 0
      %4058 = vperm.xlu0 %4057, %v3904
      %v4059 = vpop.permute.xlu0 %4058
      %4062 = vset.pattern.permute.xlu0 0
      %4063 = vperm.xlu0 %4062, %v3905
      %v4064 = vpop.permute.xlu0 %4063
      %v4066 = vmul.f32 %v3841, %v3909
      %v4067 = vmul.f32 %v3872, %v3914
      %v4068 = vmul.f32 %v3871, %v3919
      %v4069 = vmul.f32 %v3870, %v3924
      %v4070 = vmul.f32 %v3869, %v3929
      %v4071 = vmul.f32 %v3868, %v3934
      %v4072 = vmul.f32 %v3867, %v3939
      %v4073 = vmul.f32 %v3866, %v3944
      %v4074 = vmul.f32 %v3865, %v3949
      %v4075 = vmul.f32 %v3864, %v3954
      %v4076 = vmul.f32 %v3863, %v3959
      %v4077 = vmul.f32 %v3862, %v3964
      %v4078 = vmul.f32 %v3861, %v3969
      %v4079 = vmul.f32 %v3860, %v3974
      %v4080 = vmul.f32 %v3859, %v3979
      %v4081 = vmul.f32 %v3858, %v3984
      %v4082 = vmul.f32 %v3857, %v3989
      %v4083 = vmul.f32 %v3856, %v3994
      %v4084 = vmul.f32 %v3855, %v3999
      %v4085 = vmul.f32 %v3854, %v4004
      %v4086 = vmul.f32 %v3853, %v4009
      %v4087 = vmul.f32 %v3852, %v4014
      %v4088 = vmul.f32 %v3851, %v4019
      %v4089 = vmul.f32 %v3850, %v4024
      %v4090 = vmul.f32 %v3849, %v4029
      %v4091 = vmul.f32 %v3848, %v4034
      %v4092 = vmul.f32 %v3847, %v4039
      %v4093 = vmul.f32 %v3846, %v4044
      %v4094 = vmul.f32 %v3845, %v4049
      %v4095 = vmul.f32 %v3844, %v4054
      %v4096 = vmul.f32 %v3843, %v4059
      %v4097 = vmul.f32 %v3842, %v4064
      %v4098 = vmax.f32 %v3776, %v4066
      %v4099 = vmax.f32 %v3777, %v4067
      %v4100 = vmax.f32 %v3778, %v4068
      %v4101 = vmax.f32 %v3779, %v4069
      %v4102 = vmax.f32 %v3780, %v4070
      %v4103 = vmax.f32 %v3781, %v4071
      %v4104 = vmax.f32 %v3782, %v4072
      %v4105 = vmax.f32 %v3783, %v4073
      %v4106 = vmax.f32 %v3784, %v4074
      %v4107 = vmax.f32 %v3785, %v4075
      %v4108 = vmax.f32 %v3786, %v4076
      %v4109 = vmax.f32 %v3787, %v4077
      %v4110 = vmax.f32 %v3788, %v4078
      %v4111 = vmax.f32 %v3789, %v4079
      %v4112 = vmax.f32 %v3790, %v4080
      %v4113 = vmax.f32 %v3791, %v4081
      %v4114 = vmax.f32 %v3792, %v4082
      %v4115 = vmax.f32 %v3793, %v4083
      %v4116 = vmax.f32 %v3794, %v4084
      %v4117 = vmax.f32 %v3795, %v4085
      %v4118 = vmax.f32 %v3796, %v4086
      %v4119 = vmax.f32 %v3797, %v4087
      %v4120 = vmax.f32 %v3798, %v4088
      %v4121 = vmax.f32 %v3799, %v4089
      %v4122 = vmax.f32 %v3800, %v4090
      %v4123 = vmax.f32 %v3801, %v4091
      %v4124 = vmax.f32 %v3802, %v4092
      %v4125 = vmax.f32 %v3803, %v4093
      %v4126 = vmax.f32 %v3804, %v4094
      %v4127 = vmax.f32 %v3805, %v4095
      %v4128 = vmax.f32 %v3806, %v4096
      %v4129 = vmax.f32 %v3807, %v4097
      %s4130 = scalar_lea.vmem %s4, 768
      %v4131 = vld [vmem:[%s4130] sm:$0xff]
      %v4132 = vld [vmem:[%s4130 + $0x8] sm:$0xff]
      %v4133 = vld [vmem:[%s4130 + $0x10] sm:$0xff]
      %v4134 = vld [vmem:[%s4130 + $0x18] sm:$0xff]
      %v4135 = vld [vmem:[%s4130 + $0x20] sm:$0xff]
      %v4136 = vld [vmem:[%s4130 + $0x28] sm:$0xff]
      %v4137 = vld [vmem:[%s4130 + $0x30] sm:$0xff]
      %v4138 = vld [vmem:[%s4130 + $0x38] sm:$0xff]
      %v4139 = vld [vmem:[%s4130 + $0x40] sm:$0xff]
      %v4140 = vld [vmem:[%s4130 + $0x48] sm:$0xff]
      %v4141 = vld [vmem:[%s4130 + $0x50] sm:$0xff]
      %v4142 = vld [vmem:[%s4130 + $0x58] sm:$0xff]
      %v4143 = vld [vmem:[%s4130 + $0x60] sm:$0xff]
      %v4144 = vld [vmem:[%s4130 + $0x68] sm:$0xff]
      %v4145 = vld [vmem:[%s4130 + $0x70] sm:$0xff]
      %v4146 = vld [vmem:[%s4130 + $0x78] sm:$0xff]
      %v4147 = vld [vmem:[%s4130 + $0x80] sm:$0xff]
      %v4148 = vld [vmem:[%s4130 + $0x88] sm:$0xff]
      %v4149 = vld [vmem:[%s4130 + $0x90] sm:$0xff]
      %v4150 = vld [vmem:[%s4130 + $0x98] sm:$0xff]
      %v4151 = vld [vmem:[%s4130 + $0xa0] sm:$0xff]
      %v4152 = vld [vmem:[%s4130 + $0xa8] sm:$0xff]
      %v4153 = vld [vmem:[%s4130 + $0xb0] sm:$0xff]
      %v4154 = vld [vmem:[%s4130 + $0xb8] sm:$0xff]
      %v4155 = vld [vmem:[%s4130 + $0xc0] sm:$0xff]
      %v4156 = vld [vmem:[%s4130 + $0xc8] sm:$0xff]
      %v4157 = vld [vmem:[%s4130 + $0xd0] sm:$0xff]
      %v4158 = vld [vmem:[%s4130 + $0xd8] sm:$0xff]
      %v4159 = vld [vmem:[%s4130 + $0xe0] sm:$0xff]
      %v4160 = vld [vmem:[%s4130 + $0xe8] sm:$0xff]
      %v4161 = vld [vmem:[%s4130 + $0xf0] sm:$0xff]
      %v4162 = vld [vmem:[%s4130 + $0xf8] sm:$0xff]
      %4164 = vset.pattern.permute.xlu0 0
      %4165 = vperm.xlu0 %4164, %v4131
      %v4166 = vpop.permute.xlu0 %4165
      %4169 = vset.pattern.permute.xlu0 0
      %4170 = vperm.xlu0 %4169, %v4132
      %v4171 = vpop.permute.xlu0 %4170
      %4174 = vset.pattern.permute.xlu0 0
      %4175 = vperm.xlu0 %4174, %v4133
      %v4176 = vpop.permute.xlu0 %4175
      %4179 = vset.pattern.permute.xlu0 0
      %4180 = vperm.xlu0 %4179, %v4134
      %v4181 = vpop.permute.xlu0 %4180
      %4184 = vset.pattern.permute.xlu0 0
      %4185 = vperm.xlu0 %4184, %v4135
      %v4186 = vpop.permute.xlu0 %4185
      %4189 = vset.pattern.permute.xlu0 0
      %4190 = vperm.xlu0 %4189, %v4136
      %v4191 = vpop.permute.xlu0 %4190
      %4194 = vset.pattern.permute.xlu0 0
      %4195 = vperm.xlu0 %4194, %v4137
      %v4196 = vpop.permute.xlu0 %4195
      %4199 = vset.pattern.permute.xlu0 0
      %4200 = vperm.xlu0 %4199, %v4138
      %v4201 = vpop.permute.xlu0 %4200
      %4204 = vset.pattern.permute.xlu0 0
      %4205 = vperm.xlu0 %4204, %v4139
      %v4206 = vpop.permute.xlu0 %4205
      %4209 = vset.pattern.permute.xlu0 0
      %4210 = vperm.xlu0 %4209, %v4140
      %v4211 = vpop.permute.xlu0 %4210
      %4214 = vset.pattern.permute.xlu0 0
      %4215 = vperm.xlu0 %4214, %v4141
      %v4216 = vpop.permute.xlu0 %4215
      %4219 = vset.pattern.permute.xlu0 0
      %4220 = vperm.xlu0 %4219, %v4142
      %v4221 = vpop.permute.xlu0 %4220
      %4224 = vset.pattern.permute.xlu0 0
      %4225 = vperm.xlu0 %4224, %v4143
      %v4226 = vpop.permute.xlu0 %4225
      %4229 = vset.pattern.permute.xlu0 0
      %4230 = vperm.xlu0 %4229, %v4144
      %v4231 = vpop.permute.xlu0 %4230
      %4234 = vset.pattern.permute.xlu0 0
      %4235 = vperm.xlu0 %4234, %v4145
      %v4236 = vpop.permute.xlu0 %4235
      %4239 = vset.pattern.permute.xlu0 0
      %4240 = vperm.xlu0 %4239, %v4146
      %v4241 = vpop.permute.xlu0 %4240
      %4244 = vset.pattern.permute.xlu0 0
      %4245 = vperm.xlu0 %4244, %v4147
      %v4246 = vpop.permute.xlu0 %4245
      %4249 = vset.pattern.permute.xlu0 0
      %4250 = vperm.xlu0 %4249, %v4148
      %v4251 = vpop.permute.xlu0 %4250
      %4254 = vset.pattern.permute.xlu0 0
      %4255 = vperm.xlu0 %4254, %v4149
      %v4256 = vpop.permute.xlu0 %4255
      %4259 = vset.pattern.permute.xlu0 0
      %4260 = vperm.xlu0 %4259, %v4150
      %v4261 = vpop.permute.xlu0 %4260
      %4264 = vset.pattern.permute.xlu0 0
      %4265 = vperm.xlu0 %4264, %v4151
      %v4266 = vpop.permute.xlu0 %4265
      %4269 = vset.pattern.permute.xlu0 0
      %4270 = vperm.xlu0 %4269, %v4152
      %v4271 = vpop.permute.xlu0 %4270
      %4274 = vset.pattern.permute.xlu0 0
      %4275 = vperm.xlu0 %4274, %v4153
      %v4276 = vpop.permute.xlu0 %4275
      %4279 = vset.pattern.permute.xlu0 0
      %4280 = vperm.xlu0 %4279, %v4154
      %v4281 = vpop.permute.xlu0 %4280
      %4284 = vset.pattern.permute.xlu0 0
      %4285 = vperm.xlu0 %4284, %v4155
      %v4286 = vpop.permute.xlu0 %4285
      %4289 = vset.pattern.permute.xlu0 0
      %4290 = vperm.xlu0 %4289, %v4156
      %v4291 = vpop.permute.xlu0 %4290
      %4294 = vset.pattern.permute.xlu0 0
      %4295 = vperm.xlu0 %4294, %v4157
      %v4296 = vpop.permute.xlu0 %4295
      %4299 = vset.pattern.permute.xlu0 0
      %4300 = vperm.xlu0 %4299, %v4158
      %v4301 = vpop.permute.xlu0 %4300
      %4304 = vset.pattern.permute.xlu0 0
      %4305 = vperm.xlu0 %4304, %v4159
      %v4306 = vpop.permute.xlu0 %4305
      %4309 = vset.pattern.permute.xlu0 0
      %4310 = vperm.xlu0 %4309, %v4160
      %v4311 = vpop.permute.xlu0 %4310
      %4314 = vset.pattern.permute.xlu0 0
      %4315 = vperm.xlu0 %4314, %v4161
      %v4316 = vpop.permute.xlu0 %4315
      %4319 = vset.pattern.permute.xlu0 0
      %4320 = vperm.xlu0 %4319, %v4162
      %v4321 = vpop.permute.xlu0 %4320
      %v4323 = vmul.f32 %v3294, %v4166
      %v4324 = vmul.f32 %v3293, %v4171
      %v4325 = vmul.f32 %v3292, %v4176
      %v4326 = vmul.f32 %v3291, %v4181
      %v4327 = vmul.f32 %v3290, %v4186
      %v4328 = vmul.f32 %v3289, %v4191
      %v4329 = vmul.f32 %v3288, %v4196
      %v4330 = vmul.f32 %v3287, %v4201
      %v4331 = vmul.f32 %v3286, %v4206
      %v4332 = vmul.f32 %v3285, %v4211
      %v4333 = vmul.f32 %v3284, %v4216
      %v4334 = vmul.f32 %v3283, %v4221
      %v4335 = vmul.f32 %v3282, %v4226
      %v4336 = vmul.f32 %v3281, %v4231
      %v4337 = vmul.f32 %v3280, %v4236
      %v4338 = vmul.f32 %v3279, %v4241
      %v4339 = vmul.f32 %v3278, %v4246
      %v4340 = vmul.f32 %v3277, %v4251
      %v4341 = vmul.f32 %v3276, %v4256
      %v4342 = vmul.f32 %v3275, %v4261
      %v4343 = vmul.f32 %v3274, %v4266
      %v4344 = vmul.f32 %v3273, %v4271
      %v4345 = vmul.f32 %v3272, %v4276
      %v4346 = vmul.f32 %v3271, %v4281
      %v4347 = vmul.f32 %v3270, %v4286
      %v4348 = vmul.f32 %v3269, %v4291
      %v4349 = vmul.f32 %v3268, %v4296
      %v4350 = vmul.f32 %v3267, %v4301
      %v4351 = vmul.f32 %v3266, %v4306
      %v4352 = vmul.f32 %v3265, %v4311
      %v4353 = vmul.f32 %v3264, %v4316
      %v4354 = vmul.f32 %v3263, %v4321
      %v4355 = vmax.f32 %v4098, %v4323
      %v4356 = vmax.f32 %v4099, %v4324
      %v4357 = vmax.f32 %v4100, %v4325
      %v4358 = vmax.f32 %v4101, %v4326
      %v4359 = vmax.f32 %v4102, %v4327
      %v4360 = vmax.f32 %v4103, %v4328
      %v4361 = vmax.f32 %v4104, %v4329
      %v4362 = vmax.f32 %v4105, %v4330
      %v4363 = vmax.f32 %v4106, %v4331
      %v4364 = vmax.f32 %v4107, %v4332
      %v4365 = vmax.f32 %v4108, %v4333
      %v4366 = vmax.f32 %v4109, %v4334
      %v4367 = vmax.f32 %v4110, %v4335
      %v4368 = vmax.f32 %v4111, %v4336
      %v4369 = vmax.f32 %v4112, %v4337
      %v4370 = vmax.f32 %v4113, %v4338
      %v4371 = vmax.f32 %v4114, %v4339
      %v4372 = vmax.f32 %v4115, %v4340
      %v4373 = vmax.f32 %v4116, %v4341
      %v4374 = vmax.f32 %v4117, %v4342
      %v4375 = vmax.f32 %v4118, %v4343
      %v4376 = vmax.f32 %v4119, %v4344
      %v4377 = vmax.f32 %v4120, %v4345
      %v4378 = vmax.f32 %v4121, %v4346
      %v4379 = vmax.f32 %v4122, %v4347
      %v4380 = vmax.f32 %v4123, %v4348
      %v4381 = vmax.f32 %v4124, %v4349
      %v4382 = vmax.f32 %v4125, %v4350
      %v4383 = vmax.f32 %v4126, %v4351
      %v4384 = vmax.f32 %v4127, %v4352
      %v4385 = vmax.f32 %v4128, %v4353
      %v4386 = vmax.f32 %v4129, %v4354
      %s4387 = scalar_lea.vmem %s4, 1280
      %v4388 = vld [vmem:[%s4387] sm:$0xff]
      %v4389 = vld [vmem:[%s4387 + $0x8] sm:$0xff]
      %v4390 = vld [vmem:[%s4387 + $0x10] sm:$0xff]
      %v4391 = vld [vmem:[%s4387 + $0x18] sm:$0xff]
      %v4392 = vld [vmem:[%s4387 + $0x20] sm:$0xff]
      %v4393 = vld [vmem:[%s4387 + $0x28] sm:$0xff]
      %v4394 = vld [vmem:[%s4387 + $0x30] sm:$0xff]
      %v4395 = vld [vmem:[%s4387 + $0x38] sm:$0xff]
      %v4396 = vld [vmem:[%s4387 + $0x40] sm:$0xff]
      %v4397 = vld [vmem:[%s4387 + $0x48] sm:$0xff]
      %v4398 = vld [vmem:[%s4387 + $0x50] sm:$0xff]
      %v4399 = vld [vmem:[%s4387 + $0x58] sm:$0xff]
      %v4400 = vld [vmem:[%s4387 + $0x60] sm:$0xff]
      %v4401 = vld [vmem:[%s4387 + $0x68] sm:$0xff]
      %v4402 = vld [vmem:[%s4387 + $0x70] sm:$0xff]
      %v4403 = vld [vmem:[%s4387 + $0x78] sm:$0xff]
      %v4404 = vld [vmem:[%s4387 + $0x80] sm:$0xff]
      %v4405 = vld [vmem:[%s4387 + $0x88] sm:$0xff]
      %v4406 = vld [vmem:[%s4387 + $0x90] sm:$0xff]
      %v4407 = vld [vmem:[%s4387 + $0x98] sm:$0xff]
      %v4408 = vld [vmem:[%s4387 + $0xa0] sm:$0xff]
      %v4409 = vld [vmem:[%s4387 + $0xa8] sm:$0xff]
      %v4410 = vld [vmem:[%s4387 + $0xb0] sm:$0xff]
      %v4411 = vld [vmem:[%s4387 + $0xb8] sm:$0xff]
      %v4412 = vld [vmem:[%s4387 + $0xc0] sm:$0xff]
      %v4413 = vld [vmem:[%s4387 + $0xc8] sm:$0xff]
      %v4414 = vld [vmem:[%s4387 + $0xd0] sm:$0xff]
      %v4415 = vld [vmem:[%s4387 + $0xd8] sm:$0xff]
      %v4416 = vld [vmem:[%s4387 + $0xe0] sm:$0xff]
      %v4417 = vld [vmem:[%s4387 + $0xe8] sm:$0xff]
      %v4418 = vld [vmem:[%s4387 + $0xf0] sm:$0xff]
      %v4419 = vld [vmem:[%s4387 + $0xf8] sm:$0xff]
      %4421 = vset.pattern.permute.xlu0 0
      %4422 = vperm.xlu0 %4421, %v4388
      %v4423 = vpop.permute.xlu0 %4422
      %4426 = vset.pattern.permute.xlu0 0
      %4427 = vperm.xlu0 %4426, %v4389
      %v4428 = vpop.permute.xlu0 %4427
      %4431 = vset.pattern.permute.xlu0 0
      %4432 = vperm.xlu0 %4431, %v4390
      %v4433 = vpop.permute.xlu0 %4432
      %4436 = vset.pattern.permute.xlu0 0
      %4437 = vperm.xlu0 %4436, %v4391
      %v4438 = vpop.permute.xlu0 %4437
      %4441 = vset.pattern.permute.xlu0 0
      %4442 = vperm.xlu0 %4441, %v4392
      %v4443 = vpop.permute.xlu0 %4442
      %4446 = vset.pattern.permute.xlu0 0
      %4447 = vperm.xlu0 %4446, %v4393
      %v4448 = vpop.permute.xlu0 %4447
      %4451 = vset.pattern.permute.xlu0 0
      %4452 = vperm.xlu0 %4451, %v4394
      %v4453 = vpop.permute.xlu0 %4452
      %4456 = vset.pattern.permute.xlu0 0
      %4457 = vperm.xlu0 %4456, %v4395
      %v4458 = vpop.permute.xlu0 %4457
      %4461 = vset.pattern.permute.xlu0 0
      %4462 = vperm.xlu0 %4461, %v4396
      %v4463 = vpop.permute.xlu0 %4462
      %4466 = vset.pattern.permute.xlu0 0
      %4467 = vperm.xlu0 %4466, %v4397
      %v4468 = vpop.permute.xlu0 %4467
      %4471 = vset.pattern.permute.xlu0 0
      %4472 = vperm.xlu0 %4471, %v4398
      %v4473 = vpop.permute.xlu0 %4472
      %4476 = vset.pattern.permute.xlu0 0
      %4477 = vperm.xlu0 %4476, %v4399
      %v4478 = vpop.permute.xlu0 %4477
      %4481 = vset.pattern.permute.xlu0 0
      %4482 = vperm.xlu0 %4481, %v4400
      %v4483 = vpop.permute.xlu0 %4482
      %4486 = vset.pattern.permute.xlu0 0
      %4487 = vperm.xlu0 %4486, %v4401
      %v4488 = vpop.permute.xlu0 %4487
      %4491 = vset.pattern.permute.xlu0 0
      %4492 = vperm.xlu0 %4491, %v4402
      %v4493 = vpop.permute.xlu0 %4492
      %4496 = vset.pattern.permute.xlu0 0
      %4497 = vperm.xlu0 %4496, %v4403
      %v4498 = vpop.permute.xlu0 %4497
      %4501 = vset.pattern.permute.xlu0 0
      %4502 = vperm.xlu0 %4501, %v4404
      %v4503 = vpop.permute.xlu0 %4502
      %4506 = vset.pattern.permute.xlu0 0
      %4507 = vperm.xlu0 %4506, %v4405
      %v4508 = vpop.permute.xlu0 %4507
      %4511 = vset.pattern.permute.xlu0 0
      %4512 = vperm.xlu0 %4511, %v4406
      %v4513 = vpop.permute.xlu0 %4512
      %4516 = vset.pattern.permute.xlu0 0
      %4517 = vperm.xlu0 %4516, %v4407
      %v4518 = vpop.permute.xlu0 %4517
      %4521 = vset.pattern.permute.xlu0 0
      %4522 = vperm.xlu0 %4521, %v4408
      %v4523 = vpop.permute.xlu0 %4522
      %4526 = vset.pattern.permute.xlu0 0
      %4527 = vperm.xlu0 %4526, %v4409
      %v4528 = vpop.permute.xlu0 %4527
      %4531 = vset.pattern.permute.xlu0 0
      %4532 = vperm.xlu0 %4531, %v4410
      %v4533 = vpop.permute.xlu0 %4532
      %4536 = vset.pattern.permute.xlu0 0
      %4537 = vperm.xlu0 %4536, %v4411
      %v4538 = vpop.permute.xlu0 %4537
      %4541 = vset.pattern.permute.xlu0 0
      %4542 = vperm.xlu0 %4541, %v4412
      %v4543 = vpop.permute.xlu0 %4542
      %4546 = vset.pattern.permute.xlu0 0
      %4547 = vperm.xlu0 %4546, %v4413
      %v4548 = vpop.permute.xlu0 %4547
      %4551 = vset.pattern.permute.xlu0 0
      %4552 = vperm.xlu0 %4551, %v4414
      %v4553 = vpop.permute.xlu0 %4552
      %4556 = vset.pattern.permute.xlu0 0
      %4557 = vperm.xlu0 %4556, %v4415
      %v4558 = vpop.permute.xlu0 %4557
      %4561 = vset.pattern.permute.xlu0 0
      %4562 = vperm.xlu0 %4561, %v4416
      %v4563 = vpop.permute.xlu0 %4562
      %4566 = vset.pattern.permute.xlu0 0
      %4567 = vperm.xlu0 %4566, %v4417
      %v4568 = vpop.permute.xlu0 %4567
      %4571 = vset.pattern.permute.xlu0 0
      %4572 = vperm.xlu0 %4571, %v4418
      %v4573 = vpop.permute.xlu0 %4572
      %4576 = vset.pattern.permute.xlu0 0
      %4577 = vperm.xlu0 %4576, %v4419
      %v4578 = vpop.permute.xlu0 %4577
      %v4580 = vmul.f32 %v3871, %v4423
      %v4581 = vmul.f32 %v3870, %v4428
      %v4582 = vmul.f32 %v3869, %v4433
      %v4583 = vmul.f32 %v3868, %v4438
      %v4584 = vmul.f32 %v3867, %v4443
      %v4585 = vmul.f32 %v3866, %v4448
      %v4586 = vmul.f32 %v3865, %v4453
      %v4587 = vmul.f32 %v3864, %v4458
      %v4588 = vmul.f32 %v3863, %v4463
      %v4589 = vmul.f32 %v3862, %v4468
      %v4590 = vmul.f32 %v3861, %v4473
      %v4591 = vmul.f32 %v3860, %v4478
      %v4592 = vmul.f32 %v3859, %v4483
      %v4593 = vmul.f32 %v3858, %v4488
      %v4594 = vmul.f32 %v3857, %v4493
      %v4595 = vmul.f32 %v3856, %v4498
      %v4596 = vmul.f32 %v3855, %v4503
      %v4597 = vmul.f32 %v3854, %v4508
      %v4598 = vmul.f32 %v3853, %v4513
      %v4599 = vmul.f32 %v3852, %v4518
      %v4600 = vmul.f32 %v3851, %v4523
      %v4601 = vmul.f32 %v3850, %v4528
      %v4602 = vmul.f32 %v3849, %v4533
      %v4603 = vmul.f32 %v3848, %v4538
      %v4604 = vmul.f32 %v3847, %v4543
      %v4605 = vmul.f32 %v3846, %v4548
      %v4606 = vmul.f32 %v3845, %v4553
      %v4607 = vmul.f32 %v3844, %v4558
      %v4608 = vmul.f32 %v3843, %v4563
      %v4609 = vmul.f32 %v3842, %v4568
      %v4610 = vmul.f32 %v3841, %v4573
      %v4611 = vmul.f32 %v3872, %v4578
      %v4612 = vmax.f32 %v4355, %v4580
      %v4613 = vmax.f32 %v4356, %v4581
      %v4614 = vmax.f32 %v4357, %v4582
      %v4615 = vmax.f32 %v4358, %v4583
      %v4616 = vmax.f32 %v4359, %v4584
      %v4617 = vmax.f32 %v4360, %v4585
      %v4618 = vmax.f32 %v4361, %v4586
      %v4619 = vmax.f32 %v4362, %v4587
      %v4620 = vmax.f32 %v4363, %v4588
      %v4621 = vmax.f32 %v4364, %v4589
      %v4622 = vmax.f32 %v4365, %v4590
      %v4623 = vmax.f32 %v4366, %v4591
      %v4624 = vmax.f32 %v4367, %v4592
      %v4625 = vmax.f32 %v4368, %v4593
      %v4626 = vmax.f32 %v4369, %v4594
      %v4627 = vmax.f32 %v4370, %v4595
      %v4628 = vmax.f32 %v4371, %v4596
      %v4629 = vmax.f32 %v4372, %v4597
      %v4630 = vmax.f32 %v4373, %v4598
      %v4631 = vmax.f32 %v4374, %v4599
      %v4632 = vmax.f32 %v4375, %v4600
      %v4633 = vmax.f32 %v4376, %v4601
      %v4634 = vmax.f32 %v4377, %v4602
      %v4635 = vmax.f32 %v4378, %v4603
      %v4636 = vmax.f32 %v4379, %v4604
      %v4637 = vmax.f32 %v4380, %v4605
      %v4638 = vmax.f32 %v4381, %v4606
      %v4639 = vmax.f32 %v4382, %v4607
      %v4640 = vmax.f32 %v4383, %v4608
      %v4641 = vmax.f32 %v4384, %v4609
      %v4642 = vmax.f32 %v4385, %v4610
      %v4643 = vmax.f32 %v4386, %v4611
      %s4644 = scalar_lea.vmem %s4, 1536
      %v4645 = vld [vmem:[%s4644] sm:$0xff]
      %v4646 = vld [vmem:[%s4644 + $0x8] sm:$0xff]
      %v4647 = vld [vmem:[%s4644 + $0x10] sm:$0xff]
      %v4648 = vld [vmem:[%s4644 + $0x18] sm:$0xff]
      %v4649 = vld [vmem:[%s4644 + $0x20] sm:$0xff]
      %v4650 = vld [vmem:[%s4644 + $0x28] sm:$0xff]
      %v4651 = vld [vmem:[%s4644 + $0x30] sm:$0xff]
      %v4652 = vld [vmem:[%s4644 + $0x38] sm:$0xff]
      %v4653 = vld [vmem:[%s4644 + $0x40] sm:$0xff]
      %v4654 = vld [vmem:[%s4644 + $0x48] sm:$0xff]
      %v4655 = vld [vmem:[%s4644 + $0x50] sm:$0xff]
      %v4656 = vld [vmem:[%s4644 + $0x58] sm:$0xff]
      %v4657 = vld [vmem:[%s4644 + $0x60] sm:$0xff]
      %v4658 = vld [vmem:[%s4644 + $0x68] sm:$0xff]
      %v4659 = vld [vmem:[%s4644 + $0x70] sm:$0xff]
      %v4660 = vld [vmem:[%s4644 + $0x78] sm:$0xff]
      %v4661 = vld [vmem:[%s4644 + $0x80] sm:$0xff]
      %v4662 = vld [vmem:[%s4644 + $0x88] sm:$0xff]
      %v4663 = vld [vmem:[%s4644 + $0x90] sm:$0xff]
      %v4664 = vld [vmem:[%s4644 + $0x98] sm:$0xff]
      %v4665 = vld [vmem:[%s4644 + $0xa0] sm:$0xff]
      %v4666 = vld [vmem:[%s4644 + $0xa8] sm:$0xff]
      %v4667 = vld [vmem:[%s4644 + $0xb0] sm:$0xff]
      %v4668 = vld [vmem:[%s4644 + $0xb8] sm:$0xff]
      %v4669 = vld [vmem:[%s4644 + $0xc0] sm:$0xff]
      %v4670 = vld [vmem:[%s4644 + $0xc8] sm:$0xff]
      %v4671 = vld [vmem:[%s4644 + $0xd0] sm:$0xff]
      %v4672 = vld [vmem:[%s4644 + $0xd8] sm:$0xff]
      %v4673 = vld [vmem:[%s4644 + $0xe0] sm:$0xff]
      %v4674 = vld [vmem:[%s4644 + $0xe8] sm:$0xff]
      %v4675 = vld [vmem:[%s4644 + $0xf0] sm:$0xff]
      %v4676 = vld [vmem:[%s4644 + $0xf8] sm:$0xff]
      %4678 = vset.pattern.permute.xlu0 0
      %4679 = vperm.xlu0 %4678, %v4645
      %v4680 = vpop.permute.xlu0 %4679
      %4683 = vset.pattern.permute.xlu0 0
      %4684 = vperm.xlu0 %4683, %v4646
      %v4685 = vpop.permute.xlu0 %4684
      %4688 = vset.pattern.permute.xlu0 0
      %4689 = vperm.xlu0 %4688, %v4647
      %v4690 = vpop.permute.xlu0 %4689
      %4693 = vset.pattern.permute.xlu0 0
      %4694 = vperm.xlu0 %4693, %v4648
      %v4695 = vpop.permute.xlu0 %4694
      %4698 = vset.pattern.permute.xlu0 0
      %4699 = vperm.xlu0 %4698, %v4649
      %v4700 = vpop.permute.xlu0 %4699
      %4703 = vset.pattern.permute.xlu0 0
      %4704 = vperm.xlu0 %4703, %v4650
      %v4705 = vpop.permute.xlu0 %4704
      %4708 = vset.pattern.permute.xlu0 0
      %4709 = vperm.xlu0 %4708, %v4651
      %v4710 = vpop.permute.xlu0 %4709
      %4713 = vset.pattern.permute.xlu0 0
      %4714 = vperm.xlu0 %4713, %v4652
      %v4715 = vpop.permute.xlu0 %4714
      %4718 = vset.pattern.permute.xlu0 0
      %4719 = vperm.xlu0 %4718, %v4653
      %v4720 = vpop.permute.xlu0 %4719
      %4723 = vset.pattern.permute.xlu0 0
      %4724 = vperm.xlu0 %4723, %v4654
      %v4725 = vpop.permute.xlu0 %4724
      %4728 = vset.pattern.permute.xlu0 0
      %4729 = vperm.xlu0 %4728, %v4655
      %v4730 = vpop.permute.xlu0 %4729
      %4733 = vset.pattern.permute.xlu0 0
      %4734 = vperm.xlu0 %4733, %v4656
      %v4735 = vpop.permute.xlu0 %4734
      %4738 = vset.pattern.permute.xlu0 0
      %4739 = vperm.xlu0 %4738, %v4657
      %v4740 = vpop.permute.xlu0 %4739
      %4743 = vset.pattern.permute.xlu0 0
      %4744 = vperm.xlu0 %4743, %v4658
      %v4745 = vpop.permute.xlu0 %4744
      %4748 = vset.pattern.permute.xlu0 0
      %4749 = vperm.xlu0 %4748, %v4659
      %v4750 = vpop.permute.xlu0 %4749
      %4753 = vset.pattern.permute.xlu0 0
      %4754 = vperm.xlu0 %4753, %v4660
      %v4755 = vpop.permute.xlu0 %4754
      %4758 = vset.pattern.permute.xlu0 0
      %4759 = vperm.xlu0 %4758, %v4661
      %v4760 = vpop.permute.xlu0 %4759
      %4763 = vset.pattern.permute.xlu0 0
      %4764 = vperm.xlu0 %4763, %v4662
      %v4765 = vpop.permute.xlu0 %4764
      %4768 = vset.pattern.permute.xlu0 0
      %4769 = vperm.xlu0 %4768, %v4663
      %v4770 = vpop.permute.xlu0 %4769
      %4773 = vset.pattern.permute.xlu0 0
      %4774 = vperm.xlu0 %4773, %v4664
      %v4775 = vpop.permute.xlu0 %4774
      %4778 = vset.pattern.permute.xlu0 0
      %4779 = vperm.xlu0 %4778, %v4665
      %v4780 = vpop.permute.xlu0 %4779
      %4783 = vset.pattern.permute.xlu0 0
      %4784 = vperm.xlu0 %4783, %v4666
      %v4785 = vpop.permute.xlu0 %4784
      %4788 = vset.pattern.permute.xlu0 0
      %4789 = vperm.xlu0 %4788, %v4667
      %v4790 = vpop.permute.xlu0 %4789
      %4793 = vset.pattern.permute.xlu0 0
      %4794 = vperm.xlu0 %4793, %v4668
      %v4795 = vpop.permute.xlu0 %4794
      %4798 = vset.pattern.permute.xlu0 0
      %4799 = vperm.xlu0 %4798, %v4669
      %v4800 = vpop.permute.xlu0 %4799
      %4803 = vset.pattern.permute.xlu0 0
      %4804 = vperm.xlu0 %4803, %v4670
      %v4805 = vpop.permute.xlu0 %4804
      %4808 = vset.pattern.permute.xlu0 0
      %4809 = vperm.xlu0 %4808, %v4671
      %v4810 = vpop.permute.xlu0 %4809
      %4813 = vset.pattern.permute.xlu0 0
      %4814 = vperm.xlu0 %4813, %v4672
      %v4815 = vpop.permute.xlu0 %4814
      %4818 = vset.pattern.permute.xlu0 0
      %4819 = vperm.xlu0 %4818, %v4673
      %v4820 = vpop.permute.xlu0 %4819
      %4823 = vset.pattern.permute.xlu0 0
      %4824 = vperm.xlu0 %4823, %v4674
      %v4825 = vpop.permute.xlu0 %4824
      %4828 = vset.pattern.permute.xlu0 0
      %4829 = vperm.xlu0 %4828, %v4675
      %v4830 = vpop.permute.xlu0 %4829
      %4833 = vset.pattern.permute.xlu0 0
      %4834 = vperm.xlu0 %4833, %v4676
      %v4835 = vpop.permute.xlu0 %4834
      %v4837 = vmul.f32 %v3292, %v4680
      %v4838 = vmul.f32 %v3291, %v4685
      %v4839 = vmul.f32 %v3290, %v4690
      %v4840 = vmul.f32 %v3289, %v4695
      %v4841 = vmul.f32 %v3288, %v4700
      %v4842 = vmul.f32 %v3287, %v4705
      %v4843 = vmul.f32 %v3286, %v4710
      %v4844 = vmul.f32 %v3285, %v4715
      %v4845 = vmul.f32 %v3284, %v4720
      %v4846 = vmul.f32 %v3283, %v4725
      %v4847 = vmul.f32 %v3282, %v4730
      %v4848 = vmul.f32 %v3281, %v4735
      %v4849 = vmul.f32 %v3280, %v4740
      %v4850 = vmul.f32 %v3279, %v4745
      %v4851 = vmul.f32 %v3278, %v4750
      %v4852 = vmul.f32 %v3277, %v4755
      %v4853 = vmul.f32 %v3276, %v4760
      %v4854 = vmul.f32 %v3275, %v4765
      %v4855 = vmul.f32 %v3274, %v4770
      %v4856 = vmul.f32 %v3273, %v4775
      %v4857 = vmul.f32 %v3272, %v4780
      %v4858 = vmul.f32 %v3271, %v4785
      %v4859 = vmul.f32 %v3270, %v4790
      %v4860 = vmul.f32 %v3269, %v4795
      %v4861 = vmul.f32 %v3268, %v4800
      %v4862 = vmul.f32 %v3267, %v4805
      %v4863 = vmul.f32 %v3266, %v4810
      %v4864 = vmul.f32 %v3265, %v4815
      %v4865 = vmul.f32 %v3264, %v4820
      %v4866 = vmul.f32 %v3263, %v4825
      %v4867 = vmul.f32 %v3294, %v4830
      %v4868 = vmul.f32 %v3293, %v4835
      %v4869 = vmax.f32 %v4612, %v4837
      %v4870 = vmax.f32 %v4613, %v4838
      %v4871 = vmax.f32 %v4614, %v4839
      %v4872 = vmax.f32 %v4615, %v4840
      %v4873 = vmax.f32 %v4616, %v4841
      %v4874 = vmax.f32 %v4617, %v4842
      %v4875 = vmax.f32 %v4618, %v4843
      %v4876 = vmax.f32 %v4619, %v4844
      %v4877 = vmax.f32 %v4620, %v4845
      %v4878 = vmax.f32 %v4621, %v4846
      %v4879 = vmax.f32 %v4622, %v4847
      %v4880 = vmax.f32 %v4623, %v4848
      %v4881 = vmax.f32 %v4624, %v4849
      %v4882 = vmax.f32 %v4625, %v4850
      %v4883 = vmax.f32 %v4626, %v4851
      %v4884 = vmax.f32 %v4627, %v4852
      %v4885 = vmax.f32 %v4628, %v4853
      %v4886 = vmax.f32 %v4629, %v4854
      %v4887 = vmax.f32 %v4630, %v4855
      %v4888 = vmax.f32 %v4631, %v4856
      %v4889 = vmax.f32 %v4632, %v4857
      %v4890 = vmax.f32 %v4633, %v4858
      %v4891 = vmax.f32 %v4634, %v4859
      %v4892 = vmax.f32 %v4635, %v4860
      %v4893 = vmax.f32 %v4636, %v4861
      %v4894 = vmax.f32 %v4637, %v4862
      %v4895 = vmax.f32 %v4638, %v4863
      %v4896 = vmax.f32 %v4639, %v4864
      %v4897 = vmax.f32 %v4640, %v4865
      %v4898 = vmax.f32 %v4641, %v4866
      %v4899 = vmax.f32 %v4642, %v4867
      %v4900 = vmax.f32 %v4643, %v4868
      %s4901 = scalar_lea.vmem %s4, 1792
      %v4902 = vld [vmem:[%s4901] sm:$0xff]
      %v4903 = vld [vmem:[%s4901 + $0x8] sm:$0xff]
      %v4904 = vld [vmem:[%s4901 + $0x10] sm:$0xff]
      %v4905 = vld [vmem:[%s4901 + $0x18] sm:$0xff]
      %v4906 = vld [vmem:[%s4901 + $0x20] sm:$0xff]
      %v4907 = vld [vmem:[%s4901 + $0x28] sm:$0xff]
      %v4908 = vld [vmem:[%s4901 + $0x30] sm:$0xff]
      %v4909 = vld [vmem:[%s4901 + $0x38] sm:$0xff]
      %v4910 = vld [vmem:[%s4901 + $0x40] sm:$0xff]
      %v4911 = vld [vmem:[%s4901 + $0x48] sm:$0xff]
      %v4912 = vld [vmem:[%s4901 + $0x50] sm:$0xff]
      %v4913 = vld [vmem:[%s4901 + $0x58] sm:$0xff]
      %v4914 = vld [vmem:[%s4901 + $0x60] sm:$0xff]
      %v4915 = vld [vmem:[%s4901 + $0x68] sm:$0xff]
      %v4916 = vld [vmem:[%s4901 + $0x70] sm:$0xff]
      %v4917 = vld [vmem:[%s4901 + $0x78] sm:$0xff]
      %v4918 = vld [vmem:[%s4901 + $0x80] sm:$0xff]
      %v4919 = vld [vmem:[%s4901 + $0x88] sm:$0xff]
      %v4920 = vld [vmem:[%s4901 + $0x90] sm:$0xff]
      %v4921 = vld [vmem:[%s4901 + $0x98] sm:$0xff]
      %v4922 = vld [vmem:[%s4901 + $0xa0] sm:$0xff]
      %v4923 = vld [vmem:[%s4901 + $0xa8] sm:$0xff]
      %v4924 = vld [vmem:[%s4901 + $0xb0] sm:$0xff]
      %v4925 = vld [vmem:[%s4901 + $0xb8] sm:$0xff]
      %v4926 = vld [vmem:[%s4901 + $0xc0] sm:$0xff]
      %v4927 = vld [vmem:[%s4901 + $0xc8] sm:$0xff]
      %v4928 = vld [vmem:[%s4901 + $0xd0] sm:$0xff]
      %v4929 = vld [vmem:[%s4901 + $0xd8] sm:$0xff]
      %v4930 = vld [vmem:[%s4901 + $0xe0] sm:$0xff]
      %v4931 = vld [vmem:[%s4901 + $0xe8] sm:$0xff]
      %v4932 = vld [vmem:[%s4901 + $0xf0] sm:$0xff]
      %v4933 = vld [vmem:[%s4901 + $0xf8] sm:$0xff]
      %4935 = vset.pattern.permute.xlu0 0
      %4936 = vperm.xlu0 %4935, %v4902
      %v4937 = vpop.permute.xlu0 %4936
      %4940 = vset.pattern.permute.xlu0 0
      %4941 = vperm.xlu0 %4940, %v4903
      %v4942 = vpop.permute.xlu0 %4941
      %4945 = vset.pattern.permute.xlu0 0
      %4946 = vperm.xlu0 %4945, %v4904
      %v4947 = vpop.permute.xlu0 %4946
      %4950 = vset.pattern.permute.xlu0 0
      %4951 = vperm.xlu0 %4950, %v4905
      %v4952 = vpop.permute.xlu0 %4951
      %4955 = vset.pattern.permute.xlu0 0
      %4956 = vperm.xlu0 %4955, %v4906
      %v4957 = vpop.permute.xlu0 %4956
      %4960 = vset.pattern.permute.xlu0 0
      %4961 = vperm.xlu0 %4960, %v4907
      %v4962 = vpop.permute.xlu0 %4961
      %4965 = vset.pattern.permute.xlu0 0
      %4966 = vperm.xlu0 %4965, %v4908
      %v4967 = vpop.permute.xlu0 %4966
      %4970 = vset.pattern.permute.xlu0 0
      %4971 = vperm.xlu0 %4970, %v4909
      %v4972 = vpop.permute.xlu0 %4971
      %4975 = vset.pattern.permute.xlu0 0
      %4976 = vperm.xlu0 %4975, %v4910
      %v4977 = vpop.permute.xlu0 %4976
      %4980 = vset.pattern.permute.xlu0 0
      %4981 = vperm.xlu0 %4980, %v4911
      %v4982 = vpop.permute.xlu0 %4981
      %4985 = vset.pattern.permute.xlu0 0
      %4986 = vperm.xlu0 %4985, %v4912
      %v4987 = vpop.permute.xlu0 %4986
      %4990 = vset.pattern.permute.xlu0 0
      %4991 = vperm.xlu0 %4990, %v4913
      %v4992 = vpop.permute.xlu0 %4991
      %4995 = vset.pattern.permute.xlu0 0
      %4996 = vperm.xlu0 %4995, %v4914
      %v4997 = vpop.permute.xlu0 %4996
      %5000 = vset.pattern.permute.xlu0 0
      %5001 = vperm.xlu0 %5000, %v4915
      %v5002 = vpop.permute.xlu0 %5001
      %5005 = vset.pattern.permute.xlu0 0
      %5006 = vperm.xlu0 %5005, %v4916
      %v5007 = vpop.permute.xlu0 %5006
      %5010 = vset.pattern.permute.xlu0 0
      %5011 = vperm.xlu0 %5010, %v4917
      %v5012 = vpop.permute.xlu0 %5011
      %5015 = vset.pattern.permute.xlu0 0
      %5016 = vperm.xlu0 %5015, %v4918
      %v5017 = vpop.permute.xlu0 %5016
      %5020 = vset.pattern.permute.xlu0 0
      %5021 = vperm.xlu0 %5020, %v4919
      %v5022 = vpop.permute.xlu0 %5021
      %5025 = vset.pattern.permute.xlu0 0
      %5026 = vperm.xlu0 %5025, %v4920
      %v5027 = vpop.permute.xlu0 %5026
      %5030 = vset.pattern.permute.xlu0 0
      %5031 = vperm.xlu0 %5030, %v4921
      %v5032 = vpop.permute.xlu0 %5031
      %5035 = vset.pattern.permute.xlu0 0
      %5036 = vperm.xlu0 %5035, %v4922
      %v5037 = vpop.permute.xlu0 %5036
      %5040 = vset.pattern.permute.xlu0 0
      %5041 = vperm.xlu0 %5040, %v4923
      %v5042 = vpop.permute.xlu0 %5041
      %5045 = vset.pattern.permute.xlu0 0
      %5046 = vperm.xlu0 %5045, %v4924
      %v5047 = vpop.permute.xlu0 %5046
      %5050 = vset.pattern.permute.xlu0 0
      %5051 = vperm.xlu0 %5050, %v4925
      %v5052 = vpop.permute.xlu0 %5051
      %5055 = vset.pattern.permute.xlu0 0
      %5056 = vperm.xlu0 %5055, %v4926
      %v5057 = vpop.permute.xlu0 %5056
      %5060 = vset.pattern.permute.xlu0 0
      %5061 = vperm.xlu0 %5060, %v4927
      %v5062 = vpop.permute.xlu0 %5061
      %5065 = vset.pattern.permute.xlu0 0
      %5066 = vperm.xlu0 %5065, %v4928
      %v5067 = vpop.permute.xlu0 %5066
      %5070 = vset.pattern.permute.xlu0 0
      %5071 = vperm.xlu0 %5070, %v4929
      %v5072 = vpop.permute.xlu0 %5071
      %5075 = vset.pattern.permute.xlu0 0
      %5076 = vperm.xlu0 %5075, %v4930
      %v5077 = vpop.permute.xlu0 %5076
      %5080 = vset.pattern.permute.xlu0 0
      %5081 = vperm.xlu0 %5080, %v4931
      %v5082 = vpop.permute.xlu0 %5081
      %5085 = vset.pattern.permute.xlu0 0
      %5086 = vperm.xlu0 %5085, %v4932
      %v5087 = vpop.permute.xlu0 %5086
      %5090 = vset.pattern.permute.xlu0 0
      %5091 = vperm.xlu0 %5090, %v4933
      %v5092 = vpop.permute.xlu0 %5091
      %v5094 = vmul.f32 %v3198, %v4937
      %v5095 = vmul.f32 %v3199, %v4942
      %v5096 = vmul.f32 %v3200, %v4947
      %v5097 = vmul.f32 %v3201, %v4952
      %v5098 = vmul.f32 %v3202, %v4957
      %v5099 = vmul.f32 %v3203, %v4962
      %v5100 = vmul.f32 %v3204, %v4967
      %v5101 = vmul.f32 %v3205, %v4972
      %v5102 = vmul.f32 %v3206, %v4977
      %v5103 = vmul.f32 %v3207, %v4982
      %v5104 = vmul.f32 %v3208, %v4987
      %v5105 = vmul.f32 %v3209, %v4992
      %v5106 = vmul.f32 %v3210, %v4997
      %v5107 = vmul.f32 %v3211, %v5002
      %v5108 = vmul.f32 %v3212, %v5007
      %v5109 = vmul.f32 %v3213, %v5012
      %v5110 = vmul.f32 %v3214, %v5017
      %v5111 = vmul.f32 %v3215, %v5022
      %v5112 = vmul.f32 %v3216, %v5027
      %v5113 = vmul.f32 %v3217, %v5032
      %v5114 = vmul.f32 %v3218, %v5037
      %v5115 = vmul.f32 %v3219, %v5042
      %v5116 = vmul.f32 %v3220, %v5047
      %v5117 = vmul.f32 %v3221, %v5052
      %v5118 = vmul.f32 %v3222, %v5057
      %v5119 = vmul.f32 %v3223, %v5062
      %v5120 = vmul.f32 %v3224, %v5067
      %v5121 = vmul.f32 %v3225, %v5072
      %v5122 = vmul.f32 %v3226, %v5077
      %v5123 = vmul.f32 %v3227, %v5082
      %v5124 = vmul.f32 %v3196, %v5087
      %v5125 = vmul.f32 %v3197, %v5092
      %v5126 = vmax.f32 %v4869, %v5094
      %v5127 = vmax.f32 %v4870, %v5095
      %v5128 = vmax.f32 %v4871, %v5096
      %v5129 = vmax.f32 %v4872, %v5097
      %v5130 = vmax.f32 %v4873, %v5098
      %v5131 = vmax.f32 %v4874, %v5099
      %v5132 = vmax.f32 %v4875, %v5100
      %v5133 = vmax.f32 %v4876, %v5101
      %v5134 = vmax.f32 %v4877, %v5102
      %v5135 = vmax.f32 %v4878, %v5103
      %v5136 = vmax.f32 %v4879, %v5104
      %v5137 = vmax.f32 %v4880, %v5105
      %v5138 = vmax.f32 %v4881, %v5106
      %v5139 = vmax.f32 %v4882, %v5107
      %v5140 = vmax.f32 %v4883, %v5108
      %v5141 = vmax.f32 %v4884, %v5109
      %v5142 = vmax.f32 %v4885, %v5110
      %v5143 = vmax.f32 %v4886, %v5111
      %v5144 = vmax.f32 %v4887, %v5112
      %v5145 = vmax.f32 %v4888, %v5113
      %v5146 = vmax.f32 %v4889, %v5114
      %v5147 = vmax.f32 %v4890, %v5115
      %v5148 = vmax.f32 %v4891, %v5116
      %v5149 = vmax.f32 %v4892, %v5117
      %v5150 = vmax.f32 %v4893, %v5118
      %v5151 = vmax.f32 %v4894, %v5119
      %v5152 = vmax.f32 %v4895, %v5120
      %v5153 = vmax.f32 %v4896, %v5121
      %v5154 = vmax.f32 %v4897, %v5122
      %v5155 = vmax.f32 %v4898, %v5123
      %v5156 = vmax.f32 %v4899, %v5124
      %v5157 = vmax.f32 %v4900, %v5125
      %s5158 = scalar_lea.vmem %s4, 2048
      %v5159 = vld [vmem:[%s5158] sm:$0xff]
      %v5160 = vld [vmem:[%s5158 + $0x8] sm:$0xff]
      %v5161 = vld [vmem:[%s5158 + $0x10] sm:$0xff]
      %v5162 = vld [vmem:[%s5158 + $0x18] sm:$0xff]
      %v5163 = vld [vmem:[%s5158 + $0x20] sm:$0xff]
      %v5164 = vld [vmem:[%s5158 + $0x28] sm:$0xff]
      %v5165 = vld [vmem:[%s5158 + $0x30] sm:$0xff]
      %v5166 = vld [vmem:[%s5158 + $0x38] sm:$0xff]
      %v5167 = vld [vmem:[%s5158 + $0x40] sm:$0xff]
      %v5168 = vld [vmem:[%s5158 + $0x48] sm:$0xff]
      %v5169 = vld [vmem:[%s5158 + $0x50] sm:$0xff]
      %v5170 = vld [vmem:[%s5158 + $0x58] sm:$0xff]
      %v5171 = vld [vmem:[%s5158 + $0x60] sm:$0xff]
      %v5172 = vld [vmem:[%s5158 + $0x68] sm:$0xff]
      %v5173 = vld [vmem:[%s5158 + $0x70] sm:$0xff]
      %v5174 = vld [vmem:[%s5158 + $0x78] sm:$0xff]
      %v5175 = vld [vmem:[%s5158 + $0x80] sm:$0xff]
      %v5176 = vld [vmem:[%s5158 + $0x88] sm:$0xff]
      %v5177 = vld [vmem:[%s5158 + $0x90] sm:$0xff]
      %v5178 = vld [vmem:[%s5158 + $0x98] sm:$0xff]
      %v5179 = vld [vmem:[%s5158 + $0xa0] sm:$0xff]
      %v5180 = vld [vmem:[%s5158 + $0xa8] sm:$0xff]
      %v5181 = vld [vmem:[%s5158 + $0xb0] sm:$0xff]
      %v5182 = vld [vmem:[%s5158 + $0xb8] sm:$0xff]
      %v5183 = vld [vmem:[%s5158 + $0xc0] sm:$0xff]
      %v5184 = vld [vmem:[%s5158 + $0xc8] sm:$0xff]
      %v5185 = vld [vmem:[%s5158 + $0xd0] sm:$0xff]
      %v5186 = vld [vmem:[%s5158 + $0xd8] sm:$0xff]
      %v5187 = vld [vmem:[%s5158 + $0xe0] sm:$0xff]
      %v5188 = vld [vmem:[%s5158 + $0xe8] sm:$0xff]
      %v5189 = vld [vmem:[%s5158 + $0xf0] sm:$0xff]
      %v5190 = vld [vmem:[%s5158 + $0xf8] sm:$0xff]
      %5192 = vset.pattern.permute.xlu0 0
      %5193 = vperm.xlu0 %5192, %v5159
      %v5194 = vpop.permute.xlu0 %5193
      %5197 = vset.pattern.permute.xlu0 0
      %5198 = vperm.xlu0 %5197, %v5160
      %v5199 = vpop.permute.xlu0 %5198
      %5202 = vset.pattern.permute.xlu0 0
      %5203 = vperm.xlu0 %5202, %v5161
      %v5204 = vpop.permute.xlu0 %5203
      %5207 = vset.pattern.permute.xlu0 0
      %5208 = vperm.xlu0 %5207, %v5162
      %v5209 = vpop.permute.xlu0 %5208
      %5212 = vset.pattern.permute.xlu0 0
      %5213 = vperm.xlu0 %5212, %v5163
      %v5214 = vpop.permute.xlu0 %5213
      %5217 = vset.pattern.permute.xlu0 0
      %5218 = vperm.xlu0 %5217, %v5164
      %v5219 = vpop.permute.xlu0 %5218
      %5222 = vset.pattern.permute.xlu0 0
      %5223 = vperm.xlu0 %5222, %v5165
      %v5224 = vpop.permute.xlu0 %5223
      %5227 = vset.pattern.permute.xlu0 0
      %5228 = vperm.xlu0 %5227, %v5166
      %v5229 = vpop.permute.xlu0 %5228
      %5232 = vset.pattern.permute.xlu0 0
      %5233 = vperm.xlu0 %5232, %v5167
      %v5234 = vpop.permute.xlu0 %5233
      %5237 = vset.pattern.permute.xlu0 0
      %5238 = vperm.xlu0 %5237, %v5168
      %v5239 = vpop.permute.xlu0 %5238
      %5242 = vset.pattern.permute.xlu0 0
      %5243 = vperm.xlu0 %5242, %v5169
      %v5244 = vpop.permute.xlu0 %5243
      %5247 = vset.pattern.permute.xlu0 0
      %5248 = vperm.xlu0 %5247, %v5170
      %v5249 = vpop.permute.xlu0 %5248
      %5252 = vset.pattern.permute.xlu0 0
      %5253 = vperm.xlu0 %5252, %v5171
      %v5254 = vpop.permute.xlu0 %5253
      %5257 = vset.pattern.permute.xlu0 0
      %5258 = vperm.xlu0 %5257, %v5172
      %v5259 = vpop.permute.xlu0 %5258
      %5262 = vset.pattern.permute.xlu0 0
      %5263 = vperm.xlu0 %5262, %v5173
      %v5264 = vpop.permute.xlu0 %5263
      %5267 = vset.pattern.permute.xlu0 0
      %5268 = vperm.xlu0 %5267, %v5174
      %v5269 = vpop.permute.xlu0 %5268
      %5272 = vset.pattern.permute.xlu0 0
      %5273 = vperm.xlu0 %5272, %v5175
      %v5274 = vpop.permute.xlu0 %5273
      %5277 = vset.pattern.permute.xlu0 0
      %5278 = vperm.xlu0 %5277, %v5176
      %v5279 = vpop.permute.xlu0 %5278
      %5282 = vset.pattern.permute.xlu0 0
      %5283 = vperm.xlu0 %5282, %v5177
      %v5284 = vpop.permute.xlu0 %5283
      %5287 = vset.pattern.permute.xlu0 0
      %5288 = vperm.xlu0 %5287, %v5178
      %v5289 = vpop.permute.xlu0 %5288
      %5292 = vset.pattern.permute.xlu0 0
      %5293 = vperm.xlu0 %5292, %v5179
      %v5294 = vpop.permute.xlu0 %5293
      %5297 = vset.pattern.permute.xlu0 0
      %5298 = vperm.xlu0 %5297, %v5180
      %v5299 = vpop.permute.xlu0 %5298
      %5302 = vset.pattern.permute.xlu0 0
      %5303 = vperm.xlu0 %5302, %v5181
      %v5304 = vpop.permute.xlu0 %5303
      %5307 = vset.pattern.permute.xlu0 0
      %5308 = vperm.xlu0 %5307, %v5182
      %v5309 = vpop.permute.xlu0 %5308
      %5312 = vset.pattern.permute.xlu0 0
      %5313 = vperm.xlu0 %5312, %v5183
      %v5314 = vpop.permute.xlu0 %5313
      %5317 = vset.pattern.permute.xlu0 0
      %5318 = vperm.xlu0 %5317, %v5184
      %v5319 = vpop.permute.xlu0 %5318
      %5322 = vset.pattern.permute.xlu0 0
      %5323 = vperm.xlu0 %5322, %v5185
      %v5324 = vpop.permute.xlu0 %5323
      %5327 = vset.pattern.permute.xlu0 0
      %5328 = vperm.xlu0 %5327, %v5186
      %v5329 = vpop.permute.xlu0 %5328
      %5332 = vset.pattern.permute.xlu0 0
      %5333 = vperm.xlu0 %5332, %v5187
      %v5334 = vpop.permute.xlu0 %5333
      %5337 = vset.pattern.permute.xlu0 0
      %5338 = vperm.xlu0 %5337, %v5188
      %v5339 = vpop.permute.xlu0 %5338
      %5342 = vset.pattern.permute.xlu0 0
      %5343 = vperm.xlu0 %5342, %v5189
      %v5344 = vpop.permute.xlu0 %5343
      %5347 = vset.pattern.permute.xlu0 0
      %5348 = vperm.xlu0 %5347, %v5190
      %v5349 = vpop.permute.xlu0 %5348
      %v5351 = vmul.f32 %v3869, %v5194
      %v5352 = vmul.f32 %v3868, %v5199
      %v5353 = vmul.f32 %v3867, %v5204
      %v5354 = vmul.f32 %v3866, %v5209
      %v5355 = vmul.f32 %v3865, %v5214
      %v5356 = vmul.f32 %v3864, %v5219
      %v5357 = vmul.f32 %v3863, %v5224
      %v5358 = vmul.f32 %v3862, %v5229
      %v5359 = vmul.f32 %v3861, %v5234
      %v5360 = vmul.f32 %v3860, %v5239
      %v5361 = vmul.f32 %v3859, %v5244
      %v5362 = vmul.f32 %v3858, %v5249
      %v5363 = vmul.f32 %v3857, %v5254
      %v5364 = vmul.f32 %v3856, %v5259
      %v5365 = vmul.f32 %v3855, %v5264
      %v5366 = vmul.f32 %v3854, %v5269
      %v5367 = vmul.f32 %v3853, %v5274
      %v5368 = vmul.f32 %v3852, %v5279
      %v5369 = vmul.f32 %v3851, %v5284
      %v5370 = vmul.f32 %v3850, %v5289
      %v5371 = vmul.f32 %v3849, %v5294
      %v5372 = vmul.f32 %v3848, %v5299
      %v5373 = vmul.f32 %v3847, %v5304
      %v5374 = vmul.f32 %v3846, %v5309
      %v5375 = vmul.f32 %v3845, %v5314
      %v5376 = vmul.f32 %v3844, %v5319
      %v5377 = vmul.f32 %v3843, %v5324
      %v5378 = vmul.f32 %v3842, %v5329
      %v5379 = vmul.f32 %v3841, %v5334
      %v5380 = vmul.f32 %v3872, %v5339
      %v5381 = vmul.f32 %v3871, %v5344
      %v5382 = vmul.f32 %v3870, %v5349
      %v5383 = vmax.f32 %v5126, %v5351
      %v5384 = vmax.f32 %v5127, %v5352
      %v5385 = vmax.f32 %v5128, %v5353
      %v5386 = vmax.f32 %v5129, %v5354
      %v5387 = vmax.f32 %v5130, %v5355
      %v5388 = vmax.f32 %v5131, %v5356
      %v5389 = vmax.f32 %v5132, %v5357
      %v5390 = vmax.f32 %v5133, %v5358
      %v5391 = vmax.f32 %v5134, %v5359
      %v5392 = vmax.f32 %v5135, %v5360
      %v5393 = vmax.f32 %v5136, %v5361
      %v5394 = vmax.f32 %v5137, %v5362
      %v5395 = vmax.f32 %v5138, %v5363
      %v5396 = vmax.f32 %v5139, %v5364
      %v5397 = vmax.f32 %v5140, %v5365
      %v5398 = vmax.f32 %v5141, %v5366
      %v5399 = vmax.f32 %v5142, %v5367
      %v5400 = vmax.f32 %v5143, %v5368
      %v5401 = vmax.f32 %v5144, %v5369
      %v5402 = vmax.f32 %v5145, %v5370
      %v5403 = vmax.f32 %v5146, %v5371
      %v5404 = vmax.f32 %v5147, %v5372
      %v5405 = vmax.f32 %v5148, %v5373
      %v5406 = vmax.f32 %v5149, %v5374
      %v5407 = vmax.f32 %v5150, %v5375
      %v5408 = vmax.f32 %v5151, %v5376
      %v5409 = vmax.f32 %v5152, %v5377
      %v5410 = vmax.f32 %v5153, %v5378
      %v5411 = vmax.f32 %v5154, %v5379
      %v5412 = vmax.f32 %v5155, %v5380
      %v5413 = vmax.f32 %v5156, %v5381
      %v5414 = vmax.f32 %v5157, %v5382
      %5415 = vst [vmem:[#allocation2] sm:$0xff] %v5383
      %5416 = vst [vmem:[#allocation2 + $0x8] sm:$0xff] %v5384
      %5417 = vst [vmem:[#allocation2 + $0x10] sm:$0xff] %v5385
      %5418 = vst [vmem:[#allocation2 + $0x18] sm:$0xff] %v5386
      %5419 = vst [vmem:[#allocation2 + $0x20] sm:$0xff] %v5387
      %5420 = vst [vmem:[#allocation2 + $0x28] sm:$0xff] %v5388
      %5421 = vst [vmem:[#allocation2 + $0x30] sm:$0xff] %v5389
      %5422 = vst [vmem:[#allocation2 + $0x38] sm:$0xff] %v5390
      %5423 = vst [vmem:[#allocation2 + $0x40] sm:$0xff] %v5391
      %5424 = vst [vmem:[#allocation2 + $0x48] sm:$0xff] %v5392
      %5425 = vst [vmem:[#allocation2 + $0x50] sm:$0xff] %v5393
      %5426 = vst [vmem:[#allocation2 + $0x58] sm:$0xff] %v5394
      %5427 = vst [vmem:[#allocation2 + $0x60] sm:$0xff] %v5395
      %5428 = vst [vmem:[#allocation2 + $0x68] sm:$0xff] %v5396
      %5429 = vst [vmem:[#allocation2 + $0x70] sm:$0xff] %v5397
      %5430 = vst [vmem:[#allocation2 + $0x78] sm:$0xff] %v5398
      %5431 = vst [vmem:[#allocation2 + $0x80] sm:$0xff] %v5399
      %5432 = vst [vmem:[#allocation2 + $0x88] sm:$0xff] %v5400
      %5433 = vst [vmem:[#allocation2 + $0x90] sm:$0xff] %v5401
      %5434 = vst [vmem:[#allocation2 + $0x98] sm:$0xff] %v5402
      %5435 = vst [vmem:[#allocation2 + $0xa0] sm:$0xff] %v5403
      %5436 = vst [vmem:[#allocation2 + $0xa8] sm:$0xff] %v5404
      %5437 = vst [vmem:[#allocation2 + $0xb0] sm:$0xff] %v5405
      %5438 = vst [vmem:[#allocation2 + $0xb8] sm:$0xff] %v5406
      %5439 = vst [vmem:[#allocation2 + $0xc0] sm:$0xff] %v5407
      %5440 = vst [vmem:[#allocation2 + $0xc8] sm:$0xff] %v5408
      %5441 = vst [vmem:[#allocation2 + $0xd0] sm:$0xff] %v5409
      %5442 = vst [vmem:[#allocation2 + $0xd8] sm:$0xff] %v5410
      %5443 = vst [vmem:[#allocation2 + $0xe0] sm:$0xff] %v5411
      %5444 = vst [vmem:[#allocation2 + $0xe8] sm:$0xff] %v5412
      %5445 = vst [vmem:[#allocation2 + $0xf0] sm:$0xff] %v5413
      %5446 = vst [vmem:[#allocation2 + $0xf8] sm:$0xff] %v5414
      %v5447 = vld [vmem:[#allocation2] ss:$2 sm:$0xff]
      %s5448 = scalar_lea.vmem [#allocation2], 32
      %v5449 = vld [vmem:[%s5448] ss:$2 sm:$0xff]
      %s5450 = scalar_lea.vmem [#allocation2], 64
      %v5451 = vld [vmem:[%s5450] ss:$2 sm:$0xff]
      %s5452 = scalar_lea.vmem [#allocation2], 96
      %v5453 = vld [vmem:[%s5452] ss:$2 sm:$0xff]
      %s5454 = scalar_lea.vmem [#allocation2], 128
      %v5455 = vld [vmem:[%s5454] ss:$2 sm:$0xff]
      %s5456 = scalar_lea.vmem [#allocation2], 160
      %v5457 = vld [vmem:[%s5456] ss:$2 sm:$0xff]
      %s5458 = scalar_lea.vmem [#allocation2], 192
      %v5459 = vld [vmem:[%s5458] ss:$2 sm:$0xff]
      %s5460 = scalar_lea.vmem [#allocation2], 224
      %v5461 = vld [vmem:[%s5460] ss:$2 sm:$0xff]
      %v5462 = vpack.c.bf16 %v5449, %v5447
      %v5463 = vpack.c.bf16 %v5453, %v5451
      %v5464 = vpack.c.bf16 %v5457, %v5455
      %v5465 = vpack.c.bf16 %v5461, %v5459
      %v5470 = vunpack.c.l.b16 %v5462
      %v5471 = vunpack.c.h.b16 %v5462
      %v5472 = vunpack.c.l.b16 %v5463
      %v5473 = vunpack.c.h.b16 %v5463
      %v5474 = vunpack.c.l.b16 %v5464
      %v5475 = vunpack.c.h.b16 %v5464
      %v5476 = vunpack.c.l.b16 %v5465
      %v5477 = vunpack.c.h.b16 %v5465
      %v5478 = vpack.c.b16 %v5470, %v5470
      %v5479 = vpack.c.b16 %v5471, %v5471
      %v5480 = vpack.c.b16 %v5472, %v5472
      %v5481 = vpack.c.b16 %v5473, %v5473
      %v5482 = vpack.c.b16 %v5474, %v5474
      %v5483 = vpack.c.b16 %v5475, %v5475
      %v5484 = vpack.c.b16 %v5476, %v5476
      %v5485 = vpack.c.b16 %v5477, %v5477
      %5494 = vst [vmem:[%s229] sm:$0xf] %v5478
      %5495 = vst [vmem:[%s229 + $0x4] sm:$0xf] %v5479
      %5496 = vst [vmem:[%s229 + $0x8] sm:$0xf] %v5480
      %5497 = vst [vmem:[%s229 + $0xc] sm:$0xf] %v5481
      %5498 = vst [vmem:[%s229 + $0x10] sm:$0xf] %v5482
      %5499 = vst [vmem:[%s229 + $0x14] sm:$0xf] %v5483
      %5500 = vst [vmem:[%s229 + $0x18] sm:$0xf] %v5484
      %5501 = vst [vmem:[%s229 + $0x1c] sm:$0xf] %v5485
      %s5502 = smul.u32 8, %s16
      %p5503 = scmp.lt.s32.totalorder %s5502, 15
      %s5504 = scalar_select %p5503, %s5502, 15
      %s5505 = smul.addr %s5504, 4
      %s5506 = scalar_lea.vmem %s5, %s5505
      // Predicated region
      $region41: #{densenet_forward.5} parent=39 // pred_check
        %p5507 = pneg %p144
      $region42: #{densenet_forward.5} parent=39 // pred_check_branch
        %5509 = sbr.rel (%p5507) target = $region44
      $region43: #{densenet_forward.5} parent=39 // pred_region
        %s5510 = smul.u32 8, %s16
      $region44: #{densenet_forward.5} parent=39 // pred_fallthru
        _
    $region40: #{densenet_forward.5} parent=5 // pred_fallthru
      _
    %p5511 = scmp.le.s32.totalorder 2, %s11
    // Predicated region
    $region45: #{densenet_forward.5} parent=5 // pred_check
      %p5512 = pneg %p5511
    $region46: #{densenet_forward.5} parent=5 // pred_check_branch
      %5514 = sbr.rel (%p5512) target = $region48
    $region47: #{densenet_forward.5} parent=5 // pred_region
      %s5515 = ssub.s32 %s11, 2
      // Predicated region
      $region49: #{densenet_forward.5} parent=47 // pred_check
        %p5516 = pneg %p150
      $region50: #{densenet_forward.5} parent=47 // pred_check_branch
        %5518 = sbr.rel (%p5516) target = $region52
      $region51: #{densenet_forward.5} parent=47 // pred_region
        %s5519 = smul.u32 8, %s17
        %p5520 = scmp.lt.s32.totalorder %s5519, 15
        %s5521 = scalar_select %p5520, %s5519, 15
        %s5522 = smul.addr %s5521, 4
        %s5523 = scalar_lea.vmem %s5, %s5522
      $region52: #{densenet_forward.5} parent=47 // pred_fallthru
        _
    $region48: #{densenet_forward.5} parent=5 // pred_fallthru
      _
  $region6: #{densenet_forward.5} parent=0 // loop_footer
    %s15 = sadd.s32 1, %s11
  $region7: #{densenet_forward.5} parent=0 // loop_footer_branch
    %10 = sbr.rel target = $region3
  $region8: #{densenet_forward.5} parent=0 // loop_exit
    _

// kernel: densenet_forward.7
$region0: #{densenet_forward.7}
  #allocation0 [shape = 'u32[]', space=smem, size = 0x4, offset = 0x4, fixed_abs, tag = 'smem constant byte address 0x4 - core index']
  #allocation1 [shape = 'u32[144,128]{1,0:T(1,128)}', space=vmem, size = 0x12000, scoped, tag = 'internal scratch']
  #allocation2 [shape = 'f32[64,128]{1,0:T(8,128)}', space=vmem, size = 0x8000, scoped, tag = 'scratch operand']
  %s0 = inlined_call_operand.vmem [shape: bf16[128,128], index: 0, kind: input, shape index: {}]
  %s1 = inlined_call_operand.vmem [shape: f32[1,128], index: 1, kind: input, shape index: {}]
  %s2 = inlined_call_operand.vmem [shape: f32[1,128], index: 2, kind: input, shape index: {}]
  %s3 = inlined_call_operand.vmem [shape: bf16[128,128], index: 3, kind: input, shape index: {}]
  %s4 = inlined_call_operand.vmem [shape: bf16[32,128], index: 4, kind: output, shape index: {}]
  %s5 = sld [smem:[#allocation0]]
  $region49: #{densenet_forward.7} parent=0
    _
  %s7 = ssub.s32 1, %s5
  %s8 = scalar_select 0, %s7, %s5
  loop: start=0, step=1, limit=4
  $region2: #{densenet_forward.7} parent=0 // loop_pre_header
    _
  $region3: #{densenet_forward.7} parent=0 // loop_header
    %s10 = sphi 0, %s14
    %p11 = scmp.ge.s32.totalorder %s10, 4
    %s20 = sphi 0, %s22
    %s23 = sphi 0, %s20
    %s24 = sphi 0, %s23
    %s40 = sphi 0, %s24
    %s44 = sphi 0, %s44
    %s46 = sphi 0, %s44
    %s47 = sphi 0, %s46
    %s61 = sphi 0, %s47
    %s65 = sphi 0, %s65
    %s67 = sphi 0, %s65
    %s68 = sphi 0, %s67
    %s82 = sphi 0, %s68
    %s86 = sphi 0, %s86
    %s88 = sphi 0, %s86
    %s89 = sphi 0, %s88
    %s103 = sphi 0, %s89
    %s109 = sphi 0, %s111
    %s112 = sphi 0, %s109
    %s113 = sphi 0, %s112
    %s129 = sphi 0, %s113
  $region4: #{densenet_forward.7} parent=0 // loop_header_branch
    %13 = sbr.rel (%p11) target = $region8
  $region5: #{densenet_forward.7} parent=0 // loop_body
    %s15 = ssub.s32 %s10, 1
    %s16 = ssub.s32 %s10, 2
    %s17 = sadd.s32 %s10, 1
    %s18 = ssub.s32 %s10, %s17
    %p19 = scmp.eq.s32.totalorder %s18, 0
    %s21 = sadd.s32 %s20, 1
    %s22 = scalar_select %p19, %s20, %s21
    %p25 = pneg %p19
    %p26 = scmp.eq.s32.totalorder %s10, 1
    %p27 = por %p25, %p26
    %p28 = scmp.ne.s32.totalorder %s20, %s23
    %p29 = scmp.eq.s32.totalorder %s10, 0
    %p30 = por %p28, %p29
    %p31 = scmp.ne.s32.totalorder %s20, %s23
    %p32 = scmp.eq.s32.totalorder %s15, 1
    %p33 = por %p31, %p32
    %p34 = scmp.ne.s32.totalorder %s23, %s24
    %p35 = scmp.eq.s32.totalorder %s15, 0
    %p36 = por %p34, %p35
    %p37 = scmp.ne.s32.totalorder %s23, %s24
    %p38 = scmp.eq.s32.totalorder %s16, 1
    %p39 = por %p37, %p38
    %p41 = scmp.ne.s32.totalorder %s24, %s40
    %p42 = scmp.eq.s32.totalorder %s16, 0
    %p43 = por %p41, %p42
    %s45 = sadd.s32 %s44, 1
    %p48 = scmp.eq.s32.totalorder %s10, 1
    %p49 = scmp.ne.s32.totalorder %s44, %s46
    %p50 = scmp.eq.s32.totalorder %s10, 0
    %p51 = por %p49, %p50
    %p52 = scmp.ne.s32.totalorder %s44, %s46
    %p53 = scmp.eq.s32.totalorder %s15, 1
    %p54 = por %p52, %p53
    %p55 = scmp.ne.s32.totalorder %s46, %s47
    %p56 = scmp.eq.s32.totalorder %s15, 0
    %p57 = por %p55, %p56
    %p58 = scmp.ne.s32.totalorder %s46, %s47
    %p59 = scmp.eq.s32.totalorder %s16, 1
    %p60 = por %p58, %p59
    %p62 = scmp.ne.s32.totalorder %s47, %s61
    %p63 = scmp.eq.s32.totalorder %s16, 0
    %p64 = por %p62, %p63
    %s66 = sadd.s32 %s65, 1
    %p69 = scmp.eq.s32.totalorder %s10, 1
    %p70 = scmp.ne.s32.totalorder %s65, %s67
    %p71 = scmp.eq.s32.totalorder %s10, 0
    %p72 = por %p70, %p71
    %p73 = scmp.ne.s32.totalorder %s65, %s67
    %p74 = scmp.eq.s32.totalorder %s15, 1
    %p75 = por %p73, %p74
    %p76 = scmp.ne.s32.totalorder %s67, %s68
    %p77 = scmp.eq.s32.totalorder %s15, 0
    %p78 = por %p76, %p77
    %p79 = scmp.ne.s32.totalorder %s67, %s68
    %p80 = scmp.eq.s32.totalorder %s16, 1
    %p81 = por %p79, %p80
    %p83 = scmp.ne.s32.totalorder %s68, %s82
    %p84 = scmp.eq.s32.totalorder %s16, 0
    %p85 = por %p83, %p84
    %s87 = sadd.s32 %s86, 1
    %p90 = scmp.eq.s32.totalorder %s10, 1
    %p91 = scmp.ne.s32.totalorder %s86, %s88
    %p92 = scmp.eq.s32.totalorder %s10, 0
    %p93 = por %p91, %p92
    %p94 = scmp.ne.s32.totalorder %s86, %s88
    %p95 = scmp.eq.s32.totalorder %s15, 1
    %p96 = por %p94, %p95
    %p97 = scmp.ne.s32.totalorder %s88, %s89
    %p98 = scmp.eq.s32.totalorder %s15, 0
    %p99 = por %p97, %p98
    %p100 = scmp.ne.s32.totalorder %s88, %s89
    %p101 = scmp.eq.s32.totalorder %s16, 1
    %p102 = por %p100, %p101
    %p104 = scmp.ne.s32.totalorder %s89, %s103
    %p105 = scmp.eq.s32.totalorder %s16, 0
    %p106 = por %p104, %p105
    %s107 = ssub.s32 %s10, %s17
    %p108 = scmp.eq.s32.totalorder %s107, 0
    %s110 = sadd.s32 %s109, 1
    %s111 = scalar_select %p108, %s109, %s110
    %p114 = pneg %p108
    %p115 = scmp.eq.s32.totalorder %s10, 1
    %p116 = por %p114, %p115
    %p117 = scmp.ne.s32.totalorder %s109, %s112
    %p118 = scmp.eq.s32.totalorder %s10, 0
    %p119 = por %p117, %p118
    %p120 = scmp.ne.s32.totalorder %s109, %s112
    %p121 = scmp.eq.s32.totalorder %s15, 1
    %p122 = por %p120, %p121
    %p123 = scmp.ne.s32.totalorder %s112, %s113
    %p124 = scmp.eq.s32.totalorder %s15, 0
    %p125 = por %p123, %p124
    %p126 = scmp.ne.s32.totalorder %s112, %s113
    %p127 = scmp.eq.s32.totalorder %s16, 1
    %p128 = por %p126, %p127
    %p130 = scmp.ne.s32.totalorder %s113, %s129
    %p131 = scmp.eq.s32.totalorder %s16, 0
    %p132 = por %p130, %p131
    %p133 = scmp.le.s32.totalorder 1, %s10
    %p134 = scmp.lt.s32.totalorder %s10, 3
    %p135 = pnand %p133, %p134
    %p136 = pneg %p135
    // Predicated region
    $region9: #{densenet_forward.7} parent=5 // pred_check
      _
    $region10: #{densenet_forward.7} parent=5 // pred_check_branch
      %138 = sbr.rel (%p135) target = $region12
    $region11: #{densenet_forward.7} parent=5 // pred_region
      %s139 = ssub.s32 %s10, 1
      // Predicated region
      $region13: #{densenet_forward.7} parent=11 // pred_check
        %p140 = pneg %p57
      $region14: #{densenet_forward.7} parent=11 // pred_check_branch
        %142 = sbr.rel (%p140) target = $region16
      $region15: #{densenet_forward.7} parent=11 // pred_region
        _
      $region16: #{densenet_forward.7} parent=11 // pred_fallthru
        _
      // Predicated region
      $region17: #{densenet_forward.7} parent=11 // pred_check
        %p143 = pneg %p78
      $region18: #{densenet_forward.7} parent=11 // pred_check_branch
        %145 = sbr.rel (%p143) target = $region20
      $region19: #{densenet_forward.7} parent=11 // pred_region
        _
      $region20: #{densenet_forward.7} parent=11 // pred_fallthru
        _
      // Predicated region
      $region21: #{densenet_forward.7} parent=11 // pred_check
        %p146 = pneg %p99
      $region22: #{densenet_forward.7} parent=11 // pred_check_branch
        %148 = sbr.rel (%p146) target = $region24
      $region23: #{densenet_forward.7} parent=11 // pred_region
        _
      $region24: #{densenet_forward.7} parent=11 // pred_fallthru
        _
    $region12: #{densenet_forward.7} parent=5 // pred_fallthru
      _
    %p149 = scmp.lt.s32.totalorder %s10, 2
    // Predicated region
    $region25: #{densenet_forward.7} parent=5 // pred_check
      %p150 = pneg %p149
    $region26: #{densenet_forward.7} parent=5 // pred_check_branch
      %152 = sbr.rel (%p150) target = $region28
    $region27: #{densenet_forward.7} parent=5 // pred_region
      // Predicated region
      $region29: #{densenet_forward.7} parent=27 // pred_check
        %p153 = pneg %p30
      $region30: #{densenet_forward.7} parent=27 // pred_check_branch
        %155 = sbr.rel (%p153) target = $region32
      $region31: #{densenet_forward.7} parent=27 // pred_region
        %s156 = smul.u32 8, %s10
        %p157 = scmp.lt.s32.totalorder %s156, 15
        %s158 = scalar_select %p157, %s156, 15
        %s159 = smul.addr %s158, 4
        %s160 = scalar_lea.vmem %s0, %s159
        %s161 = smul.u32 8, %s10
      $region32: #{densenet_forward.7} parent=27 // pred_fallthru
        _
    $region28: #{densenet_forward.7} parent=5 // pred_fallthru
      _
    %p162 = scmp.le.s32.totalorder 1, %s10
    %p163 = scmp.lt.s32.totalorder %s10, 3
    %p164 = pnand %p162, %p163
    %p165 = pneg %p164
    // Predicated region
    $region33: #{densenet_forward.7} parent=5 // pred_check
      _
    $region34: #{densenet_forward.7} parent=5 // pred_check_branch
      %167 = sbr.rel (%p164) target = $region36
    $region35: #{densenet_forward.7} parent=5 // pred_region
      %s168 = ssub.s32 %s10, 1
      %s169 = smul.u32 8, %s15
      %p170 = scmp.lt.s32.totalorder %s169, 15
      %s171 = scalar_select %p170, %s169, 15
      %s172 = smul.addr %s171, 4
      %s173 = scalar_lea.vmem %s0, %s172
      %p174 = pneg %p36
      %p175 = pneg %p33
      %p176 = pneg %p57
      %p177 = pneg %p54
      %p178 = pneg %p78
      %p179 = pneg %p75
      %p180 = pneg %p99
      %p181 = pneg %p96
      %p182 = pneg %p125
      %p183 = pneg %p122
      %s184 = smul.u32 2, %s15
      %p185 = scmp.lt.s32.totalorder %s184, 3
      %s186 = scalar_select %p185, %s184, 3
      %s187 = smul.addr %s186, 4
      %s188 = scalar_lea.vmem %s4, %s187
      %s189 = smul.u32 8, %s15
      %p190 = scmp.lt.s32.totalorder %s189, 15
      %s191 = scalar_select %p190, %s189, 15
      %s192 = smul.addr %s191, 4
      %s193 = scalar_lea.vmem %s0, %s192
      %s194 = smul.u32 8, %s15
      %s195 = smul.u32 2, %s15
      %p196 = scmp.lt.s32.totalorder %s195, 3
      %s197 = scalar_select %p196, %s195, 3
      %s198 = smul.addr %s197, 4
      %s199 = scalar_lea.vmem %s4, %s198
      %s200 = smul.u32 2, %s15
      %v202 = vld [vmem:[%s193] sm:$0xf]
      %v203 = vld [vmem:[%s193 + $0x4] sm:$0xf]
      %v204 = vld [vmem:[%s193 + $0x8] sm:$0xf]
      %v205 = vld [vmem:[%s193 + $0xc] sm:$0xf]
      %v206 = vld [vmem:[%s193 + $0x10] sm:$0xf]
      %v207 = vld [vmem:[%s193 + $0x14] sm:$0xf]
      %v208 = vld [vmem:[%s193 + $0x18] sm:$0xf]
      %v209 = vld [vmem:[%s193 + $0x1c] sm:$0xf]
      %v210 = vunpack.c.l.bf16 %v202
      %v211 = vunpack.c.l.bf16 %v203
      %v212 = vunpack.c.l.bf16 %v204
      %v213 = vunpack.c.l.bf16 %v205
      %v214 = vunpack.c.l.bf16 %v206
      %v215 = vunpack.c.l.bf16 %v207
      %v216 = vunpack.c.l.bf16 %v208
      %v217 = vunpack.c.l.bf16 %v209
      %v218 = vld [vmem:[%s1] sm:$0x1]
      %v220 = vlaneseq
      %v221 = vshrl.u32 %v220, 7
      %v222 = vsub.s32 0, %v221
      %v223 = vrot.slane %v218, %v222
      %v225 = vmul.f32 %v210, %v223
      %v226 = vmul.f32 %v211, %v223
      %v227 = vmul.f32 %v212, %v223
      %v228 = vmul.f32 %v213, %v223
      %v229 = vmul.f32 %v214, %v223
      %v230 = vmul.f32 %v215, %v223
      %v231 = vmul.f32 %v216, %v223
      %v232 = vmul.f32 %v217, %v223
      %v233 = vld [vmem:[%s2] sm:$0x1]
      %v235 = vlaneseq
      %v236 = vshrl.u32 %v235, 7
      %v237 = vsub.s32 0, %v236
      %v238 = vrot.slane %v233, %v237
      %v240 = vadd.f32 %v225, %v238
      %v241 = vadd.f32 %v226, %v238
      %v242 = vadd.f32 %v227, %v238
      %v243 = vadd.f32 %v228, %v238
      %v244 = vadd.f32 %v229, %v238
      %v245 = vadd.f32 %v230, %v238
      %v246 = vadd.f32 %v231, %v238
      %v247 = vadd.f32 %v232, %v238
      %v248 = vmax.f32 %v240, 0.0
      %v249 = vmax.f32 %v241, 0.0
      %v250 = vmax.f32 %v242, 0.0
      %v251 = vmax.f32 %v243, 0.0
      %v252 = vmax.f32 %v244, 0.0
      %v253 = vmax.f32 %v245, 0.0
      %v254 = vmax.f32 %v246, 0.0
      %v255 = vmax.f32 %v247, 0.0
      %v256 = vpack.c.bf16 %v249, %v248
      %v257 = vpack.c.bf16 %v251, %v250
      %v258 = vpack.c.bf16 %v253, %v252
      %v259 = vpack.c.bf16 %v255, %v254
      %v260 = vld [vmem:[%s3] sm:$0xf]
      %v261 = vld [vmem:[%s3 + $0x4] sm:$0xf]
      %v262 = vld [vmem:[%s3 + $0x8] sm:$0xf]
      %v263 = vld [vmem:[%s3 + $0xc] sm:$0xf]
      %v264 = vld [vmem:[%s3 + $0x10] sm:$0xf]
      %v265 = vld [vmem:[%s3 + $0x14] sm:$0xf]
      %v266 = vld [vmem:[%s3 + $0x18] sm:$0xf]
      %v267 = vld [vmem:[%s3 + $0x1c] sm:$0xf]
      %v268 = vld [vmem:[%s3 + $0x20] sm:$0xf]
      %v269 = vld [vmem:[%s3 + $0x24] sm:$0xf]
      %v270 = vld [vmem:[%s3 + $0x28] sm:$0xf]
      %v271 = vld [vmem:[%s3 + $0x2c] sm:$0xf]
      %v272 = vld [vmem:[%s3 + $0x30] sm:$0xf]
      %v273 = vld [vmem:[%s3 + $0x34] sm:$0xf]
      %v274 = vld [vmem:[%s3 + $0x38] sm:$0xf]
      %v275 = vld [vmem:[%s3 + $0x3c] sm:$0xf]
      %v292 = vunpack.c.l.b16 %v260
      %v293 = vunpack.c.l.b16 %v261
      %v294 = vunpack.c.l.b16 %v262
      %v295 = vunpack.c.l.b16 %v263
      %v296 = vunpack.c.l.b16 %v264
      %v297 = vunpack.c.l.b16 %v265
      %v298 = vunpack.c.l.b16 %v266
      %v299 = vunpack.c.l.b16 %v267
      %v300 = vunpack.c.l.b16 %v268
      %v301 = vunpack.c.l.b16 %v269
      %v302 = vunpack.c.l.b16 %v270
      %v303 = vunpack.c.l.b16 %v271
      %v304 = vunpack.c.l.b16 %v272
      %v305 = vunpack.c.l.b16 %v273
      %v306 = vunpack.c.l.b16 %v274
      %v307 = vunpack.c.l.b16 %v275
      %v308 = vpack.c.b16 %v293, %v292
      %v309 = vpack.c.b16 %v295, %v294
      %v310 = vpack.c.b16 %v297, %v296
      %v311 = vpack.c.b16 %v299, %v298
      %v312 = vpack.c.b16 %v301, %v300
      %v313 = vpack.c.b16 %v303, %v302
      %v314 = vpack.c.b16 %v305, %v304
      %v315 = vpack.c.b16 %v307, %v306
      %324 = vmatprep.subr.bf16.mxu0 0
      %325 = vmatpush1.bf16.msra.mxu0 %v315
      %326 = vmatprep.subr.bf16.mxu0 0
      %327 = vmatpush1.bf16.msra.mxu0 %v314
      %328 = vmatprep.subr.bf16.mxu0 0
      %329 = vmatpush1.bf16.msra.mxu0 %v313
      %330 = vmatprep.subr.bf16.mxu0 0
      %331 = vmatpush1.bf16.msra.mxu0 %v312
      %332 = vmatprep.subr.bf16.mxu0 0
      %333 = vmatpush1.bf16.msra.mxu0 %v311
      %334 = vmatprep.subr.bf16.mxu0 0
      %335 = vmatpush1.bf16.msra.mxu0 %v310
      %336 = vmatprep.subr.bf16.mxu0 0
      %337 = vmatpush1.bf16.msra.mxu0 %v309
      %338 = vmatprep.subr.bf16.mxu0 0
      %339 = vmatpush1.bf16.msra.mxu0 %v308
      %340 = vmatprep.subr.bf16.mxu0 0
      %341 = vmatpush2.bf16.msra.mxu0 0
      %342 = vmatprep.subr.bf16.mxu0 0
      %343 = vmatpush2.bf16.msra.mxu0 0
      %344 = vmatprep.subr.bf16.mxu0 0
      %345 = vmatpush2.bf16.msra.mxu0 0
      %346 = vmatprep.subr.bf16.mxu0 0
      %347 = vmatpush2.bf16.msra.mxu0 0
      %348 = vmatprep.subr.bf16.mxu0 0
      %349 = vmatpush2.bf16.msra.mxu0 0
      %350 = vmatprep.subr.bf16.mxu0 0
      %351 = vmatpush2.bf16.msra.mxu0 0
      %352 = vmatprep.subr.bf16.mxu0 0
      %353 = vmatpush2.bf16.msra.mxu0 0
      %354 = vmatprep.subr.bf16.mxu0 0
      %355 = vmatpush2.bf16.msra.mxu0 0
      %356 = vmatprep.mubr.bf16.mxu0 0
      %357 = vmatmul.mubr.bf16.gmra.mxu0 %v256
      %v358 = vpop.f32.mrf.mxu0
      %v359 = vadd.f32 0.0, %v358
      %v360 = vpop.f32.mrf.mxu0
      %v361 = vpop.f32.mrf.mxu0
      %v362 = vadd.f32 0.0, %v361
      %v363 = vpop.f32.mrf.mxu0
      %364 = vmatprep.mubr.bf16.mxu0 0
      %365 = vmatmul.mubr.bf16.gmra.mxu0 %v257
      %v366 = vpop.f32.mrf.mxu0
      %v367 = vadd.f32 0.0, %v366
      %v368 = vpop.f32.mrf.mxu0
      %v369 = vpop.f32.mrf.mxu0
      %v370 = vadd.f32 0.0, %v369
      %v371 = vpop.f32.mrf.mxu0
      %372 = vmatprep.mubr.bf16.mxu0 0
      %373 = vmatmul.mubr.bf16.gmra.mxu0 %v258
      %v374 = vpop.f32.mrf.mxu0
      %v375 = vadd.f32 0.0, %v374
      %v376 = vpop.f32.mrf.mxu0
      %v377 = vpop.f32.mrf.mxu0
      %v378 = vadd.f32 0.0, %v377
      %v379 = vpop.f32.mrf.mxu0
      %380 = vmatprep.mubr.bf16.mxu0 0
      %381 = vmatmul.mubr.bf16.gmra.mxu0 %v259
      %v382 = vpop.f32.mrf.mxu0
      %v383 = vadd.f32 0.0, %v382
      %v384 = vpop.f32.mrf.mxu0
      %v385 = vpop.f32.mrf.mxu0
      %v386 = vadd.f32 0.0, %v385
      %v387 = vpop.f32.mrf.mxu0
      %388 = vdwg.mxu0
      %v389 = vrot.slane %v359, 1
      %v390 = vrot.slane %v362, 1
      %v391 = vrot.slane %v367, 1
      %v392 = vrot.slane %v370, 1
      %v393 = vrot.slane %v375, 1
      %v394 = vrot.slane %v378, 1
      %v395 = vrot.slane %v383, 1
      %v396 = vrot.slane %v386, 1
      %v397 = vlaneseq
      %v398 = vshrl.u32 %v397, 7
      %vm399 = vcmp.lt.s32.totalorder %v398, 7
      %v400 = vsel %vm399, %v395, %v396
      %v401 = vsel %vm399, %v394, %v395
      %v402 = vsel %vm399, %v393, %v394
      %v403 = vsel %vm399, %v392, %v393
      %v404 = vsel %vm399, %v391, %v392
      %v405 = vsel %vm399, %v390, %v391
      %v406 = vsel %vm399, %v389, %v390
      %v407 = vsel %vm399, %v396, %v389
      %v408 = vadd.f32 %v359, %v406
      %v409 = vadd.f32 %v362, %v405
      %v410 = vadd.f32 %v367, %v404
      %v411 = vadd.f32 %v370, %v403
      %v412 = vadd.f32 %v375, %v402
      %v413 = vadd.f32 %v378, %v401
      %v414 = vadd.f32 %v383, %v400
      %v415 = vadd.f32 %v386, %v407
      %v416 = vadd.f32 %v408, %v362
      %v417 = vadd.f32 %v409, %v367
      %v418 = vadd.f32 %v410, %v370
      %v419 = vadd.f32 %v411, %v375
      %v420 = vadd.f32 %v412, %v378
      %v421 = vadd.f32 %v413, %v383
      %v422 = vadd.f32 %v414, %v386
      %v423 = vadd.f32 %v415, %v359
      %v424 = vadd.f32 %v416, %v405
      %v425 = vadd.f32 %v417, %v404
      %v426 = vadd.f32 %v418, %v403
      %v427 = vadd.f32 %v419, %v402
      %v428 = vadd.f32 %v420, %v401
      %v429 = vadd.f32 %v421, %v400
      %v430 = vadd.f32 %v422, %v407
      %v431 = vadd.f32 %v423, %v406
      %v432 = vmul.f32 %v424, 0.25
      %v433 = vmul.f32 %v425, 0.25
      %v434 = vmul.f32 %v426, 0.25
      %v435 = vmul.f32 %v427, 0.25
      %v436 = vmul.f32 %v428, 0.25
      %v437 = vmul.f32 %v429, 0.25
      %v438 = vmul.f32 %v430, 0.25
      %v439 = vmul.f32 %v431, 0.25
      %440 = vst [vmem:[#allocation2] sm:$0xff] %v432
      %441 = vst [vmem:[#allocation2 + $0x8] sm:$0xff] %v433
      %442 = vst [vmem:[#allocation2 + $0x10] sm:$0xff] %v434
      %443 = vst [vmem:[#allocation2 + $0x18] sm:$0xff] %v435
      %444 = vst [vmem:[#allocation2 + $0x20] sm:$0xff] %v436
      %445 = vst [vmem:[#allocation2 + $0x28] sm:$0xff] %v437
      %446 = vst [vmem:[#allocation2 + $0x30] sm:$0xff] %v438
      %447 = vst [vmem:[#allocation2 + $0x38] sm:$0xff] %v439
      %v448 = vld [vmem:[#allocation2] ss:$2 sm:$0xf]
      %s449 = scalar_lea.vmem [#allocation2], 16
      %v450 = vld [vmem:[%s449] ss:$2 sm:$0xf]
      %s451 = scalar_lea.vmem [#allocation2], 32
      %v452 = vld [vmem:[%s451] ss:$2 sm:$0xf]
      %s453 = scalar_lea.vmem [#allocation2], 48
      %v454 = vld [vmem:[%s453] ss:$2 sm:$0xf]
      %v456 = vrot.slane %v450, 4
      %v459 = vrot.slane %v454, 4
      %vm461 = vcmask 1043456
      %v462 = vsel %vm461, %v448, %v456
      %v463 = vsel %vm461, %v452, %v459
      %v464 = vpack.c.bf16 %v463, %v462
      %v466 = vunpack.c.l.b16 %v464
      %v467 = vunpack.c.h.b16 %v464
      %v468 = vpack.c.b16 %v466, %v466
      %v469 = vpack.c.b16 %v467, %v467
      %472 = vst [vmem:[%s199] sm:$0xf] %v468
      %473 = vst [vmem:[%s199 + $0x4] sm:$0xf] %v469
      %s474 = smul.u32 2, %s15
      %p475 = scmp.lt.s32.totalorder %s474, 3
      %s476 = scalar_select %p475, %s474, 3
      %s477 = smul.addr %s476, 4
      %s478 = scalar_lea.vmem %s4, %s477
      // Predicated region
      $region37: #{densenet_forward.7} parent=35 // pred_check
        %p479 = pneg %p122
      $region38: #{densenet_forward.7} parent=35 // pred_check_branch
        %481 = sbr.rel (%p479) target = $region40
      $region39: #{densenet_forward.7} parent=35 // pred_region
        %s482 = smul.u32 2, %s15
      $region40: #{densenet_forward.7} parent=35 // pred_fallthru
        _
    $region36: #{densenet_forward.7} parent=5 // pred_fallthru
      _
    %p483 = scmp.le.s32.totalorder 2, %s10
    // Predicated region
    $region41: #{densenet_forward.7} parent=5 // pred_check
      %p484 = pneg %p483
    $region42: #{densenet_forward.7} parent=5 // pred_check_branch
      %486 = sbr.rel (%p484) target = $region44
    $region43: #{densenet_forward.7} parent=5 // pred_region
      %s487 = ssub.s32 %s10, 2
      // Predicated region
      $region45: #{densenet_forward.7} parent=43 // pred_check
        %p488 = pneg %p128
      $region46: #{densenet_forward.7} parent=43 // pred_check_branch
        %490 = sbr.rel (%p488) target = $region48
      $region47: #{densenet_forward.7} parent=43 // pred_region
        %s491 = smul.u32 2, %s16
        %p492 = scmp.lt.s32.totalorder %s491, 3
        %s493 = scalar_select %p492, %s491, 3
        %s494 = smul.addr %s493, 4
        %s495 = scalar_lea.vmem %s4, %s494
      $region48: #{densenet_forward.7} parent=43 // pred_fallthru
        _
    $region44: #{densenet_forward.7} parent=5 // pred_fallthru
      _
  $region6: #{densenet_forward.7} parent=0 // loop_footer
    %s14 = sadd.s32 1, %s10
  $region7: #{densenet_forward.7} parent=0 // loop_footer_branch
    %9 = sbr.rel target = $region3
  $region8: #{densenet_forward.7} parent=0 // loop_exit
    _

// kernel: densenet_forward.9
$region0: #{densenet_forward.9}
  #allocation0 [shape = 'u32[]', space=smem, size = 0x4, offset = 0x4, fixed_abs, tag = 'smem constant byte address 0x4 - core index']
  #allocation1 [shape = 'u32[144,128]{1,0:T(1,128)}', space=vmem, size = 0x12000, scoped, tag = 'internal scratch']
  %s0 = inlined_call_operand.vmem [shape: bf16[32,128], index: 0, kind: input, shape index: {}]
  %s1 = inlined_call_operand.vmem [shape: f32[1,128], index: 1, kind: input, shape index: {}]
  %s2 = inlined_call_operand.vmem [shape: f32[1,128], index: 2, kind: input, shape index: {}]
  %s3 = inlined_call_operand.vmem [shape: bf16[128,128], index: 3, kind: input, shape index: {}]
  %s4 = inlined_call_operand.vmem [shape: f32[1,128], index: 4, kind: input, shape index: {}]
  %s5 = inlined_call_operand.hbm [shape: f32[2,128], index: 5, kind: output, shape index: {}]
  %s6 = sld [smem:[#allocation0]]
  $region30: #{densenet_forward.9} parent=0
    _
  %s8 = ssub.s32 1, %s6
  %s9 = scalar_select 0, %s8, %s6
  $region1: #{densenet_forward.9} parent=0
    #allocation2 [shape = 'u8[1024]{0}', space=vmem, size = 0x400, scoped, tag = 'output window, operand 0, single buffered']
    #allocation3 [shape = 's32[1]{0}', space=sflag, size = 0x4, scoped, tag = 'scoped memory for densenet_forward.9']
    %10 = vsyncpa [#allocation3], 0
    // Predicated region
    $region2: #{densenet_forward.9} parent=1 // pred_check
      _
    $region3: #{densenet_forward.9} parent=1 // pred_check_branch
      %12 = sbr.rel (0) target = $region5
    $region4: #{densenet_forward.9} parent=1 // pred_region
      _
    $region5: #{densenet_forward.9} parent=1 // pred_fallthru
      _
    // Predicated region
    $region6: #{densenet_forward.9} parent=1 // pred_check
      _
    $region7: #{densenet_forward.9} parent=1 // pred_check_branch
      %14 = sbr.rel (0) target = $region9
    $region8: #{densenet_forward.9} parent=1 // pred_region
      _
    $region9: #{densenet_forward.9} parent=1 // pred_fallthru
      _
    // Predicated region
    $region10: #{densenet_forward.9} parent=1 // pred_check
      _
    $region11: #{densenet_forward.9} parent=1 // pred_check_branch
      %16 = sbr.rel (0) target = $region13
    $region12: #{densenet_forward.9} parent=1 // pred_region
      _
    $region13: #{densenet_forward.9} parent=1 // pred_fallthru
      _
    // Predicated region
    $region14: #{densenet_forward.9} parent=1 // pred_check
      _
    $region15: #{densenet_forward.9} parent=1 // pred_check_branch
      %18 = sbr.rel (0) target = $region17
    $region16: #{densenet_forward.9} parent=1 // pred_region
      _
    $region17: #{densenet_forward.9} parent=1 // pred_fallthru
      _
    // Predicated region
    $region18: #{densenet_forward.9} parent=1 // pred_check
      _
    $region19: #{densenet_forward.9} parent=1 // pred_check_branch
      %20 = sbr.rel (0) target = $region21
    $region20: #{densenet_forward.9} parent=1 // pred_region
      _
    $region21: #{densenet_forward.9} parent=1 // pred_fallthru
      _
    %v22 = vld [vmem:[%s0] sm:$0xf]
    %v23 = vld [vmem:[%s0 + $0x4] sm:$0xf]
    %v24 = vld [vmem:[%s0 + $0x8] sm:$0xf]
    %v25 = vld [vmem:[%s0 + $0xc] sm:$0xf]
    %v26 = vunpack.c.l.bf16 %v22
    %v27 = vunpack.c.l.bf16 %v23
    %v28 = vunpack.c.l.bf16 %v24
    %v29 = vunpack.c.l.bf16 %v25
    %v30 = vld [vmem:[%s1] sm:$0x1]
    %v32 = vlaneseq
    %v33 = vshrl.u32 %v32, 7
    %v34 = vsub.s32 0, %v33
    %v35 = vrot.slane %v30, %v34
    %v37 = vmul.f32 %v26, %v35
    %v38 = vmul.f32 %v27, %v35
    %v39 = vmul.f32 %v28, %v35
    %v40 = vmul.f32 %v29, %v35
    %v41 = vld [vmem:[%s2] sm:$0x1]
    %v43 = vlaneseq
    %v44 = vshrl.u32 %v43, 7
    %v45 = vsub.s32 0, %v44
    %v46 = vrot.slane %v41, %v45
    %v48 = vadd.f32 %v37, %v46
    %v49 = vadd.f32 %v38, %v46
    %v50 = vadd.f32 %v39, %v46
    %v51 = vadd.f32 %v40, %v46
    %v52 = vmax.f32 %v48, 0.0
    %v53 = vmax.f32 %v49, 0.0
    %v54 = vmax.f32 %v50, 0.0
    %v55 = vmax.f32 %v51, 0.0
    %v56 = vadd.f32 %v52, %v53
    %v57 = vrot.slane %v56, 4
    %v58 = vadd.f32 %v56, %v57
    %v59 = vrot.slane %v58, 2
    %v60 = vadd.f32 %v58, %v59
    %v61 = vrot.slane %v60, 1
    %v62 = vadd.f32 %v60, %v61
    %v63 = vrcp.pop 16.0
    %v64 = vmul.f32 %v62, %v63
    %v65 = vadd.f32 %v54, %v55
    %v66 = vrot.slane %v65, 4
    %v67 = vadd.f32 %v65, %v66
    %v68 = vrot.slane %v67, 2
    %v69 = vadd.f32 %v67, %v68
    %v70 = vrot.slane %v69, 1
    %v71 = vadd.f32 %v69, %v70
    %v72 = vmul.f32 %v71, %v63
    %vm73 = vcmask 1040384
    %v74 = vsel %vm73, %v64, %v72
    %v75 = vpack.c.bf16 %v74, %v74
    %v76 = vld [vmem:[%s3] sm:$0xf]
    %v77 = vld [vmem:[%s3 + $0x4] sm:$0xf]
    %v78 = vld [vmem:[%s3 + $0x8] sm:$0xf]
    %v79 = vld [vmem:[%s3 + $0xc] sm:$0xf]
    %v80 = vld [vmem:[%s3 + $0x10] sm:$0xf]
    %v81 = vld [vmem:[%s3 + $0x14] sm:$0xf]
    %v82 = vld [vmem:[%s3 + $0x18] sm:$0xf]
    %v83 = vld [vmem:[%s3 + $0x1c] sm:$0xf]
    %v84 = vld [vmem:[%s3 + $0x20] sm:$0xf]
    %v85 = vld [vmem:[%s3 + $0x24] sm:$0xf]
    %v86 = vld [vmem:[%s3 + $0x28] sm:$0xf]
    %v87 = vld [vmem:[%s3 + $0x2c] sm:$0xf]
    %v88 = vld [vmem:[%s3 + $0x30] sm:$0xf]
    %v89 = vld [vmem:[%s3 + $0x34] sm:$0xf]
    %v90 = vld [vmem:[%s3 + $0x38] sm:$0xf]
    %v91 = vld [vmem:[%s3 + $0x3c] sm:$0xf]
    %v92 = vld [vmem:[%s4] sm:$0x1]
    %v94 = vlaneseq
    %v95 = vshrl.u32 %v94, 7
    %v96 = vsub.s32 0, %v95
    %v97 = vrot.slane %v92, %v96
    %v115 = vunpack.c.l.b16 %v76
    %v116 = vunpack.c.l.b16 %v77
    %v117 = vunpack.c.l.b16 %v78
    %v118 = vunpack.c.l.b16 %v79
    %v119 = vunpack.c.l.b16 %v80
    %v120 = vunpack.c.l.b16 %v81
    %v121 = vunpack.c.l.b16 %v82
    %v122 = vunpack.c.l.b16 %v83
    %v123 = vunpack.c.l.b16 %v84
    %v124 = vunpack.c.l.b16 %v85
    %v125 = vunpack.c.l.b16 %v86
    %v126 = vunpack.c.l.b16 %v87
    %v127 = vunpack.c.l.b16 %v88
    %v128 = vunpack.c.l.b16 %v89
    %v129 = vunpack.c.l.b16 %v90
    %v130 = vunpack.c.l.b16 %v91
    %v131 = vpack.c.b16 %v116, %v115
    %v132 = vpack.c.b16 %v118, %v117
    %v133 = vpack.c.b16 %v120, %v119
    %v134 = vpack.c.b16 %v122, %v121
    %v135 = vpack.c.b16 %v124, %v123
    %v136 = vpack.c.b16 %v126, %v125
    %v137 = vpack.c.b16 %v128, %v127
    %v138 = vpack.c.b16 %v130, %v129
    %147 = vmatprep.subr.bf16.mxu0 0
    %148 = vmatpush1.bf16.msra.mxu0 %v138
    %149 = vmatprep.subr.bf16.mxu0 0
    %150 = vmatpush1.bf16.msra.mxu0 %v137
    %151 = vmatprep.subr.bf16.mxu0 0
    %152 = vmatpush1.bf16.msra.mxu0 %v136
    %153 = vmatprep.subr.bf16.mxu0 0
    %154 = vmatpush1.bf16.msra.mxu0 %v135
    %155 = vmatprep.subr.bf16.mxu0 0
    %156 = vmatpush1.bf16.msra.mxu0 %v134
    %157 = vmatprep.subr.bf16.mxu0 0
    %158 = vmatpush1.bf16.msra.mxu0 %v133
    %159 = vmatprep.subr.bf16.mxu0 0
    %160 = vmatpush1.bf16.msra.mxu0 %v132
    %161 = vmatprep.subr.bf16.mxu0 0
    %162 = vmatpush1.bf16.msra.mxu0 %v131
    %163 = vmatprep.subr.bf16.mxu0 0
    %164 = vmatpush2.bf16.msra.mxu0 0
    %165 = vmatprep.subr.bf16.mxu0 0
    %166 = vmatpush2.bf16.msra.mxu0 0
    %167 = vmatprep.subr.bf16.mxu0 0
    %168 = vmatpush2.bf16.msra.mxu0 0
    %169 = vmatprep.subr.bf16.mxu0 0
    %170 = vmatpush2.bf16.msra.mxu0 0
    %171 = vmatprep.subr.bf16.mxu0 0
    %172 = vmatpush2.bf16.msra.mxu0 0
    %173 = vmatprep.subr.bf16.mxu0 0
    %174 = vmatpush2.bf16.msra.mxu0 0
    %175 = vmatprep.subr.bf16.mxu0 0
    %176 = vmatpush2.bf16.msra.mxu0 0
    %177 = vmatprep.subr.bf16.mxu0 0
    %178 = vmatpush2.bf16.msra.mxu0 0
    %179 = vmatprep.mubr.bf16.mxu0 0
    %180 = vmatmul.mubr.bf16.gmra.mxu0 %v75
    %v181 = vpop.f32.mrf.mxu0
    %v182 = vadd.f32 %v97, %v181
    %v183 = vpop.f32.mrf.mxu0
    %v184 = vpop.f32.mrf.mxu0
    %v185 = vpop.f32.mrf.mxu0
    %186 = vdwg.mxu0
    %187 = vst [vmem:[#allocation2] sm:$0x3] %v182
    // Predicated region
    $region22: #{densenet_forward.9} parent=1 // pred_check
      _
    $region23: #{densenet_forward.9} parent=1 // pred_check_branch
      %189 = sbr.rel (0) target = $region25
    $region24: #{densenet_forward.9} parent=1 // pred_region
      %s191 = ssub.s32 32, 32
      %192 = vsyncadd [#allocation3], %s191
      %s194 = sshll.u32 [#allocation2], 4
      %s195 = int_to_ptr.vmem [resolvable:$true] %s194
      %197 = dma.vmem_to_hbm [thread:$0]  %s195, 32, %s5, [#allocation3]
    $region25: #{densenet_forward.9} parent=1 // pred_fallthru
      _
    // Predicated region
    $region26: #{densenet_forward.9} parent=1 // pred_check
      _
    $region27: #{densenet_forward.9} parent=1 // pred_check_branch
      %199 = sbr.rel (0) target = $region29
    $region28: #{densenet_forward.9} parent=1 // pred_region
      %200 = dma.done [#allocation3], 32
    $region29: #{densenet_forward.9} parent=1 // pred_fallthru
      _
    %201 = vsyncpa [#allocation3], 1

// kernel: densenet_forward.8
$region0: #{densenet_forward.8}
  #allocation0 [shape = 'u32[]', space=smem, size = 0x4, offset = 0x4, fixed_abs, tag = 'smem constant byte address 0x4 - core index']
  #allocation1 [shape = 'u32[144,128]{1,0:T(1,128)}', space=vmem, size = 0x12000, scoped, tag = 'internal scratch']
  #allocation2 [shape = 'f32[16,128]{1,0:T(8,128)}', space=vmem, size = 0x2000, scoped, tag = 'scratch operand']
  %s0 = inlined_call_operand.vmem [shape: bf16[32,128], index: 0, kind: input, shape index: {}]
  %s1 = inlined_call_operand.vmem [shape: f32[2,1,128], index: 1, kind: input, shape index: {}]
  %s2 = inlined_call_operand.vmem [shape: f32[2,1,128], index: 2, kind: input, shape index: {}]
  %s3 = inlined_call_operand.vmem [shape: bf16[2,128,128], index: 3, kind: input, shape index: {}]
  %s4 = inlined_call_operand.vmem [shape: f32[2,1,128], index: 4, kind: input, shape index: {}]
  %s5 = inlined_call_operand.vmem [shape: f32[2,1,128], index: 5, kind: input, shape index: {}]
  %s6 = inlined_call_operand.vmem [shape: bf16[2,384,128], index: 6, kind: input, shape index: {}]
  %s7 = inlined_call_operand.vmem [shape: f32[9,16,1], index: 7, kind: input, shape index: {}]
  %s8 = inlined_call_operand.vmem [shape: bf16[32,128], index: 8, kind: output, shape index: {}]
  %s9 = sld [smem:[#allocation0]]
  $region73: #{densenet_forward.8} parent=0
    _
  %s11 = ssub.s32 1, %s9
  %s12 = scalar_select 0, %s11, %s9
  loop: start=0, step=1, limit=6
  $region2: #{densenet_forward.8} parent=0 // loop_pre_header
    _
  $region3: #{densenet_forward.8} parent=0 // loop_header
    %s14 = sphi 0, %s18
    %p15 = scmp.ge.s32.totalorder %s14, 6
    %s21 = sphi 0, %s33
    %s22 = sphi 0, %s29
    %s23 = sphi 0, %s21
    %s24 = sphi 0, %s22
    %s25 = sphi 0, %s23
    %s26 = sphi 0, %s24
    %s36 = sphi 0, %s38
    %s39 = sphi 0, %s36
    %s40 = sphi 0, %s39
    %s56 = sphi 0, %s40
    %s62 = sphi 0, %s64
    %s65 = sphi 0, %s62
    %s66 = sphi 0, %s65
    %s82 = sphi 0, %s66
    %s88 = sphi 0, %s90
    %s91 = sphi 0, %s88
    %s92 = sphi 0, %s91
    %s108 = sphi 0, %s92
    %s114 = sphi 0, %s116
    %s117 = sphi 0, %s114
    %s118 = sphi 0, %s117
    %s134 = sphi 0, %s118
    %s140 = sphi 0, %s142
    %s143 = sphi 0, %s140
    %s144 = sphi 0, %s143
    %s160 = sphi 0, %s144
    %s166 = sphi 0, %s168
    %s169 = sphi 0, %s166
    %s170 = sphi 0, %s169
    %s186 = sphi 0, %s170
    %s192 = sphi 0, %s194
    %s195 = sphi 0, %s192
    %s196 = sphi 0, %s195
    %s212 = sphi 0, %s196
    %s216 = sphi 0, %s216
    %s218 = sphi 0, %s216
    %s219 = sphi 0, %s218
    %s233 = sphi 0, %s219
    %s239 = sphi 0, %s241
    %s242 = sphi 0, %s239
    %s243 = sphi 0, %s242
    %s259 = sphi 0, %s243
  $region4: #{densenet_forward.8} parent=0 // loop_header_branch
    %17 = sbr.rel (%p15) target = $region8
  $region5: #{densenet_forward.8} parent=0 // loop_body
    %s19 = ssub.s32 %s14, 1
    %s20 = ssub.s32 %s14, 2
    %s27 = sadd.s32 1, %s22
    %p28 = scmp.ge.s32.totalorder %s27, 2
    %s29 = scalar_select %p28, 0, %s27
    %s30 = sadd.s32 1, %s21
    %s31 = scalar_select %p28, %s30, %s21
    %p32 = scmp.ge.s32.totalorder %s31, 2
    %s33 = scalar_select %p32, 0, %s31
    %s34 = ssub.s32 %s21, %s33
    %p35 = scmp.eq.s32.totalorder %s34, 0
    %s37 = sadd.s32 %s36, 1
    %s38 = scalar_select %p35, %s36, %s37
    %p41 = pneg %p35
    %p42 = scmp.eq.s32.totalorder %s14, 3
    %p43 = por %p41, %p42
    %p44 = scmp.ne.s32.totalorder %s36, %s39
    %p45 = scmp.eq.s32.totalorder %s14, 0
    %p46 = por %p44, %p45
    %p47 = scmp.ne.s32.totalorder %s36, %s39
    %p48 = scmp.eq.s32.totalorder %s19, 3
    %p49 = por %p47, %p48
    %p50 = scmp.ne.s32.totalorder %s39, %s40
    %p51 = scmp.eq.s32.totalorder %s19, 0
    %p52 = por %p50, %p51
    %p53 = scmp.ne.s32.totalorder %s39, %s40
    %p54 = scmp.eq.s32.totalorder %s20, 3
    %p55 = por %p53, %p54
    %p57 = scmp.ne.s32.totalorder %s40, %s56
    %p58 = scmp.eq.s32.totalorder %s20, 0
    %p59 = por %p57, %p58
    %s60 = ssub.s32 %s22, %s29
    %p61 = scmp.eq.s32.totalorder %s60, 0
    %s63 = sadd.s32 %s62, 1
    %s64 = scalar_select %p61, %s62, %s63
    %p67 = pneg %p61
    %p68 = scmp.eq.s32.totalorder %s14, 3
    %p69 = por %p67, %p68
    %p70 = scmp.ne.s32.totalorder %s62, %s65
    %p71 = scmp.eq.s32.totalorder %s14, 0
    %p72 = por %p70, %p71
    %p73 = scmp.ne.s32.totalorder %s62, %s65
    %p74 = scmp.eq.s32.totalorder %s19, 3
    %p75 = por %p73, %p74
    %p76 = scmp.ne.s32.totalorder %s65, %s66
    %p77 = scmp.eq.s32.totalorder %s19, 0
    %p78 = por %p76, %p77
    %p79 = scmp.ne.s32.totalorder %s65, %s66
    %p80 = scmp.eq.s32.totalorder %s20, 3
    %p81 = por %p79, %p80
    %p83 = scmp.ne.s32.totalorder %s66, %s82
    %p84 = scmp.eq.s32.totalorder %s20, 0
    %p85 = por %p83, %p84
    %s86 = ssub.s32 %s22, %s29
    %p87 = scmp.eq.s32.totalorder %s86, 0
    %s89 = sadd.s32 %s88, 1
    %s90 = scalar_select %p87, %s88, %s89
    %p93 = pneg %p87
    %p94 = scmp.eq.s32.totalorder %s14, 3
    %p95 = por %p93, %p94
    %p96 = scmp.ne.s32.totalorder %s88, %s91
    %p97 = scmp.eq.s32.totalorder %s14, 0
    %p98 = por %p96, %p97
    %p99 = scmp.ne.s32.totalorder %s88, %s91
    %p100 = scmp.eq.s32.totalorder %s19, 3
    %p101 = por %p99, %p100
    %p102 = scmp.ne.s32.totalorder %s91, %s92
    %p103 = scmp.eq.s32.totalorder %s19, 0
    %p104 = por %p102, %p103
    %p105 = scmp.ne.s32.totalorder %s91, %s92
    %p106 = scmp.eq.s32.totalorder %s20, 3
    %p107 = por %p105, %p106
    %p109 = scmp.ne.s32.totalorder %s92, %s108
    %p110 = scmp.eq.s32.totalorder %s20, 0
    %p111 = por %p109, %p110
    %s112 = ssub.s32 %s22, %s29
    %p113 = scmp.eq.s32.totalorder %s112, 0
    %s115 = sadd.s32 %s114, 1
    %s116 = scalar_select %p113, %s114, %s115
    %p119 = pneg %p113
    %p120 = scmp.eq.s32.totalorder %s14, 3
    %p121 = por %p119, %p120
    %p122 = scmp.ne.s32.totalorder %s114, %s117
    %p123 = scmp.eq.s32.totalorder %s14, 0
    %p124 = por %p122, %p123
    %p125 = scmp.ne.s32.totalorder %s114, %s117
    %p126 = scmp.eq.s32.totalorder %s19, 3
    %p127 = por %p125, %p126
    %p128 = scmp.ne.s32.totalorder %s117, %s118
    %p129 = scmp.eq.s32.totalorder %s19, 0
    %p130 = por %p128, %p129
    %p131 = scmp.ne.s32.totalorder %s117, %s118
    %p132 = scmp.eq.s32.totalorder %s20, 3
    %p133 = por %p131, %p132
    %p135 = scmp.ne.s32.totalorder %s118, %s134
    %p136 = scmp.eq.s32.totalorder %s20, 0
    %p137 = por %p135, %p136
    %s138 = ssub.s32 %s22, %s29
    %p139 = scmp.eq.s32.totalorder %s138, 0
    %s141 = sadd.s32 %s140, 1
    %s142 = scalar_select %p139, %s140, %s141
    %p145 = pneg %p139
    %p146 = scmp.eq.s32.totalorder %s14, 3
    %p147 = por %p145, %p146
    %p148 = scmp.ne.s32.totalorder %s140, %s143
    %p149 = scmp.eq.s32.totalorder %s14, 0
    %p150 = por %p148, %p149
    %p151 = scmp.ne.s32.totalorder %s140, %s143
    %p152 = scmp.eq.s32.totalorder %s19, 3
    %p153 = por %p151, %p152
    %p154 = scmp.ne.s32.totalorder %s143, %s144
    %p155 = scmp.eq.s32.totalorder %s19, 0
    %p156 = por %p154, %p155
    %p157 = scmp.ne.s32.totalorder %s143, %s144
    %p158 = scmp.eq.s32.totalorder %s20, 3
    %p159 = por %p157, %p158
    %p161 = scmp.ne.s32.totalorder %s144, %s160
    %p162 = scmp.eq.s32.totalorder %s20, 0
    %p163 = por %p161, %p162
    %s164 = ssub.s32 %s22, %s29
    %p165 = scmp.eq.s32.totalorder %s164, 0
    %s167 = sadd.s32 %s166, 1
    %s168 = scalar_select %p165, %s166, %s167
    %p171 = pneg %p165
    %p172 = scmp.eq.s32.totalorder %s14, 3
    %p173 = por %p171, %p172
    %p174 = scmp.ne.s32.totalorder %s166, %s169
    %p175 = scmp.eq.s32.totalorder %s14, 0
    %p176 = por %p174, %p175
    %p177 = scmp.ne.s32.totalorder %s166, %s169
    %p178 = scmp.eq.s32.totalorder %s19, 3
    %p179 = por %p177, %p178
    %p180 = scmp.ne.s32.totalorder %s169, %s170
    %p181 = scmp.eq.s32.totalorder %s19, 0
    %p182 = por %p180, %p181
    %p183 = scmp.ne.s32.totalorder %s169, %s170
    %p184 = scmp.eq.s32.totalorder %s20, 3
    %p185 = por %p183, %p184
    %p187 = scmp.ne.s32.totalorder %s170, %s186
    %p188 = scmp.eq.s32.totalorder %s20, 0
    %p189 = por %p187, %p188
    %s190 = ssub.s32 %s22, %s29
    %p191 = scmp.eq.s32.totalorder %s190, 0
    %s193 = sadd.s32 %s192, 1
    %s194 = scalar_select %p191, %s192, %s193
    %p197 = pneg %p191
    %p198 = scmp.eq.s32.totalorder %s14, 3
    %p199 = por %p197, %p198
    %p200 = scmp.ne.s32.totalorder %s192, %s195
    %p201 = scmp.eq.s32.totalorder %s14, 0
    %p202 = por %p200, %p201
    %p203 = scmp.ne.s32.totalorder %s192, %s195
    %p204 = scmp.eq.s32.totalorder %s19, 3
    %p205 = por %p203, %p204
    %p206 = scmp.ne.s32.totalorder %s195, %s196
    %p207 = scmp.eq.s32.totalorder %s19, 0
    %p208 = por %p206, %p207
    %p209 = scmp.ne.s32.totalorder %s195, %s196
    %p210 = scmp.eq.s32.totalorder %s20, 3
    %p211 = por %p209, %p210
    %p213 = scmp.ne.s32.totalorder %s196, %s212
    %p214 = scmp.eq.s32.totalorder %s20, 0
    %p215 = por %p213, %p214
    %s217 = sadd.s32 %s216, 1
    %p220 = scmp.eq.s32.totalorder %s14, 3
    %p221 = scmp.ne.s32.totalorder %s216, %s218
    %p222 = scmp.eq.s32.totalorder %s14, 0
    %p223 = por %p221, %p222
    %p224 = scmp.ne.s32.totalorder %s216, %s218
    %p225 = scmp.eq.s32.totalorder %s19, 3
    %p226 = por %p224, %p225
    %p227 = scmp.ne.s32.totalorder %s218, %s219
    %p228 = scmp.eq.s32.totalorder %s19, 0
    %p229 = por %p227, %p228
    %p230 = scmp.ne.s32.totalorder %s218, %s219
    %p231 = scmp.eq.s32.totalorder %s20, 3
    %p232 = por %p230, %p231
    %p234 = scmp.ne.s32.totalorder %s219, %s233
    %p235 = scmp.eq.s32.totalorder %s20, 0
    %p236 = por %p234, %p235
    %s237 = ssub.s32 %s21, %s33
    %p238 = scmp.eq.s32.totalorder %s237, 0
    %s240 = sadd.s32 %s239, 1
    %s241 = scalar_select %p238, %s239, %s240
    %p244 = pneg %p238
    %p245 = scmp.eq.s32.totalorder %s14, 3
    %p246 = por %p244, %p245
    %p247 = scmp.ne.s32.totalorder %s239, %s242
    %p248 = scmp.eq.s32.totalorder %s14, 0
    %p249 = por %p247, %p248
    %p250 = scmp.ne.s32.totalorder %s239, %s242
    %p251 = scmp.eq.s32.totalorder %s19, 3
    %p252 = por %p250, %p251
    %p253 = scmp.ne.s32.totalorder %s242, %s243
    %p254 = scmp.eq.s32.totalorder %s19, 0
    %p255 = por %p253, %p254
    %p256 = scmp.ne.s32.totalorder %s242, %s243
    %p257 = scmp.eq.s32.totalorder %s20, 3
    %p258 = por %p256, %p257
    %p260 = scmp.ne.s32.totalorder %s243, %s259
    %p261 = scmp.eq.s32.totalorder %s20, 0
    %p262 = por %p260, %p261
    %p263 = scmp.le.s32.totalorder 1, %s14
    %p264 = scmp.lt.s32.totalorder %s14, 5
    %p265 = pnand %p263, %p264
    %p266 = pneg %p265
    // Predicated region
    $region9: #{densenet_forward.8} parent=5 // pred_check
      _
    $region10: #{densenet_forward.8} parent=5 // pred_check_branch
      %268 = sbr.rel (%p265) target = $region12
    $region11: #{densenet_forward.8} parent=5 // pred_region
      %s269 = ssub.s32 %s14, 1
      // Predicated region
      $region13: #{densenet_forward.8} parent=11 // pred_check
        %p270 = pneg %p229
      $region14: #{densenet_forward.8} parent=11 // pred_check_branch
        %272 = sbr.rel (%p270) target = $region16
      $region15: #{densenet_forward.8} parent=11 // pred_region
        _
      $region16: #{densenet_forward.8} parent=11 // pred_fallthru
        _
    $region12: #{densenet_forward.8} parent=5 // pred_fallthru
      _
    %p273 = scmp.lt.s32.totalorder %s14, 4
    // Predicated region
    $region17: #{densenet_forward.8} parent=5 // pred_check
      %p274 = pneg %p273
    $region18: #{densenet_forward.8} parent=5 // pred_check_branch
      %276 = sbr.rel (%p274) target = $region20
    $region19: #{densenet_forward.8} parent=5 // pred_region
      // Predicated region
      $region21: #{densenet_forward.8} parent=19 // pred_check
        %p277 = pneg %p46
      $region22: #{densenet_forward.8} parent=19 // pred_check_branch
        %279 = sbr.rel (%p277) target = $region24
      $region23: #{densenet_forward.8} parent=19 // pred_region
        %s280 = smul.u32 2, %s21
        %p281 = scmp.lt.s32.totalorder %s280, 3
        %s282 = scalar_select %p281, %s280, 3
        %s283 = smul.addr %s282, 4
        %s284 = scalar_lea.vmem %s0, %s283
        %s285 = smul.u32 2, %s21
      $region24: #{densenet_forward.8} parent=19 // pred_fallthru
        _
      // Predicated region
      $region25: #{densenet_forward.8} parent=19 // pred_check
        %p286 = pneg %p72
      $region26: #{densenet_forward.8} parent=19 // pred_check_branch
        %288 = sbr.rel (%p286) target = $region28
      $region27: #{densenet_forward.8} parent=19 // pred_region
        %p289 = scmp.lt.s32.totalorder %s22, 1
        %s290 = scalar_select %p289, %s22, 1
        %s291 = scalar_lea.vmem %s1, %s290
      $region28: #{densenet_forward.8} parent=19 // pred_fallthru
        _
      // Predicated region
      $region29: #{densenet_forward.8} parent=19 // pred_check
        %p292 = pneg %p98
      $region30: #{densenet_forward.8} parent=19 // pred_check_branch
        %294 = sbr.rel (%p292) target = $region32
      $region31: #{densenet_forward.8} parent=19 // pred_region
        %p295 = scmp.lt.s32.totalorder %s22, 1
        %s296 = scalar_select %p295, %s22, 1
        %s297 = scalar_lea.vmem %s2, %s296
      $region32: #{densenet_forward.8} parent=19 // pred_fallthru
        _
      // Predicated region
      $region33: #{densenet_forward.8} parent=19 // pred_check
        %p298 = pneg %p124
      $region34: #{densenet_forward.8} parent=19 // pred_check_branch
        %300 = sbr.rel (%p298) target = $region36
      $region35: #{densenet_forward.8} parent=19 // pred_region
        %p301 = scmp.lt.s32.totalorder %s22, 1
        %s302 = scalar_select %p301, %s22, 1
        %s303 = smul.addr %s302, 16
        %s304 = smul.addr %s303, 4
        %s305 = scalar_lea.vmem %s3, %s304
      $region36: #{densenet_forward.8} parent=19 // pred_fallthru
        _
      // Predicated region
      $region37: #{densenet_forward.8} parent=19 // pred_check
        %p306 = pneg %p150
      $region38: #{densenet_forward.8} parent=19 // pred_check_branch
        %308 = sbr.rel (%p306) target = $region40
      $region39: #{densenet_forward.8} parent=19 // pred_region
        %p309 = scmp.lt.s32.totalorder %s22, 1
        %s310 = scalar_select %p309, %s22, 1
        %s311 = scalar_lea.vmem %s4, %s310
      $region40: #{densenet_forward.8} parent=19 // pred_fallthru
        _
      // Predicated region
      $region41: #{densenet_forward.8} parent=19 // pred_check
        %p312 = pneg %p176
      $region42: #{densenet_forward.8} parent=19 // pred_check_branch
        %314 = sbr.rel (%p312) target = $region44
      $region43: #{densenet_forward.8} parent=19 // pred_region
        %p315 = scmp.lt.s32.totalorder %s22, 1
        %s316 = scalar_select %p315, %s22, 1
        %s317 = scalar_lea.vmem %s5, %s316
      $region44: #{densenet_forward.8} parent=19 // pred_fallthru
        _
      // Predicated region
      $region45: #{densenet_forward.8} parent=19 // pred_check
        %p318 = pneg %p202
      $region46: #{densenet_forward.8} parent=19 // pred_check_branch
        %320 = sbr.rel (%p318) target = $region48
      $region47: #{densenet_forward.8} parent=19 // pred_region
        %p321 = scmp.lt.s32.totalorder %s22, 1
        %s322 = scalar_select %p321, %s22, 1
        %s323 = smul.addr %s322, 48
        %s324 = smul.addr %s323, 4
        %s325 = scalar_lea.vmem %s6, %s324
      $region48: #{densenet_forward.8} parent=19 // pred_fallthru
        _
    $region20: #{densenet_forward.8} parent=5 // pred_fallthru
      _
    %p326 = scmp.le.s32.totalorder 1, %s14
    %p327 = scmp.lt.s32.totalorder %s14, 5
    %p328 = pnand %p326, %p327
    %p329 = pneg %p328
    // Predicated region
    $region49: #{densenet_forward.8} parent=5 // pred_check
      _
    $region50: #{densenet_forward.8} parent=5 // pred_check_branch
      %331 = sbr.rel (%p328) target = $region52
    $region51: #{densenet_forward.8} parent=5 // pred_region
      %s332 = ssub.s32 %s14, 1
      %s333 = smul.u32 2, %s23
      %p334 = scmp.lt.s32.totalorder %s333, 3
      %s335 = scalar_select %p334, %s333, 3
      %s336 = smul.addr %s335, 4
      %s337 = scalar_lea.vmem %s0, %s336
      %p338 = pneg %p52
      %p339 = pneg %p49
      %p340 = scmp.lt.s32.totalorder %s24, 1
      %s341 = scalar_select %p340, %s24, 1
      %s342 = scalar_lea.vmem %s1, %s341
      %p343 = pneg %p78
      %p344 = pneg %p75
      %p345 = scmp.lt.s32.totalorder %s24, 1
      %s346 = scalar_select %p345, %s24, 1
      %s347 = scalar_lea.vmem %s2, %s346
      %p348 = pneg %p104
      %p349 = pneg %p101
      %p350 = scmp.lt.s32.totalorder %s24, 1
      %s351 = scalar_select %p350, %s24, 1
      %s352 = smul.addr %s351, 16
      %s353 = smul.addr %s352, 4
      %s354 = scalar_lea.vmem %s3, %s353
      %p355 = pneg %p130
      %p356 = pneg %p127
      %p357 = scmp.lt.s32.totalorder %s24, 1
      %s358 = scalar_select %p357, %s24, 1
      %s359 = scalar_lea.vmem %s4, %s358
      %p360 = pneg %p156
      %p361 = pneg %p153
      %p362 = scmp.lt.s32.totalorder %s24, 1
      %s363 = scalar_select %p362, %s24, 1
      %s364 = scalar_lea.vmem %s5, %s363
      %p365 = pneg %p182
      %p366 = pneg %p179
      %p367 = scmp.lt.s32.totalorder %s24, 1
      %s368 = scalar_select %p367, %s24, 1
      %s369 = smul.addr %s368, 48
      %s370 = smul.addr %s369, 4
      %s371 = scalar_lea.vmem %s6, %s370
      %p372 = pneg %p208
      %p373 = pneg %p205
      %p374 = pneg %p229
      %p375 = pneg %p226
      %p376 = pneg %p255
      %p377 = pneg %p252
      %s378 = smul.u32 2, %s23
      %p379 = scmp.lt.s32.totalorder %s378, 3
      %s380 = scalar_select %p379, %s378, 3
      %s381 = smul.addr %s380, 4
      %s382 = scalar_lea.vmem %s8, %s381
      %s383 = smul.u32 2, %s23
      %p384 = scmp.lt.s32.totalorder %s383, 3
      %s385 = scalar_select %p384, %s383, 3
      %s386 = smul.addr %s385, 4
      %s387 = scalar_lea.vmem %s0, %s386
      %s388 = smul.u32 2, %s23
      %p389 = scmp.lt.s32.totalorder %s24, 1
      %s390 = scalar_select %p389, %s24, 1
      %s391 = scalar_lea.vmem %s1, %s390
      %p392 = scmp.lt.s32.totalorder %s24, 1
      %s393 = scalar_select %p392, %s24, 1
      %s394 = scalar_lea.vmem %s2, %s393
      %p395 = scmp.lt.s32.totalorder %s24, 1
      %s396 = scalar_select %p395, %s24, 1
      %s397 = smul.addr %s396, 16
      %s398 = smul.addr %s397, 4
      %s399 = scalar_lea.vmem %s3, %s398
      %p400 = scmp.lt.s32.totalorder %s24, 1
      %s401 = scalar_select %p400, %s24, 1
      %s402 = scalar_lea.vmem %s4, %s401
      %p403 = scmp.lt.s32.totalorder %s24, 1
      %s404 = scalar_select %p403, %s24, 1
      %s405 = scalar_lea.vmem %s5, %s404
      %p406 = scmp.lt.s32.totalorder %s24, 1
      %s407 = scalar_select %p406, %s24, 1
      %s408 = smul.addr %s407, 48
      %s409 = smul.addr %s408, 4
      %s410 = scalar_lea.vmem %s6, %s409
      %s411 = smul.u32 2, %s23
      %p412 = scmp.lt.s32.totalorder %s411, 3
      %s413 = scalar_select %p412, %s411, 3
      %s414 = smul.addr %s413, 4
      %s415 = scalar_lea.vmem %s8, %s414
      %s416 = smul.u32 2, %s23
      %p418 = scmp.eq.s32.totalorder %s24, 0
      // Predicated region
      $region53: #{densenet_forward.8} parent=51 // pred_check
        %p419 = pneg %p418
      $region54: #{densenet_forward.8} parent=51 // pred_check_branch
        %421 = sbr.rel (%p419) target = $region56
      $region55: #{densenet_forward.8} parent=51 // pred_region
        %v422 = vld [vmem:[%s387] sm:$0xf]
        %v423 = vld [vmem:[%s387 + $0x4] sm:$0xf]
        %v424 = vunpack.c.l.bf16 %v422
        %v425 = vunpack.c.l.bf16 %v423
        %426 = vst [vmem:[#allocation2] sm:$0xff] %v424
        %427 = vst [vmem:[#allocation2 + $0x8] sm:$0xff] %v425
      $region56: #{densenet_forward.8} parent=51 // pred_fallthru
        _
      %v428 = vld [vmem:[#allocation2] sm:$0xff]
      %v429 = vld [vmem:[#allocation2 + $0x8] sm:$0xff]
      %v430 = vld [vmem:[%s391] sm:$0x1]
      %v432 = vlaneseq
      %v433 = vshrl.u32 %v432, 7
      %v434 = vsub.s32 0, %v433
      %v435 = vrot.slane %v430, %v434
      %v437 = vmul.f32 %v428, %v435
      %v438 = vmul.f32 %v429, %v435
      %v439 = vld [vmem:[%s394] sm:$0x1]
      %v441 = vlaneseq
      %v442 = vshrl.u32 %v441, 7
      %v443 = vsub.s32 0, %v442
      %v444 = vrot.slane %v439, %v443
      %v446 = vadd.f32 %v437, %v444
      %v447 = vadd.f32 %v438, %v444
      %v448 = vmax.f32 %v446, 0.0
      %v449 = vmax.f32 %v447, 0.0
      %v450 = vpack.c.bf16 %v449, %v448
      %v451 = vld [vmem:[%s399] sm:$0xf]
      %v452 = vld [vmem:[%s399 + $0x4] sm:$0xf]
      %v453 = vld [vmem:[%s399 + $0x8] sm:$0xf]
      %v454 = vld [vmem:[%s399 + $0xc] sm:$0xf]
      %v455 = vld [vmem:[%s399 + $0x10] sm:$0xf]
      %v456 = vld [vmem:[%s399 + $0x14] sm:$0xf]
      %v457 = vld [vmem:[%s399 + $0x18] sm:$0xf]
      %v458 = vld [vmem:[%s399 + $0x1c] sm:$0xf]
      %v459 = vld [vmem:[%s399 + $0x20] sm:$0xf]
      %v460 = vld [vmem:[%s399 + $0x24] sm:$0xf]
      %v461 = vld [vmem:[%s399 + $0x28] sm:$0xf]
      %v462 = vld [vmem:[%s399 + $0x2c] sm:$0xf]
      %v463 = vld [vmem:[%s399 + $0x30] sm:$0xf]
      %v464 = vld [vmem:[%s399 + $0x34] sm:$0xf]
      %v465 = vld [vmem:[%s399 + $0x38] sm:$0xf]
      %v466 = vld [vmem:[%s399 + $0x3c] sm:$0xf]
      %v483 = vunpack.c.l.b16 %v451
      %v484 = vunpack.c.l.b16 %v452
      %v485 = vunpack.c.l.b16 %v453
      %v486 = vunpack.c.l.b16 %v454
      %v487 = vunpack.c.l.b16 %v455
      %v488 = vunpack.c.l.b16 %v456
      %v489 = vunpack.c.l.b16 %v457
      %v490 = vunpack.c.l.b16 %v458
      %v491 = vunpack.c.l.b16 %v459
      %v492 = vunpack.c.l.b16 %v460
      %v493 = vunpack.c.l.b16 %v461
      %v494 = vunpack.c.l.b16 %v462
      %v495 = vunpack.c.l.b16 %v463
      %v496 = vunpack.c.l.b16 %v464
      %v497 = vunpack.c.l.b16 %v465
      %v498 = vunpack.c.l.b16 %v466
      %v499 = vpack.c.b16 %v484, %v483
      %v500 = vpack.c.b16 %v486, %v485
      %v501 = vpack.c.b16 %v488, %v487
      %v502 = vpack.c.b16 %v490, %v489
      %v503 = vpack.c.b16 %v492, %v491
      %v504 = vpack.c.b16 %v494, %v493
      %v505 = vpack.c.b16 %v496, %v495
      %v506 = vpack.c.b16 %v498, %v497
      %515 = vmatprep.subr.bf16.mxu0 0
      %516 = vmatpush1.bf16.msra.mxu0 %v506
      %517 = vmatprep.subr.bf16.mxu0 0
      %518 = vmatpush1.bf16.msra.mxu0 %v505
      %519 = vmatprep.subr.bf16.mxu0 0
      %520 = vmatpush1.bf16.msra.mxu0 %v504
      %521 = vmatprep.subr.bf16.mxu0 0
      %522 = vmatpush1.bf16.msra.mxu0 %v503
      %523 = vmatprep.subr.bf16.mxu0 0
      %524 = vmatpush1.bf16.msra.mxu0 %v502
      %525 = vmatprep.subr.bf16.mxu0 0
      %526 = vmatpush1.bf16.msra.mxu0 %v501
      %527 = vmatprep.subr.bf16.mxu0 0
      %528 = vmatpush1.bf16.msra.mxu0 %v500
      %529 = vmatprep.subr.bf16.mxu0 0
      %530 = vmatpush1.bf16.msra.mxu0 %v499
      %531 = vmatprep.subr.bf16.mxu0 0
      %532 = vmatpush2.bf16.msra.mxu0 0
      %533 = vmatprep.subr.bf16.mxu0 0
      %534 = vmatpush2.bf16.msra.mxu0 0
      %535 = vmatprep.subr.bf16.mxu0 0
      %536 = vmatpush2.bf16.msra.mxu0 0
      %537 = vmatprep.subr.bf16.mxu0 0
      %538 = vmatpush2.bf16.msra.mxu0 0
      %539 = vmatprep.subr.bf16.mxu0 0
      %540 = vmatpush2.bf16.msra.mxu0 0
      %541 = vmatprep.subr.bf16.mxu0 0
      %542 = vmatpush2.bf16.msra.mxu0 0
      %543 = vmatprep.subr.bf16.mxu0 0
      %544 = vmatpush2.bf16.msra.mxu0 0
      %545 = vmatprep.subr.bf16.mxu0 0
      %546 = vmatpush2.bf16.msra.mxu0 0
      %547 = vmatprep.mubr.bf16.mxu0 0
      %548 = vmatmul.mubr.bf16.gmra.mxu0 %v450
      %v549 = vpop.f32.mrf.mxu0
      %v550 = vadd.f32 0.0, %v549
      %v551 = vpop.f32.mrf.mxu0
      %v552 = vpop.f32.mrf.mxu0
      %v553 = vadd.f32 0.0, %v552
      %v554 = vpop.f32.mrf.mxu0
      %555 = vdwg.mxu0
      %v556 = vld [vmem:[%s402] sm:$0x1]
      %v558 = vlaneseq
      %v559 = vshrl.u32 %v558, 7
      %v560 = vsub.s32 0, %v559
      %v561 = vrot.slane %v556, %v560
      %v563 = vmul.f32 %v550, %v561
      %v564 = vmul.f32 %v553, %v561
      %v565 = vld [vmem:[%s405] sm:$0x1]
      %v567 = vlaneseq
      %v568 = vshrl.u32 %v567, 7
      %v569 = vsub.s32 0, %v568
      %v570 = vrot.slane %v565, %v569
      %v572 = vadd.f32 %v563, %v570
      %v573 = vadd.f32 %v564, %v570
      %v574 = vmax.f32 %v572, 0.0
      %v575 = vmax.f32 %v573, 0.0
      %v576 = vrot.slane %v574, 3
      %v577 = vrot.slane %v575, 3
      %v578 = vlaneseq
      %v579 = vshrl.u32 %v578, 7
      %vm580 = vcmp.lt.s32.totalorder %v579, 5
      %v581 = vsel %vm580, %v576, %v577
      %v582 = vsel %vm580, %v577, %v576
      %v583 = vld [vmem:[%s7] sm:$0xff]
      %v584 = vld [vmem:[%s7 + $0x8] sm:$0xff]
      %586 = vset.pattern.permute.xlu0 0
      %587 = vperm.xlu0 %586, %v583
      %v588 = vpop.permute.xlu0 %587
      %591 = vset.pattern.permute.xlu0 0
      %592 = vperm.xlu0 %591, %v584
      %v593 = vpop.permute.xlu0 %592
      %v595 = vmul.f32 %v582, %v588
      %v596 = vmul.f32 %v581, %v593
      %v597 = vrot.slane %v574, 4
      %v598 = vrot.slane %v575, 4
      %vm599 = vcmp.lt.s32.totalorder %v579, 4
      %v600 = vsel %vm599, %v597, %v598
      %v601 = vsel %vm599, %v598, %v597
      %s602 = scalar_lea.vmem %s7, 16
      %v603 = vld [vmem:[%s602] sm:$0xff]
      %v604 = vld [vmem:[%s602 + $0x8] sm:$0xff]
      %606 = vset.pattern.permute.xlu0 0
      %607 = vperm.xlu0 %606, %v603
      %v608 = vpop.permute.xlu0 %607
      %611 = vset.pattern.permute.xlu0 0
      %612 = vperm.xlu0 %611, %v604
      %v613 = vpop.permute.xlu0 %612
      %v615 = vmul.f32 %v601, %v608
      %v616 = vmul.f32 %v600, %v613
      %617 = vrot.lane.b32.xlu0 %v615, 32
      %v618 = vpop.permute.xlu0 %617
      %619 = vrot.lane.b32.xlu0 %v616, 32
      %v620 = vpop.permute.xlu0 %619
      %v621 = vadd.f32 %v595, %v618
      %v622 = vadd.f32 %v596, %v620
      %v623 = vrot.slane %v574, 5
      %v624 = vrot.slane %v575, 5
      %vm625 = vcmp.lt.s32.totalorder %v579, 3
      %v626 = vsel %vm625, %v623, %v624
      %v627 = vsel %vm625, %v624, %v623
      %s628 = scalar_lea.vmem %s7, 32
      %v629 = vld [vmem:[%s628] sm:$0xff]
      %v630 = vld [vmem:[%s628 + $0x8] sm:$0xff]
      %632 = vset.pattern.permute.xlu0 0
      %633 = vperm.xlu0 %632, %v629
      %v634 = vpop.permute.xlu0 %633
      %637 = vset.pattern.permute.xlu0 0
      %638 = vperm.xlu0 %637, %v630
      %v639 = vpop.permute.xlu0 %638
      %v641 = vmul.f32 %v627, %v634
      %v642 = vmul.f32 %v626, %v639
      %643 = vrot.lane.b32.xlu0 %v641, 64
      %v644 = vpop.permute.xlu0 %643
      %645 = vrot.lane.b32.xlu0 %v642, 64
      %v646 = vpop.permute.xlu0 %645
      %v647 = vadd.f32 %v621, %v644
      %v648 = vadd.f32 %v622, %v646
      %v649 = vrot.slane %v574, 7
      %v650 = vrot.slane %v575, 7
      %vm651 = vcmp.lt.s32.totalorder %v579, 1
      %v652 = vsel %vm651, %v649, %v650
      %v653 = vsel %vm651, %v650, %v649
      %s654 = scalar_lea.vmem %s7, 48
      %v655 = vld [vmem:[%s654] sm:$0xff]
      %v656 = vld [vmem:[%s654 + $0x8] sm:$0xff]
      %658 = vset.pattern.permute.xlu0 0
      %659 = vperm.xlu0 %658, %v655
      %v660 = vpop.permute.xlu0 %659
      %663 = vset.pattern.permute.xlu0 0
      %664 = vperm.xlu0 %663, %v656
      %v665 = vpop.permute.xlu0 %664
      %v667 = vmul.f32 %v653, %v660
      %v668 = vmul.f32 %v652, %v665
      %669 = vrot.lane.b32.xlu0 %v667, 96
      %v670 = vpop.permute.xlu0 %669
      %671 = vrot.lane.b32.xlu0 %v668, 96
      %v672 = vpop.permute.xlu0 %671
      %v673 = vadd.f32 %v647, %v670
      %v674 = vadd.f32 %v648, %v672
      %v675 = vrot.slane %v574, 1
      %v676 = vrot.slane %v575, 1
      %vm677 = vcmp.lt.s32.totalorder %v579, 7
      %v678 = vsel %vm677, %v675, %v676
      %v679 = vsel %vm677, %v676, %v675
      %s680 = scalar_lea.vmem %s7, 80
      %v681 = vld [vmem:[%s680] sm:$0xff]
      %v682 = vld [vmem:[%s680 + $0x8] sm:$0xff]
      %684 = vset.pattern.permute.xlu0 0
      %685 = vperm.xlu0 %684, %v681
      %v686 = vpop.permute.xlu0 %685
      %689 = vset.pattern.permute.xlu0 0
      %690 = vperm.xlu0 %689, %v682
      %v691 = vpop.permute.xlu0 %690
      %v693 = vmul.f32 %v678, %v686
      %v694 = vmul.f32 %v679, %v691
      %695 = vrot.lane.b32.xlu0 %v693, 32
      %v696 = vpop.permute.xlu0 %695
      %697 = vrot.lane.b32.xlu0 %v694, 32
      %v698 = vpop.permute.xlu0 %697
      %v699 = vadd.f32 %v574, %v696
      %v700 = vadd.f32 %v575, %v698
      %s701 = scalar_lea.vmem %s7, 96
      %v702 = vld [vmem:[%s701] sm:$0xff]
      %v703 = vld [vmem:[%s701 + $0x8] sm:$0xff]
      %705 = vset.pattern.permute.xlu0 0
      %706 = vperm.xlu0 %705, %v702
      %v707 = vpop.permute.xlu0 %706
      %710 = vset.pattern.permute.xlu0 0
      %711 = vperm.xlu0 %710, %v703
      %v712 = vpop.permute.xlu0 %711
      %v714 = vmul.f32 %v581, %v707
      %v715 = vmul.f32 %v582, %v712
      %716 = vrot.lane.b32.xlu0 %v714, 64
      %v717 = vpop.permute.xlu0 %716
      %718 = vrot.lane.b32.xlu0 %v715, 64
      %v719 = vpop.permute.xlu0 %718
      %v720 = vadd.f32 %v699, %v717
      %v721 = vadd.f32 %v700, %v719
      %s722 = scalar_lea.vmem %s7, 112
      %v723 = vld [vmem:[%s722] sm:$0xff]
      %v724 = vld [vmem:[%s722 + $0x8] sm:$0xff]
      %726 = vset.pattern.permute.xlu0 0
      %727 = vperm.xlu0 %726, %v723
      %v728 = vpop.permute.xlu0 %727
      %731 = vset.pattern.permute.xlu0 0
      %732 = vperm.xlu0 %731, %v724
      %v733 = vpop.permute.xlu0 %732
      %v735 = vmul.f32 %v600, %v728
      %v736 = vmul.f32 %v601, %v733
      %737 = vrot.lane.b32.xlu0 %v735, 96
      %v738 = vpop.permute.xlu0 %737
      %739 = vrot.lane.b32.xlu0 %v736, 96
      %v740 = vpop.permute.xlu0 %739
      %v741 = vadd.f32 %v720, %v738
      %v742 = vadd.f32 %v721, %v740
      %s743 = scalar_lea.vmem %s7, 128
      %v744 = vld [vmem:[%s743] sm:$0xff]
      %v745 = vld [vmem:[%s743 + $0x8] sm:$0xff]
      %747 = vset.pattern.permute.xlu0 0
      %748 = vperm.xlu0 %747, %v744
      %v749 = vpop.permute.xlu0 %748
      %752 = vset.pattern.permute.xlu0 0
      %753 = vperm.xlu0 %752, %v745
      %v754 = vpop.permute.xlu0 %753
      %v756 = vmul.f32 %v626, %v749
      %v757 = vmul.f32 %v627, %v754
      %v758 = vpack.c.bf16 %v674, %v673
      %v759 = vpack.c.bf16 %v742, %v741
      %v760 = vpack.c.bf16 %v757, %v756
      %v761 = vld [vmem:[%s410] sm:$0xf]
      %v762 = vld [vmem:[%s410 + $0x4] sm:$0xf]
      %v763 = vld [vmem:[%s410 + $0x8] sm:$0xf]
      %v764 = vld [vmem:[%s410 + $0xc] sm:$0xf]
      %v765 = vld [vmem:[%s410 + $0x10] sm:$0xf]
      %v766 = vld [vmem:[%s410 + $0x14] sm:$0xf]
      %v767 = vld [vmem:[%s410 + $0x18] sm:$0xf]
      %v768 = vld [vmem:[%s410 + $0x1c] sm:$0xf]
      %v769 = vld [vmem:[%s410 + $0x20] sm:$0xf]
      %v770 = vld [vmem:[%s410 + $0x24] sm:$0xf]
      %v771 = vld [vmem:[%s410 + $0x28] sm:$0xf]
      %v772 = vld [vmem:[%s410 + $0x2c] sm:$0xf]
      %v773 = vld [vmem:[%s410 + $0x30] sm:$0xf]
      %v774 = vld [vmem:[%s410 + $0x34] sm:$0xf]
      %v775 = vld [vmem:[%s410 + $0x38] sm:$0xf]
      %v776 = vld [vmem:[%s410 + $0x3c] sm:$0xf]
      %v777 = vld [vmem:[%s410 + $0x40] sm:$0xf]
      %v778 = vld [vmem:[%s410 + $0x44] sm:$0xf]
      %v779 = vld [vmem:[%s410 + $0x48] sm:$0xf]
      %v780 = vld [vmem:[%s410 + $0x4c] sm:$0xf]
      %v781 = vld [vmem:[%s410 + $0x50] sm:$0xf]
      %v782 = vld [vmem:[%s410 + $0x54] sm:$0xf]
      %v783 = vld [vmem:[%s410 + $0x58] sm:$0xf]
      %v784 = vld [vmem:[%s410 + $0x5c] sm:$0xf]
      %v785 = vld [vmem:[%s410 + $0x60] sm:$0xf]
      %v786 = vld [vmem:[%s410 + $0x64] sm:$0xf]
      %v787 = vld [vmem:[%s410 + $0x68] sm:$0xf]
      %v788 = vld [vmem:[%s410 + $0x6c] sm:$0xf]
      %v789 = vld [vmem:[%s410 + $0x70] sm:$0xf]
      %v790 = vld [vmem:[%s410 + $0x74] sm:$0xf]
      %v791 = vld [vmem:[%s410 + $0x78] sm:$0xf]
      %v792 = vld [vmem:[%s410 + $0x7c] sm:$0xf]
      %v793 = vld [vmem:[%s410 + $0x80] sm:$0xf]
      %v794 = vld [vmem:[%s410 + $0x84] sm:$0xf]
      %v795 = vld [vmem:[%s410 + $0x88] sm:$0xf]
      %v796 = vld [vmem:[%s410 + $0x8c] sm:$0xf]
      %v797 = vld [vmem:[%s410 + $0x90] sm:$0xf]
      %v798 = vld [vmem:[%s410 + $0x94] sm:$0xf]
      %v799 = vld [vmem:[%s410 + $0x98] sm:$0xf]
      %v800 = vld [vmem:[%s410 + $0x9c] sm:$0xf]
      %v801 = vld [vmem:[%s410 + $0xa0] sm:$0xf]
      %v802 = vld [vmem:[%s410 + $0xa4] sm:$0xf]
      %v803 = vld [vmem:[%s410 + $0xa8] sm:$0xf]
      %v804 = vld [vmem:[%s410 + $0xac] sm:$0xf]
      %v805 = vld [vmem:[%s410 + $0xb0] sm:$0xf]
      %v806 = vld [vmem:[%s410 + $0xb4] sm:$0xf]
      %v807 = vld [vmem:[%s410 + $0xb8] sm:$0xf]
      %v808 = vld [vmem:[%s410 + $0xbc] sm:$0xf]
      %v857 = vunpack.c.l.b16 %v761
      %v858 = vunpack.c.l.b16 %v762
      %v859 = vunpack.c.l.b16 %v763
      %v860 = vunpack.c.l.b16 %v764
      %v861 = vunpack.c.l.b16 %v765
      %v862 = vunpack.c.l.b16 %v766
      %v863 = vunpack.c.l.b16 %v767
      %v864 = vunpack.c.l.b16 %v768
      %v865 = vunpack.c.l.b16 %v769
      %v866 = vunpack.c.l.b16 %v770
      %v867 = vunpack.c.l.b16 %v771
      %v868 = vunpack.c.l.b16 %v772
      %v869 = vunpack.c.l.b16 %v773
      %v870 = vunpack.c.l.b16 %v774
      %v871 = vunpack.c.l.b16 %v775
      %v872 = vunpack.c.l.b16 %v776
      %v873 = vunpack.c.l.b16 %v777
      %v874 = vunpack.c.l.b16 %v778
      %v875 = vunpack.c.l.b16 %v779
      %v876 = vunpack.c.l.b16 %v780
      %v877 = vunpack.c.l.b16 %v781
      %v878 = vunpack.c.l.b16 %v782
      %v879 = vunpack.c.l.b16 %v783
      %v880 = vunpack.c.l.b16 %v784
      %v881 = vunpack.c.l.b16 %v785
      %v882 = vunpack.c.l.b16 %v786
      %v883 = vunpack.c.l.b16 %v787
      %v884 = vunpack.c.l.b16 %v788
      %v885 = vunpack.c.l.b16 %v789
      %v886 = vunpack.c.l.b16 %v790
      %v887 = vunpack.c.l.b16 %v791
      %v888 = vunpack.c.l.b16 %v792
      %v889 = vunpack.c.l.b16 %v793
      %v890 = vunpack.c.l.b16 %v794
      %v891 = vunpack.c.l.b16 %v795
      %v892 = vunpack.c.l.b16 %v796
      %v893 = vunpack.c.l.b16 %v797
      %v894 = vunpack.c.l.b16 %v798
      %v895 = vunpack.c.l.b16 %v799
      %v896 = vunpack.c.l.b16 %v800
      %v897 = vunpack.c.l.b16 %v801
      %v898 = vunpack.c.l.b16 %v802
      %v899 = vunpack.c.l.b16 %v803
      %v900 = vunpack.c.l.b16 %v804
      %v901 = vunpack.c.l.b16 %v805
      %v902 = vunpack.c.l.b16 %v806
      %v903 = vunpack.c.l.b16 %v807
      %v904 = vunpack.c.l.b16 %v808
      %v905 = vpack.c.b16 %v858, %v857
      %v906 = vpack.c.b16 %v860, %v859
      %v907 = vpack.c.b16 %v862, %v861
      %v908 = vpack.c.b16 %v864, %v863
      %v909 = vpack.c.b16 %v866, %v865
      %v910 = vpack.c.b16 %v868, %v867
      %v911 = vpack.c.b16 %v870, %v869
      %v912 = vpack.c.b16 %v872, %v871
      %v913 = vpack.c.b16 %v874, %v873
      %v914 = vpack.c.b16 %v876, %v875
      %v915 = vpack.c.b16 %v878, %v877
      %v916 = vpack.c.b16 %v880, %v879
      %v917 = vpack.c.b16 %v882, %v881
      %v918 = vpack.c.b16 %v884, %v883
      %v919 = vpack.c.b16 %v886, %v885
      %v920 = vpack.c.b16 %v888, %v887
      %v921 = vpack.c.b16 %v890, %v889
      %v922 = vpack.c.b16 %v892, %v891
      %v923 = vpack.c.b16 %v894, %v893
      %v924 = vpack.c.b16 %v896, %v895
      %v925 = vpack.c.b16 %v898, %v897
      %v926 = vpack.c.b16 %v900, %v899
      %v927 = vpack.c.b16 %v902, %v901
      %v928 = vpack.c.b16 %v904, %v903
      %953 = vmatprep.subr.bf16.mxu0 0
      %954 = vmatpush1.bf16.msra.mxu0 %v912
      %955 = vmatprep.subr.bf16.mxu0 0
      %956 = vmatpush1.bf16.msra.mxu0 %v911
      %957 = vmatprep.subr.bf16.mxu0 0
      %958 = vmatpush1.bf16.msra.mxu0 %v910
      %959 = vmatprep.subr.bf16.mxu0 0
      %960 = vmatpush1.bf16.msra.mxu0 %v909
      %961 = vmatprep.subr.bf16.mxu0 0
      %962 = vmatpush1.bf16.msra.mxu0 %v908
      %963 = vmatprep.subr.bf16.mxu0 0
      %964 = vmatpush1.bf16.msra.mxu0 %v907
      %965 = vmatprep.subr.bf16.mxu0 0
      %966 = vmatpush1.bf16.msra.mxu0 %v906
      %967 = vmatprep.subr.bf16.mxu0 0
      %968 = vmatpush1.bf16.msra.mxu0 %v905
      %969 = vmatprep.subr.bf16.mxu0 0
      %970 = vmatpush2.bf16.msra.mxu0 %v920
      %971 = vmatprep.subr.bf16.mxu0 0
      %972 = vmatpush2.bf16.msra.mxu0 %v919
      %973 = vmatprep.subr.bf16.mxu0 0
      %974 = vmatpush2.bf16.msra.mxu0 %v918
      %975 = vmatprep.subr.bf16.mxu0 0
      %976 = vmatpush2.bf16.msra.mxu0 %v917
      %977 = vmatprep.subr.bf16.mxu0 0
      %978 = vmatpush2.bf16.msra.mxu0 %v916
      %979 = vmatprep.subr.bf16.mxu0 0
      %980 = vmatpush2.bf16.msra.mxu0 %v915
      %981 = vmatprep.subr.bf16.mxu0 0
      %982 = vmatpush2.bf16.msra.mxu0 %v914
      %983 = vmatprep.subr.bf16.mxu0 0
      %984 = vmatpush2.bf16.msra.mxu0 %v913
      %985 = vmatprep.mubr.bf16.mxu0 %v759
      %986 = vmatmul.mubr.bf16.gmra.mxu0 %v758
      %v987 = vpop.f32.mrf.mxu0
      %v988 = vadd.f32 0.0, %v987
      %v989 = vpop.f32.mrf.mxu0
      %v990 = vpop.f32.mrf.mxu0
      %v991 = vadd.f32 0.0, %v990
      %v992 = vpop.f32.mrf.mxu0
      %993 = vdwg.mxu0
      %994 = vmatprep.subr.bf16.mxu0 0
      %995 = vmatpush1.bf16.msra.mxu0 %v928
      %996 = vmatprep.subr.bf16.mxu0 0
      %997 = vmatpush1.bf16.msra.mxu0 %v927
      %998 = vmatprep.subr.bf16.mxu0 0
      %999 = vmatpush1.bf16.msra.mxu0 %v926
      %1000 = vmatprep.subr.bf16.mxu0 0
      %1001 = vmatpush1.bf16.msra.mxu0 %v925
      %1002 = vmatprep.subr.bf16.mxu0 0
      %1003 = vmatpush1.bf16.msra.mxu0 %v924
      %1004 = vmatprep.subr.bf16.mxu0 0
      %1005 = vmatpush1.bf16.msra.mxu0 %v923
      %1006 = vmatprep.subr.bf16.mxu0 0
      %1007 = vmatpush1.bf16.msra.mxu0 %v922
      %1008 = vmatprep.subr.bf16.mxu0 0
      %1009 = vmatpush1.bf16.msra.mxu0 %v921
      %1010 = vmatprep.subr.bf16.mxu0 0
      %1011 = vmatpush2.bf16.msra.mxu0 0
      %1012 = vmatprep.subr.bf16.mxu0 0
      %1013 = vmatpush2.bf16.msra.mxu0 0
      %1014 = vmatprep.subr.bf16.mxu0 0
      %1015 = vmatpush2.bf16.msra.mxu0 0
      %1016 = vmatprep.subr.bf16.mxu0 0
      %1017 = vmatpush2.bf16.msra.mxu0 0
      %1018 = vmatprep.subr.bf16.mxu0 0
      %1019 = vmatpush2.bf16.msra.mxu0 0
      %1020 = vmatprep.subr.bf16.mxu0 0
      %1021 = vmatpush2.bf16.msra.mxu0 0
      %1022 = vmatprep.subr.bf16.mxu0 0
      %1023 = vmatpush2.bf16.msra.mxu0 0
      %1024 = vmatprep.subr.bf16.mxu0 0
      %1025 = vmatpush2.bf16.msra.mxu0 0
      %1026 = vmatprep.mubr.bf16.mxu0 0
      %1027 = vmatmul.mubr.bf16.gmra.mxu0 %v760
      %v1028 = vpop.f32.mrf.mxu0
      %v1029 = vadd.f32 %v988, %v1028
      %v1030 = vpop.f32.mrf.mxu0
      %v1031 = vpop.f32.mrf.mxu0
      %v1032 = vadd.f32 %v991, %v1031
      %v1033 = vpop.f32.mrf.mxu0
      %1034 = vdwg.mxu0
      %v1035 = vadd.f32 %v428, %v1029
      %v1036 = vadd.f32 %v429, %v1032
      %1037 = vst [vmem:[#allocation2] sm:$0xff] %v1035
      %1038 = vst [vmem:[#allocation2 + $0x8] sm:$0xff] %v1036
      %p1039 = scmp.eq.s32.totalorder %s24, 1
      // Predicated region
      $region57: #{densenet_forward.8} parent=51 // pred_check
        %p1040 = pneg %p1039
      $region58: #{densenet_forward.8} parent=51 // pred_check_branch
        %1042 = sbr.rel (%p1040) target = $region60
      $region59: #{densenet_forward.8} parent=51 // pred_region
        %v1043 = vld [vmem:[#allocation2] sm:$0xff]
        %v1044 = vld [vmem:[#allocation2 + $0x8] sm:$0xff]
        %v1045 = vpack.c.bf16 %v1044, %v1043
        %v1047 = vunpack.c.l.b16 %v1045
        %v1048 = vunpack.c.h.b16 %v1045
        %v1049 = vpack.c.b16 %v1047, %v1047
        %v1050 = vpack.c.b16 %v1048, %v1048
        %1053 = vst [vmem:[%s415] sm:$0xf] %v1049
        %1054 = vst [vmem:[%s415 + $0x4] sm:$0xf] %v1050
      $region60: #{densenet_forward.8} parent=51 // pred_fallthru
        _
      %s1055 = smul.u32 2, %s23
      %p1056 = scmp.lt.s32.totalorder %s1055, 3
      %s1057 = scalar_select %p1056, %s1055, 3
      %s1058 = smul.addr %s1057, 4
      %s1059 = scalar_lea.vmem %s8, %s1058
      // Predicated region
      $region61: #{densenet_forward.8} parent=51 // pred_check
        %p1060 = pneg %p252
      $region62: #{densenet_forward.8} parent=51 // pred_check_branch
        %1062 = sbr.rel (%p1060) target = $region64
      $region63: #{densenet_forward.8} parent=51 // pred_region
        %s1063 = smul.u32 2, %s23
      $region64: #{densenet_forward.8} parent=51 // pred_fallthru
        _
    $region52: #{densenet_forward.8} parent=5 // pred_fallthru
      _
    %p1064 = scmp.le.s32.totalorder 2, %s14
    // Predicated region
    $region65: #{densenet_forward.8} parent=5 // pred_check
      %p1065 = pneg %p1064
    $region66: #{densenet_forward.8} parent=5 // pred_check_branch
      %1067 = sbr.rel (%p1065) target = $region68
    $region67: #{densenet_forward.8} parent=5 // pred_region
      %s1068 = ssub.s32 %s14, 2
      // Predicated region
      $region69: #{densenet_forward.8} parent=67 // pred_check
        %p1069 = pneg %p258
      $region70: #{densenet_forward.8} parent=67 // pred_check_branch
        %1071 = sbr.rel (%p1069) target = $region72
      $region71: #{densenet_forward.8} parent=67 // pred_region
        %s1072 = smul.u32 2, %s25
        %p1073 = scmp.lt.s32.totalorder %s1072, 3
        %s1074 = scalar_select %p1073, %s1072, 3
        %s1075 = smul.addr %s1074, 4
        %s1076 = scalar_lea.vmem %s8, %s1075
      $region72: #{densenet_forward.8} parent=67 // pred_fallthru
        _
    $region68: #{densenet_forward.8} parent=5 // pred_fallthru
      _
  $region6: #{densenet_forward.8} parent=0 // loop_footer
    %s18 = sadd.s32 1, %s14
  $region7: #{densenet_forward.8} parent=0 // loop_footer_branch
    %13 = sbr.rel target = $region3
  $region8: #{densenet_forward.8} parent=0 // loop_exit
    _

</llo_original>
